<compile_context>
chip_gen: v7x
topology: tpu7x:2x2x1
jax: 0.10.0
libtpu: 0.0.40
codegen_flags: <defaults>
</compile_context>

<pallas_src>
import functools

import jax
import jax.numpy as jnp
from jax import lax
from jax.experimental import pallas as pl
from jax.experimental.pallas import tpu as pltpu


# ---------------------------------------------------------------------------
# Pallas kernel: batched (Gb window-heads) softmax attention in (hd, N) layout.
# ---------------------------------------------------------------------------
def _window_attn_kernel(q_ref, k_ref, v_ref, o_ref, *, scale):
    # refs are (Gb, hd, N): head-dim on sublanes, tokens on lanes (lane-dense).
    q = q_ref[...]
    k = k_ref[...]
    v = v_ref[...]

    # s[b, i, j] = sum_d q[b, d, i] * k[b, d, j]   (contract hd, no explicit .T)
    s = lax.dot_general(
        q, k,
        dimension_numbers=(((1,), (1,)), ((0,), (0,))),
        preferred_element_type=jnp.float32)                 # (Gb, N, N), f32 acc
    s = s * scale

    # numerically-stable softmax over keys (lanes); elementwise math kept f32
    s = s - jnp.max(s, axis=-1, keepdims=True)
    p = jnp.exp(s)
    denom = jnp.sum(p, axis=-1, keepdims=True)
    p = p * pl.reciprocal(denom, approx=True)               # divide on the EUP
    p = p.astype(v.dtype)                                   # bf16-in -> bf16 MXU

    # oT[b, d, i] = sum_j v[b, d, j] * p[b, i, j]  -> lane-dense (Gb, hd, N)
    o = lax.dot_general(
        v, p,
        dimension_numbers=(((2,), (2,)), ((0,), (0,))),
        preferred_element_type=jnp.float32)
    o_ref[...] = o.astype(o_ref.dtype)


def _choose_block_g(G, N, hd, itemsize,
                    vmem_budget_bytes=12 * 1024 * 1024, cap=32):
    """Largest divisor Gb of G under a per-step VMEM budget.

    Prefers a Gb that keeps the grid extent even (balances v7x's 2 TensorCores).
    Budget stays well under the 32 MiB scoped VMEM we request (v7x-safe).
    """
    hd_pad = max(8, hd)  # sublane padding of the (hd, N) tiles in VMEM
    best, best_even = 1, None
    for gb in range(1, min(G, cap) + 1):
        if G % gb:
            continue
        # f32 scores/probs (+ slack) + double-buffered q/k/v/out tiles
        footprint = 3 * gb * N * N * 4 + 4 * 2 * gb * hd_pad * N * itemsize
        if footprint > vmem_budget_bytes:
            break
        best = gb
        if (G // gb) % 2 == 0:
            best_even = gb
    return best_even if best_even is not None else best


def windowed_attention_pallas(q, k, v, scale):
    """q, k, v: (G, hd, N) -> (G, hd, N)   (transposed per-head layout)."""
    G, hd, N = q.shape
    Gb = _choose_block_g(G, N, hd, q.dtype.itemsize)
    kernel = functools.partial(_window_attn_kernel, scale=scale)
    spec = pl.BlockSpec((Gb, hd, N), lambda i: (i, 0, 0))
    # TODO(synk): for very large N (idx=-1 full-resolution windows) the (N, N)
    # score block should be flash-tiled along the key axis instead of
    # materialized; unnecessary at CSWin window sizes used here.
    return pl.pallas_call(
        kernel,
        out_shape=jax.ShapeDtypeStruct((G, hd, N), q.dtype),
        grid=(G // Gb,),
        in_specs=[spec, spec, spec],
        out_specs=spec,
        compiler_params=pltpu.CompilerParams(
            dimension_semantics=("parallel",),
            vmem_limit_bytes=32 * 1024 * 1024),
    )(q, k, v)


# ---------------------------------------------------------------------------
# Plain-JAX layout glue mirroring the PyTorch helpers.
# ---------------------------------------------------------------------------
def img2windows(img_bhwc, H_sp, W_sp):
    """img_bhwc: (B, H, W, C) -> (B * nH * nW, H_sp * W_sp, C)."""
    B, H, W, C = img_bhwc.shape
    x = img_bhwc.reshape(B, H // H_sp, H_sp, W // W_sp, W_sp, C)
    x = x.transpose(0, 1, 3, 2, 4, 5)                   # B, nH, nW, H_sp, W_sp, C
    return x.reshape(-1, H_sp * W_sp, C)


def windows2img(win, H_sp, W_sp, H, W):
    """win: (B', H_sp * W_sp, C) -> (B, H, W, C)."""
    Bp, N, C = win.shape
    B = Bp // ((H // H_sp) * (W // W_sp))
    x = win.reshape(B, H // H_sp, W // W_sp, H_sp, W_sp, C)
    x = x.transpose(0, 1, 3, 2, 4, 5)                   # B, nH, H_sp, nW, W_sp, C
    return x.reshape(B, H, W, C)


class LePEAttentionPallas:
    def __init__(self, dim, resolution, idx, split_size=7, dim_out=None,
                 num_heads=8, qk_scale=None):
        self.dim = dim
        self.dim_out = dim_out or dim
        self.resolution = resolution
        self.split_size = split_size
        self.num_heads = num_heads
        head_dim = dim // num_heads
        self.scale = qk_scale or head_dim ** (-0.5)
        if idx == -1:
            H_sp, W_sp = resolution[0], resolution[1]
        elif idx == 0:
            H_sp, W_sp = resolution[0], split_size
        elif idx == 1:
            W_sp, H_sp = resolution[1], split_size
        else:
            raise ValueError(f"ERROR MODE {idx}")
        self.H_sp = H_sp
        self.W_sp = W_sp

        # get_v: nn.Conv2d(dim, dim, 3, 1, 1, groups=dim) — deterministic init.
        # TODO(synk): get_v (LePE depthwise conv) and attn_drop exist in
        # __init__ but the module's forward() never applies them.
        k1, k2 = jax.random.split(jax.random.PRNGKey(42))
        fan_in = 1 * 3 * 3
        bound = 1.0 / (fan_in ** 0.5)
        self.get_v_weight = jax.random.uniform(
            k1, (dim, 1, 3, 3), jnp.float32, minval=-bound, maxval=bound)
        self.get_v_bias = jax.random.uniform(
            k2, (dim,), jnp.float32, minval=-bound, maxval=bound)

    def _window_geometry(self, x_size):
        # per-call window geometry (no stateful self.H_sp/W_sp mutation)
        H, W = x_size
        H_sp = self.H_sp if self.H_sp == self.split_size else H
        W_sp = self.W_sp if self.W_sp == self.split_size else W
        return H_sp, W_sp

    def _im2cswin_t(self, x, x_size, H_sp, W_sp):
        """(B, L, C) -> (B', heads, hd, N): head-dim on sublanes, tokens on lanes."""
        B, L, C = x.shape
        H, W = x_size
        x = x.reshape(B, H, W, C)
        x = img2windows(x, H_sp, W_sp)                       # (B', N, C)
        Bp, N, _ = x.shape
        x = x.reshape(Bp, N, self.num_heads, C // self.num_heads)
        return x.transpose(0, 2, 3, 1)                       # (B', h, hd, N)

    def forward(self, x_size, qkv):
        """qkv: (3, B, L, C)  ->  (B, L, C)"""
        q, k, v = qkv[0], qkv[1], qkv[2]
        H, W = x_size
        B, L, C = q.shape
        H_sp, W_sp = self._window_geometry(x_size)

        qt = self._im2cswin_t(q, x_size, H_sp, W_sp)         # (B', h, hd, N)
        kt = self._im2cswin_t(k, x_size, H_sp, W_sp)
        vt = self._im2cswin_t(v, x_size, H_sp, W_sp)

        Bp, h, hd, N = qt.shape
        qf = qt.reshape(Bp * h, hd, N)
        kf = kt.reshape(Bp * h, hd, N)
        vf = vt.reshape(Bp * h, hd, N)

        # ---- Pallas hot path: softmax(scale * q k^T) v, transposed layout ----
        of = windowed_attention_pallas(qf, kf, vf, self.scale)   # (G, hd, N)

        x = of.reshape(Bp, h, hd, N).transpose(0, 3, 1, 2).reshape(Bp, N, C)
        x = windows2img(x, H_sp, W_sp, H, W).reshape(B, -1, C)
        return x


# ---------------------------------------------------------------------------
# Pure-JAX reference (standard layout, no Pallas) for correctness checking.
# ---------------------------------------------------------------------------
def reference_forward(module, x_size, qkv):
    q, k, v = qkv[0], qkv[1], qkv[2]
    H, W = x_size
    B, L, C = q.shape
    H_sp, W_sp = module._window_geometry(x_size)

    def to_windows(x):
        x = x.reshape(B, H, W, C)
        x = img2windows(x, H_sp, W_sp)
        Bp, N, _ = x.shape
        x = x.reshape(Bp, N, module.num_heads, C // module.num_heads)
        return x.transpose(0, 2, 1, 3)                       # (B', h, N, hd)

    q = to_windows(q) * module.scale
    k = to_windows(k)
    v = to_windows(v)
    attn = jnp.einsum("bhnd,bhmd->bhnm", q, k)
    attn = jax.nn.softmax(attn, axis=-1)
    x = jnp.einsum("bhnm,bhmd->bhnd", attn, v)
    Bp, h, N, hd = x.shape
    x = x.transpose(0, 2, 1, 3).reshape(Bp, N, C)
    x = windows2img(x, H_sp, W_sp, H, W).reshape(B, -1, C)
    return x


if __name__ == "__main__":
    # Small, module-consistent shapes.
    B = 2
    H = W = 16
    C = 32
    num_heads = 8
    split_size = 8
    L = H * W

    qkv = jax.random.normal(jax.random.PRNGKey(0), (3, B, L, C), jnp.float32)

    for idx in (0, 1):   # horizontal and vertical stripe branches
        module = LePEAttentionPallas(
            dim=C, resolution=(H, W), idx=idx,
            split_size=split_size, num_heads=num_heads)

        out = module.forward((H, W), qkv)
        out = jax.block_until_ready(out)

        ref = reference_forward(module, (H, W), qkv)
        assert out.shape == (B, L, C), out.shape
        # tolerance allows the EUP approximate-reciprocal softmax denominator
        assert jnp.allclose(out, ref, rtol=5e-3, atol=5e-3), float(
            jnp.max(jnp.abs(out - ref)))

    print("KERNEL_OK")
</pallas_src>

<mosaic_0001>
module attributes {stable_mosaic.version = 11 : i64} {
  func.func @_window_attn_kernel(%arg0: i32, %arg1: memref<16x4x128xf32, #tpu.memory_space<vmem>>, %arg2: memref<16x4x128xf32, #tpu.memory_space<vmem>>, %arg3: memref<16x4x128xf32, #tpu.memory_space<vmem>>, %arg4: memref<16x4x128xf32, #tpu.memory_space<vmem>>) attributes {dimension_semantics = [#tpu.dimension_semantics<parallel>], iteration_bounds = array<i64: 2>, scalar_prefetch = 0 : i64, scratch_operands = 0 : i64, tpu.core_type = #tpu.core_type<tc>, window_params = [{transform_indices = @transform_0, window_bounds = array<i64: 16, 4, 128>}, {transform_indices = @transform_1, window_bounds = array<i64: 16, 4, 128>}, {transform_indices = @transform_2, window_bounds = array<i64: 16, 4, 128>}, {transform_indices = @transform_3, window_bounds = array<i64: 16, 4, 128>}]} {
    %c0 = arith.constant 0 : index
    %c0_0 = arith.constant 0 : index
    %c0_1 = arith.constant 0 : index
    %0 = vector.load %arg1[%c0, %c0_0, %c0_1] : memref<16x4x128xf32, #tpu.memory_space<vmem>>, vector<16x4x128xf32>
    %c0_2 = arith.constant 0 : index
    %c0_3 = arith.constant 0 : index
    %c0_4 = arith.constant 0 : index
    %1 = vector.load %arg2[%c0_2, %c0_3, %c0_4] : memref<16x4x128xf32, #tpu.memory_space<vmem>>, vector<16x4x128xf32>
    %c0_5 = arith.constant 0 : index
    %c0_6 = arith.constant 0 : index
    %c0_7 = arith.constant 0 : index
    %2 = vector.load %arg3[%c0_5, %c0_6, %c0_7] : memref<16x4x128xf32, #tpu.memory_space<vmem>>, vector<16x4x128xf32>
    %cst = arith.constant dense<0.000000e+00> : vector<16x128x128xf32>
    %3 = tpu.matmul %0, %1, %cst {dimension_numbers = #tpu.dot_dimension_numbers<[1], [1], [2], [2], [0, 0, 0, 2, 1, 2], [0], [0]>} : vector<16x4x128xf32>, vector<16x4x128xf32>, vector<16x128x128xf32> -> vector<16x128x128xf32>
    %cst_8 = arith.constant 5.000000e-01 : f32
    %4 = vector.broadcast %cst_8 : f32 to vector<16x128x128xf32>
    %5 = arith.mulf %3, %4 : vector<16x128x128xf32>
    %cst_9 = arith.constant dense<0xFF800000> : vector<16x128xf32>
    %6 = vector.multi_reduction <maximumf>, %5, %cst_9 [2] : vector<16x128x128xf32> to vector<16x128xf32>
    %7 = vector.shape_cast %6 : vector<16x128xf32> to vector<16x128x1xf32>
    %8 = vector.broadcast %7 : vector<16x128x1xf32> to vector<16x128x128xf32>
    %9 = arith.subf %5, %8 : vector<16x128x128xf32>
    %10 = math.exp %9 : vector<16x128x128xf32>
    %cst_10 = arith.constant dense<0.000000e+00> : vector<16x128xf32>
    %11 = vector.multi_reduction <add>, %10, %cst_10 [2] : vector<16x128x128xf32> to vector<16x128xf32>
    %12 = vector.shape_cast %11 : vector<16x128xf32> to vector<16x128x1xf32>
    %13 = tpu.reciprocal %12 {approx = true} : vector<16x128x1xf32> -> vector<16x128x1xf32>
    %14 = vector.broadcast %13 : vector<16x128x1xf32> to vector<16x128x128xf32>
    %15 = arith.mulf %10, %14 : vector<16x128x128xf32>
    %cst_11 = arith.constant dense<0.000000e+00> : vector<16x4x128xf32>
    %16 = tpu.matmul %2, %15, %cst_11 {dimension_numbers = #tpu.dot_dimension_numbers<[2], [2], [1], [1], [0, 0, 0, 1, 1, 1], [0], [0]>} : vector<16x4x128xf32>, vector<16x128x128xf32>, vector<16x4x128xf32> -> vector<16x4x128xf32>
    %c0_12 = arith.constant 0 : index
    %c0_13 = arith.constant 0 : index
    %c0_14 = arith.constant 0 : index
    %17 = vector.load %arg4[%c0_12, %c0_13, %c0_14] : memref<16x4x128xf32, #tpu.memory_space<vmem>>, vector<16x4x128xf32>
    tpu.vector_store %arg4[%c0_12, %c0_13, %c0_14], %16 {strides = array<i32>} : memref<16x4x128xf32, #tpu.memory_space<vmem>>, vector<16x4x128xf32>,
    return
  }
  func.func @transform_0(%arg0: i32) -> (i32, i32, i32) {
    %c0_i32 = arith.constant 0 : i32
    %c0_i32_0 = arith.constant 0 : i32
    %c0_i32_1 = arith.constant 0 : i32
    return %arg0, %c0_i32, %c0_i32_0 : i32, i32, i32
  }
  func.func @transform_1(%arg0: i32) -> (i32, i32, i32) {
    %c0_i32 = arith.constant 0 : i32
    %c0_i32_0 = arith.constant 0 : i32
    %c0_i32_1 = arith.constant 0 : i32
    return %arg0, %c0_i32, %c0_i32_0 : i32, i32, i32
  }
  func.func @transform_2(%arg0: i32) -> (i32, i32, i32) {
    %c0_i32 = arith.constant 0 : i32
    %c0_i32_0 = arith.constant 0 : i32
    %c0_i32_1 = arith.constant 0 : i32
    return %arg0, %c0_i32, %c0_i32_0 : i32, i32, i32
  }
  func.func @transform_3(%arg0: i32) -> (i32, i32, i32) {
    %c0_i32 = arith.constant 0 : i32
    %c0_i32_0 = arith.constant 0 : i32
    %c0_i32_1 = arith.constant 0 : i32
    return %arg0, %c0_i32, %c0_i32_0 : i32, i32, i32
  }
}

</mosaic_0001>

<llo_original>
// kernel: tpu_custom_call.1
$region0: #{tpu_custom_call.1}
  #allocation0 [shape = 'u32[]', space=smem, size = 0x4, offset = 0x4, fixed_abs, tag = 'smem constant byte address 0x4 - core index']
  #allocation1 [shape = 'u32[144,128]{1,0:T(1,128)}', space=vmem, size = 0x12000, scoped, tag = 'internal scratch']
  %s0 = inlined_call_operand.hbm [shape: f32[32,4,128], index: 0, kind: input, shape index: {}]
  %s1 = inlined_call_operand.hbm [shape: f32[32,4,128], index: 1, kind: input, shape index: {}]
  %s2 = inlined_call_operand.hbm [shape: f32[32,4,128], index: 2, kind: input, shape index: {}]
  %s3 = inlined_call_operand.hbm [shape: f32[32,4,128], index: 3, kind: output, shape index: {}]
  %s4 = sld [smem:[#allocation0]]
  $region57: #{tpu_custom_call.1} parent=0
    _
  %s6 = ssub.s32 1, %s4
  %s7 = scalar_select 0, %s6, %s4
  $region1: #{tpu_custom_call.1} parent=0
    #allocation2 [shape = 'u8[65536]{0}', space=vmem, size = 0x10000, scoped, tag = 'input window, operand 0']
    #allocation3 [shape = 's32[2]{0}', space=sflag, size = 0x8, scoped, tag = 'scoped memory for tpu_custom_call.1']
    #allocation4 [shape = 's32[2]{0}', space=sflag, size = 0x8, scoped, tag = 'scoped memory for tpu_custom_call.1']
    #allocation5 [shape = 'u8[65536]{0}', space=vmem, size = 0x10000, scoped, tag = 'input window, operand 1']
    #allocation6 [shape = 's32[2]{0}', space=sflag, size = 0x8, scoped, tag = 'scoped memory for tpu_custom_call.1']
    #allocation7 [shape = 'u8[65536]{0}', space=vmem, size = 0x10000, scoped, tag = 'input window, operand 2']
    #allocation8 [shape = 'u8[65536]{0}', space=vmem, size = 0x10000, scoped, tag = 'output window, operand 0']
    %8 = vsyncpa [#allocation3], 0
    %s9 = scalar_lea.sflag [#allocation3], 1
    %10 = vsyncpa %s9, 0
    %11 = vsyncpa [#allocation6], 0
    %s12 = scalar_lea.sflag [#allocation6], 1
    %13 = vsyncpa %s12, 0
    %14 = vsyncpa [#allocation4], 0
    %s15 = scalar_lea.sflag [#allocation4], 1
    %16 = vsyncpa %s15, 0
    loop: start=0, step=1, limit=4
    $region2: #{tpu_custom_call.1} parent=1 // loop_pre_header
      _
    $region3: #{tpu_custom_call.1} parent=1 // loop_header
      %s18 = sphi 0, %s22
      %p19 = scmp.ge.s32.totalorder %s18, 4
      %s28 = sphi 0, %s30
      %s31 = sphi 0, %s28
      %s32 = sphi 0, %s31
      %s48 = sphi 0, %s32
      %s54 = sphi 0, %s56
      %s57 = sphi 0, %s54
      %s58 = sphi 0, %s57
      %s74 = sphi 0, %s58
      %s80 = sphi 0, %s82
      %s83 = sphi 0, %s80
      %s84 = sphi 0, %s83
      %s100 = sphi 0, %s84
      %s106 = sphi 0, %s108
      %s109 = sphi 0, %s106
      %s110 = sphi 0, %s109
      %s126 = sphi 0, %s110
    $region4: #{tpu_custom_call.1} parent=1 // loop_header_branch
      %21 = sbr.rel (%p19) target = $region8
    $region5: #{tpu_custom_call.1} parent=1 // loop_body
      %s23 = ssub.s32 %s18, 1
      %s24 = ssub.s32 %s18, 2
      %s25 = sadd.s32 %s18, 1
      %s26 = ssub.s32 %s18, %s25
      %p27 = scmp.eq.s32.totalorder %s26, 0
      %s29 = sadd.s32 %s28, 1
      %s30 = scalar_select %p27, %s28, %s29
      %p33 = pneg %p27
      %p34 = scmp.eq.s32.totalorder %s18, 1
      %p35 = por %p33, %p34
      %p36 = scmp.ne.s32.totalorder %s28, %s31
      %p37 = scmp.eq.s32.totalorder %s18, 0
      %p38 = por %p36, %p37
      %p39 = scmp.ne.s32.totalorder %s28, %s31
      %p40 = scmp.eq.s32.totalorder %s23, 1
      %p41 = por %p39, %p40
      %p42 = scmp.ne.s32.totalorder %s31, %s32
      %p43 = scmp.eq.s32.totalorder %s23, 0
      %p44 = por %p42, %p43
      %p45 = scmp.ne.s32.totalorder %s31, %s32
      %p46 = scmp.eq.s32.totalorder %s24, 1
      %p47 = por %p45, %p46
      %p49 = scmp.ne.s32.totalorder %s32, %s48
      %p50 = scmp.eq.s32.totalorder %s24, 0
      %p51 = por %p49, %p50
      %s52 = ssub.s32 %s18, %s25
      %p53 = scmp.eq.s32.totalorder %s52, 0
      %s55 = sadd.s32 %s54, 1
      %s56 = scalar_select %p53, %s54, %s55
      %p59 = pneg %p53
      %p60 = scmp.eq.s32.totalorder %s18, 1
      %p61 = por %p59, %p60
      %p62 = scmp.ne.s32.totalorder %s54, %s57
      %p63 = scmp.eq.s32.totalorder %s18, 0
      %p64 = por %p62, %p63
      %p65 = scmp.ne.s32.totalorder %s54, %s57
      %p66 = scmp.eq.s32.totalorder %s23, 1
      %p67 = por %p65, %p66
      %p68 = scmp.ne.s32.totalorder %s57, %s58
      %p69 = scmp.eq.s32.totalorder %s23, 0
      %p70 = por %p68, %p69
      %p71 = scmp.ne.s32.totalorder %s57, %s58
      %p72 = scmp.eq.s32.totalorder %s24, 1
      %p73 = por %p71, %p72
      %p75 = scmp.ne.s32.totalorder %s58, %s74
      %p76 = scmp.eq.s32.totalorder %s24, 0
      %p77 = por %p75, %p76
      %s78 = ssub.s32 %s18, %s25
      %p79 = scmp.eq.s32.totalorder %s78, 0
      %s81 = sadd.s32 %s80, 1
      %s82 = scalar_select %p79, %s80, %s81
      %p85 = pneg %p79
      %p86 = scmp.eq.s32.totalorder %s18, 1
      %p87 = por %p85, %p86
      %p88 = scmp.ne.s32.totalorder %s80, %s83
      %p89 = scmp.eq.s32.totalorder %s18, 0
      %p90 = por %p88, %p89
      %p91 = scmp.ne.s32.totalorder %s80, %s83
      %p92 = scmp.eq.s32.totalorder %s23, 1
      %p93 = por %p91, %p92
      %p94 = scmp.ne.s32.totalorder %s83, %s84
      %p95 = scmp.eq.s32.totalorder %s23, 0
      %p96 = por %p94, %p95
      %p97 = scmp.ne.s32.totalorder %s83, %s84
      %p98 = scmp.eq.s32.totalorder %s24, 1
      %p99 = por %p97, %p98
      %p101 = scmp.ne.s32.totalorder %s84, %s100
      %p102 = scmp.eq.s32.totalorder %s24, 0
      %p103 = por %p101, %p102
      %s104 = ssub.s32 %s18, %s25
      %p105 = scmp.eq.s32.totalorder %s104, 0
      %s107 = sadd.s32 %s106, 1
      %s108 = scalar_select %p105, %s106, %s107
      %p111 = pneg %p105
      %p112 = scmp.eq.s32.totalorder %s18, 1
      %p113 = por %p111, %p112
      %p114 = scmp.ne.s32.totalorder %s106, %s109
      %p115 = scmp.eq.s32.totalorder %s18, 0
      %p116 = por %p114, %p115
      %p117 = scmp.ne.s32.totalorder %s106, %s109
      %p118 = scmp.eq.s32.totalorder %s23, 1
      %p119 = por %p117, %p118
      %p120 = scmp.ne.s32.totalorder %s109, %s110
      %p121 = scmp.eq.s32.totalorder %s23, 0
      %p122 = por %p120, %p121
      %p123 = scmp.ne.s32.totalorder %s109, %s110
      %p124 = scmp.eq.s32.totalorder %s24, 1
      %p125 = por %p123, %p124
      %p127 = scmp.ne.s32.totalorder %s110, %s126
      %p128 = scmp.eq.s32.totalorder %s24, 0
      %p129 = por %p127, %p128
      %p130 = scmp.le.s32.totalorder 1, %s18
      %p131 = scmp.lt.s32.totalorder %s18, 3
      %p132 = pnand %p130, %p131
      %p133 = pneg %p132
      // Predicated region
      $region9: #{tpu_custom_call.1} parent=5 // pred_check
        _
      $region10: #{tpu_custom_call.1} parent=5 // pred_check_branch
        %135 = sbr.rel (%p132) target = $region12
      $region11: #{tpu_custom_call.1} parent=5 // pred_region
        %s136 = ssub.s32 %s18, 1
      $region12: #{tpu_custom_call.1} parent=5 // pred_fallthru
        _
      %p137 = scmp.lt.s32.totalorder %s18, 2
      // Predicated region
      $region13: #{tpu_custom_call.1} parent=5 // pred_check
        %p138 = pneg %p137
      $region14: #{tpu_custom_call.1} parent=5 // pred_check_branch
        %140 = sbr.rel (%p138) target = $region16
      $region15: #{tpu_custom_call.1} parent=5 // pred_region
        // Predicated region
        $region17: #{tpu_custom_call.1} parent=15 // pred_check
          %p141 = pneg %p38
        $region18: #{tpu_custom_call.1} parent=15 // pred_check_branch
          %143 = sbr.rel (%p141) target = $region20
        $region19: #{tpu_custom_call.1} parent=15 // pred_region
          %s144 = sand.u32 %s28, 1
          %s145 = scalar_lea.sflag [#allocation3], %s144
          %s146 = sand.u32 %s28, 1
          %s147 = smul.addr %s146, 64
          %s148 = scalar_lea.vmem [#allocation2], %s147
          %s149 = smul.u32 16, %s18
          %s151 = ssub.s32 1024, 1024
          %152 = vsyncadd %s145, %s151
          %s153 = smul.addr %s149, 64
          %s154 = scalar_lea.hbm %s0, %s153
          %s155 = sshll.u32 %s148, 4
          %s156 = int_to_ptr.vmem [resolvable:$true] %s155
          %161 = dma.hbm_to_vmem [thread:$0]  %s154, 1024, %s156, %s145, 64, 64, 4
        $region20: #{tpu_custom_call.1} parent=15 // pred_fallthru
          _
        // Predicated region
        $region21: #{tpu_custom_call.1} parent=15 // pred_check
          %p162 = pneg %p64
        $region22: #{tpu_custom_call.1} parent=15 // pred_check_branch
          %164 = sbr.rel (%p162) target = $region24
        $region23: #{tpu_custom_call.1} parent=15 // pred_region
          %s165 = sand.u32 %s18, 1
          %s166 = scalar_lea.sflag [#allocation6], %s165
          %s167 = sand.u32 %s54, 1
          %s168 = smul.addr %s167, 64
          %s169 = scalar_lea.vmem [#allocation5], %s168
          %s170 = smul.u32 16, %s18
          %s172 = ssub.s32 1024, 1024
          %173 = vsyncadd %s166, %s172
          %s174 = smul.addr %s170, 64
          %s175 = scalar_lea.hbm %s1, %s174
          %s176 = sshll.u32 %s169, 4
          %s177 = int_to_ptr.vmem [resolvable:$true] %s176
          %182 = dma.hbm_to_vmem [thread:$0]  %s175, 1024, %s177, %s166, 64, 64, 4
        $region24: #{tpu_custom_call.1} parent=15 // pred_fallthru
          _
        // Predicated region
        $region25: #{tpu_custom_call.1} parent=15 // pred_check
          %p183 = pneg %p90
        $region26: #{tpu_custom_call.1} parent=15 // pred_check_branch
          %185 = sbr.rel (%p183) target = $region28
        $region27: #{tpu_custom_call.1} parent=15 // pred_region
          %s186 = sand.u32 %s18, 1
          %s187 = scalar_lea.sflag [#allocation6], %s186
          %s188 = sand.u32 %s80, 1
          %s189 = smul.addr %s188, 64
          %s190 = scalar_lea.vmem [#allocation7], %s189
          %s191 = smul.u32 16, %s18
          %s193 = ssub.s32 1024, 1024
          %194 = vsyncadd %s187, %s193
          %s195 = smul.addr %s191, 64
          %s196 = scalar_lea.hbm %s2, %s195
          %s197 = sshll.u32 %s190, 4
          %s198 = int_to_ptr.vmem [resolvable:$true] %s197
          %203 = dma.hbm_to_vmem [thread:$0]  %s196, 1024, %s198, %s187, 64, 64, 4
        $region28: #{tpu_custom_call.1} parent=15 // pred_fallthru
          _
      $region16: #{tpu_custom_call.1} parent=5 // pred_fallthru
        _
      %p204 = scmp.le.s32.totalorder 1, %s18
      %p205 = scmp.lt.s32.totalorder %s18, 3
      %p206 = pnand %p204, %p205
      %p207 = pneg %p206
      // Predicated region
      $region29: #{tpu_custom_call.1} parent=5 // pred_check
        _
      $region30: #{tpu_custom_call.1} parent=5 // pred_check_branch
        %209 = sbr.rel (%p206) target = $region32
      $region31: #{tpu_custom_call.1} parent=5 // pred_region
        %s210 = ssub.s32 %s18, 1
        %s211 = sand.u32 %s31, 1
        %s212 = scalar_lea.sflag [#allocation3], %s211
        %s213 = sand.u32 %s31, 1
        %s214 = smul.addr %s213, 64
        %s215 = scalar_lea.vmem [#allocation2], %s214
        // Predicated region
        $region33: #{tpu_custom_call.1} parent=31 // pred_check
          %p216 = pneg %p44
        $region34: #{tpu_custom_call.1} parent=31 // pred_check_branch
          %218 = sbr.rel (%p216) target = $region36
        $region35: #{tpu_custom_call.1} parent=31 // pred_region
          %219 = dma.done %s212, 1024
        $region36: #{tpu_custom_call.1} parent=31 // pred_fallthru
          _
        %s220 = sand.u32 %s23, 1
        %s221 = scalar_lea.sflag [#allocation6], %s220
        %s222 = sand.u32 %s57, 1
        %s223 = smul.addr %s222, 64
        %s224 = scalar_lea.vmem [#allocation5], %s223
        // Predicated region
        $region37: #{tpu_custom_call.1} parent=31 // pred_check
          %p225 = pneg %p70
        $region38: #{tpu_custom_call.1} parent=31 // pred_check_branch
          %227 = sbr.rel (%p225) target = $region40
        $region39: #{tpu_custom_call.1} parent=31 // pred_region
          %228 = dma.done %s221, 1024
        $region40: #{tpu_custom_call.1} parent=31 // pred_fallthru
          _
        %s229 = sand.u32 %s23, 1
        %s230 = scalar_lea.sflag [#allocation6], %s229
        %s231 = sand.u32 %s83, 1
        %s232 = smul.addr %s231, 64
        %s233 = scalar_lea.vmem [#allocation7], %s232
        // Predicated region
        $region41: #{tpu_custom_call.1} parent=31 // pred_check
          %p234 = pneg %p96
        $region42: #{tpu_custom_call.1} parent=31 // pred_check_branch
          %236 = sbr.rel (%p234) target = $region44
        $region43: #{tpu_custom_call.1} parent=31 // pred_region
          %237 = dma.done %s230, 1024
        $region44: #{tpu_custom_call.1} parent=31 // pred_fallthru
          _
        %s238 = sand.u32 %s31, 1
        %s239 = scalar_lea.sflag [#allocation3], %s238
        %s240 = sand.u32 %s31, 1
        %s241 = smul.addr %s240, 64
        %s242 = scalar_lea.vmem [#allocation2], %s241
        %p243 = pneg %p44
        %p244 = pneg %p41
        %s245 = sand.u32 %s23, 1
        %s246 = scalar_lea.sflag [#allocation6], %s245
        %s247 = sand.u32 %s57, 1
        %s248 = smul.addr %s247, 64
        %s249 = scalar_lea.vmem [#allocation5], %s248
        %p250 = pneg %p70
        %p251 = pneg %p67
        %s252 = sand.u32 %s23, 1
        %s253 = scalar_lea.sflag [#allocation6], %s252
        %s254 = sand.u32 %s83, 1
        %s255 = smul.addr %s254, 64
        %s256 = scalar_lea.vmem [#allocation7], %s255
        %p257 = pneg %p96
        %p258 = pneg %p93
        %p259 = pneg %p122
        %p260 = pneg %p119
        %s261 = sand.u32 %s109, 1
        %s262 = scalar_lea.sflag [#allocation4], %s261
        %s263 = sand.u32 %s109, 1
        %s264 = smul.addr %s263, 64
        %s265 = scalar_lea.vmem [#allocation8], %s264
        %s266 = smul.u32 16, %s23
        %s267 = smul.u32 16, %s23
        %s268 = smul.u32 16, %s23
        %s269 = smul.u32 16, %s23
        %v270 = vld [vmem:[%s215] sm:$0xf]
        %v271 = vld [vmem:[%s215 + $0x4] sm:$0xf]
        %v272 = vld [vmem:[%s215 + $0x8] sm:$0xf]
        %v273 = vld [vmem:[%s215 + $0xc] sm:$0xf]
        %v274 = vld [vmem:[%s215 + $0x10] sm:$0xf]
        %v275 = vld [vmem:[%s215 + $0x14] sm:$0xf]
        %v276 = vld [vmem:[%s215 + $0x18] sm:$0xf]
        %v277 = vld [vmem:[%s215 + $0x1c] sm:$0xf]
        %v278 = vld [vmem:[%s215 + $0x20] sm:$0xf]
        %v279 = vld [vmem:[%s215 + $0x24] sm:$0xf]
        %v280 = vld [vmem:[%s215 + $0x28] sm:$0xf]
        %v281 = vld [vmem:[%s215 + $0x2c] sm:$0xf]
        %v282 = vld [vmem:[%s215 + $0x30] sm:$0xf]
        %v283 = vld [vmem:[%s215 + $0x34] sm:$0xf]
        %v284 = vld [vmem:[%s215 + $0x38] sm:$0xf]
        %v285 = vld [vmem:[%s215 + $0x3c] sm:$0xf]
        %v286 = vld [vmem:[%s224] sm:$0xf]
        %v287 = vld [vmem:[%s224 + $0x4] sm:$0xf]
        %v288 = vld [vmem:[%s224 + $0x8] sm:$0xf]
        %v289 = vld [vmem:[%s224 + $0xc] sm:$0xf]
        %v290 = vld [vmem:[%s224 + $0x10] sm:$0xf]
        %v291 = vld [vmem:[%s224 + $0x14] sm:$0xf]
        %v292 = vld [vmem:[%s224 + $0x18] sm:$0xf]
        %v293 = vld [vmem:[%s224 + $0x1c] sm:$0xf]
        %v294 = vld [vmem:[%s224 + $0x20] sm:$0xf]
        %v295 = vld [vmem:[%s224 + $0x24] sm:$0xf]
        %v296 = vld [vmem:[%s224 + $0x28] sm:$0xf]
        %v297 = vld [vmem:[%s224 + $0x2c] sm:$0xf]
        %v298 = vld [vmem:[%s224 + $0x30] sm:$0xf]
        %v299 = vld [vmem:[%s224 + $0x34] sm:$0xf]
        %v300 = vld [vmem:[%s224 + $0x38] sm:$0xf]
        %v301 = vld [vmem:[%s224 + $0x3c] sm:$0xf]
        %v302 = vld [vmem:[%s233] sm:$0xf]
        %v303 = vld [vmem:[%s233 + $0x4] sm:$0xf]
        %v304 = vld [vmem:[%s233 + $0x8] sm:$0xf]
        %v305 = vld [vmem:[%s233 + $0xc] sm:$0xf]
        %v306 = vld [vmem:[%s233 + $0x10] sm:$0xf]
        %v307 = vld [vmem:[%s233 + $0x14] sm:$0xf]
        %v308 = vld [vmem:[%s233 + $0x18] sm:$0xf]
        %v309 = vld [vmem:[%s233 + $0x1c] sm:$0xf]
        %v310 = vld [vmem:[%s233 + $0x20] sm:$0xf]
        %v311 = vld [vmem:[%s233 + $0x24] sm:$0xf]
        %v312 = vld [vmem:[%s233 + $0x28] sm:$0xf]
        %v313 = vld [vmem:[%s233 + $0x2c] sm:$0xf]
        %v314 = vld [vmem:[%s233 + $0x30] sm:$0xf]
        %v315 = vld [vmem:[%s233 + $0x34] sm:$0xf]
        %v316 = vld [vmem:[%s233 + $0x38] sm:$0xf]
        %v317 = vld [vmem:[%s233 + $0x3c] sm:$0xf]
        %318 = vxpose.xlu0.b32.start [1/16] %v270, 128
        %319 = vxpose.xlu0.b32.cont [2/16] 0.0, 128
        %320 = vxpose.xlu0.b32.cont [3/16] 0.0, 128
        %321 = vxpose.xlu0.b32.cont [4/16] 0.0, 128
        %322 = vxpose.xlu0.b32.cont [5/16] 0.0, 128
        %323 = vxpose.xlu0.b32.cont [6/16] 0.0, 128
        %324 = vxpose.xlu0.b32.cont [7/16] 0.0, 128
        %325 = vxpose.xlu0.b32.cont [8/16] 0.0, 128
        %326 = vxpose.xlu0.b32.cont [9/16] 0.0, 128
        %327 = vxpose.xlu0.b32.cont [10/16] 0.0, 128
        %328 = vxpose.xlu0.b32.cont [11/16] 0.0, 128
        %329 = vxpose.xlu0.b32.cont [12/16] 0.0, 128
        %330 = vxpose.xlu0.b32.cont [13/16] 0.0, 128
        %331 = vxpose.xlu0.b32.cont [14/16] 0.0, 128
        %332 = vxpose.xlu0.b32.cont [15/16] 0.0, 128
        %333 = vxpose.xlu0.b32.end [16/16] 0.0, 128
        %v334 = vpop.trf.xlu0
        %v335 = vpop.trf.xlu0
        %v336 = vpop.trf.xlu0
        %v337 = vpop.trf.xlu0
        %v338 = vpop.trf.xlu0
        %v339 = vpop.trf.xlu0
        %v340 = vpop.trf.xlu0
        %v341 = vpop.trf.xlu0
        %v342 = vpop.trf.xlu0
        %v343 = vpop.trf.xlu0
        %v344 = vpop.trf.xlu0
        %v345 = vpop.trf.xlu0
        %v346 = vpop.trf.xlu0
        %v347 = vpop.trf.xlu0
        %v348 = vpop.trf.xlu0
        %v349 = vpop.trf.xlu0
        %vm350 = vcmask 31744
        %v352 = vsel %vm350, %v334, 0
        %v355 = vsel %vm350, %v335, 0
        %v358 = vsel %vm350, %v336, 0
        %v361 = vsel %vm350, %v337, 0
        %v364 = vsel %vm350, %v338, 0
        %v367 = vsel %vm350, %v339, 0
        %v370 = vsel %vm350, %v340, 0
        %v373 = vsel %vm350, %v341, 0
        %v376 = vsel %vm350, %v342, 0
        %v379 = vsel %vm350, %v343, 0
        %v382 = vsel %vm350, %v344, 0
        %v385 = vsel %vm350, %v345, 0
        %v388 = vsel %vm350, %v346, 0
        %v391 = vsel %vm350, %v347, 0
        %v394 = vsel %vm350, %v348, 0
        %v397 = vsel %vm350, %v349, 0
        %vm399 = vcmask 1043456
        %v401 = vsel %vm399, %v286, 0
        %403 = vmatprep.subr.mxu0 0.0
        %404 = vmatpush1.msra.mxu0 %v401
        %405 = vmatprep.subr.mxu0 0.0
        %406 = vmatpush1.msra.mxu0 0.0
        %407 = vmatprep.subr.mxu0 0.0
        %408 = vmatpush1.msra.mxu0 0.0
        %409 = vmatprep.subr.mxu0 0.0
        %410 = vmatpush1.msra.mxu0 0.0
        %411 = vmatprep.subr.mxu0 0.0
        %412 = vmatpush1.msra.mxu0 0.0
        %413 = vmatprep.subr.mxu0 0.0
        %414 = vmatpush1.msra.mxu0 0.0
        %415 = vmatprep.subr.mxu0 0.0
        %416 = vmatpush1.msra.mxu0 0.0
        %417 = vmatprep.subr.mxu0 0.0
        %418 = vmatpush1.msra.mxu0 0.0
        %419 = vmatprep.subr.mxu0 0.0
        %420 = vmatpush1.msra.mxu0 0.0
        %421 = vmatprep.subr.mxu0 0.0
        %422 = vmatpush1.msra.mxu0 0.0
        %423 = vmatprep.subr.mxu0 0.0
        %424 = vmatpush1.msra.mxu0 0.0
        %425 = vmatprep.subr.mxu0 0.0
        %426 = vmatpush1.msra.mxu0 0.0
        %427 = vmatprep.subr.mxu0 0.0
        %428 = vmatpush1.msra.mxu0 0.0
        %429 = vmatprep.subr.mxu0 0.0
        %430 = vmatpush1.msra.mxu0 0.0
        %431 = vmatprep.subr.mxu0 0.0
        %432 = vmatpush1.msra.mxu0 0.0
        %433 = vmatprep.subr.mxu0 0.0
        %434 = vmatpush1.msra.mxu0 0.0
        %435 = vmatprep.subr.mxu0 0.0
        %436 = vmatpush1.msra.mxu0 0.0
        %437 = vmatprep.subr.mxu0 0.0
        %438 = vmatpush1.msra.mxu0 0.0
        %439 = vmatprep.subr.mxu0 0.0
        %440 = vmatpush1.msra.mxu0 0.0
        %441 = vmatprep.subr.mxu0 0.0
        %442 = vmatpush1.msra.mxu0 0.0
        %443 = vmatprep.subr.mxu0 0.0
        %444 = vmatpush1.msra.mxu0 0.0
        %445 = vmatprep.subr.mxu0 0.0
        %446 = vmatpush1.msra.mxu0 0.0
        %447 = vmatprep.subr.mxu0 0.0
        %448 = vmatpush1.msra.mxu0 0.0
        %449 = vmatprep.subr.mxu0 0.0
        %450 = vmatpush1.msra.mxu0 0.0
        %451 = vmatprep.subr.mxu0 0.0
        %452 = vmatpush1.msra.mxu0 0.0
        %453 = vmatprep.subr.mxu0 0.0
        %454 = vmatpush1.msra.mxu0 0.0
        %455 = vmatprep.subr.mxu0 0.0
        %456 = vmatpush1.msra.mxu0 0.0
        %457 = vmatprep.subr.mxu0 0.0
        %458 = vmatpush1.msra.mxu0 0.0
        %459 = vmatprep.subr.mxu0 0.0
        %460 = vmatpush1.msra.mxu0 0.0
        %461 = vmatprep.subr.mxu0 0.0
        %462 = vmatpush1.msra.mxu0 0.0
        %463 = vmatprep.subr.mxu0 0.0
        %464 = vmatpush1.msra.mxu0 0.0
        %465 = vmatprep.subr.mxu0 0.0
        %466 = vmatpush1.msra.mxu0 0.0
        %467 = vmatprep.mubr.f32.mxu0 0.0
        %468 = vmatmul.mubr.f32.gmra.mrb[0].mxu0 %v352
        %v469 = vpop.f32.mrb[0].mxu0
        %v470 = vadd.f32 0.0, %v469
        %v471 = vpop.f32.mrb[0].mxu0
        %472 = vmatprep.mubr.f32.mxu0 0.0
        %473 = vmatmul.mubr.f32.gmra.mrb[0].mxu0 %v355
        %v474 = vpop.f32.mrb[0].mxu0
        %v475 = vadd.f32 0.0, %v474
        %v476 = vpop.f32.mrb[0].mxu0
        %477 = vmatprep.mubr.f32.mxu0 0.0
        %478 = vmatmul.mubr.f32.gmra.mrb[0].mxu0 %v358
        %v479 = vpop.f32.mrb[0].mxu0
        %v480 = vadd.f32 0.0, %v479
        %v481 = vpop.f32.mrb[0].mxu0
        %482 = vmatprep.mubr.f32.mxu0 0.0
        %483 = vmatmul.mubr.f32.gmra.mrb[0].mxu0 %v361
        %v484 = vpop.f32.mrb[0].mxu0
        %v485 = vadd.f32 0.0, %v484
        %v486 = vpop.f32.mrb[0].mxu0
        %487 = vmatprep.mubr.f32.mxu0 0.0
        %488 = vmatmul.mubr.f32.gmra.mrb[0].mxu0 %v364
        %v489 = vpop.f32.mrb[0].mxu0
        %v490 = vadd.f32 0.0, %v489
        %v491 = vpop.f32.mrb[0].mxu0
        %492 = vmatprep.mubr.f32.mxu0 0.0
        %493 = vmatmul.mubr.f32.gmra.mrb[0].mxu0 %v367
        %v494 = vpop.f32.mrb[0].mxu0
        %v495 = vadd.f32 0.0, %v494
        %v496 = vpop.f32.mrb[0].mxu0
        %497 = vmatprep.mubr.f32.mxu0 0.0
        %498 = vmatmul.mubr.f32.gmra.mrb[0].mxu0 %v370
        %v499 = vpop.f32.mrb[0].mxu0
        %v500 = vadd.f32 0.0, %v499
        %v501 = vpop.f32.mrb[0].mxu0
        %502 = vmatprep.mubr.f32.mxu0 0.0
        %503 = vmatmul.mubr.f32.gmra.mrb[0].mxu0 %v373
        %v504 = vpop.f32.mrb[0].mxu0
        %v505 = vadd.f32 0.0, %v504
        %v506 = vpop.f32.mrb[0].mxu0
        %507 = vmatprep.mubr.f32.mxu0 0.0
        %508 = vmatmul.mubr.f32.gmra.mrb[0].mxu0 %v376
        %v509 = vpop.f32.mrb[0].mxu0
        %v510 = vadd.f32 0.0, %v509
        %v511 = vpop.f32.mrb[0].mxu0
        %512 = vmatprep.mubr.f32.mxu0 0.0
        %513 = vmatmul.mubr.f32.gmra.mrb[0].mxu0 %v379
        %v514 = vpop.f32.mrb[0].mxu0
        %v515 = vadd.f32 0.0, %v514
        %v516 = vpop.f32.mrb[0].mxu0
        %517 = vmatprep.mubr.f32.mxu0 0.0
        %518 = vmatmul.mubr.f32.gmra.mrb[0].mxu0 %v382
        %v519 = vpop.f32.mrb[0].mxu0
        %v520 = vadd.f32 0.0, %v519
        %v521 = vpop.f32.mrb[0].mxu0
        %522 = vmatprep.mubr.f32.mxu0 0.0
        %523 = vmatmul.mubr.f32.gmra.mrb[0].mxu0 %v385
        %v524 = vpop.f32.mrb[0].mxu0
        %v525 = vadd.f32 0.0, %v524
        %v526 = vpop.f32.mrb[0].mxu0
        %527 = vmatprep.mubr.f32.mxu0 0.0
        %528 = vmatmul.mubr.f32.gmra.mrb[0].mxu0 %v388
        %v529 = vpop.f32.mrb[0].mxu0
        %v530 = vadd.f32 0.0, %v529
        %v531 = vpop.f32.mrb[0].mxu0
        %532 = vmatprep.mubr.f32.mxu0 0.0
        %533 = vmatmul.mubr.f32.gmra.mrb[0].mxu0 %v391
        %v534 = vpop.f32.mrb[0].mxu0
        %v535 = vadd.f32 0.0, %v534
        %v536 = vpop.f32.mrb[0].mxu0
        %537 = vmatprep.mubr.f32.mxu0 0.0
        %538 = vmatmul.mubr.f32.gmra.mrb[0].mxu0 %v394
        %v539 = vpop.f32.mrb[0].mxu0
        %v540 = vadd.f32 0.0, %v539
        %v541 = vpop.f32.mrb[0].mxu0
        %542 = vmatprep.mubr.f32.mxu0 0.0
        %543 = vmatmul.mubr.f32.gmra.mrb[0].mxu0 %v397
        %v544 = vpop.f32.mrb[0].mxu0
        %v545 = vadd.f32 0.0, %v544
        %v546 = vpop.f32.mrb[0].mxu0
        %547 = vdwg.mxu0
        %548 = vxpose.xlu0.b32.start [1/16] %v271, 128
        %549 = vxpose.xlu0.b32.cont [2/16] 0.0, 128
        %550 = vxpose.xlu0.b32.cont [3/16] 0.0, 128
        %551 = vxpose.xlu0.b32.cont [4/16] 0.0, 128
        %552 = vxpose.xlu0.b32.cont [5/16] 0.0, 128
        %553 = vxpose.xlu0.b32.cont [6/16] 0.0, 128
        %554 = vxpose.xlu0.b32.cont [7/16] 0.0, 128
        %555 = vxpose.xlu0.b32.cont [8/16] 0.0, 128
        %556 = vxpose.xlu0.b32.cont [9/16] 0.0, 128
        %557 = vxpose.xlu0.b32.cont [10/16] 0.0, 128
        %558 = vxpose.xlu0.b32.cont [11/16] 0.0, 128
        %559 = vxpose.xlu0.b32.cont [12/16] 0.0, 128
        %560 = vxpose.xlu0.b32.cont [13/16] 0.0, 128
        %561 = vxpose.xlu0.b32.cont [14/16] 0.0, 128
        %562 = vxpose.xlu0.b32.cont [15/16] 0.0, 128
        %563 = vxpose.xlu0.b32.end [16/16] 0.0, 128
        %v564 = vpop.trf.xlu0
        %v565 = vpop.trf.xlu0
        %v566 = vpop.trf.xlu0
        %v567 = vpop.trf.xlu0
        %v568 = vpop.trf.xlu0
        %v569 = vpop.trf.xlu0
        %v570 = vpop.trf.xlu0
        %v571 = vpop.trf.xlu0
        %v572 = vpop.trf.xlu0
        %v573 = vpop.trf.xlu0
        %v574 = vpop.trf.xlu0
        %v575 = vpop.trf.xlu0
        %v576 = vpop.trf.xlu0
        %v577 = vpop.trf.xlu0
        %v578 = vpop.trf.xlu0
        %v579 = vpop.trf.xlu0
        %v581 = vsel %vm350, %v564, 0
        %v584 = vsel %vm350, %v565, 0
        %v587 = vsel %vm350, %v566, 0
        %v590 = vsel %vm350, %v567, 0
        %v593 = vsel %vm350, %v568, 0
        %v596 = vsel %vm350, %v569, 0
        %v599 = vsel %vm350, %v570, 0
        %v602 = vsel %vm350, %v571, 0
        %v605 = vsel %vm350, %v572, 0
        %v608 = vsel %vm350, %v573, 0
        %v611 = vsel %vm350, %v574, 0
        %v614 = vsel %vm350, %v575, 0
        %v617 = vsel %vm350, %v576, 0
        %v620 = vsel %vm350, %v577, 0
        %v623 = vsel %vm350, %v578, 0
        %v626 = vsel %vm350, %v579, 0
        %v629 = vsel %vm399, %v287, 0
        %631 = vmatprep.subr.mxu0 0.0
        %632 = vmatpush1.msra.mxu0 %v629
        %633 = vmatprep.subr.mxu0 0.0
        %634 = vmatpush1.msra.mxu0 0.0
        %635 = vmatprep.subr.mxu0 0.0
        %636 = vmatpush1.msra.mxu0 0.0
        %637 = vmatprep.subr.mxu0 0.0
        %638 = vmatpush1.msra.mxu0 0.0
        %639 = vmatprep.subr.mxu0 0.0
        %640 = vmatpush1.msra.mxu0 0.0
        %641 = vmatprep.subr.mxu0 0.0
        %642 = vmatpush1.msra.mxu0 0.0
        %643 = vmatprep.subr.mxu0 0.0
        %644 = vmatpush1.msra.mxu0 0.0
        %645 = vmatprep.subr.mxu0 0.0
        %646 = vmatpush1.msra.mxu0 0.0
        %647 = vmatprep.subr.mxu0 0.0
        %648 = vmatpush1.msra.mxu0 0.0
        %649 = vmatprep.subr.mxu0 0.0
        %650 = vmatpush1.msra.mxu0 0.0
        %651 = vmatprep.subr.mxu0 0.0
        %652 = vmatpush1.msra.mxu0 0.0
        %653 = vmatprep.subr.mxu0 0.0
        %654 = vmatpush1.msra.mxu0 0.0
        %655 = vmatprep.subr.mxu0 0.0
        %656 = vmatpush1.msra.mxu0 0.0
        %657 = vmatprep.subr.mxu0 0.0
        %658 = vmatpush1.msra.mxu0 0.0
        %659 = vmatprep.subr.mxu0 0.0
        %660 = vmatpush1.msra.mxu0 0.0
        %661 = vmatprep.subr.mxu0 0.0
        %662 = vmatpush1.msra.mxu0 0.0
        %663 = vmatprep.subr.mxu0 0.0
        %664 = vmatpush1.msra.mxu0 0.0
        %665 = vmatprep.subr.mxu0 0.0
        %666 = vmatpush1.msra.mxu0 0.0
        %667 = vmatprep.subr.mxu0 0.0
        %668 = vmatpush1.msra.mxu0 0.0
        %669 = vmatprep.subr.mxu0 0.0
        %670 = vmatpush1.msra.mxu0 0.0
        %671 = vmatprep.subr.mxu0 0.0
        %672 = vmatpush1.msra.mxu0 0.0
        %673 = vmatprep.subr.mxu0 0.0
        %674 = vmatpush1.msra.mxu0 0.0
        %675 = vmatprep.subr.mxu0 0.0
        %676 = vmatpush1.msra.mxu0 0.0
        %677 = vmatprep.subr.mxu0 0.0
        %678 = vmatpush1.msra.mxu0 0.0
        %679 = vmatprep.subr.mxu0 0.0
        %680 = vmatpush1.msra.mxu0 0.0
        %681 = vmatprep.subr.mxu0 0.0
        %682 = vmatpush1.msra.mxu0 0.0
        %683 = vmatprep.subr.mxu0 0.0
        %684 = vmatpush1.msra.mxu0 0.0
        %685 = vmatprep.subr.mxu0 0.0
        %686 = vmatpush1.msra.mxu0 0.0
        %687 = vmatprep.subr.mxu0 0.0
        %688 = vmatpush1.msra.mxu0 0.0
        %689 = vmatprep.subr.mxu0 0.0
        %690 = vmatpush1.msra.mxu0 0.0
        %691 = vmatprep.subr.mxu0 0.0
        %692 = vmatpush1.msra.mxu0 0.0
        %693 = vmatprep.subr.mxu0 0.0
        %694 = vmatpush1.msra.mxu0 0.0
        %695 = vmatprep.mubr.f32.mxu0 0.0
        %696 = vmatmul.mubr.f32.gmra.mrb[0].mxu0 %v581
        %v697 = vpop.f32.mrb[0].mxu0
        %v698 = vadd.f32 0.0, %v697
        %v699 = vpop.f32.mrb[0].mxu0
        %700 = vmatprep.mubr.f32.mxu0 0.0
        %701 = vmatmul.mubr.f32.gmra.mrb[0].mxu0 %v584
        %v702 = vpop.f32.mrb[0].mxu0
        %v703 = vadd.f32 0.0, %v702
        %v704 = vpop.f32.mrb[0].mxu0
        %705 = vmatprep.mubr.f32.mxu0 0.0
        %706 = vmatmul.mubr.f32.gmra.mrb[0].mxu0 %v587
        %v707 = vpop.f32.mrb[0].mxu0
        %v708 = vadd.f32 0.0, %v707
        %v709 = vpop.f32.mrb[0].mxu0
        %710 = vmatprep.mubr.f32.mxu0 0.0
        %711 = vmatmul.mubr.f32.gmra.mrb[0].mxu0 %v590
        %v712 = vpop.f32.mrb[0].mxu0
        %v713 = vadd.f32 0.0, %v712
        %v714 = vpop.f32.mrb[0].mxu0
        %715 = vmatprep.mubr.f32.mxu0 0.0
        %716 = vmatmul.mubr.f32.gmra.mrb[0].mxu0 %v593
        %v717 = vpop.f32.mrb[0].mxu0
        %v718 = vadd.f32 0.0, %v717
        %v719 = vpop.f32.mrb[0].mxu0
        %720 = vmatprep.mubr.f32.mxu0 0.0
        %721 = vmatmul.mubr.f32.gmra.mrb[0].mxu0 %v596
        %v722 = vpop.f32.mrb[0].mxu0
        %v723 = vadd.f32 0.0, %v722
        %v724 = vpop.f32.mrb[0].mxu0
        %725 = vmatprep.mubr.f32.mxu0 0.0
        %726 = vmatmul.mubr.f32.gmra.mrb[0].mxu0 %v599
        %v727 = vpop.f32.mrb[0].mxu0
        %v728 = vadd.f32 0.0, %v727
        %v729 = vpop.f32.mrb[0].mxu0
        %730 = vmatprep.mubr.f32.mxu0 0.0
        %731 = vmatmul.mubr.f32.gmra.mrb[0].mxu0 %v602
        %v732 = vpop.f32.mrb[0].mxu0
        %v733 = vadd.f32 0.0, %v732
        %v734 = vpop.f32.mrb[0].mxu0
        %735 = vmatprep.mubr.f32.mxu0 0.0
        %736 = vmatmul.mubr.f32.gmra.mrb[0].mxu0 %v605
        %v737 = vpop.f32.mrb[0].mxu0
        %v738 = vadd.f32 0.0, %v737
        %v739 = vpop.f32.mrb[0].mxu0
        %740 = vmatprep.mubr.f32.mxu0 0.0
        %741 = vmatmul.mubr.f32.gmra.mrb[0].mxu0 %v608
        %v742 = vpop.f32.mrb[0].mxu0
        %v743 = vadd.f32 0.0, %v742
        %v744 = vpop.f32.mrb[0].mxu0
        %745 = vmatprep.mubr.f32.mxu0 0.0
        %746 = vmatmul.mubr.f32.gmra.mrb[0].mxu0 %v611
        %v747 = vpop.f32.mrb[0].mxu0
        %v748 = vadd.f32 0.0, %v747
        %v749 = vpop.f32.mrb[0].mxu0
        %750 = vmatprep.mubr.f32.mxu0 0.0
        %751 = vmatmul.mubr.f32.gmra.mrb[0].mxu0 %v614
        %v752 = vpop.f32.mrb[0].mxu0
        %v753 = vadd.f32 0.0, %v752
        %v754 = vpop.f32.mrb[0].mxu0
        %755 = vmatprep.mubr.f32.mxu0 0.0
        %756 = vmatmul.mubr.f32.gmra.mrb[0].mxu0 %v617
        %v757 = vpop.f32.mrb[0].mxu0
        %v758 = vadd.f32 0.0, %v757
        %v759 = vpop.f32.mrb[0].mxu0
        %760 = vmatprep.mubr.f32.mxu0 0.0
        %761 = vmatmul.mubr.f32.gmra.mrb[0].mxu0 %v620
        %v762 = vpop.f32.mrb[0].mxu0
        %v763 = vadd.f32 0.0, %v762
        %v764 = vpop.f32.mrb[0].mxu0
        %765 = vmatprep.mubr.f32.mxu0 0.0
        %766 = vmatmul.mubr.f32.gmra.mrb[0].mxu0 %v623
        %v767 = vpop.f32.mrb[0].mxu0
        %v768 = vadd.f32 0.0, %v767
        %v769 = vpop.f32.mrb[0].mxu0
        %770 = vmatprep.mubr.f32.mxu0 0.0
        %771 = vmatmul.mubr.f32.gmra.mrb[0].mxu0 %v626
        %v772 = vpop.f32.mrb[0].mxu0
        %v773 = vadd.f32 0.0, %v772
        %v774 = vpop.f32.mrb[0].mxu0
        %775 = vdwg.mxu0
        %776 = vxpose.xlu0.b32.start [1/16] %v272, 128
        %777 = vxpose.xlu0.b32.cont [2/16] 0.0, 128
        %778 = vxpose.xlu0.b32.cont [3/16] 0.0, 128
        %779 = vxpose.xlu0.b32.cont [4/16] 0.0, 128
        %780 = vxpose.xlu0.b32.cont [5/16] 0.0, 128
        %781 = vxpose.xlu0.b32.cont [6/16] 0.0, 128
        %782 = vxpose.xlu0.b32.cont [7/16] 0.0, 128
        %783 = vxpose.xlu0.b32.cont [8/16] 0.0, 128
        %784 = vxpose.xlu0.b32.cont [9/16] 0.0, 128
        %785 = vxpose.xlu0.b32.cont [10/16] 0.0, 128
        %786 = vxpose.xlu0.b32.cont [11/16] 0.0, 128
        %787 = vxpose.xlu0.b32.cont [12/16] 0.0, 128
        %788 = vxpose.xlu0.b32.cont [13/16] 0.0, 128
        %789 = vxpose.xlu0.b32.cont [14/16] 0.0, 128
        %790 = vxpose.xlu0.b32.cont [15/16] 0.0, 128
        %791 = vxpose.xlu0.b32.end [16/16] 0.0, 128
        %v792 = vpop.trf.xlu0
        %v793 = vpop.trf.xlu0
        %v794 = vpop.trf.xlu0
        %v795 = vpop.trf.xlu0
        %v796 = vpop.trf.xlu0
        %v797 = vpop.trf.xlu0
        %v798 = vpop.trf.xlu0
        %v799 = vpop.trf.xlu0
        %v800 = vpop.trf.xlu0
        %v801 = vpop.trf.xlu0
        %v802 = vpop.trf.xlu0
        %v803 = vpop.trf.xlu0
        %v804 = vpop.trf.xlu0
        %v805 = vpop.trf.xlu0
        %v806 = vpop.trf.xlu0
        %v807 = vpop.trf.xlu0
        %v809 = vsel %vm350, %v792, 0
        %v812 = vsel %vm350, %v793, 0
        %v815 = vsel %vm350, %v794, 0
        %v818 = vsel %vm350, %v795, 0
        %v821 = vsel %vm350, %v796, 0
        %v824 = vsel %vm350, %v797, 0
        %v827 = vsel %vm350, %v798, 0
        %v830 = vsel %vm350, %v799, 0
        %v833 = vsel %vm350, %v800, 0
        %v836 = vsel %vm350, %v801, 0
        %v839 = vsel %vm350, %v802, 0
        %v842 = vsel %vm350, %v803, 0
        %v845 = vsel %vm350, %v804, 0
        %v848 = vsel %vm350, %v805, 0
        %v851 = vsel %vm350, %v806, 0
        %v854 = vsel %vm350, %v807, 0
        %v857 = vsel %vm399, %v288, 0
        %859 = vmatprep.subr.mxu0 0.0
        %860 = vmatpush1.msra.mxu0 %v857
        %861 = vmatprep.subr.mxu0 0.0
        %862 = vmatpush1.msra.mxu0 0.0
        %863 = vmatprep.subr.mxu0 0.0
        %864 = vmatpush1.msra.mxu0 0.0
        %865 = vmatprep.subr.mxu0 0.0
        %866 = vmatpush1.msra.mxu0 0.0
        %867 = vmatprep.subr.mxu0 0.0
        %868 = vmatpush1.msra.mxu0 0.0
        %869 = vmatprep.subr.mxu0 0.0
        %870 = vmatpush1.msra.mxu0 0.0
        %871 = vmatprep.subr.mxu0 0.0
        %872 = vmatpush1.msra.mxu0 0.0
        %873 = vmatprep.subr.mxu0 0.0
        %874 = vmatpush1.msra.mxu0 0.0
        %875 = vmatprep.subr.mxu0 0.0
        %876 = vmatpush1.msra.mxu0 0.0
        %877 = vmatprep.subr.mxu0 0.0
        %878 = vmatpush1.msra.mxu0 0.0
        %879 = vmatprep.subr.mxu0 0.0
        %880 = vmatpush1.msra.mxu0 0.0
        %881 = vmatprep.subr.mxu0 0.0
        %882 = vmatpush1.msra.mxu0 0.0
        %883 = vmatprep.subr.mxu0 0.0
        %884 = vmatpush1.msra.mxu0 0.0
        %885 = vmatprep.subr.mxu0 0.0
        %886 = vmatpush1.msra.mxu0 0.0
        %887 = vmatprep.subr.mxu0 0.0
        %888 = vmatpush1.msra.mxu0 0.0
        %889 = vmatprep.subr.mxu0 0.0
        %890 = vmatpush1.msra.mxu0 0.0
        %891 = vmatprep.subr.mxu0 0.0
        %892 = vmatpush1.msra.mxu0 0.0
        %893 = vmatprep.subr.mxu0 0.0
        %894 = vmatpush1.msra.mxu0 0.0
        %895 = vmatprep.subr.mxu0 0.0
        %896 = vmatpush1.msra.mxu0 0.0
        %897 = vmatprep.subr.mxu0 0.0
        %898 = vmatpush1.msra.mxu0 0.0
        %899 = vmatprep.subr.mxu0 0.0
        %900 = vmatpush1.msra.mxu0 0.0
        %901 = vmatprep.subr.mxu0 0.0
        %902 = vmatpush1.msra.mxu0 0.0
        %903 = vmatprep.subr.mxu0 0.0
        %904 = vmatpush1.msra.mxu0 0.0
        %905 = vmatprep.subr.mxu0 0.0
        %906 = vmatpush1.msra.mxu0 0.0
        %907 = vmatprep.subr.mxu0 0.0
        %908 = vmatpush1.msra.mxu0 0.0
        %909 = vmatprep.subr.mxu0 0.0
        %910 = vmatpush1.msra.mxu0 0.0
        %911 = vmatprep.subr.mxu0 0.0
        %912 = vmatpush1.msra.mxu0 0.0
        %913 = vmatprep.subr.mxu0 0.0
        %914 = vmatpush1.msra.mxu0 0.0
        %915 = vmatprep.subr.mxu0 0.0
        %916 = vmatpush1.msra.mxu0 0.0
        %917 = vmatprep.subr.mxu0 0.0
        %918 = vmatpush1.msra.mxu0 0.0
        %919 = vmatprep.subr.mxu0 0.0
        %920 = vmatpush1.msra.mxu0 0.0
        %921 = vmatprep.subr.mxu0 0.0
        %922 = vmatpush1.msra.mxu0 0.0
        %923 = vmatprep.mubr.f32.mxu0 0.0
        %924 = vmatmul.mubr.f32.gmra.mrb[0].mxu0 %v809
        %v925 = vpop.f32.mrb[0].mxu0
        %v926 = vadd.f32 0.0, %v925
        %v927 = vpop.f32.mrb[0].mxu0
        %928 = vmatprep.mubr.f32.mxu0 0.0
        %929 = vmatmul.mubr.f32.gmra.mrb[0].mxu0 %v812
        %v930 = vpop.f32.mrb[0].mxu0
        %v931 = vadd.f32 0.0, %v930
        %v932 = vpop.f32.mrb[0].mxu0
        %933 = vmatprep.mubr.f32.mxu0 0.0
        %934 = vmatmul.mubr.f32.gmra.mrb[0].mxu0 %v815
        %v935 = vpop.f32.mrb[0].mxu0
        %v936 = vadd.f32 0.0, %v935
        %v937 = vpop.f32.mrb[0].mxu0
        %938 = vmatprep.mubr.f32.mxu0 0.0
        %939 = vmatmul.mubr.f32.gmra.mrb[0].mxu0 %v818
        %v940 = vpop.f32.mrb[0].mxu0
        %v941 = vadd.f32 0.0, %v940
        %v942 = vpop.f32.mrb[0].mxu0
        %943 = vmatprep.mubr.f32.mxu0 0.0
        %944 = vmatmul.mubr.f32.gmra.mrb[0].mxu0 %v821
        %v945 = vpop.f32.mrb[0].mxu0
        %v946 = vadd.f32 0.0, %v945
        %v947 = vpop.f32.mrb[0].mxu0
        %948 = vmatprep.mubr.f32.mxu0 0.0
        %949 = vmatmul.mubr.f32.gmra.mrb[0].mxu0 %v824
        %v950 = vpop.f32.mrb[0].mxu0
        %v951 = vadd.f32 0.0, %v950
        %v952 = vpop.f32.mrb[0].mxu0
        %953 = vmatprep.mubr.f32.mxu0 0.0
        %954 = vmatmul.mubr.f32.gmra.mrb[0].mxu0 %v827
        %v955 = vpop.f32.mrb[0].mxu0
        %v956 = vadd.f32 0.0, %v955
        %v957 = vpop.f32.mrb[0].mxu0
        %958 = vmatprep.mubr.f32.mxu0 0.0
        %959 = vmatmul.mubr.f32.gmra.mrb[0].mxu0 %v830
        %v960 = vpop.f32.mrb[0].mxu0
        %v961 = vadd.f32 0.0, %v960
        %v962 = vpop.f32.mrb[0].mxu0
        %963 = vmatprep.mubr.f32.mxu0 0.0
        %964 = vmatmul.mubr.f32.gmra.mrb[0].mxu0 %v833
        %v965 = vpop.f32.mrb[0].mxu0
        %v966 = vadd.f32 0.0, %v965
        %v967 = vpop.f32.mrb[0].mxu0
        %968 = vmatprep.mubr.f32.mxu0 0.0
        %969 = vmatmul.mubr.f32.gmra.mrb[0].mxu0 %v836
        %v970 = vpop.f32.mrb[0].mxu0
        %v971 = vadd.f32 0.0, %v970
        %v972 = vpop.f32.mrb[0].mxu0
        %973 = vmatprep.mubr.f32.mxu0 0.0
        %974 = vmatmul.mubr.f32.gmra.mrb[0].mxu0 %v839
        %v975 = vpop.f32.mrb[0].mxu0
        %v976 = vadd.f32 0.0, %v975
        %v977 = vpop.f32.mrb[0].mxu0
        %978 = vmatprep.mubr.f32.mxu0 0.0
        %979 = vmatmul.mubr.f32.gmra.mrb[0].mxu0 %v842
        %v980 = vpop.f32.mrb[0].mxu0
        %v981 = vadd.f32 0.0, %v980
        %v982 = vpop.f32.mrb[0].mxu0
        %983 = vmatprep.mubr.f32.mxu0 0.0
        %984 = vmatmul.mubr.f32.gmra.mrb[0].mxu0 %v845
        %v985 = vpop.f32.mrb[0].mxu0
        %v986 = vadd.f32 0.0, %v985
        %v987 = vpop.f32.mrb[0].mxu0
        %988 = vmatprep.mubr.f32.mxu0 0.0
        %989 = vmatmul.mubr.f32.gmra.mrb[0].mxu0 %v848
        %v990 = vpop.f32.mrb[0].mxu0
        %v991 = vadd.f32 0.0, %v990
        %v992 = vpop.f32.mrb[0].mxu0
        %993 = vmatprep.mubr.f32.mxu0 0.0
        %994 = vmatmul.mubr.f32.gmra.mrb[0].mxu0 %v851
        %v995 = vpop.f32.mrb[0].mxu0
        %v996 = vadd.f32 0.0, %v995
        %v997 = vpop.f32.mrb[0].mxu0
        %998 = vmatprep.mubr.f32.mxu0 0.0
        %999 = vmatmul.mubr.f32.gmra.mrb[0].mxu0 %v854
        %v1000 = vpop.f32.mrb[0].mxu0
        %v1001 = vadd.f32 0.0, %v1000
        %v1002 = vpop.f32.mrb[0].mxu0
        %1003 = vdwg.mxu0
        %1004 = vxpose.xlu0.b32.start [1/16] %v273, 128
        %1005 = vxpose.xlu0.b32.cont [2/16] 0.0, 128
        %1006 = vxpose.xlu0.b32.cont [3/16] 0.0, 128
        %1007 = vxpose.xlu0.b32.cont [4/16] 0.0, 128
        %1008 = vxpose.xlu0.b32.cont [5/16] 0.0, 128
        %1009 = vxpose.xlu0.b32.cont [6/16] 0.0, 128
        %1010 = vxpose.xlu0.b32.cont [7/16] 0.0, 128
        %1011 = vxpose.xlu0.b32.cont [8/16] 0.0, 128
        %1012 = vxpose.xlu0.b32.cont [9/16] 0.0, 128
        %1013 = vxpose.xlu0.b32.cont [10/16] 0.0, 128
        %1014 = vxpose.xlu0.b32.cont [11/16] 0.0, 128
        %1015 = vxpose.xlu0.b32.cont [12/16] 0.0, 128
        %1016 = vxpose.xlu0.b32.cont [13/16] 0.0, 128
        %1017 = vxpose.xlu0.b32.cont [14/16] 0.0, 128
        %1018 = vxpose.xlu0.b32.cont [15/16] 0.0, 128
        %1019 = vxpose.xlu0.b32.end [16/16] 0.0, 128
        %v1020 = vpop.trf.xlu0
        %v1021 = vpop.trf.xlu0
        %v1022 = vpop.trf.xlu0
        %v1023 = vpop.trf.xlu0
        %v1024 = vpop.trf.xlu0
        %v1025 = vpop.trf.xlu0
        %v1026 = vpop.trf.xlu0
        %v1027 = vpop.trf.xlu0
        %v1028 = vpop.trf.xlu0
        %v1029 = vpop.trf.xlu0
        %v1030 = vpop.trf.xlu0
        %v1031 = vpop.trf.xlu0
        %v1032 = vpop.trf.xlu0
        %v1033 = vpop.trf.xlu0
        %v1034 = vpop.trf.xlu0
        %v1035 = vpop.trf.xlu0
        %v1037 = vsel %vm350, %v1020, 0
        %v1040 = vsel %vm350, %v1021, 0
        %v1043 = vsel %vm350, %v1022, 0
        %v1046 = vsel %vm350, %v1023, 0
        %v1049 = vsel %vm350, %v1024, 0
        %v1052 = vsel %vm350, %v1025, 0
        %v1055 = vsel %vm350, %v1026, 0
        %v1058 = vsel %vm350, %v1027, 0
        %v1061 = vsel %vm350, %v1028, 0
        %v1064 = vsel %vm350, %v1029, 0
        %v1067 = vsel %vm350, %v1030, 0
        %v1070 = vsel %vm350, %v1031, 0
        %v1073 = vsel %vm350, %v1032, 0
        %v1076 = vsel %vm350, %v1033, 0
        %v1079 = vsel %vm350, %v1034, 0
        %v1082 = vsel %vm350, %v1035, 0
        %v1085 = vsel %vm399, %v289, 0
        %1087 = vmatprep.subr.mxu0 0.0
        %1088 = vmatpush1.msra.mxu0 %v1085
        %1089 = vmatprep.subr.mxu0 0.0
        %1090 = vmatpush1.msra.mxu0 0.0
        %1091 = vmatprep.subr.mxu0 0.0
        %1092 = vmatpush1.msra.mxu0 0.0
        %1093 = vmatprep.subr.mxu0 0.0
        %1094 = vmatpush1.msra.mxu0 0.0
        %1095 = vmatprep.subr.mxu0 0.0
        %1096 = vmatpush1.msra.mxu0 0.0
        %1097 = vmatprep.subr.mxu0 0.0
        %1098 = vmatpush1.msra.mxu0 0.0
        %1099 = vmatprep.subr.mxu0 0.0
        %1100 = vmatpush1.msra.mxu0 0.0
        %1101 = vmatprep.subr.mxu0 0.0
        %1102 = vmatpush1.msra.mxu0 0.0
        %1103 = vmatprep.subr.mxu0 0.0
        %1104 = vmatpush1.msra.mxu0 0.0
        %1105 = vmatprep.subr.mxu0 0.0
        %1106 = vmatpush1.msra.mxu0 0.0
        %1107 = vmatprep.subr.mxu0 0.0
        %1108 = vmatpush1.msra.mxu0 0.0
        %1109 = vmatprep.subr.mxu0 0.0
        %1110 = vmatpush1.msra.mxu0 0.0
        %1111 = vmatprep.subr.mxu0 0.0
        %1112 = vmatpush1.msra.mxu0 0.0
        %1113 = vmatprep.subr.mxu0 0.0
        %1114 = vmatpush1.msra.mxu0 0.0
        %1115 = vmatprep.subr.mxu0 0.0
        %1116 = vmatpush1.msra.mxu0 0.0
        %1117 = vmatprep.subr.mxu0 0.0
        %1118 = vmatpush1.msra.mxu0 0.0
        %1119 = vmatprep.subr.mxu0 0.0
        %1120 = vmatpush1.msra.mxu0 0.0
        %1121 = vmatprep.subr.mxu0 0.0
        %1122 = vmatpush1.msra.mxu0 0.0
        %1123 = vmatprep.subr.mxu0 0.0
        %1124 = vmatpush1.msra.mxu0 0.0
        %1125 = vmatprep.subr.mxu0 0.0
        %1126 = vmatpush1.msra.mxu0 0.0
        %1127 = vmatprep.subr.mxu0 0.0
        %1128 = vmatpush1.msra.mxu0 0.0
        %1129 = vmatprep.subr.mxu0 0.0
        %1130 = vmatpush1.msra.mxu0 0.0
        %1131 = vmatprep.subr.mxu0 0.0
        %1132 = vmatpush1.msra.mxu0 0.0
        %1133 = vmatprep.subr.mxu0 0.0
        %1134 = vmatpush1.msra.mxu0 0.0
        %1135 = vmatprep.subr.mxu0 0.0
        %1136 = vmatpush1.msra.mxu0 0.0
        %1137 = vmatprep.subr.mxu0 0.0
        %1138 = vmatpush1.msra.mxu0 0.0
        %1139 = vmatprep.subr.mxu0 0.0
        %1140 = vmatpush1.msra.mxu0 0.0
        %1141 = vmatprep.subr.mxu0 0.0
        %1142 = vmatpush1.msra.mxu0 0.0
        %1143 = vmatprep.subr.mxu0 0.0
        %1144 = vmatpush1.msra.mxu0 0.0
        %1145 = vmatprep.subr.mxu0 0.0
        %1146 = vmatpush1.msra.mxu0 0.0
        %1147 = vmatprep.subr.mxu0 0.0
        %1148 = vmatpush1.msra.mxu0 0.0
        %1149 = vmatprep.subr.mxu0 0.0
        %1150 = vmatpush1.msra.mxu0 0.0
        %1151 = vmatprep.mubr.f32.mxu0 0.0
        %1152 = vmatmul.mubr.f32.gmra.mrb[0].mxu0 %v1037
        %v1153 = vpop.f32.mrb[0].mxu0
        %v1154 = vadd.f32 0.0, %v1153
        %v1155 = vpop.f32.mrb[0].mxu0
        %1156 = vmatprep.mubr.f32.mxu0 0.0
        %1157 = vmatmul.mubr.f32.gmra.mrb[0].mxu0 %v1040
        %v1158 = vpop.f32.mrb[0].mxu0
        %v1159 = vadd.f32 0.0, %v1158
        %v1160 = vpop.f32.mrb[0].mxu0
        %1161 = vmatprep.mubr.f32.mxu0 0.0
        %1162 = vmatmul.mubr.f32.gmra.mrb[0].mxu0 %v1043
        %v1163 = vpop.f32.mrb[0].mxu0
        %v1164 = vadd.f32 0.0, %v1163
        %v1165 = vpop.f32.mrb[0].mxu0
        %1166 = vmatprep.mubr.f32.mxu0 0.0
        %1167 = vmatmul.mubr.f32.gmra.mrb[0].mxu0 %v1046
        %v1168 = vpop.f32.mrb[0].mxu0
        %v1169 = vadd.f32 0.0, %v1168
        %v1170 = vpop.f32.mrb[0].mxu0
        %1171 = vmatprep.mubr.f32.mxu0 0.0
        %1172 = vmatmul.mubr.f32.gmra.mrb[0].mxu0 %v1049
        %v1173 = vpop.f32.mrb[0].mxu0
        %v1174 = vadd.f32 0.0, %v1173
        %v1175 = vpop.f32.mrb[0].mxu0
        %1176 = vmatprep.mubr.f32.mxu0 0.0
        %1177 = vmatmul.mubr.f32.gmra.mrb[0].mxu0 %v1052
        %v1178 = vpop.f32.mrb[0].mxu0
        %v1179 = vadd.f32 0.0, %v1178
        %v1180 = vpop.f32.mrb[0].mxu0
        %1181 = vmatprep.mubr.f32.mxu0 0.0
        %1182 = vmatmul.mubr.f32.gmra.mrb[0].mxu0 %v1055
        %v1183 = vpop.f32.mrb[0].mxu0
        %v1184 = vadd.f32 0.0, %v1183
        %v1185 = vpop.f32.mrb[0].mxu0
        %1186 = vmatprep.mubr.f32.mxu0 0.0
        %1187 = vmatmul.mubr.f32.gmra.mrb[0].mxu0 %v1058
        %v1188 = vpop.f32.mrb[0].mxu0
        %v1189 = vadd.f32 0.0, %v1188
        %v1190 = vpop.f32.mrb[0].mxu0
        %1191 = vmatprep.mubr.f32.mxu0 0.0
        %1192 = vmatmul.mubr.f32.gmra.mrb[0].mxu0 %v1061
        %v1193 = vpop.f32.mrb[0].mxu0
        %v1194 = vadd.f32 0.0, %v1193
        %v1195 = vpop.f32.mrb[0].mxu0
        %1196 = vmatprep.mubr.f32.mxu0 0.0
        %1197 = vmatmul.mubr.f32.gmra.mrb[0].mxu0 %v1064
        %v1198 = vpop.f32.mrb[0].mxu0
        %v1199 = vadd.f32 0.0, %v1198
        %v1200 = vpop.f32.mrb[0].mxu0
        %1201 = vmatprep.mubr.f32.mxu0 0.0
        %1202 = vmatmul.mubr.f32.gmra.mrb[0].mxu0 %v1067
        %v1203 = vpop.f32.mrb[0].mxu0
        %v1204 = vadd.f32 0.0, %v1203
        %v1205 = vpop.f32.mrb[0].mxu0
        %1206 = vmatprep.mubr.f32.mxu0 0.0
        %1207 = vmatmul.mubr.f32.gmra.mrb[0].mxu0 %v1070
        %v1208 = vpop.f32.mrb[0].mxu0
        %v1209 = vadd.f32 0.0, %v1208
        %v1210 = vpop.f32.mrb[0].mxu0
        %1211 = vmatprep.mubr.f32.mxu0 0.0
        %1212 = vmatmul.mubr.f32.gmra.mrb[0].mxu0 %v1073
        %v1213 = vpop.f32.mrb[0].mxu0
        %v1214 = vadd.f32 0.0, %v1213
        %v1215 = vpop.f32.mrb[0].mxu0
        %1216 = vmatprep.mubr.f32.mxu0 0.0
        %1217 = vmatmul.mubr.f32.gmra.mrb[0].mxu0 %v1076
        %v1218 = vpop.f32.mrb[0].mxu0
        %v1219 = vadd.f32 0.0, %v1218
        %v1220 = vpop.f32.mrb[0].mxu0
        %1221 = vmatprep.mubr.f32.mxu0 0.0
        %1222 = vmatmul.mubr.f32.gmra.mrb[0].mxu0 %v1079
        %v1223 = vpop.f32.mrb[0].mxu0
        %v1224 = vadd.f32 0.0, %v1223
        %v1225 = vpop.f32.mrb[0].mxu0
        %1226 = vmatprep.mubr.f32.mxu0 0.0
        %1227 = vmatmul.mubr.f32.gmra.mrb[0].mxu0 %v1082
        %v1228 = vpop.f32.mrb[0].mxu0
        %v1229 = vadd.f32 0.0, %v1228
        %v1230 = vpop.f32.mrb[0].mxu0
        %1231 = vdwg.mxu0
        %1232 = vxpose.xlu0.b32.start [1/16] %v274, 128
        %1233 = vxpose.xlu0.b32.cont [2/16] 0.0, 128
        %1234 = vxpose.xlu0.b32.cont [3/16] 0.0, 128
        %1235 = vxpose.xlu0.b32.cont [4/16] 0.0, 128
        %1236 = vxpose.xlu0.b32.cont [5/16] 0.0, 128
        %1237 = vxpose.xlu0.b32.cont [6/16] 0.0, 128
        %1238 = vxpose.xlu0.b32.cont [7/16] 0.0, 128
        %1239 = vxpose.xlu0.b32.cont [8/16] 0.0, 128
        %1240 = vxpose.xlu0.b32.cont [9/16] 0.0, 128
        %1241 = vxpose.xlu0.b32.cont [10/16] 0.0, 128
        %1242 = vxpose.xlu0.b32.cont [11/16] 0.0, 128
        %1243 = vxpose.xlu0.b32.cont [12/16] 0.0, 128
        %1244 = vxpose.xlu0.b32.cont [13/16] 0.0, 128
        %1245 = vxpose.xlu0.b32.cont [14/16] 0.0, 128
        %1246 = vxpose.xlu0.b32.cont [15/16] 0.0, 128
        %1247 = vxpose.xlu0.b32.end [16/16] 0.0, 128
        %v1248 = vpop.trf.xlu0
        %v1249 = vpop.trf.xlu0
        %v1250 = vpop.trf.xlu0
        %v1251 = vpop.trf.xlu0
        %v1252 = vpop.trf.xlu0
        %v1253 = vpop.trf.xlu0
        %v1254 = vpop.trf.xlu0
        %v1255 = vpop.trf.xlu0
        %v1256 = vpop.trf.xlu0
        %v1257 = vpop.trf.xlu0
        %v1258 = vpop.trf.xlu0
        %v1259 = vpop.trf.xlu0
        %v1260 = vpop.trf.xlu0
        %v1261 = vpop.trf.xlu0
        %v1262 = vpop.trf.xlu0
        %v1263 = vpop.trf.xlu0
        %v1265 = vsel %vm350, %v1248, 0
        %v1268 = vsel %vm350, %v1249, 0
        %v1271 = vsel %vm350, %v1250, 0
        %v1274 = vsel %vm350, %v1251, 0
        %v1277 = vsel %vm350, %v1252, 0
        %v1280 = vsel %vm350, %v1253, 0
        %v1283 = vsel %vm350, %v1254, 0
        %v1286 = vsel %vm350, %v1255, 0
        %v1289 = vsel %vm350, %v1256, 0
        %v1292 = vsel %vm350, %v1257, 0
        %v1295 = vsel %vm350, %v1258, 0
        %v1298 = vsel %vm350, %v1259, 0
        %v1301 = vsel %vm350, %v1260, 0
        %v1304 = vsel %vm350, %v1261, 0
        %v1307 = vsel %vm350, %v1262, 0
        %v1310 = vsel %vm350, %v1263, 0
        %v1313 = vsel %vm399, %v290, 0
        %1315 = vmatprep.subr.mxu0 0.0
        %1316 = vmatpush1.msra.mxu0 %v1313
        %1317 = vmatprep.subr.mxu0 0.0
        %1318 = vmatpush1.msra.mxu0 0.0
        %1319 = vmatprep.subr.mxu0 0.0
        %1320 = vmatpush1.msra.mxu0 0.0
        %1321 = vmatprep.subr.mxu0 0.0
        %1322 = vmatpush1.msra.mxu0 0.0
        %1323 = vmatprep.subr.mxu0 0.0
        %1324 = vmatpush1.msra.mxu0 0.0
        %1325 = vmatprep.subr.mxu0 0.0
        %1326 = vmatpush1.msra.mxu0 0.0
        %1327 = vmatprep.subr.mxu0 0.0
        %1328 = vmatpush1.msra.mxu0 0.0
        %1329 = vmatprep.subr.mxu0 0.0
        %1330 = vmatpush1.msra.mxu0 0.0
        %1331 = vmatprep.subr.mxu0 0.0
        %1332 = vmatpush1.msra.mxu0 0.0
        %1333 = vmatprep.subr.mxu0 0.0
        %1334 = vmatpush1.msra.mxu0 0.0
        %1335 = vmatprep.subr.mxu0 0.0
        %1336 = vmatpush1.msra.mxu0 0.0
        %1337 = vmatprep.subr.mxu0 0.0
        %1338 = vmatpush1.msra.mxu0 0.0
        %1339 = vmatprep.subr.mxu0 0.0
        %1340 = vmatpush1.msra.mxu0 0.0
        %1341 = vmatprep.subr.mxu0 0.0
        %1342 = vmatpush1.msra.mxu0 0.0
        %1343 = vmatprep.subr.mxu0 0.0
        %1344 = vmatpush1.msra.mxu0 0.0
        %1345 = vmatprep.subr.mxu0 0.0
        %1346 = vmatpush1.msra.mxu0 0.0
        %1347 = vmatprep.subr.mxu0 0.0
        %1348 = vmatpush1.msra.mxu0 0.0
        %1349 = vmatprep.subr.mxu0 0.0
        %1350 = vmatpush1.msra.mxu0 0.0
        %1351 = vmatprep.subr.mxu0 0.0
        %1352 = vmatpush1.msra.mxu0 0.0
        %1353 = vmatprep.subr.mxu0 0.0
        %1354 = vmatpush1.msra.mxu0 0.0
        %1355 = vmatprep.subr.mxu0 0.0
        %1356 = vmatpush1.msra.mxu0 0.0
        %1357 = vmatprep.subr.mxu0 0.0
        %1358 = vmatpush1.msra.mxu0 0.0
        %1359 = vmatprep.subr.mxu0 0.0
        %1360 = vmatpush1.msra.mxu0 0.0
        %1361 = vmatprep.subr.mxu0 0.0
        %1362 = vmatpush1.msra.mxu0 0.0
        %1363 = vmatprep.subr.mxu0 0.0
        %1364 = vmatpush1.msra.mxu0 0.0
        %1365 = vmatprep.subr.mxu0 0.0
        %1366 = vmatpush1.msra.mxu0 0.0
        %1367 = vmatprep.subr.mxu0 0.0
        %1368 = vmatpush1.msra.mxu0 0.0
        %1369 = vmatprep.subr.mxu0 0.0
        %1370 = vmatpush1.msra.mxu0 0.0
        %1371 = vmatprep.subr.mxu0 0.0
        %1372 = vmatpush1.msra.mxu0 0.0
        %1373 = vmatprep.subr.mxu0 0.0
        %1374 = vmatpush1.msra.mxu0 0.0
        %1375 = vmatprep.subr.mxu0 0.0
        %1376 = vmatpush1.msra.mxu0 0.0
        %1377 = vmatprep.subr.mxu0 0.0
        %1378 = vmatpush1.msra.mxu0 0.0
        %1379 = vmatprep.mubr.f32.mxu0 0.0
        %1380 = vmatmul.mubr.f32.gmra.mrb[0].mxu0 %v1265
        %v1381 = vpop.f32.mrb[0].mxu0
        %v1382 = vadd.f32 0.0, %v1381
        %v1383 = vpop.f32.mrb[0].mxu0
        %1384 = vmatprep.mubr.f32.mxu0 0.0
        %1385 = vmatmul.mubr.f32.gmra.mrb[0].mxu0 %v1268
        %v1386 = vpop.f32.mrb[0].mxu0
        %v1387 = vadd.f32 0.0, %v1386
        %v1388 = vpop.f32.mrb[0].mxu0
        %1389 = vmatprep.mubr.f32.mxu0 0.0
        %1390 = vmatmul.mubr.f32.gmra.mrb[0].mxu0 %v1271
        %v1391 = vpop.f32.mrb[0].mxu0
        %v1392 = vadd.f32 0.0, %v1391
        %v1393 = vpop.f32.mrb[0].mxu0
        %1394 = vmatprep.mubr.f32.mxu0 0.0
        %1395 = vmatmul.mubr.f32.gmra.mrb[0].mxu0 %v1274
        %v1396 = vpop.f32.mrb[0].mxu0
        %v1397 = vadd.f32 0.0, %v1396
        %v1398 = vpop.f32.mrb[0].mxu0
        %1399 = vmatprep.mubr.f32.mxu0 0.0
        %1400 = vmatmul.mubr.f32.gmra.mrb[0].mxu0 %v1277
        %v1401 = vpop.f32.mrb[0].mxu0
        %v1402 = vadd.f32 0.0, %v1401
        %v1403 = vpop.f32.mrb[0].mxu0
        %1404 = vmatprep.mubr.f32.mxu0 0.0
        %1405 = vmatmul.mubr.f32.gmra.mrb[0].mxu0 %v1280
        %v1406 = vpop.f32.mrb[0].mxu0
        %v1407 = vadd.f32 0.0, %v1406
        %v1408 = vpop.f32.mrb[0].mxu0
        %1409 = vmatprep.mubr.f32.mxu0 0.0
        %1410 = vmatmul.mubr.f32.gmra.mrb[0].mxu0 %v1283
        %v1411 = vpop.f32.mrb[0].mxu0
        %v1412 = vadd.f32 0.0, %v1411
        %v1413 = vpop.f32.mrb[0].mxu0
        %1414 = vmatprep.mubr.f32.mxu0 0.0
        %1415 = vmatmul.mubr.f32.gmra.mrb[0].mxu0 %v1286
        %v1416 = vpop.f32.mrb[0].mxu0
        %v1417 = vadd.f32 0.0, %v1416
        %v1418 = vpop.f32.mrb[0].mxu0
        %1419 = vmatprep.mubr.f32.mxu0 0.0
        %1420 = vmatmul.mubr.f32.gmra.mrb[0].mxu0 %v1289
        %v1421 = vpop.f32.mrb[0].mxu0
        %v1422 = vadd.f32 0.0, %v1421
        %v1423 = vpop.f32.mrb[0].mxu0
        %1424 = vmatprep.mubr.f32.mxu0 0.0
        %1425 = vmatmul.mubr.f32.gmra.mrb[0].mxu0 %v1292
        %v1426 = vpop.f32.mrb[0].mxu0
        %v1427 = vadd.f32 0.0, %v1426
        %v1428 = vpop.f32.mrb[0].mxu0
        %1429 = vmatprep.mubr.f32.mxu0 0.0
        %1430 = vmatmul.mubr.f32.gmra.mrb[0].mxu0 %v1295
        %v1431 = vpop.f32.mrb[0].mxu0
        %v1432 = vadd.f32 0.0, %v1431
        %v1433 = vpop.f32.mrb[0].mxu0
        %1434 = vmatprep.mubr.f32.mxu0 0.0
        %1435 = vmatmul.mubr.f32.gmra.mrb[0].mxu0 %v1298
        %v1436 = vpop.f32.mrb[0].mxu0
        %v1437 = vadd.f32 0.0, %v1436
        %v1438 = vpop.f32.mrb[0].mxu0
        %1439 = vmatprep.mubr.f32.mxu0 0.0
        %1440 = vmatmul.mubr.f32.gmra.mrb[0].mxu0 %v1301
        %v1441 = vpop.f32.mrb[0].mxu0
        %v1442 = vadd.f32 0.0, %v1441
        %v1443 = vpop.f32.mrb[0].mxu0
        %1444 = vmatprep.mubr.f32.mxu0 0.0
        %1445 = vmatmul.mubr.f32.gmra.mrb[0].mxu0 %v1304
        %v1446 = vpop.f32.mrb[0].mxu0
        %v1447 = vadd.f32 0.0, %v1446
        %v1448 = vpop.f32.mrb[0].mxu0
        %1449 = vmatprep.mubr.f32.mxu0 0.0
        %1450 = vmatmul.mubr.f32.gmra.mrb[0].mxu0 %v1307
        %v1451 = vpop.f32.mrb[0].mxu0
        %v1452 = vadd.f32 0.0, %v1451
        %v1453 = vpop.f32.mrb[0].mxu0
        %1454 = vmatprep.mubr.f32.mxu0 0.0
        %1455 = vmatmul.mubr.f32.gmra.mrb[0].mxu0 %v1310
        %v1456 = vpop.f32.mrb[0].mxu0
        %v1457 = vadd.f32 0.0, %v1456
        %v1458 = vpop.f32.mrb[0].mxu0
        %1459 = vdwg.mxu0
        %1460 = vxpose.xlu0.b32.start [1/16] %v275, 128
        %1461 = vxpose.xlu0.b32.cont [2/16] 0.0, 128
        %1462 = vxpose.xlu0.b32.cont [3/16] 0.0, 128
        %1463 = vxpose.xlu0.b32.cont [4/16] 0.0, 128
        %1464 = vxpose.xlu0.b32.cont [5/16] 0.0, 128
        %1465 = vxpose.xlu0.b32.cont [6/16] 0.0, 128
        %1466 = vxpose.xlu0.b32.cont [7/16] 0.0, 128
        %1467 = vxpose.xlu0.b32.cont [8/16] 0.0, 128
        %1468 = vxpose.xlu0.b32.cont [9/16] 0.0, 128
        %1469 = vxpose.xlu0.b32.cont [10/16] 0.0, 128
        %1470 = vxpose.xlu0.b32.cont [11/16] 0.0, 128
        %1471 = vxpose.xlu0.b32.cont [12/16] 0.0, 128
        %1472 = vxpose.xlu0.b32.cont [13/16] 0.0, 128
        %1473 = vxpose.xlu0.b32.cont [14/16] 0.0, 128
        %1474 = vxpose.xlu0.b32.cont [15/16] 0.0, 128
        %1475 = vxpose.xlu0.b32.end [16/16] 0.0, 128
        %v1476 = vpop.trf.xlu0
        %v1477 = vpop.trf.xlu0
        %v1478 = vpop.trf.xlu0
        %v1479 = vpop.trf.xlu0
        %v1480 = vpop.trf.xlu0
        %v1481 = vpop.trf.xlu0
        %v1482 = vpop.trf.xlu0
        %v1483 = vpop.trf.xlu0
        %v1484 = vpop.trf.xlu0
        %v1485 = vpop.trf.xlu0
        %v1486 = vpop.trf.xlu0
        %v1487 = vpop.trf.xlu0
        %v1488 = vpop.trf.xlu0
        %v1489 = vpop.trf.xlu0
        %v1490 = vpop.trf.xlu0
        %v1491 = vpop.trf.xlu0
        %v1493 = vsel %vm350, %v1476, 0
        %v1496 = vsel %vm350, %v1477, 0
        %v1499 = vsel %vm350, %v1478, 0
        %v1502 = vsel %vm350, %v1479, 0
        %v1505 = vsel %vm350, %v1480, 0
        %v1508 = vsel %vm350, %v1481, 0
        %v1511 = vsel %vm350, %v1482, 0
        %v1514 = vsel %vm350, %v1483, 0
        %v1517 = vsel %vm350, %v1484, 0
        %v1520 = vsel %vm350, %v1485, 0
        %v1523 = vsel %vm350, %v1486, 0
        %v1526 = vsel %vm350, %v1487, 0
        %v1529 = vsel %vm350, %v1488, 0
        %v1532 = vsel %vm350, %v1489, 0
        %v1535 = vsel %vm350, %v1490, 0
        %v1538 = vsel %vm350, %v1491, 0
        %v1541 = vsel %vm399, %v291, 0
        %1543 = vmatprep.subr.mxu0 0.0
        %1544 = vmatpush1.msra.mxu0 %v1541
        %1545 = vmatprep.subr.mxu0 0.0
        %1546 = vmatpush1.msra.mxu0 0.0
        %1547 = vmatprep.subr.mxu0 0.0
        %1548 = vmatpush1.msra.mxu0 0.0
        %1549 = vmatprep.subr.mxu0 0.0
        %1550 = vmatpush1.msra.mxu0 0.0
        %1551 = vmatprep.subr.mxu0 0.0
        %1552 = vmatpush1.msra.mxu0 0.0
        %1553 = vmatprep.subr.mxu0 0.0
        %1554 = vmatpush1.msra.mxu0 0.0
        %1555 = vmatprep.subr.mxu0 0.0
        %1556 = vmatpush1.msra.mxu0 0.0
        %1557 = vmatprep.subr.mxu0 0.0
        %1558 = vmatpush1.msra.mxu0 0.0
        %1559 = vmatprep.subr.mxu0 0.0
        %1560 = vmatpush1.msra.mxu0 0.0
        %1561 = vmatprep.subr.mxu0 0.0
        %1562 = vmatpush1.msra.mxu0 0.0
        %1563 = vmatprep.subr.mxu0 0.0
        %1564 = vmatpush1.msra.mxu0 0.0
        %1565 = vmatprep.subr.mxu0 0.0
        %1566 = vmatpush1.msra.mxu0 0.0
        %1567 = vmatprep.subr.mxu0 0.0
        %1568 = vmatpush1.msra.mxu0 0.0
        %1569 = vmatprep.subr.mxu0 0.0
        %1570 = vmatpush1.msra.mxu0 0.0
        %1571 = vmatprep.subr.mxu0 0.0
        %1572 = vmatpush1.msra.mxu0 0.0
        %1573 = vmatprep.subr.mxu0 0.0
        %1574 = vmatpush1.msra.mxu0 0.0
        %1575 = vmatprep.subr.mxu0 0.0
        %1576 = vmatpush1.msra.mxu0 0.0
        %1577 = vmatprep.subr.mxu0 0.0
        %1578 = vmatpush1.msra.mxu0 0.0
        %1579 = vmatprep.subr.mxu0 0.0
        %1580 = vmatpush1.msra.mxu0 0.0
        %1581 = vmatprep.subr.mxu0 0.0
        %1582 = vmatpush1.msra.mxu0 0.0
        %1583 = vmatprep.subr.mxu0 0.0
        %1584 = vmatpush1.msra.mxu0 0.0
        %1585 = vmatprep.subr.mxu0 0.0
        %1586 = vmatpush1.msra.mxu0 0.0
        %1587 = vmatprep.subr.mxu0 0.0
        %1588 = vmatpush1.msra.mxu0 0.0
        %1589 = vmatprep.subr.mxu0 0.0
        %1590 = vmatpush1.msra.mxu0 0.0
        %1591 = vmatprep.subr.mxu0 0.0
        %1592 = vmatpush1.msra.mxu0 0.0
        %1593 = vmatprep.subr.mxu0 0.0
        %1594 = vmatpush1.msra.mxu0 0.0
        %1595 = vmatprep.subr.mxu0 0.0
        %1596 = vmatpush1.msra.mxu0 0.0
        %1597 = vmatprep.subr.mxu0 0.0
        %1598 = vmatpush1.msra.mxu0 0.0
        %1599 = vmatprep.subr.mxu0 0.0
        %1600 = vmatpush1.msra.mxu0 0.0
        %1601 = vmatprep.subr.mxu0 0.0
        %1602 = vmatpush1.msra.mxu0 0.0
        %1603 = vmatprep.subr.mxu0 0.0
        %1604 = vmatpush1.msra.mxu0 0.0
        %1605 = vmatprep.subr.mxu0 0.0
        %1606 = vmatpush1.msra.mxu0 0.0
        %1607 = vmatprep.mubr.f32.mxu0 0.0
        %1608 = vmatmul.mubr.f32.gmra.mrb[0].mxu0 %v1493
        %v1609 = vpop.f32.mrb[0].mxu0
        %v1610 = vadd.f32 0.0, %v1609
        %v1611 = vpop.f32.mrb[0].mxu0
        %1612 = vmatprep.mubr.f32.mxu0 0.0
        %1613 = vmatmul.mubr.f32.gmra.mrb[0].mxu0 %v1496
        %v1614 = vpop.f32.mrb[0].mxu0
        %v1615 = vadd.f32 0.0, %v1614
        %v1616 = vpop.f32.mrb[0].mxu0
        %1617 = vmatprep.mubr.f32.mxu0 0.0
        %1618 = vmatmul.mubr.f32.gmra.mrb[0].mxu0 %v1499
        %v1619 = vpop.f32.mrb[0].mxu0
        %v1620 = vadd.f32 0.0, %v1619
        %v1621 = vpop.f32.mrb[0].mxu0
        %1622 = vmatprep.mubr.f32.mxu0 0.0
        %1623 = vmatmul.mubr.f32.gmra.mrb[0].mxu0 %v1502
        %v1624 = vpop.f32.mrb[0].mxu0
        %v1625 = vadd.f32 0.0, %v1624
        %v1626 = vpop.f32.mrb[0].mxu0
        %1627 = vmatprep.mubr.f32.mxu0 0.0
        %1628 = vmatmul.mubr.f32.gmra.mrb[0].mxu0 %v1505
        %v1629 = vpop.f32.mrb[0].mxu0
        %v1630 = vadd.f32 0.0, %v1629
        %v1631 = vpop.f32.mrb[0].mxu0
        %1632 = vmatprep.mubr.f32.mxu0 0.0
        %1633 = vmatmul.mubr.f32.gmra.mrb[0].mxu0 %v1508
        %v1634 = vpop.f32.mrb[0].mxu0
        %v1635 = vadd.f32 0.0, %v1634
        %v1636 = vpop.f32.mrb[0].mxu0
        %1637 = vmatprep.mubr.f32.mxu0 0.0
        %1638 = vmatmul.mubr.f32.gmra.mrb[0].mxu0 %v1511
        %v1639 = vpop.f32.mrb[0].mxu0
        %v1640 = vadd.f32 0.0, %v1639
        %v1641 = vpop.f32.mrb[0].mxu0
        %1642 = vmatprep.mubr.f32.mxu0 0.0
        %1643 = vmatmul.mubr.f32.gmra.mrb[0].mxu0 %v1514
        %v1644 = vpop.f32.mrb[0].mxu0
        %v1645 = vadd.f32 0.0, %v1644
        %v1646 = vpop.f32.mrb[0].mxu0
        %1647 = vmatprep.mubr.f32.mxu0 0.0
        %1648 = vmatmul.mubr.f32.gmra.mrb[0].mxu0 %v1517
        %v1649 = vpop.f32.mrb[0].mxu0
        %v1650 = vadd.f32 0.0, %v1649
        %v1651 = vpop.f32.mrb[0].mxu0
        %1652 = vmatprep.mubr.f32.mxu0 0.0
        %1653 = vmatmul.mubr.f32.gmra.mrb[0].mxu0 %v1520
        %v1654 = vpop.f32.mrb[0].mxu0
        %v1655 = vadd.f32 0.0, %v1654
        %v1656 = vpop.f32.mrb[0].mxu0
        %1657 = vmatprep.mubr.f32.mxu0 0.0
        %1658 = vmatmul.mubr.f32.gmra.mrb[0].mxu0 %v1523
        %v1659 = vpop.f32.mrb[0].mxu0
        %v1660 = vadd.f32 0.0, %v1659
        %v1661 = vpop.f32.mrb[0].mxu0
        %1662 = vmatprep.mubr.f32.mxu0 0.0
        %1663 = vmatmul.mubr.f32.gmra.mrb[0].mxu0 %v1526
        %v1664 = vpop.f32.mrb[0].mxu0
        %v1665 = vadd.f32 0.0, %v1664
        %v1666 = vpop.f32.mrb[0].mxu0
        %1667 = vmatprep.mubr.f32.mxu0 0.0
        %1668 = vmatmul.mubr.f32.gmra.mrb[0].mxu0 %v1529
        %v1669 = vpop.f32.mrb[0].mxu0
        %v1670 = vadd.f32 0.0, %v1669
        %v1671 = vpop.f32.mrb[0].mxu0
        %1672 = vmatprep.mubr.f32.mxu0 0.0
        %1673 = vmatmul.mubr.f32.gmra.mrb[0].mxu0 %v1532
        %v1674 = vpop.f32.mrb[0].mxu0
        %v1675 = vadd.f32 0.0, %v1674
        %v1676 = vpop.f32.mrb[0].mxu0
        %1677 = vmatprep.mubr.f32.mxu0 0.0
        %1678 = vmatmul.mubr.f32.gmra.mrb[0].mxu0 %v1535
        %v1679 = vpop.f32.mrb[0].mxu0
        %v1680 = vadd.f32 0.0, %v1679
        %v1681 = vpop.f32.mrb[0].mxu0
        %1682 = vmatprep.mubr.f32.mxu0 0.0
        %1683 = vmatmul.mubr.f32.gmra.mrb[0].mxu0 %v1538
        %v1684 = vpop.f32.mrb[0].mxu0
        %v1685 = vadd.f32 0.0, %v1684
        %v1686 = vpop.f32.mrb[0].mxu0
        %1687 = vdwg.mxu0
        %1688 = vxpose.xlu0.b32.start [1/16] %v276, 128
        %1689 = vxpose.xlu0.b32.cont [2/16] 0.0, 128
        %1690 = vxpose.xlu0.b32.cont [3/16] 0.0, 128
        %1691 = vxpose.xlu0.b32.cont [4/16] 0.0, 128
        %1692 = vxpose.xlu0.b32.cont [5/16] 0.0, 128
        %1693 = vxpose.xlu0.b32.cont [6/16] 0.0, 128
        %1694 = vxpose.xlu0.b32.cont [7/16] 0.0, 128
        %1695 = vxpose.xlu0.b32.cont [8/16] 0.0, 128
        %1696 = vxpose.xlu0.b32.cont [9/16] 0.0, 128
        %1697 = vxpose.xlu0.b32.cont [10/16] 0.0, 128
        %1698 = vxpose.xlu0.b32.cont [11/16] 0.0, 128
        %1699 = vxpose.xlu0.b32.cont [12/16] 0.0, 128
        %1700 = vxpose.xlu0.b32.cont [13/16] 0.0, 128
        %1701 = vxpose.xlu0.b32.cont [14/16] 0.0, 128
        %1702 = vxpose.xlu0.b32.cont [15/16] 0.0, 128
        %1703 = vxpose.xlu0.b32.end [16/16] 0.0, 128
        %v1704 = vpop.trf.xlu0
        %v1705 = vpop.trf.xlu0
        %v1706 = vpop.trf.xlu0
        %v1707 = vpop.trf.xlu0
        %v1708 = vpop.trf.xlu0
        %v1709 = vpop.trf.xlu0
        %v1710 = vpop.trf.xlu0
        %v1711 = vpop.trf.xlu0
        %v1712 = vpop.trf.xlu0
        %v1713 = vpop.trf.xlu0
        %v1714 = vpop.trf.xlu0
        %v1715 = vpop.trf.xlu0
        %v1716 = vpop.trf.xlu0
        %v1717 = vpop.trf.xlu0
        %v1718 = vpop.trf.xlu0
        %v1719 = vpop.trf.xlu0
        %v1721 = vsel %vm350, %v1704, 0
        %v1724 = vsel %vm350, %v1705, 0
        %v1727 = vsel %vm350, %v1706, 0
        %v1730 = vsel %vm350, %v1707, 0
        %v1733 = vsel %vm350, %v1708, 0
        %v1736 = vsel %vm350, %v1709, 0
        %v1739 = vsel %vm350, %v1710, 0
        %v1742 = vsel %vm350, %v1711, 0
        %v1745 = vsel %vm350, %v1712, 0
        %v1748 = vsel %vm350, %v1713, 0
        %v1751 = vsel %vm350, %v1714, 0
        %v1754 = vsel %vm350, %v1715, 0
        %v1757 = vsel %vm350, %v1716, 0
        %v1760 = vsel %vm350, %v1717, 0
        %v1763 = vsel %vm350, %v1718, 0
        %v1766 = vsel %vm350, %v1719, 0
        %v1769 = vsel %vm399, %v292, 0
        %1771 = vmatprep.subr.mxu0 0.0
        %1772 = vmatpush1.msra.mxu0 %v1769
        %1773 = vmatprep.subr.mxu0 0.0
        %1774 = vmatpush1.msra.mxu0 0.0
        %1775 = vmatprep.subr.mxu0 0.0
        %1776 = vmatpush1.msra.mxu0 0.0
        %1777 = vmatprep.subr.mxu0 0.0
        %1778 = vmatpush1.msra.mxu0 0.0
        %1779 = vmatprep.subr.mxu0 0.0
        %1780 = vmatpush1.msra.mxu0 0.0
        %1781 = vmatprep.subr.mxu0 0.0
        %1782 = vmatpush1.msra.mxu0 0.0
        %1783 = vmatprep.subr.mxu0 0.0
        %1784 = vmatpush1.msra.mxu0 0.0
        %1785 = vmatprep.subr.mxu0 0.0
        %1786 = vmatpush1.msra.mxu0 0.0
        %1787 = vmatprep.subr.mxu0 0.0
        %1788 = vmatpush1.msra.mxu0 0.0
        %1789 = vmatprep.subr.mxu0 0.0
        %1790 = vmatpush1.msra.mxu0 0.0
        %1791 = vmatprep.subr.mxu0 0.0
        %1792 = vmatpush1.msra.mxu0 0.0
        %1793 = vmatprep.subr.mxu0 0.0
        %1794 = vmatpush1.msra.mxu0 0.0
        %1795 = vmatprep.subr.mxu0 0.0
        %1796 = vmatpush1.msra.mxu0 0.0
        %1797 = vmatprep.subr.mxu0 0.0
        %1798 = vmatpush1.msra.mxu0 0.0
        %1799 = vmatprep.subr.mxu0 0.0
        %1800 = vmatpush1.msra.mxu0 0.0
        %1801 = vmatprep.subr.mxu0 0.0
        %1802 = vmatpush1.msra.mxu0 0.0
        %1803 = vmatprep.subr.mxu0 0.0
        %1804 = vmatpush1.msra.mxu0 0.0
        %1805 = vmatprep.subr.mxu0 0.0
        %1806 = vmatpush1.msra.mxu0 0.0
        %1807 = vmatprep.subr.mxu0 0.0
        %1808 = vmatpush1.msra.mxu0 0.0
        %1809 = vmatprep.subr.mxu0 0.0
        %1810 = vmatpush1.msra.mxu0 0.0
        %1811 = vmatprep.subr.mxu0 0.0
        %1812 = vmatpush1.msra.mxu0 0.0
        %1813 = vmatprep.subr.mxu0 0.0
        %1814 = vmatpush1.msra.mxu0 0.0
        %1815 = vmatprep.subr.mxu0 0.0
        %1816 = vmatpush1.msra.mxu0 0.0
        %1817 = vmatprep.subr.mxu0 0.0
        %1818 = vmatpush1.msra.mxu0 0.0
        %1819 = vmatprep.subr.mxu0 0.0
        %1820 = vmatpush1.msra.mxu0 0.0
        %1821 = vmatprep.subr.mxu0 0.0
        %1822 = vmatpush1.msra.mxu0 0.0
        %1823 = vmatprep.subr.mxu0 0.0
        %1824 = vmatpush1.msra.mxu0 0.0
        %1825 = vmatprep.subr.mxu0 0.0
        %1826 = vmatpush1.msra.mxu0 0.0
        %1827 = vmatprep.subr.mxu0 0.0
        %1828 = vmatpush1.msra.mxu0 0.0
        %1829 = vmatprep.subr.mxu0 0.0
        %1830 = vmatpush1.msra.mxu0 0.0
        %1831 = vmatprep.subr.mxu0 0.0
        %1832 = vmatpush1.msra.mxu0 0.0
        %1833 = vmatprep.subr.mxu0 0.0
        %1834 = vmatpush1.msra.mxu0 0.0
        %1835 = vmatprep.mubr.f32.mxu0 0.0
        %1836 = vmatmul.mubr.f32.gmra.mrb[0].mxu0 %v1721
        %v1837 = vpop.f32.mrb[0].mxu0
        %v1838 = vadd.f32 0.0, %v1837
        %v1839 = vpop.f32.mrb[0].mxu0
        %1840 = vmatprep.mubr.f32.mxu0 0.0
        %1841 = vmatmul.mubr.f32.gmra.mrb[0].mxu0 %v1724
        %v1842 = vpop.f32.mrb[0].mxu0
        %v1843 = vadd.f32 0.0, %v1842
        %v1844 = vpop.f32.mrb[0].mxu0
        %1845 = vmatprep.mubr.f32.mxu0 0.0
        %1846 = vmatmul.mubr.f32.gmra.mrb[0].mxu0 %v1727
        %v1847 = vpop.f32.mrb[0].mxu0
        %v1848 = vadd.f32 0.0, %v1847
        %v1849 = vpop.f32.mrb[0].mxu0
        %1850 = vmatprep.mubr.f32.mxu0 0.0
        %1851 = vmatmul.mubr.f32.gmra.mrb[0].mxu0 %v1730
        %v1852 = vpop.f32.mrb[0].mxu0
        %v1853 = vadd.f32 0.0, %v1852
        %v1854 = vpop.f32.mrb[0].mxu0
        %1855 = vmatprep.mubr.f32.mxu0 0.0
        %1856 = vmatmul.mubr.f32.gmra.mrb[0].mxu0 %v1733
        %v1857 = vpop.f32.mrb[0].mxu0
        %v1858 = vadd.f32 0.0, %v1857
        %v1859 = vpop.f32.mrb[0].mxu0
        %1860 = vmatprep.mubr.f32.mxu0 0.0
        %1861 = vmatmul.mubr.f32.gmra.mrb[0].mxu0 %v1736
        %v1862 = vpop.f32.mrb[0].mxu0
        %v1863 = vadd.f32 0.0, %v1862
        %v1864 = vpop.f32.mrb[0].mxu0
        %1865 = vmatprep.mubr.f32.mxu0 0.0
        %1866 = vmatmul.mubr.f32.gmra.mrb[0].mxu0 %v1739
        %v1867 = vpop.f32.mrb[0].mxu0
        %v1868 = vadd.f32 0.0, %v1867
        %v1869 = vpop.f32.mrb[0].mxu0
        %1870 = vmatprep.mubr.f32.mxu0 0.0
        %1871 = vmatmul.mubr.f32.gmra.mrb[0].mxu0 %v1742
        %v1872 = vpop.f32.mrb[0].mxu0
        %v1873 = vadd.f32 0.0, %v1872
        %v1874 = vpop.f32.mrb[0].mxu0
        %1875 = vmatprep.mubr.f32.mxu0 0.0
        %1876 = vmatmul.mubr.f32.gmra.mrb[0].mxu0 %v1745
        %v1877 = vpop.f32.mrb[0].mxu0
        %v1878 = vadd.f32 0.0, %v1877
        %v1879 = vpop.f32.mrb[0].mxu0
        %1880 = vmatprep.mubr.f32.mxu0 0.0
        %1881 = vmatmul.mubr.f32.gmra.mrb[0].mxu0 %v1748
        %v1882 = vpop.f32.mrb[0].mxu0
        %v1883 = vadd.f32 0.0, %v1882
        %v1884 = vpop.f32.mrb[0].mxu0
        %1885 = vmatprep.mubr.f32.mxu0 0.0
        %1886 = vmatmul.mubr.f32.gmra.mrb[0].mxu0 %v1751
        %v1887 = vpop.f32.mrb[0].mxu0
        %v1888 = vadd.f32 0.0, %v1887
        %v1889 = vpop.f32.mrb[0].mxu0
        %1890 = vmatprep.mubr.f32.mxu0 0.0
        %1891 = vmatmul.mubr.f32.gmra.mrb[0].mxu0 %v1754
        %v1892 = vpop.f32.mrb[0].mxu0
        %v1893 = vadd.f32 0.0, %v1892
        %v1894 = vpop.f32.mrb[0].mxu0
        %1895 = vmatprep.mubr.f32.mxu0 0.0
        %1896 = vmatmul.mubr.f32.gmra.mrb[0].mxu0 %v1757
        %v1897 = vpop.f32.mrb[0].mxu0
        %v1898 = vadd.f32 0.0, %v1897
        %v1899 = vpop.f32.mrb[0].mxu0
        %1900 = vmatprep.mubr.f32.mxu0 0.0
        %1901 = vmatmul.mubr.f32.gmra.mrb[0].mxu0 %v1760
        %v1902 = vpop.f32.mrb[0].mxu0
        %v1903 = vadd.f32 0.0, %v1902
        %v1904 = vpop.f32.mrb[0].mxu0
        %1905 = vmatprep.mubr.f32.mxu0 0.0
        %1906 = vmatmul.mubr.f32.gmra.mrb[0].mxu0 %v1763
        %v1907 = vpop.f32.mrb[0].mxu0
        %v1908 = vadd.f32 0.0, %v1907
        %v1909 = vpop.f32.mrb[0].mxu0
        %1910 = vmatprep.mubr.f32.mxu0 0.0
        %1911 = vmatmul.mubr.f32.gmra.mrb[0].mxu0 %v1766
        %v1912 = vpop.f32.mrb[0].mxu0
        %v1913 = vadd.f32 0.0, %v1912
        %v1914 = vpop.f32.mrb[0].mxu0
        %1915 = vdwg.mxu0
        %1916 = vxpose.xlu0.b32.start [1/16] %v277, 128
        %1917 = vxpose.xlu0.b32.cont [2/16] 0.0, 128
        %1918 = vxpose.xlu0.b32.cont [3/16] 0.0, 128
        %1919 = vxpose.xlu0.b32.cont [4/16] 0.0, 128
        %1920 = vxpose.xlu0.b32.cont [5/16] 0.0, 128
        %1921 = vxpose.xlu0.b32.cont [6/16] 0.0, 128
        %1922 = vxpose.xlu0.b32.cont [7/16] 0.0, 128
        %1923 = vxpose.xlu0.b32.cont [8/16] 0.0, 128
        %1924 = vxpose.xlu0.b32.cont [9/16] 0.0, 128
        %1925 = vxpose.xlu0.b32.cont [10/16] 0.0, 128
        %1926 = vxpose.xlu0.b32.cont [11/16] 0.0, 128
        %1927 = vxpose.xlu0.b32.cont [12/16] 0.0, 128
        %1928 = vxpose.xlu0.b32.cont [13/16] 0.0, 128
        %1929 = vxpose.xlu0.b32.cont [14/16] 0.0, 128
        %1930 = vxpose.xlu0.b32.cont [15/16] 0.0, 128
        %1931 = vxpose.xlu0.b32.end [16/16] 0.0, 128
        %v1932 = vpop.trf.xlu0
        %v1933 = vpop.trf.xlu0
        %v1934 = vpop.trf.xlu0
        %v1935 = vpop.trf.xlu0
        %v1936 = vpop.trf.xlu0
        %v1937 = vpop.trf.xlu0
        %v1938 = vpop.trf.xlu0
        %v1939 = vpop.trf.xlu0
        %v1940 = vpop.trf.xlu0
        %v1941 = vpop.trf.xlu0
        %v1942 = vpop.trf.xlu0
        %v1943 = vpop.trf.xlu0
        %v1944 = vpop.trf.xlu0
        %v1945 = vpop.trf.xlu0
        %v1946 = vpop.trf.xlu0
        %v1947 = vpop.trf.xlu0
        %v1949 = vsel %vm350, %v1932, 0
        %v1952 = vsel %vm350, %v1933, 0
        %v1955 = vsel %vm350, %v1934, 0
        %v1958 = vsel %vm350, %v1935, 0
        %v1961 = vsel %vm350, %v1936, 0
        %v1964 = vsel %vm350, %v1937, 0
        %v1967 = vsel %vm350, %v1938, 0
        %v1970 = vsel %vm350, %v1939, 0
        %v1973 = vsel %vm350, %v1940, 0
        %v1976 = vsel %vm350, %v1941, 0
        %v1979 = vsel %vm350, %v1942, 0
        %v1982 = vsel %vm350, %v1943, 0
        %v1985 = vsel %vm350, %v1944, 0
        %v1988 = vsel %vm350, %v1945, 0
        %v1991 = vsel %vm350, %v1946, 0
        %v1994 = vsel %vm350, %v1947, 0
        %v1997 = vsel %vm399, %v293, 0
        %1999 = vmatprep.subr.mxu0 0.0
        %2000 = vmatpush1.msra.mxu0 %v1997
        %2001 = vmatprep.subr.mxu0 0.0
        %2002 = vmatpush1.msra.mxu0 0.0
        %2003 = vmatprep.subr.mxu0 0.0
        %2004 = vmatpush1.msra.mxu0 0.0
        %2005 = vmatprep.subr.mxu0 0.0
        %2006 = vmatpush1.msra.mxu0 0.0
        %2007 = vmatprep.subr.mxu0 0.0
        %2008 = vmatpush1.msra.mxu0 0.0
        %2009 = vmatprep.subr.mxu0 0.0
        %2010 = vmatpush1.msra.mxu0 0.0
        %2011 = vmatprep.subr.mxu0 0.0
        %2012 = vmatpush1.msra.mxu0 0.0
        %2013 = vmatprep.subr.mxu0 0.0
        %2014 = vmatpush1.msra.mxu0 0.0
        %2015 = vmatprep.subr.mxu0 0.0
        %2016 = vmatpush1.msra.mxu0 0.0
        %2017 = vmatprep.subr.mxu0 0.0
        %2018 = vmatpush1.msra.mxu0 0.0
        %2019 = vmatprep.subr.mxu0 0.0
        %2020 = vmatpush1.msra.mxu0 0.0
        %2021 = vmatprep.subr.mxu0 0.0
        %2022 = vmatpush1.msra.mxu0 0.0
        %2023 = vmatprep.subr.mxu0 0.0
        %2024 = vmatpush1.msra.mxu0 0.0
        %2025 = vmatprep.subr.mxu0 0.0
        %2026 = vmatpush1.msra.mxu0 0.0
        %2027 = vmatprep.subr.mxu0 0.0
        %2028 = vmatpush1.msra.mxu0 0.0
        %2029 = vmatprep.subr.mxu0 0.0
        %2030 = vmatpush1.msra.mxu0 0.0
        %2031 = vmatprep.subr.mxu0 0.0
        %2032 = vmatpush1.msra.mxu0 0.0
        %2033 = vmatprep.subr.mxu0 0.0
        %2034 = vmatpush1.msra.mxu0 0.0
        %2035 = vmatprep.subr.mxu0 0.0
        %2036 = vmatpush1.msra.mxu0 0.0
        %2037 = vmatprep.subr.mxu0 0.0
        %2038 = vmatpush1.msra.mxu0 0.0
        %2039 = vmatprep.subr.mxu0 0.0
        %2040 = vmatpush1.msra.mxu0 0.0
        %2041 = vmatprep.subr.mxu0 0.0
        %2042 = vmatpush1.msra.mxu0 0.0
        %2043 = vmatprep.subr.mxu0 0.0
        %2044 = vmatpush1.msra.mxu0 0.0
        %2045 = vmatprep.subr.mxu0 0.0
        %2046 = vmatpush1.msra.mxu0 0.0
        %2047 = vmatprep.subr.mxu0 0.0
        %2048 = vmatpush1.msra.mxu0 0.0
        %2049 = vmatprep.subr.mxu0 0.0
        %2050 = vmatpush1.msra.mxu0 0.0
        %2051 = vmatprep.subr.mxu0 0.0
        %2052 = vmatpush1.msra.mxu0 0.0
        %2053 = vmatprep.subr.mxu0 0.0
        %2054 = vmatpush1.msra.mxu0 0.0
        %2055 = vmatprep.subr.mxu0 0.0
        %2056 = vmatpush1.msra.mxu0 0.0
        %2057 = vmatprep.subr.mxu0 0.0
        %2058 = vmatpush1.msra.mxu0 0.0
        %2059 = vmatprep.subr.mxu0 0.0
        %2060 = vmatpush1.msra.mxu0 0.0
        %2061 = vmatprep.subr.mxu0 0.0
        %2062 = vmatpush1.msra.mxu0 0.0
        %2063 = vmatprep.mubr.f32.mxu0 0.0
        %2064 = vmatmul.mubr.f32.gmra.mrb[0].mxu0 %v1949
        %v2065 = vpop.f32.mrb[0].mxu0
        %v2066 = vadd.f32 0.0, %v2065
        %v2067 = vpop.f32.mrb[0].mxu0
        %2068 = vmatprep.mubr.f32.mxu0 0.0
        %2069 = vmatmul.mubr.f32.gmra.mrb[0].mxu0 %v1952
        %v2070 = vpop.f32.mrb[0].mxu0
        %v2071 = vadd.f32 0.0, %v2070
        %v2072 = vpop.f32.mrb[0].mxu0
        %2073 = vmatprep.mubr.f32.mxu0 0.0
        %2074 = vmatmul.mubr.f32.gmra.mrb[0].mxu0 %v1955
        %v2075 = vpop.f32.mrb[0].mxu0
        %v2076 = vadd.f32 0.0, %v2075
        %v2077 = vpop.f32.mrb[0].mxu0
        %2078 = vmatprep.mubr.f32.mxu0 0.0
        %2079 = vmatmul.mubr.f32.gmra.mrb[0].mxu0 %v1958
        %v2080 = vpop.f32.mrb[0].mxu0
        %v2081 = vadd.f32 0.0, %v2080
        %v2082 = vpop.f32.mrb[0].mxu0
        %2083 = vmatprep.mubr.f32.mxu0 0.0
        %2084 = vmatmul.mubr.f32.gmra.mrb[0].mxu0 %v1961
        %v2085 = vpop.f32.mrb[0].mxu0
        %v2086 = vadd.f32 0.0, %v2085
        %v2087 = vpop.f32.mrb[0].mxu0
        %2088 = vmatprep.mubr.f32.mxu0 0.0
        %2089 = vmatmul.mubr.f32.gmra.mrb[0].mxu0 %v1964
        %v2090 = vpop.f32.mrb[0].mxu0
        %v2091 = vadd.f32 0.0, %v2090
        %v2092 = vpop.f32.mrb[0].mxu0
        %2093 = vmatprep.mubr.f32.mxu0 0.0
        %2094 = vmatmul.mubr.f32.gmra.mrb[0].mxu0 %v1967
        %v2095 = vpop.f32.mrb[0].mxu0
        %v2096 = vadd.f32 0.0, %v2095
        %v2097 = vpop.f32.mrb[0].mxu0
        %2098 = vmatprep.mubr.f32.mxu0 0.0
        %2099 = vmatmul.mubr.f32.gmra.mrb[0].mxu0 %v1970
        %v2100 = vpop.f32.mrb[0].mxu0
        %v2101 = vadd.f32 0.0, %v2100
        %v2102 = vpop.f32.mrb[0].mxu0
        %2103 = vmatprep.mubr.f32.mxu0 0.0
        %2104 = vmatmul.mubr.f32.gmra.mrb[0].mxu0 %v1973
        %v2105 = vpop.f32.mrb[0].mxu0
        %v2106 = vadd.f32 0.0, %v2105
        %v2107 = vpop.f32.mrb[0].mxu0
        %2108 = vmatprep.mubr.f32.mxu0 0.0
        %2109 = vmatmul.mubr.f32.gmra.mrb[0].mxu0 %v1976
        %v2110 = vpop.f32.mrb[0].mxu0
        %v2111 = vadd.f32 0.0, %v2110
        %v2112 = vpop.f32.mrb[0].mxu0
        %2113 = vmatprep.mubr.f32.mxu0 0.0
        %2114 = vmatmul.mubr.f32.gmra.mrb[0].mxu0 %v1979
        %v2115 = vpop.f32.mrb[0].mxu0
        %v2116 = vadd.f32 0.0, %v2115
        %v2117 = vpop.f32.mrb[0].mxu0
        %2118 = vmatprep.mubr.f32.mxu0 0.0
        %2119 = vmatmul.mubr.f32.gmra.mrb[0].mxu0 %v1982
        %v2120 = vpop.f32.mrb[0].mxu0
        %v2121 = vadd.f32 0.0, %v2120
        %v2122 = vpop.f32.mrb[0].mxu0
        %2123 = vmatprep.mubr.f32.mxu0 0.0
        %2124 = vmatmul.mubr.f32.gmra.mrb[0].mxu0 %v1985
        %v2125 = vpop.f32.mrb[0].mxu0
        %v2126 = vadd.f32 0.0, %v2125
        %v2127 = vpop.f32.mrb[0].mxu0
        %2128 = vmatprep.mubr.f32.mxu0 0.0
        %2129 = vmatmul.mubr.f32.gmra.mrb[0].mxu0 %v1988
        %v2130 = vpop.f32.mrb[0].mxu0
        %v2131 = vadd.f32 0.0, %v2130
        %v2132 = vpop.f32.mrb[0].mxu0
        %2133 = vmatprep.mubr.f32.mxu0 0.0
        %2134 = vmatmul.mubr.f32.gmra.mrb[0].mxu0 %v1991
        %v2135 = vpop.f32.mrb[0].mxu0
        %v2136 = vadd.f32 0.0, %v2135
        %v2137 = vpop.f32.mrb[0].mxu0
        %2138 = vmatprep.mubr.f32.mxu0 0.0
        %2139 = vmatmul.mubr.f32.gmra.mrb[0].mxu0 %v1994
        %v2140 = vpop.f32.mrb[0].mxu0
        %v2141 = vadd.f32 0.0, %v2140
        %v2142 = vpop.f32.mrb[0].mxu0
        %2143 = vdwg.mxu0
        %2144 = vxpose.xlu0.b32.start [1/16] %v278, 128
        %2145 = vxpose.xlu0.b32.cont [2/16] 0.0, 128
        %2146 = vxpose.xlu0.b32.cont [3/16] 0.0, 128
        %2147 = vxpose.xlu0.b32.cont [4/16] 0.0, 128
        %2148 = vxpose.xlu0.b32.cont [5/16] 0.0, 128
        %2149 = vxpose.xlu0.b32.cont [6/16] 0.0, 128
        %2150 = vxpose.xlu0.b32.cont [7/16] 0.0, 128
        %2151 = vxpose.xlu0.b32.cont [8/16] 0.0, 128
        %2152 = vxpose.xlu0.b32.cont [9/16] 0.0, 128
        %2153 = vxpose.xlu0.b32.cont [10/16] 0.0, 128
        %2154 = vxpose.xlu0.b32.cont [11/16] 0.0, 128
        %2155 = vxpose.xlu0.b32.cont [12/16] 0.0, 128
        %2156 = vxpose.xlu0.b32.cont [13/16] 0.0, 128
        %2157 = vxpose.xlu0.b32.cont [14/16] 0.0, 128
        %2158 = vxpose.xlu0.b32.cont [15/16] 0.0, 128
        %2159 = vxpose.xlu0.b32.end [16/16] 0.0, 128
        %v2160 = vpop.trf.xlu0
        %v2161 = vpop.trf.xlu0
        %v2162 = vpop.trf.xlu0
        %v2163 = vpop.trf.xlu0
        %v2164 = vpop.trf.xlu0
        %v2165 = vpop.trf.xlu0
        %v2166 = vpop.trf.xlu0
        %v2167 = vpop.trf.xlu0
        %v2168 = vpop.trf.xlu0
        %v2169 = vpop.trf.xlu0
        %v2170 = vpop.trf.xlu0
        %v2171 = vpop.trf.xlu0
        %v2172 = vpop.trf.xlu0
        %v2173 = vpop.trf.xlu0
        %v2174 = vpop.trf.xlu0
        %v2175 = vpop.trf.xlu0
        %v2177 = vsel %vm350, %v2160, 0
        %v2180 = vsel %vm350, %v2161, 0
        %v2183 = vsel %vm350, %v2162, 0
        %v2186 = vsel %vm350, %v2163, 0
        %v2189 = vsel %vm350, %v2164, 0
        %v2192 = vsel %vm350, %v2165, 0
        %v2195 = vsel %vm350, %v2166, 0
        %v2198 = vsel %vm350, %v2167, 0
        %v2201 = vsel %vm350, %v2168, 0
        %v2204 = vsel %vm350, %v2169, 0
        %v2207 = vsel %vm350, %v2170, 0
        %v2210 = vsel %vm350, %v2171, 0
        %v2213 = vsel %vm350, %v2172, 0
        %v2216 = vsel %vm350, %v2173, 0
        %v2219 = vsel %vm350, %v2174, 0
        %v2222 = vsel %vm350, %v2175, 0
        %v2225 = vsel %vm399, %v294, 0
        %2227 = vmatprep.subr.mxu0 0.0
        %2228 = vmatpush1.msra.mxu0 %v2225
        %2229 = vmatprep.subr.mxu0 0.0
        %2230 = vmatpush1.msra.mxu0 0.0
        %2231 = vmatprep.subr.mxu0 0.0
        %2232 = vmatpush1.msra.mxu0 0.0
        %2233 = vmatprep.subr.mxu0 0.0
        %2234 = vmatpush1.msra.mxu0 0.0
        %2235 = vmatprep.subr.mxu0 0.0
        %2236 = vmatpush1.msra.mxu0 0.0
        %2237 = vmatprep.subr.mxu0 0.0
        %2238 = vmatpush1.msra.mxu0 0.0
        %2239 = vmatprep.subr.mxu0 0.0
        %2240 = vmatpush1.msra.mxu0 0.0
        %2241 = vmatprep.subr.mxu0 0.0
        %2242 = vmatpush1.msra.mxu0 0.0
        %2243 = vmatprep.subr.mxu0 0.0
        %2244 = vmatpush1.msra.mxu0 0.0
        %2245 = vmatprep.subr.mxu0 0.0
        %2246 = vmatpush1.msra.mxu0 0.0
        %2247 = vmatprep.subr.mxu0 0.0
        %2248 = vmatpush1.msra.mxu0 0.0
        %2249 = vmatprep.subr.mxu0 0.0
        %2250 = vmatpush1.msra.mxu0 0.0
        %2251 = vmatprep.subr.mxu0 0.0
        %2252 = vmatpush1.msra.mxu0 0.0
        %2253 = vmatprep.subr.mxu0 0.0
        %2254 = vmatpush1.msra.mxu0 0.0
        %2255 = vmatprep.subr.mxu0 0.0
        %2256 = vmatpush1.msra.mxu0 0.0
        %2257 = vmatprep.subr.mxu0 0.0
        %2258 = vmatpush1.msra.mxu0 0.0
        %2259 = vmatprep.subr.mxu0 0.0
        %2260 = vmatpush1.msra.mxu0 0.0
        %2261 = vmatprep.subr.mxu0 0.0
        %2262 = vmatpush1.msra.mxu0 0.0
        %2263 = vmatprep.subr.mxu0 0.0
        %2264 = vmatpush1.msra.mxu0 0.0
        %2265 = vmatprep.subr.mxu0 0.0
        %2266 = vmatpush1.msra.mxu0 0.0
        %2267 = vmatprep.subr.mxu0 0.0
        %2268 = vmatpush1.msra.mxu0 0.0
        %2269 = vmatprep.subr.mxu0 0.0
        %2270 = vmatpush1.msra.mxu0 0.0
        %2271 = vmatprep.subr.mxu0 0.0
        %2272 = vmatpush1.msra.mxu0 0.0
        %2273 = vmatprep.subr.mxu0 0.0
        %2274 = vmatpush1.msra.mxu0 0.0
        %2275 = vmatprep.subr.mxu0 0.0
        %2276 = vmatpush1.msra.mxu0 0.0
        %2277 = vmatprep.subr.mxu0 0.0
        %2278 = vmatpush1.msra.mxu0 0.0
        %2279 = vmatprep.subr.mxu0 0.0
        %2280 = vmatpush1.msra.mxu0 0.0
        %2281 = vmatprep.subr.mxu0 0.0
        %2282 = vmatpush1.msra.mxu0 0.0
        %2283 = vmatprep.subr.mxu0 0.0
        %2284 = vmatpush1.msra.mxu0 0.0
        %2285 = vmatprep.subr.mxu0 0.0
        %2286 = vmatpush1.msra.mxu0 0.0
        %2287 = vmatprep.subr.mxu0 0.0
        %2288 = vmatpush1.msra.mxu0 0.0
        %2289 = vmatprep.subr.mxu0 0.0
        %2290 = vmatpush1.msra.mxu0 0.0
        %2291 = vmatprep.mubr.f32.mxu0 0.0
        %2292 = vmatmul.mubr.f32.gmra.mrb[0].mxu0 %v2177
        %v2293 = vpop.f32.mrb[0].mxu0
        %v2294 = vadd.f32 0.0, %v2293
        %v2295 = vpop.f32.mrb[0].mxu0
        %2296 = vmatprep.mubr.f32.mxu0 0.0
        %2297 = vmatmul.mubr.f32.gmra.mrb[0].mxu0 %v2180
        %v2298 = vpop.f32.mrb[0].mxu0
        %v2299 = vadd.f32 0.0, %v2298
        %v2300 = vpop.f32.mrb[0].mxu0
        %2301 = vmatprep.mubr.f32.mxu0 0.0
        %2302 = vmatmul.mubr.f32.gmra.mrb[0].mxu0 %v2183
        %v2303 = vpop.f32.mrb[0].mxu0
        %v2304 = vadd.f32 0.0, %v2303
        %v2305 = vpop.f32.mrb[0].mxu0
        %2306 = vmatprep.mubr.f32.mxu0 0.0
        %2307 = vmatmul.mubr.f32.gmra.mrb[0].mxu0 %v2186
        %v2308 = vpop.f32.mrb[0].mxu0
        %v2309 = vadd.f32 0.0, %v2308
        %v2310 = vpop.f32.mrb[0].mxu0
        %2311 = vmatprep.mubr.f32.mxu0 0.0
        %2312 = vmatmul.mubr.f32.gmra.mrb[0].mxu0 %v2189
        %v2313 = vpop.f32.mrb[0].mxu0
        %v2314 = vadd.f32 0.0, %v2313
        %v2315 = vpop.f32.mrb[0].mxu0
        %2316 = vmatprep.mubr.f32.mxu0 0.0
        %2317 = vmatmul.mubr.f32.gmra.mrb[0].mxu0 %v2192
        %v2318 = vpop.f32.mrb[0].mxu0
        %v2319 = vadd.f32 0.0, %v2318
        %v2320 = vpop.f32.mrb[0].mxu0
        %2321 = vmatprep.mubr.f32.mxu0 0.0
        %2322 = vmatmul.mubr.f32.gmra.mrb[0].mxu0 %v2195
        %v2323 = vpop.f32.mrb[0].mxu0
        %v2324 = vadd.f32 0.0, %v2323
        %v2325 = vpop.f32.mrb[0].mxu0
        %2326 = vmatprep.mubr.f32.mxu0 0.0
        %2327 = vmatmul.mubr.f32.gmra.mrb[0].mxu0 %v2198
        %v2328 = vpop.f32.mrb[0].mxu0
        %v2329 = vadd.f32 0.0, %v2328
        %v2330 = vpop.f32.mrb[0].mxu0
        %2331 = vmatprep.mubr.f32.mxu0 0.0
        %2332 = vmatmul.mubr.f32.gmra.mrb[0].mxu0 %v2201
        %v2333 = vpop.f32.mrb[0].mxu0
        %v2334 = vadd.f32 0.0, %v2333
        %v2335 = vpop.f32.mrb[0].mxu0
        %2336 = vmatprep.mubr.f32.mxu0 0.0
        %2337 = vmatmul.mubr.f32.gmra.mrb[0].mxu0 %v2204
        %v2338 = vpop.f32.mrb[0].mxu0
        %v2339 = vadd.f32 0.0, %v2338
        %v2340 = vpop.f32.mrb[0].mxu0
        %2341 = vmatprep.mubr.f32.mxu0 0.0
        %2342 = vmatmul.mubr.f32.gmra.mrb[0].mxu0 %v2207
        %v2343 = vpop.f32.mrb[0].mxu0
        %v2344 = vadd.f32 0.0, %v2343
        %v2345 = vpop.f32.mrb[0].mxu0
        %2346 = vmatprep.mubr.f32.mxu0 0.0
        %2347 = vmatmul.mubr.f32.gmra.mrb[0].mxu0 %v2210
        %v2348 = vpop.f32.mrb[0].mxu0
        %v2349 = vadd.f32 0.0, %v2348
        %v2350 = vpop.f32.mrb[0].mxu0
        %2351 = vmatprep.mubr.f32.mxu0 0.0
        %2352 = vmatmul.mubr.f32.gmra.mrb[0].mxu0 %v2213
        %v2353 = vpop.f32.mrb[0].mxu0
        %v2354 = vadd.f32 0.0, %v2353
        %v2355 = vpop.f32.mrb[0].mxu0
        %2356 = vmatprep.mubr.f32.mxu0 0.0
        %2357 = vmatmul.mubr.f32.gmra.mrb[0].mxu0 %v2216
        %v2358 = vpop.f32.mrb[0].mxu0
        %v2359 = vadd.f32 0.0, %v2358
        %v2360 = vpop.f32.mrb[0].mxu0
        %2361 = vmatprep.mubr.f32.mxu0 0.0
        %2362 = vmatmul.mubr.f32.gmra.mrb[0].mxu0 %v2219
        %v2363 = vpop.f32.mrb[0].mxu0
        %v2364 = vadd.f32 0.0, %v2363
        %v2365 = vpop.f32.mrb[0].mxu0
        %2366 = vmatprep.mubr.f32.mxu0 0.0
        %2367 = vmatmul.mubr.f32.gmra.mrb[0].mxu0 %v2222
        %v2368 = vpop.f32.mrb[0].mxu0
        %v2369 = vadd.f32 0.0, %v2368
        %v2370 = vpop.f32.mrb[0].mxu0
        %2371 = vdwg.mxu0
        %2372 = vxpose.xlu0.b32.start [1/16] %v279, 128
        %2373 = vxpose.xlu0.b32.cont [2/16] 0.0, 128
        %2374 = vxpose.xlu0.b32.cont [3/16] 0.0, 128
        %2375 = vxpose.xlu0.b32.cont [4/16] 0.0, 128
        %2376 = vxpose.xlu0.b32.cont [5/16] 0.0, 128
        %2377 = vxpose.xlu0.b32.cont [6/16] 0.0, 128
        %2378 = vxpose.xlu0.b32.cont [7/16] 0.0, 128
        %2379 = vxpose.xlu0.b32.cont [8/16] 0.0, 128
        %2380 = vxpose.xlu0.b32.cont [9/16] 0.0, 128
        %2381 = vxpose.xlu0.b32.cont [10/16] 0.0, 128
        %2382 = vxpose.xlu0.b32.cont [11/16] 0.0, 128
        %2383 = vxpose.xlu0.b32.cont [12/16] 0.0, 128
        %2384 = vxpose.xlu0.b32.cont [13/16] 0.0, 128
        %2385 = vxpose.xlu0.b32.cont [14/16] 0.0, 128
        %2386 = vxpose.xlu0.b32.cont [15/16] 0.0, 128
        %2387 = vxpose.xlu0.b32.end [16/16] 0.0, 128
        %v2388 = vpop.trf.xlu0
        %v2389 = vpop.trf.xlu0
        %v2390 = vpop.trf.xlu0
        %v2391 = vpop.trf.xlu0
        %v2392 = vpop.trf.xlu0
        %v2393 = vpop.trf.xlu0
        %v2394 = vpop.trf.xlu0
        %v2395 = vpop.trf.xlu0
        %v2396 = vpop.trf.xlu0
        %v2397 = vpop.trf.xlu0
        %v2398 = vpop.trf.xlu0
        %v2399 = vpop.trf.xlu0
        %v2400 = vpop.trf.xlu0
        %v2401 = vpop.trf.xlu0
        %v2402 = vpop.trf.xlu0
        %v2403 = vpop.trf.xlu0
        %v2405 = vsel %vm350, %v2388, 0
        %v2408 = vsel %vm350, %v2389, 0
        %v2411 = vsel %vm350, %v2390, 0
        %v2414 = vsel %vm350, %v2391, 0
        %v2417 = vsel %vm350, %v2392, 0
        %v2420 = vsel %vm350, %v2393, 0
        %v2423 = vsel %vm350, %v2394, 0
        %v2426 = vsel %vm350, %v2395, 0
        %v2429 = vsel %vm350, %v2396, 0
        %v2432 = vsel %vm350, %v2397, 0
        %v2435 = vsel %vm350, %v2398, 0
        %v2438 = vsel %vm350, %v2399, 0
        %v2441 = vsel %vm350, %v2400, 0
        %v2444 = vsel %vm350, %v2401, 0
        %v2447 = vsel %vm350, %v2402, 0
        %v2450 = vsel %vm350, %v2403, 0
        %v2453 = vsel %vm399, %v295, 0
        %2455 = vmatprep.subr.mxu0 0.0
        %2456 = vmatpush1.msra.mxu0 %v2453
        %2457 = vmatprep.subr.mxu0 0.0
        %2458 = vmatpush1.msra.mxu0 0.0
        %2459 = vmatprep.subr.mxu0 0.0
        %2460 = vmatpush1.msra.mxu0 0.0
        %2461 = vmatprep.subr.mxu0 0.0
        %2462 = vmatpush1.msra.mxu0 0.0
        %2463 = vmatprep.subr.mxu0 0.0
        %2464 = vmatpush1.msra.mxu0 0.0
        %2465 = vmatprep.subr.mxu0 0.0
        %2466 = vmatpush1.msra.mxu0 0.0
        %2467 = vmatprep.subr.mxu0 0.0
        %2468 = vmatpush1.msra.mxu0 0.0
        %2469 = vmatprep.subr.mxu0 0.0
        %2470 = vmatpush1.msra.mxu0 0.0
        %2471 = vmatprep.subr.mxu0 0.0
        %2472 = vmatpush1.msra.mxu0 0.0
        %2473 = vmatprep.subr.mxu0 0.0
        %2474 = vmatpush1.msra.mxu0 0.0
        %2475 = vmatprep.subr.mxu0 0.0
        %2476 = vmatpush1.msra.mxu0 0.0
        %2477 = vmatprep.subr.mxu0 0.0
        %2478 = vmatpush1.msra.mxu0 0.0
        %2479 = vmatprep.subr.mxu0 0.0
        %2480 = vmatpush1.msra.mxu0 0.0
        %2481 = vmatprep.subr.mxu0 0.0
        %2482 = vmatpush1.msra.mxu0 0.0
        %2483 = vmatprep.subr.mxu0 0.0
        %2484 = vmatpush1.msra.mxu0 0.0
        %2485 = vmatprep.subr.mxu0 0.0
        %2486 = vmatpush1.msra.mxu0 0.0
        %2487 = vmatprep.subr.mxu0 0.0
        %2488 = vmatpush1.msra.mxu0 0.0
        %2489 = vmatprep.subr.mxu0 0.0
        %2490 = vmatpush1.msra.mxu0 0.0
        %2491 = vmatprep.subr.mxu0 0.0
        %2492 = vmatpush1.msra.mxu0 0.0
        %2493 = vmatprep.subr.mxu0 0.0
        %2494 = vmatpush1.msra.mxu0 0.0
        %2495 = vmatprep.subr.mxu0 0.0
        %2496 = vmatpush1.msra.mxu0 0.0
        %2497 = vmatprep.subr.mxu0 0.0
        %2498 = vmatpush1.msra.mxu0 0.0
        %2499 = vmatprep.subr.mxu0 0.0
        %2500 = vmatpush1.msra.mxu0 0.0
        %2501 = vmatprep.subr.mxu0 0.0
        %2502 = vmatpush1.msra.mxu0 0.0
        %2503 = vmatprep.subr.mxu0 0.0
        %2504 = vmatpush1.msra.mxu0 0.0
        %2505 = vmatprep.subr.mxu0 0.0
        %2506 = vmatpush1.msra.mxu0 0.0
        %2507 = vmatprep.subr.mxu0 0.0
        %2508 = vmatpush1.msra.mxu0 0.0
        %2509 = vmatprep.subr.mxu0 0.0
        %2510 = vmatpush1.msra.mxu0 0.0
        %2511 = vmatprep.subr.mxu0 0.0
        %2512 = vmatpush1.msra.mxu0 0.0
        %2513 = vmatprep.subr.mxu0 0.0
        %2514 = vmatpush1.msra.mxu0 0.0
        %2515 = vmatprep.subr.mxu0 0.0
        %2516 = vmatpush1.msra.mxu0 0.0
        %2517 = vmatprep.subr.mxu0 0.0
        %2518 = vmatpush1.msra.mxu0 0.0
        %2519 = vmatprep.mubr.f32.mxu0 0.0
        %2520 = vmatmul.mubr.f32.gmra.mrb[0].mxu0 %v2405
        %v2521 = vpop.f32.mrb[0].mxu0
        %v2522 = vadd.f32 0.0, %v2521
        %v2523 = vpop.f32.mrb[0].mxu0
        %2524 = vmatprep.mubr.f32.mxu0 0.0
        %2525 = vmatmul.mubr.f32.gmra.mrb[0].mxu0 %v2408
        %v2526 = vpop.f32.mrb[0].mxu0
        %v2527 = vadd.f32 0.0, %v2526
        %v2528 = vpop.f32.mrb[0].mxu0
        %2529 = vmatprep.mubr.f32.mxu0 0.0
        %2530 = vmatmul.mubr.f32.gmra.mrb[0].mxu0 %v2411
        %v2531 = vpop.f32.mrb[0].mxu0
        %v2532 = vadd.f32 0.0, %v2531
        %v2533 = vpop.f32.mrb[0].mxu0
        %2534 = vmatprep.mubr.f32.mxu0 0.0
        %2535 = vmatmul.mubr.f32.gmra.mrb[0].mxu0 %v2414
        %v2536 = vpop.f32.mrb[0].mxu0
        %v2537 = vadd.f32 0.0, %v2536
        %v2538 = vpop.f32.mrb[0].mxu0
        %2539 = vmatprep.mubr.f32.mxu0 0.0
        %2540 = vmatmul.mubr.f32.gmra.mrb[0].mxu0 %v2417
        %v2541 = vpop.f32.mrb[0].mxu0
        %v2542 = vadd.f32 0.0, %v2541
        %v2543 = vpop.f32.mrb[0].mxu0
        %2544 = vmatprep.mubr.f32.mxu0 0.0
        %2545 = vmatmul.mubr.f32.gmra.mrb[0].mxu0 %v2420
        %v2546 = vpop.f32.mrb[0].mxu0
        %v2547 = vadd.f32 0.0, %v2546
        %v2548 = vpop.f32.mrb[0].mxu0
        %2549 = vmatprep.mubr.f32.mxu0 0.0
        %2550 = vmatmul.mubr.f32.gmra.mrb[0].mxu0 %v2423
        %v2551 = vpop.f32.mrb[0].mxu0
        %v2552 = vadd.f32 0.0, %v2551
        %v2553 = vpop.f32.mrb[0].mxu0
        %2554 = vmatprep.mubr.f32.mxu0 0.0
        %2555 = vmatmul.mubr.f32.gmra.mrb[0].mxu0 %v2426
        %v2556 = vpop.f32.mrb[0].mxu0
        %v2557 = vadd.f32 0.0, %v2556
        %v2558 = vpop.f32.mrb[0].mxu0
        %2559 = vmatprep.mubr.f32.mxu0 0.0
        %2560 = vmatmul.mubr.f32.gmra.mrb[0].mxu0 %v2429
        %v2561 = vpop.f32.mrb[0].mxu0
        %v2562 = vadd.f32 0.0, %v2561
        %v2563 = vpop.f32.mrb[0].mxu0
        %2564 = vmatprep.mubr.f32.mxu0 0.0
        %2565 = vmatmul.mubr.f32.gmra.mrb[0].mxu0 %v2432
        %v2566 = vpop.f32.mrb[0].mxu0
        %v2567 = vadd.f32 0.0, %v2566
        %v2568 = vpop.f32.mrb[0].mxu0
        %2569 = vmatprep.mubr.f32.mxu0 0.0
        %2570 = vmatmul.mubr.f32.gmra.mrb[0].mxu0 %v2435
        %v2571 = vpop.f32.mrb[0].mxu0
        %v2572 = vadd.f32 0.0, %v2571
        %v2573 = vpop.f32.mrb[0].mxu0
        %2574 = vmatprep.mubr.f32.mxu0 0.0
        %2575 = vmatmul.mubr.f32.gmra.mrb[0].mxu0 %v2438
        %v2576 = vpop.f32.mrb[0].mxu0
        %v2577 = vadd.f32 0.0, %v2576
        %v2578 = vpop.f32.mrb[0].mxu0
        %2579 = vmatprep.mubr.f32.mxu0 0.0
        %2580 = vmatmul.mubr.f32.gmra.mrb[0].mxu0 %v2441
        %v2581 = vpop.f32.mrb[0].mxu0
        %v2582 = vadd.f32 0.0, %v2581
        %v2583 = vpop.f32.mrb[0].mxu0
        %2584 = vmatprep.mubr.f32.mxu0 0.0
        %2585 = vmatmul.mubr.f32.gmra.mrb[0].mxu0 %v2444
        %v2586 = vpop.f32.mrb[0].mxu0
        %v2587 = vadd.f32 0.0, %v2586
        %v2588 = vpop.f32.mrb[0].mxu0
        %2589 = vmatprep.mubr.f32.mxu0 0.0
        %2590 = vmatmul.mubr.f32.gmra.mrb[0].mxu0 %v2447
        %v2591 = vpop.f32.mrb[0].mxu0
        %v2592 = vadd.f32 0.0, %v2591
        %v2593 = vpop.f32.mrb[0].mxu0
        %2594 = vmatprep.mubr.f32.mxu0 0.0
        %2595 = vmatmul.mubr.f32.gmra.mrb[0].mxu0 %v2450
        %v2596 = vpop.f32.mrb[0].mxu0
        %v2597 = vadd.f32 0.0, %v2596
        %v2598 = vpop.f32.mrb[0].mxu0
        %2599 = vdwg.mxu0
        %2600 = vxpose.xlu0.b32.start [1/16] %v280, 128
        %2601 = vxpose.xlu0.b32.cont [2/16] 0.0, 128
        %2602 = vxpose.xlu0.b32.cont [3/16] 0.0, 128
        %2603 = vxpose.xlu0.b32.cont [4/16] 0.0, 128
        %2604 = vxpose.xlu0.b32.cont [5/16] 0.0, 128
        %2605 = vxpose.xlu0.b32.cont [6/16] 0.0, 128
        %2606 = vxpose.xlu0.b32.cont [7/16] 0.0, 128
        %2607 = vxpose.xlu0.b32.cont [8/16] 0.0, 128
        %2608 = vxpose.xlu0.b32.cont [9/16] 0.0, 128
        %2609 = vxpose.xlu0.b32.cont [10/16] 0.0, 128
        %2610 = vxpose.xlu0.b32.cont [11/16] 0.0, 128
        %2611 = vxpose.xlu0.b32.cont [12/16] 0.0, 128
        %2612 = vxpose.xlu0.b32.cont [13/16] 0.0, 128
        %2613 = vxpose.xlu0.b32.cont [14/16] 0.0, 128
        %2614 = vxpose.xlu0.b32.cont [15/16] 0.0, 128
        %2615 = vxpose.xlu0.b32.end [16/16] 0.0, 128
        %v2616 = vpop.trf.xlu0
        %v2617 = vpop.trf.xlu0
        %v2618 = vpop.trf.xlu0
        %v2619 = vpop.trf.xlu0
        %v2620 = vpop.trf.xlu0
        %v2621 = vpop.trf.xlu0
        %v2622 = vpop.trf.xlu0
        %v2623 = vpop.trf.xlu0
        %v2624 = vpop.trf.xlu0
        %v2625 = vpop.trf.xlu0
        %v2626 = vpop.trf.xlu0
        %v2627 = vpop.trf.xlu0
        %v2628 = vpop.trf.xlu0
        %v2629 = vpop.trf.xlu0
        %v2630 = vpop.trf.xlu0
        %v2631 = vpop.trf.xlu0
        %v2633 = vsel %vm350, %v2616, 0
        %v2636 = vsel %vm350, %v2617, 0
        %v2639 = vsel %vm350, %v2618, 0
        %v2642 = vsel %vm350, %v2619, 0
        %v2645 = vsel %vm350, %v2620, 0
        %v2648 = vsel %vm350, %v2621, 0
        %v2651 = vsel %vm350, %v2622, 0
        %v2654 = vsel %vm350, %v2623, 0
        %v2657 = vsel %vm350, %v2624, 0
        %v2660 = vsel %vm350, %v2625, 0
        %v2663 = vsel %vm350, %v2626, 0
        %v2666 = vsel %vm350, %v2627, 0
        %v2669 = vsel %vm350, %v2628, 0
        %v2672 = vsel %vm350, %v2629, 0
        %v2675 = vsel %vm350, %v2630, 0
        %v2678 = vsel %vm350, %v2631, 0
        %v2681 = vsel %vm399, %v296, 0
        %2683 = vmatprep.subr.mxu0 0.0
        %2684 = vmatpush1.msra.mxu0 %v2681
        %2685 = vmatprep.subr.mxu0 0.0
        %2686 = vmatpush1.msra.mxu0 0.0
        %2687 = vmatprep.subr.mxu0 0.0
        %2688 = vmatpush1.msra.mxu0 0.0
        %2689 = vmatprep.subr.mxu0 0.0
        %2690 = vmatpush1.msra.mxu0 0.0
        %2691 = vmatprep.subr.mxu0 0.0
        %2692 = vmatpush1.msra.mxu0 0.0
        %2693 = vmatprep.subr.mxu0 0.0
        %2694 = vmatpush1.msra.mxu0 0.0
        %2695 = vmatprep.subr.mxu0 0.0
        %2696 = vmatpush1.msra.mxu0 0.0
        %2697 = vmatprep.subr.mxu0 0.0
        %2698 = vmatpush1.msra.mxu0 0.0
        %2699 = vmatprep.subr.mxu0 0.0
        %2700 = vmatpush1.msra.mxu0 0.0
        %2701 = vmatprep.subr.mxu0 0.0
        %2702 = vmatpush1.msra.mxu0 0.0
        %2703 = vmatprep.subr.mxu0 0.0
        %2704 = vmatpush1.msra.mxu0 0.0
        %2705 = vmatprep.subr.mxu0 0.0
        %2706 = vmatpush1.msra.mxu0 0.0
        %2707 = vmatprep.subr.mxu0 0.0
        %2708 = vmatpush1.msra.mxu0 0.0
        %2709 = vmatprep.subr.mxu0 0.0
        %2710 = vmatpush1.msra.mxu0 0.0
        %2711 = vmatprep.subr.mxu0 0.0
        %2712 = vmatpush1.msra.mxu0 0.0
        %2713 = vmatprep.subr.mxu0 0.0
        %2714 = vmatpush1.msra.mxu0 0.0
        %2715 = vmatprep.subr.mxu0 0.0
        %2716 = vmatpush1.msra.mxu0 0.0
        %2717 = vmatprep.subr.mxu0 0.0
        %2718 = vmatpush1.msra.mxu0 0.0
        %2719 = vmatprep.subr.mxu0 0.0
        %2720 = vmatpush1.msra.mxu0 0.0
        %2721 = vmatprep.subr.mxu0 0.0
        %2722 = vmatpush1.msra.mxu0 0.0
        %2723 = vmatprep.subr.mxu0 0.0
        %2724 = vmatpush1.msra.mxu0 0.0
        %2725 = vmatprep.subr.mxu0 0.0
        %2726 = vmatpush1.msra.mxu0 0.0
        %2727 = vmatprep.subr.mxu0 0.0
        %2728 = vmatpush1.msra.mxu0 0.0
        %2729 = vmatprep.subr.mxu0 0.0
        %2730 = vmatpush1.msra.mxu0 0.0
        %2731 = vmatprep.subr.mxu0 0.0
        %2732 = vmatpush1.msra.mxu0 0.0
        %2733 = vmatprep.subr.mxu0 0.0
        %2734 = vmatpush1.msra.mxu0 0.0
        %2735 = vmatprep.subr.mxu0 0.0
        %2736 = vmatpush1.msra.mxu0 0.0
        %2737 = vmatprep.subr.mxu0 0.0
        %2738 = vmatpush1.msra.mxu0 0.0
        %2739 = vmatprep.subr.mxu0 0.0
        %2740 = vmatpush1.msra.mxu0 0.0
        %2741 = vmatprep.subr.mxu0 0.0
        %2742 = vmatpush1.msra.mxu0 0.0
        %2743 = vmatprep.subr.mxu0 0.0
        %2744 = vmatpush1.msra.mxu0 0.0
        %2745 = vmatprep.subr.mxu0 0.0
        %2746 = vmatpush1.msra.mxu0 0.0
        %2747 = vmatprep.mubr.f32.mxu0 0.0
        %2748 = vmatmul.mubr.f32.gmra.mrb[0].mxu0 %v2633
        %v2749 = vpop.f32.mrb[0].mxu0
        %v2750 = vadd.f32 0.0, %v2749
        %v2751 = vpop.f32.mrb[0].mxu0
        %2752 = vmatprep.mubr.f32.mxu0 0.0
        %2753 = vmatmul.mubr.f32.gmra.mrb[0].mxu0 %v2636
        %v2754 = vpop.f32.mrb[0].mxu0
        %v2755 = vadd.f32 0.0, %v2754
        %v2756 = vpop.f32.mrb[0].mxu0
        %2757 = vmatprep.mubr.f32.mxu0 0.0
        %2758 = vmatmul.mubr.f32.gmra.mrb[0].mxu0 %v2639
        %v2759 = vpop.f32.mrb[0].mxu0
        %v2760 = vadd.f32 0.0, %v2759
        %v2761 = vpop.f32.mrb[0].mxu0
        %2762 = vmatprep.mubr.f32.mxu0 0.0
        %2763 = vmatmul.mubr.f32.gmra.mrb[0].mxu0 %v2642
        %v2764 = vpop.f32.mrb[0].mxu0
        %v2765 = vadd.f32 0.0, %v2764
        %v2766 = vpop.f32.mrb[0].mxu0
        %2767 = vmatprep.mubr.f32.mxu0 0.0
        %2768 = vmatmul.mubr.f32.gmra.mrb[0].mxu0 %v2645
        %v2769 = vpop.f32.mrb[0].mxu0
        %v2770 = vadd.f32 0.0, %v2769
        %v2771 = vpop.f32.mrb[0].mxu0
        %2772 = vmatprep.mubr.f32.mxu0 0.0
        %2773 = vmatmul.mubr.f32.gmra.mrb[0].mxu0 %v2648
        %v2774 = vpop.f32.mrb[0].mxu0
        %v2775 = vadd.f32 0.0, %v2774
        %v2776 = vpop.f32.mrb[0].mxu0
        %2777 = vmatprep.mubr.f32.mxu0 0.0
        %2778 = vmatmul.mubr.f32.gmra.mrb[0].mxu0 %v2651
        %v2779 = vpop.f32.mrb[0].mxu0
        %v2780 = vadd.f32 0.0, %v2779
        %v2781 = vpop.f32.mrb[0].mxu0
        %2782 = vmatprep.mubr.f32.mxu0 0.0
        %2783 = vmatmul.mubr.f32.gmra.mrb[0].mxu0 %v2654
        %v2784 = vpop.f32.mrb[0].mxu0
        %v2785 = vadd.f32 0.0, %v2784
        %v2786 = vpop.f32.mrb[0].mxu0
        %2787 = vmatprep.mubr.f32.mxu0 0.0
        %2788 = vmatmul.mubr.f32.gmra.mrb[0].mxu0 %v2657
        %v2789 = vpop.f32.mrb[0].mxu0
        %v2790 = vadd.f32 0.0, %v2789
        %v2791 = vpop.f32.mrb[0].mxu0
        %2792 = vmatprep.mubr.f32.mxu0 0.0
        %2793 = vmatmul.mubr.f32.gmra.mrb[0].mxu0 %v2660
        %v2794 = vpop.f32.mrb[0].mxu0
        %v2795 = vadd.f32 0.0, %v2794
        %v2796 = vpop.f32.mrb[0].mxu0
        %2797 = vmatprep.mubr.f32.mxu0 0.0
        %2798 = vmatmul.mubr.f32.gmra.mrb[0].mxu0 %v2663
        %v2799 = vpop.f32.mrb[0].mxu0
        %v2800 = vadd.f32 0.0, %v2799
        %v2801 = vpop.f32.mrb[0].mxu0
        %2802 = vmatprep.mubr.f32.mxu0 0.0
        %2803 = vmatmul.mubr.f32.gmra.mrb[0].mxu0 %v2666
        %v2804 = vpop.f32.mrb[0].mxu0
        %v2805 = vadd.f32 0.0, %v2804
        %v2806 = vpop.f32.mrb[0].mxu0
        %2807 = vmatprep.mubr.f32.mxu0 0.0
        %2808 = vmatmul.mubr.f32.gmra.mrb[0].mxu0 %v2669
        %v2809 = vpop.f32.mrb[0].mxu0
        %v2810 = vadd.f32 0.0, %v2809
        %v2811 = vpop.f32.mrb[0].mxu0
        %2812 = vmatprep.mubr.f32.mxu0 0.0
        %2813 = vmatmul.mubr.f32.gmra.mrb[0].mxu0 %v2672
        %v2814 = vpop.f32.mrb[0].mxu0
        %v2815 = vadd.f32 0.0, %v2814
        %v2816 = vpop.f32.mrb[0].mxu0
        %2817 = vmatprep.mubr.f32.mxu0 0.0
        %2818 = vmatmul.mubr.f32.gmra.mrb[0].mxu0 %v2675
        %v2819 = vpop.f32.mrb[0].mxu0
        %v2820 = vadd.f32 0.0, %v2819
        %v2821 = vpop.f32.mrb[0].mxu0
        %2822 = vmatprep.mubr.f32.mxu0 0.0
        %2823 = vmatmul.mubr.f32.gmra.mrb[0].mxu0 %v2678
        %v2824 = vpop.f32.mrb[0].mxu0
        %v2825 = vadd.f32 0.0, %v2824
        %v2826 = vpop.f32.mrb[0].mxu0
        %2827 = vdwg.mxu0
        %2828 = vxpose.xlu0.b32.start [1/16] %v281, 128
        %2829 = vxpose.xlu0.b32.cont [2/16] 0.0, 128
        %2830 = vxpose.xlu0.b32.cont [3/16] 0.0, 128
        %2831 = vxpose.xlu0.b32.cont [4/16] 0.0, 128
        %2832 = vxpose.xlu0.b32.cont [5/16] 0.0, 128
        %2833 = vxpose.xlu0.b32.cont [6/16] 0.0, 128
        %2834 = vxpose.xlu0.b32.cont [7/16] 0.0, 128
        %2835 = vxpose.xlu0.b32.cont [8/16] 0.0, 128
        %2836 = vxpose.xlu0.b32.cont [9/16] 0.0, 128
        %2837 = vxpose.xlu0.b32.cont [10/16] 0.0, 128
        %2838 = vxpose.xlu0.b32.cont [11/16] 0.0, 128
        %2839 = vxpose.xlu0.b32.cont [12/16] 0.0, 128
        %2840 = vxpose.xlu0.b32.cont [13/16] 0.0, 128
        %2841 = vxpose.xlu0.b32.cont [14/16] 0.0, 128
        %2842 = vxpose.xlu0.b32.cont [15/16] 0.0, 128
        %2843 = vxpose.xlu0.b32.end [16/16] 0.0, 128
        %v2844 = vpop.trf.xlu0
        %v2845 = vpop.trf.xlu0
        %v2846 = vpop.trf.xlu0
        %v2847 = vpop.trf.xlu0
        %v2848 = vpop.trf.xlu0
        %v2849 = vpop.trf.xlu0
        %v2850 = vpop.trf.xlu0
        %v2851 = vpop.trf.xlu0
        %v2852 = vpop.trf.xlu0
        %v2853 = vpop.trf.xlu0
        %v2854 = vpop.trf.xlu0
        %v2855 = vpop.trf.xlu0
        %v2856 = vpop.trf.xlu0
        %v2857 = vpop.trf.xlu0
        %v2858 = vpop.trf.xlu0
        %v2859 = vpop.trf.xlu0
        %v2861 = vsel %vm350, %v2844, 0
        %v2864 = vsel %vm350, %v2845, 0
        %v2867 = vsel %vm350, %v2846, 0
        %v2870 = vsel %vm350, %v2847, 0
        %v2873 = vsel %vm350, %v2848, 0
        %v2876 = vsel %vm350, %v2849, 0
        %v2879 = vsel %vm350, %v2850, 0
        %v2882 = vsel %vm350, %v2851, 0
        %v2885 = vsel %vm350, %v2852, 0
        %v2888 = vsel %vm350, %v2853, 0
        %v2891 = vsel %vm350, %v2854, 0
        %v2894 = vsel %vm350, %v2855, 0
        %v2897 = vsel %vm350, %v2856, 0
        %v2900 = vsel %vm350, %v2857, 0
        %v2903 = vsel %vm350, %v2858, 0
        %v2906 = vsel %vm350, %v2859, 0
        %v2909 = vsel %vm399, %v297, 0
        %2911 = vmatprep.subr.mxu0 0.0
        %2912 = vmatpush1.msra.mxu0 %v2909
        %2913 = vmatprep.subr.mxu0 0.0
        %2914 = vmatpush1.msra.mxu0 0.0
        %2915 = vmatprep.subr.mxu0 0.0
        %2916 = vmatpush1.msra.mxu0 0.0
        %2917 = vmatprep.subr.mxu0 0.0
        %2918 = vmatpush1.msra.mxu0 0.0
        %2919 = vmatprep.subr.mxu0 0.0
        %2920 = vmatpush1.msra.mxu0 0.0
        %2921 = vmatprep.subr.mxu0 0.0
        %2922 = vmatpush1.msra.mxu0 0.0
        %2923 = vmatprep.subr.mxu0 0.0
        %2924 = vmatpush1.msra.mxu0 0.0
        %2925 = vmatprep.subr.mxu0 0.0
        %2926 = vmatpush1.msra.mxu0 0.0
        %2927 = vmatprep.subr.mxu0 0.0
        %2928 = vmatpush1.msra.mxu0 0.0
        %2929 = vmatprep.subr.mxu0 0.0
        %2930 = vmatpush1.msra.mxu0 0.0
        %2931 = vmatprep.subr.mxu0 0.0
        %2932 = vmatpush1.msra.mxu0 0.0
        %2933 = vmatprep.subr.mxu0 0.0
        %2934 = vmatpush1.msra.mxu0 0.0
        %2935 = vmatprep.subr.mxu0 0.0
        %2936 = vmatpush1.msra.mxu0 0.0
        %2937 = vmatprep.subr.mxu0 0.0
        %2938 = vmatpush1.msra.mxu0 0.0
        %2939 = vmatprep.subr.mxu0 0.0
        %2940 = vmatpush1.msra.mxu0 0.0
        %2941 = vmatprep.subr.mxu0 0.0
        %2942 = vmatpush1.msra.mxu0 0.0
        %2943 = vmatprep.subr.mxu0 0.0
        %2944 = vmatpush1.msra.mxu0 0.0
        %2945 = vmatprep.subr.mxu0 0.0
        %2946 = vmatpush1.msra.mxu0 0.0
        %2947 = vmatprep.subr.mxu0 0.0
        %2948 = vmatpush1.msra.mxu0 0.0
        %2949 = vmatprep.subr.mxu0 0.0
        %2950 = vmatpush1.msra.mxu0 0.0
        %2951 = vmatprep.subr.mxu0 0.0
        %2952 = vmatpush1.msra.mxu0 0.0
        %2953 = vmatprep.subr.mxu0 0.0
        %2954 = vmatpush1.msra.mxu0 0.0
        %2955 = vmatprep.subr.mxu0 0.0
        %2956 = vmatpush1.msra.mxu0 0.0
        %2957 = vmatprep.subr.mxu0 0.0
        %2958 = vmatpush1.msra.mxu0 0.0
        %2959 = vmatprep.subr.mxu0 0.0
        %2960 = vmatpush1.msra.mxu0 0.0
        %2961 = vmatprep.subr.mxu0 0.0
        %2962 = vmatpush1.msra.mxu0 0.0
        %2963 = vmatprep.subr.mxu0 0.0
        %2964 = vmatpush1.msra.mxu0 0.0
        %2965 = vmatprep.subr.mxu0 0.0
        %2966 = vmatpush1.msra.mxu0 0.0
        %2967 = vmatprep.subr.mxu0 0.0
        %2968 = vmatpush1.msra.mxu0 0.0
        %2969 = vmatprep.subr.mxu0 0.0
        %2970 = vmatpush1.msra.mxu0 0.0
        %2971 = vmatprep.subr.mxu0 0.0
        %2972 = vmatpush1.msra.mxu0 0.0
        %2973 = vmatprep.subr.mxu0 0.0
        %2974 = vmatpush1.msra.mxu0 0.0
        %2975 = vmatprep.mubr.f32.mxu0 0.0
        %2976 = vmatmul.mubr.f32.gmra.mrb[0].mxu0 %v2861
        %v2977 = vpop.f32.mrb[0].mxu0
        %v2978 = vadd.f32 0.0, %v2977
        %v2979 = vpop.f32.mrb[0].mxu0
        %2980 = vmatprep.mubr.f32.mxu0 0.0
        %2981 = vmatmul.mubr.f32.gmra.mrb[0].mxu0 %v2864
        %v2982 = vpop.f32.mrb[0].mxu0
        %v2983 = vadd.f32 0.0, %v2982
        %v2984 = vpop.f32.mrb[0].mxu0
        %2985 = vmatprep.mubr.f32.mxu0 0.0
        %2986 = vmatmul.mubr.f32.gmra.mrb[0].mxu0 %v2867
        %v2987 = vpop.f32.mrb[0].mxu0
        %v2988 = vadd.f32 0.0, %v2987
        %v2989 = vpop.f32.mrb[0].mxu0
        %2990 = vmatprep.mubr.f32.mxu0 0.0
        %2991 = vmatmul.mubr.f32.gmra.mrb[0].mxu0 %v2870
        %v2992 = vpop.f32.mrb[0].mxu0
        %v2993 = vadd.f32 0.0, %v2992
        %v2994 = vpop.f32.mrb[0].mxu0
        %2995 = vmatprep.mubr.f32.mxu0 0.0
        %2996 = vmatmul.mubr.f32.gmra.mrb[0].mxu0 %v2873
        %v2997 = vpop.f32.mrb[0].mxu0
        %v2998 = vadd.f32 0.0, %v2997
        %v2999 = vpop.f32.mrb[0].mxu0
        %3000 = vmatprep.mubr.f32.mxu0 0.0
        %3001 = vmatmul.mubr.f32.gmra.mrb[0].mxu0 %v2876
        %v3002 = vpop.f32.mrb[0].mxu0
        %v3003 = vadd.f32 0.0, %v3002
        %v3004 = vpop.f32.mrb[0].mxu0
        %3005 = vmatprep.mubr.f32.mxu0 0.0
        %3006 = vmatmul.mubr.f32.gmra.mrb[0].mxu0 %v2879
        %v3007 = vpop.f32.mrb[0].mxu0
        %v3008 = vadd.f32 0.0, %v3007
        %v3009 = vpop.f32.mrb[0].mxu0
        %3010 = vmatprep.mubr.f32.mxu0 0.0
        %3011 = vmatmul.mubr.f32.gmra.mrb[0].mxu0 %v2882
        %v3012 = vpop.f32.mrb[0].mxu0
        %v3013 = vadd.f32 0.0, %v3012
        %v3014 = vpop.f32.mrb[0].mxu0
        %3015 = vmatprep.mubr.f32.mxu0 0.0
        %3016 = vmatmul.mubr.f32.gmra.mrb[0].mxu0 %v2885
        %v3017 = vpop.f32.mrb[0].mxu0
        %v3018 = vadd.f32 0.0, %v3017
        %v3019 = vpop.f32.mrb[0].mxu0
        %3020 = vmatprep.mubr.f32.mxu0 0.0
        %3021 = vmatmul.mubr.f32.gmra.mrb[0].mxu0 %v2888
        %v3022 = vpop.f32.mrb[0].mxu0
        %v3023 = vadd.f32 0.0, %v3022
        %v3024 = vpop.f32.mrb[0].mxu0
        %3025 = vmatprep.mubr.f32.mxu0 0.0
        %3026 = vmatmul.mubr.f32.gmra.mrb[0].mxu0 %v2891
        %v3027 = vpop.f32.mrb[0].mxu0
        %v3028 = vadd.f32 0.0, %v3027
        %v3029 = vpop.f32.mrb[0].mxu0
        %3030 = vmatprep.mubr.f32.mxu0 0.0
        %3031 = vmatmul.mubr.f32.gmra.mrb[0].mxu0 %v2894
        %v3032 = vpop.f32.mrb[0].mxu0
        %v3033 = vadd.f32 0.0, %v3032
        %v3034 = vpop.f32.mrb[0].mxu0
        %3035 = vmatprep.mubr.f32.mxu0 0.0
        %3036 = vmatmul.mubr.f32.gmra.mrb[0].mxu0 %v2897
        %v3037 = vpop.f32.mrb[0].mxu0
        %v3038 = vadd.f32 0.0, %v3037
        %v3039 = vpop.f32.mrb[0].mxu0
        %3040 = vmatprep.mubr.f32.mxu0 0.0
        %3041 = vmatmul.mubr.f32.gmra.mrb[0].mxu0 %v2900
        %v3042 = vpop.f32.mrb[0].mxu0
        %v3043 = vadd.f32 0.0, %v3042
        %v3044 = vpop.f32.mrb[0].mxu0
        %3045 = vmatprep.mubr.f32.mxu0 0.0
        %3046 = vmatmul.mubr.f32.gmra.mrb[0].mxu0 %v2903
        %v3047 = vpop.f32.mrb[0].mxu0
        %v3048 = vadd.f32 0.0, %v3047
        %v3049 = vpop.f32.mrb[0].mxu0
        %3050 = vmatprep.mubr.f32.mxu0 0.0
        %3051 = vmatmul.mubr.f32.gmra.mrb[0].mxu0 %v2906
        %v3052 = vpop.f32.mrb[0].mxu0
        %v3053 = vadd.f32 0.0, %v3052
        %v3054 = vpop.f32.mrb[0].mxu0
        %3055 = vdwg.mxu0
        %3056 = vxpose.xlu0.b32.start [1/16] %v282, 128
        %3057 = vxpose.xlu0.b32.cont [2/16] 0.0, 128
        %3058 = vxpose.xlu0.b32.cont [3/16] 0.0, 128
        %3059 = vxpose.xlu0.b32.cont [4/16] 0.0, 128
        %3060 = vxpose.xlu0.b32.cont [5/16] 0.0, 128
        %3061 = vxpose.xlu0.b32.cont [6/16] 0.0, 128
        %3062 = vxpose.xlu0.b32.cont [7/16] 0.0, 128
        %3063 = vxpose.xlu0.b32.cont [8/16] 0.0, 128
        %3064 = vxpose.xlu0.b32.cont [9/16] 0.0, 128
        %3065 = vxpose.xlu0.b32.cont [10/16] 0.0, 128
        %3066 = vxpose.xlu0.b32.cont [11/16] 0.0, 128
        %3067 = vxpose.xlu0.b32.cont [12/16] 0.0, 128
        %3068 = vxpose.xlu0.b32.cont [13/16] 0.0, 128
        %3069 = vxpose.xlu0.b32.cont [14/16] 0.0, 128
        %3070 = vxpose.xlu0.b32.cont [15/16] 0.0, 128
        %3071 = vxpose.xlu0.b32.end [16/16] 0.0, 128
        %v3072 = vpop.trf.xlu0
        %v3073 = vpop.trf.xlu0
        %v3074 = vpop.trf.xlu0
        %v3075 = vpop.trf.xlu0
        %v3076 = vpop.trf.xlu0
        %v3077 = vpop.trf.xlu0
        %v3078 = vpop.trf.xlu0
        %v3079 = vpop.trf.xlu0
        %v3080 = vpop.trf.xlu0
        %v3081 = vpop.trf.xlu0
        %v3082 = vpop.trf.xlu0
        %v3083 = vpop.trf.xlu0
        %v3084 = vpop.trf.xlu0
        %v3085 = vpop.trf.xlu0
        %v3086 = vpop.trf.xlu0
        %v3087 = vpop.trf.xlu0
        %v3089 = vsel %vm350, %v3072, 0
        %v3092 = vsel %vm350, %v3073, 0
        %v3095 = vsel %vm350, %v3074, 0
        %v3098 = vsel %vm350, %v3075, 0
        %v3101 = vsel %vm350, %v3076, 0
        %v3104 = vsel %vm350, %v3077, 0
        %v3107 = vsel %vm350, %v3078, 0
        %v3110 = vsel %vm350, %v3079, 0
        %v3113 = vsel %vm350, %v3080, 0
        %v3116 = vsel %vm350, %v3081, 0
        %v3119 = vsel %vm350, %v3082, 0
        %v3122 = vsel %vm350, %v3083, 0
        %v3125 = vsel %vm350, %v3084, 0
        %v3128 = vsel %vm350, %v3085, 0
        %v3131 = vsel %vm350, %v3086, 0
        %v3134 = vsel %vm350, %v3087, 0
        %v3137 = vsel %vm399, %v298, 0
        %3139 = vmatprep.subr.mxu0 0.0
        %3140 = vmatpush1.msra.mxu0 %v3137
        %3141 = vmatprep.subr.mxu0 0.0
        %3142 = vmatpush1.msra.mxu0 0.0
        %3143 = vmatprep.subr.mxu0 0.0
        %3144 = vmatpush1.msra.mxu0 0.0
        %3145 = vmatprep.subr.mxu0 0.0
        %3146 = vmatpush1.msra.mxu0 0.0
        %3147 = vmatprep.subr.mxu0 0.0
        %3148 = vmatpush1.msra.mxu0 0.0
        %3149 = vmatprep.subr.mxu0 0.0
        %3150 = vmatpush1.msra.mxu0 0.0
        %3151 = vmatprep.subr.mxu0 0.0
        %3152 = vmatpush1.msra.mxu0 0.0
        %3153 = vmatprep.subr.mxu0 0.0
        %3154 = vmatpush1.msra.mxu0 0.0
        %3155 = vmatprep.subr.mxu0 0.0
        %3156 = vmatpush1.msra.mxu0 0.0
        %3157 = vmatprep.subr.mxu0 0.0
        %3158 = vmatpush1.msra.mxu0 0.0
        %3159 = vmatprep.subr.mxu0 0.0
        %3160 = vmatpush1.msra.mxu0 0.0
        %3161 = vmatprep.subr.mxu0 0.0
        %3162 = vmatpush1.msra.mxu0 0.0
        %3163 = vmatprep.subr.mxu0 0.0
        %3164 = vmatpush1.msra.mxu0 0.0
        %3165 = vmatprep.subr.mxu0 0.0
        %3166 = vmatpush1.msra.mxu0 0.0
        %3167 = vmatprep.subr.mxu0 0.0
        %3168 = vmatpush1.msra.mxu0 0.0
        %3169 = vmatprep.subr.mxu0 0.0
        %3170 = vmatpush1.msra.mxu0 0.0
        %3171 = vmatprep.subr.mxu0 0.0
        %3172 = vmatpush1.msra.mxu0 0.0
        %3173 = vmatprep.subr.mxu0 0.0
        %3174 = vmatpush1.msra.mxu0 0.0
        %3175 = vmatprep.subr.mxu0 0.0
        %3176 = vmatpush1.msra.mxu0 0.0
        %3177 = vmatprep.subr.mxu0 0.0
        %3178 = vmatpush1.msra.mxu0 0.0
        %3179 = vmatprep.subr.mxu0 0.0
        %3180 = vmatpush1.msra.mxu0 0.0
        %3181 = vmatprep.subr.mxu0 0.0
        %3182 = vmatpush1.msra.mxu0 0.0
        %3183 = vmatprep.subr.mxu0 0.0
        %3184 = vmatpush1.msra.mxu0 0.0
        %3185 = vmatprep.subr.mxu0 0.0
        %3186 = vmatpush1.msra.mxu0 0.0
        %3187 = vmatprep.subr.mxu0 0.0
        %3188 = vmatpush1.msra.mxu0 0.0
        %3189 = vmatprep.subr.mxu0 0.0
        %3190 = vmatpush1.msra.mxu0 0.0
        %3191 = vmatprep.subr.mxu0 0.0
        %3192 = vmatpush1.msra.mxu0 0.0
        %3193 = vmatprep.subr.mxu0 0.0
        %3194 = vmatpush1.msra.mxu0 0.0
        %3195 = vmatprep.subr.mxu0 0.0
        %3196 = vmatpush1.msra.mxu0 0.0
        %3197 = vmatprep.subr.mxu0 0.0
        %3198 = vmatpush1.msra.mxu0 0.0
        %3199 = vmatprep.subr.mxu0 0.0
        %3200 = vmatpush1.msra.mxu0 0.0
        %3201 = vmatprep.subr.mxu0 0.0
        %3202 = vmatpush1.msra.mxu0 0.0
        %3203 = vmatprep.mubr.f32.mxu0 0.0
        %3204 = vmatmul.mubr.f32.gmra.mrb[0].mxu0 %v3089
        %v3205 = vpop.f32.mrb[0].mxu0
        %v3206 = vadd.f32 0.0, %v3205
        %v3207 = vpop.f32.mrb[0].mxu0
        %3208 = vmatprep.mubr.f32.mxu0 0.0
        %3209 = vmatmul.mubr.f32.gmra.mrb[0].mxu0 %v3092
        %v3210 = vpop.f32.mrb[0].mxu0
        %v3211 = vadd.f32 0.0, %v3210
        %v3212 = vpop.f32.mrb[0].mxu0
        %3213 = vmatprep.mubr.f32.mxu0 0.0
        %3214 = vmatmul.mubr.f32.gmra.mrb[0].mxu0 %v3095
        %v3215 = vpop.f32.mrb[0].mxu0
        %v3216 = vadd.f32 0.0, %v3215
        %v3217 = vpop.f32.mrb[0].mxu0
        %3218 = vmatprep.mubr.f32.mxu0 0.0
        %3219 = vmatmul.mubr.f32.gmra.mrb[0].mxu0 %v3098
        %v3220 = vpop.f32.mrb[0].mxu0
        %v3221 = vadd.f32 0.0, %v3220
        %v3222 = vpop.f32.mrb[0].mxu0
        %3223 = vmatprep.mubr.f32.mxu0 0.0
        %3224 = vmatmul.mubr.f32.gmra.mrb[0].mxu0 %v3101
        %v3225 = vpop.f32.mrb[0].mxu0
        %v3226 = vadd.f32 0.0, %v3225
        %v3227 = vpop.f32.mrb[0].mxu0
        %3228 = vmatprep.mubr.f32.mxu0 0.0
        %3229 = vmatmul.mubr.f32.gmra.mrb[0].mxu0 %v3104
        %v3230 = vpop.f32.mrb[0].mxu0
        %v3231 = vadd.f32 0.0, %v3230
        %v3232 = vpop.f32.mrb[0].mxu0
        %3233 = vmatprep.mubr.f32.mxu0 0.0
        %3234 = vmatmul.mubr.f32.gmra.mrb[0].mxu0 %v3107
        %v3235 = vpop.f32.mrb[0].mxu0
        %v3236 = vadd.f32 0.0, %v3235
        %v3237 = vpop.f32.mrb[0].mxu0
        %3238 = vmatprep.mubr.f32.mxu0 0.0
        %3239 = vmatmul.mubr.f32.gmra.mrb[0].mxu0 %v3110
        %v3240 = vpop.f32.mrb[0].mxu0
        %v3241 = vadd.f32 0.0, %v3240
        %v3242 = vpop.f32.mrb[0].mxu0
        %3243 = vmatprep.mubr.f32.mxu0 0.0
        %3244 = vmatmul.mubr.f32.gmra.mrb[0].mxu0 %v3113
        %v3245 = vpop.f32.mrb[0].mxu0
        %v3246 = vadd.f32 0.0, %v3245
        %v3247 = vpop.f32.mrb[0].mxu0
        %3248 = vmatprep.mubr.f32.mxu0 0.0
        %3249 = vmatmul.mubr.f32.gmra.mrb[0].mxu0 %v3116
        %v3250 = vpop.f32.mrb[0].mxu0
        %v3251 = vadd.f32 0.0, %v3250
        %v3252 = vpop.f32.mrb[0].mxu0
        %3253 = vmatprep.mubr.f32.mxu0 0.0
        %3254 = vmatmul.mubr.f32.gmra.mrb[0].mxu0 %v3119
        %v3255 = vpop.f32.mrb[0].mxu0
        %v3256 = vadd.f32 0.0, %v3255
        %v3257 = vpop.f32.mrb[0].mxu0
        %3258 = vmatprep.mubr.f32.mxu0 0.0
        %3259 = vmatmul.mubr.f32.gmra.mrb[0].mxu0 %v3122
        %v3260 = vpop.f32.mrb[0].mxu0
        %v3261 = vadd.f32 0.0, %v3260
        %v3262 = vpop.f32.mrb[0].mxu0
        %3263 = vmatprep.mubr.f32.mxu0 0.0
        %3264 = vmatmul.mubr.f32.gmra.mrb[0].mxu0 %v3125
        %v3265 = vpop.f32.mrb[0].mxu0
        %v3266 = vadd.f32 0.0, %v3265
        %v3267 = vpop.f32.mrb[0].mxu0
        %3268 = vmatprep.mubr.f32.mxu0 0.0
        %3269 = vmatmul.mubr.f32.gmra.mrb[0].mxu0 %v3128
        %v3270 = vpop.f32.mrb[0].mxu0
        %v3271 = vadd.f32 0.0, %v3270
        %v3272 = vpop.f32.mrb[0].mxu0
        %3273 = vmatprep.mubr.f32.mxu0 0.0
        %3274 = vmatmul.mubr.f32.gmra.mrb[0].mxu0 %v3131
        %v3275 = vpop.f32.mrb[0].mxu0
        %v3276 = vadd.f32 0.0, %v3275
        %v3277 = vpop.f32.mrb[0].mxu0
        %3278 = vmatprep.mubr.f32.mxu0 0.0
        %3279 = vmatmul.mubr.f32.gmra.mrb[0].mxu0 %v3134
        %v3280 = vpop.f32.mrb[0].mxu0
        %v3281 = vadd.f32 0.0, %v3280
        %v3282 = vpop.f32.mrb[0].mxu0
        %3283 = vdwg.mxu0
        %3284 = vxpose.xlu0.b32.start [1/16] %v283, 128
        %3285 = vxpose.xlu0.b32.cont [2/16] 0.0, 128
        %3286 = vxpose.xlu0.b32.cont [3/16] 0.0, 128
        %3287 = vxpose.xlu0.b32.cont [4/16] 0.0, 128
        %3288 = vxpose.xlu0.b32.cont [5/16] 0.0, 128
        %3289 = vxpose.xlu0.b32.cont [6/16] 0.0, 128
        %3290 = vxpose.xlu0.b32.cont [7/16] 0.0, 128
        %3291 = vxpose.xlu0.b32.cont [8/16] 0.0, 128
        %3292 = vxpose.xlu0.b32.cont [9/16] 0.0, 128
        %3293 = vxpose.xlu0.b32.cont [10/16] 0.0, 128
        %3294 = vxpose.xlu0.b32.cont [11/16] 0.0, 128
        %3295 = vxpose.xlu0.b32.cont [12/16] 0.0, 128
        %3296 = vxpose.xlu0.b32.cont [13/16] 0.0, 128
        %3297 = vxpose.xlu0.b32.cont [14/16] 0.0, 128
        %3298 = vxpose.xlu0.b32.cont [15/16] 0.0, 128
        %3299 = vxpose.xlu0.b32.end [16/16] 0.0, 128
        %v3300 = vpop.trf.xlu0
        %v3301 = vpop.trf.xlu0
        %v3302 = vpop.trf.xlu0
        %v3303 = vpop.trf.xlu0
        %v3304 = vpop.trf.xlu0
        %v3305 = vpop.trf.xlu0
        %v3306 = vpop.trf.xlu0
        %v3307 = vpop.trf.xlu0
        %v3308 = vpop.trf.xlu0
        %v3309 = vpop.trf.xlu0
        %v3310 = vpop.trf.xlu0
        %v3311 = vpop.trf.xlu0
        %v3312 = vpop.trf.xlu0
        %v3313 = vpop.trf.xlu0
        %v3314 = vpop.trf.xlu0
        %v3315 = vpop.trf.xlu0
        %v3317 = vsel %vm350, %v3300, 0
        %v3320 = vsel %vm350, %v3301, 0
        %v3323 = vsel %vm350, %v3302, 0
        %v3326 = vsel %vm350, %v3303, 0
        %v3329 = vsel %vm350, %v3304, 0
        %v3332 = vsel %vm350, %v3305, 0
        %v3335 = vsel %vm350, %v3306, 0
        %v3338 = vsel %vm350, %v3307, 0
        %v3341 = vsel %vm350, %v3308, 0
        %v3344 = vsel %vm350, %v3309, 0
        %v3347 = vsel %vm350, %v3310, 0
        %v3350 = vsel %vm350, %v3311, 0
        %v3353 = vsel %vm350, %v3312, 0
        %v3356 = vsel %vm350, %v3313, 0
        %v3359 = vsel %vm350, %v3314, 0
        %v3362 = vsel %vm350, %v3315, 0
        %v3365 = vsel %vm399, %v299, 0
        %3367 = vmatprep.subr.mxu0 0.0
        %3368 = vmatpush1.msra.mxu0 %v3365
        %3369 = vmatprep.subr.mxu0 0.0
        %3370 = vmatpush1.msra.mxu0 0.0
        %3371 = vmatprep.subr.mxu0 0.0
        %3372 = vmatpush1.msra.mxu0 0.0
        %3373 = vmatprep.subr.mxu0 0.0
        %3374 = vmatpush1.msra.mxu0 0.0
        %3375 = vmatprep.subr.mxu0 0.0
        %3376 = vmatpush1.msra.mxu0 0.0
        %3377 = vmatprep.subr.mxu0 0.0
        %3378 = vmatpush1.msra.mxu0 0.0
        %3379 = vmatprep.subr.mxu0 0.0
        %3380 = vmatpush1.msra.mxu0 0.0
        %3381 = vmatprep.subr.mxu0 0.0
        %3382 = vmatpush1.msra.mxu0 0.0
        %3383 = vmatprep.subr.mxu0 0.0
        %3384 = vmatpush1.msra.mxu0 0.0
        %3385 = vmatprep.subr.mxu0 0.0
        %3386 = vmatpush1.msra.mxu0 0.0
        %3387 = vmatprep.subr.mxu0 0.0
        %3388 = vmatpush1.msra.mxu0 0.0
        %3389 = vmatprep.subr.mxu0 0.0
        %3390 = vmatpush1.msra.mxu0 0.0
        %3391 = vmatprep.subr.mxu0 0.0
        %3392 = vmatpush1.msra.mxu0 0.0
        %3393 = vmatprep.subr.mxu0 0.0
        %3394 = vmatpush1.msra.mxu0 0.0
        %3395 = vmatprep.subr.mxu0 0.0
        %3396 = vmatpush1.msra.mxu0 0.0
        %3397 = vmatprep.subr.mxu0 0.0
        %3398 = vmatpush1.msra.mxu0 0.0
        %3399 = vmatprep.subr.mxu0 0.0
        %3400 = vmatpush1.msra.mxu0 0.0
        %3401 = vmatprep.subr.mxu0 0.0
        %3402 = vmatpush1.msra.mxu0 0.0
        %3403 = vmatprep.subr.mxu0 0.0
        %3404 = vmatpush1.msra.mxu0 0.0
        %3405 = vmatprep.subr.mxu0 0.0
        %3406 = vmatpush1.msra.mxu0 0.0
        %3407 = vmatprep.subr.mxu0 0.0
        %3408 = vmatpush1.msra.mxu0 0.0
        %3409 = vmatprep.subr.mxu0 0.0
        %3410 = vmatpush1.msra.mxu0 0.0
        %3411 = vmatprep.subr.mxu0 0.0
        %3412 = vmatpush1.msra.mxu0 0.0
        %3413 = vmatprep.subr.mxu0 0.0
        %3414 = vmatpush1.msra.mxu0 0.0
        %3415 = vmatprep.subr.mxu0 0.0
        %3416 = vmatpush1.msra.mxu0 0.0
        %3417 = vmatprep.subr.mxu0 0.0
        %3418 = vmatpush1.msra.mxu0 0.0
        %3419 = vmatprep.subr.mxu0 0.0
        %3420 = vmatpush1.msra.mxu0 0.0
        %3421 = vmatprep.subr.mxu0 0.0
        %3422 = vmatpush1.msra.mxu0 0.0
        %3423 = vmatprep.subr.mxu0 0.0
        %3424 = vmatpush1.msra.mxu0 0.0
        %3425 = vmatprep.subr.mxu0 0.0
        %3426 = vmatpush1.msra.mxu0 0.0
        %3427 = vmatprep.subr.mxu0 0.0
        %3428 = vmatpush1.msra.mxu0 0.0
        %3429 = vmatprep.subr.mxu0 0.0
        %3430 = vmatpush1.msra.mxu0 0.0
        %3431 = vmatprep.mubr.f32.mxu0 0.0
        %3432 = vmatmul.mubr.f32.gmra.mrb[0].mxu0 %v3317
        %v3433 = vpop.f32.mrb[0].mxu0
        %v3434 = vadd.f32 0.0, %v3433
        %v3435 = vpop.f32.mrb[0].mxu0
        %3436 = vmatprep.mubr.f32.mxu0 0.0
        %3437 = vmatmul.mubr.f32.gmra.mrb[0].mxu0 %v3320
        %v3438 = vpop.f32.mrb[0].mxu0
        %v3439 = vadd.f32 0.0, %v3438
        %v3440 = vpop.f32.mrb[0].mxu0
        %3441 = vmatprep.mubr.f32.mxu0 0.0
        %3442 = vmatmul.mubr.f32.gmra.mrb[0].mxu0 %v3323
        %v3443 = vpop.f32.mrb[0].mxu0
        %v3444 = vadd.f32 0.0, %v3443
        %v3445 = vpop.f32.mrb[0].mxu0
        %3446 = vmatprep.mubr.f32.mxu0 0.0
        %3447 = vmatmul.mubr.f32.gmra.mrb[0].mxu0 %v3326
        %v3448 = vpop.f32.mrb[0].mxu0
        %v3449 = vadd.f32 0.0, %v3448
        %v3450 = vpop.f32.mrb[0].mxu0
        %3451 = vmatprep.mubr.f32.mxu0 0.0
        %3452 = vmatmul.mubr.f32.gmra.mrb[0].mxu0 %v3329
        %v3453 = vpop.f32.mrb[0].mxu0
        %v3454 = vadd.f32 0.0, %v3453
        %v3455 = vpop.f32.mrb[0].mxu0
        %3456 = vmatprep.mubr.f32.mxu0 0.0
        %3457 = vmatmul.mubr.f32.gmra.mrb[0].mxu0 %v3332
        %v3458 = vpop.f32.mrb[0].mxu0
        %v3459 = vadd.f32 0.0, %v3458
        %v3460 = vpop.f32.mrb[0].mxu0
        %3461 = vmatprep.mubr.f32.mxu0 0.0
        %3462 = vmatmul.mubr.f32.gmra.mrb[0].mxu0 %v3335
        %v3463 = vpop.f32.mrb[0].mxu0
        %v3464 = vadd.f32 0.0, %v3463
        %v3465 = vpop.f32.mrb[0].mxu0
        %3466 = vmatprep.mubr.f32.mxu0 0.0
        %3467 = vmatmul.mubr.f32.gmra.mrb[0].mxu0 %v3338
        %v3468 = vpop.f32.mrb[0].mxu0
        %v3469 = vadd.f32 0.0, %v3468
        %v3470 = vpop.f32.mrb[0].mxu0
        %3471 = vmatprep.mubr.f32.mxu0 0.0
        %3472 = vmatmul.mubr.f32.gmra.mrb[0].mxu0 %v3341
        %v3473 = vpop.f32.mrb[0].mxu0
        %v3474 = vadd.f32 0.0, %v3473
        %v3475 = vpop.f32.mrb[0].mxu0
        %3476 = vmatprep.mubr.f32.mxu0 0.0
        %3477 = vmatmul.mubr.f32.gmra.mrb[0].mxu0 %v3344
        %v3478 = vpop.f32.mrb[0].mxu0
        %v3479 = vadd.f32 0.0, %v3478
        %v3480 = vpop.f32.mrb[0].mxu0
        %3481 = vmatprep.mubr.f32.mxu0 0.0
        %3482 = vmatmul.mubr.f32.gmra.mrb[0].mxu0 %v3347
        %v3483 = vpop.f32.mrb[0].mxu0
        %v3484 = vadd.f32 0.0, %v3483
        %v3485 = vpop.f32.mrb[0].mxu0
        %3486 = vmatprep.mubr.f32.mxu0 0.0
        %3487 = vmatmul.mubr.f32.gmra.mrb[0].mxu0 %v3350
        %v3488 = vpop.f32.mrb[0].mxu0
        %v3489 = vadd.f32 0.0, %v3488
        %v3490 = vpop.f32.mrb[0].mxu0
        %3491 = vmatprep.mubr.f32.mxu0 0.0
        %3492 = vmatmul.mubr.f32.gmra.mrb[0].mxu0 %v3353
        %v3493 = vpop.f32.mrb[0].mxu0
        %v3494 = vadd.f32 0.0, %v3493
        %v3495 = vpop.f32.mrb[0].mxu0
        %3496 = vmatprep.mubr.f32.mxu0 0.0
        %3497 = vmatmul.mubr.f32.gmra.mrb[0].mxu0 %v3356
        %v3498 = vpop.f32.mrb[0].mxu0
        %v3499 = vadd.f32 0.0, %v3498
        %v3500 = vpop.f32.mrb[0].mxu0
        %3501 = vmatprep.mubr.f32.mxu0 0.0
        %3502 = vmatmul.mubr.f32.gmra.mrb[0].mxu0 %v3359
        %v3503 = vpop.f32.mrb[0].mxu0
        %v3504 = vadd.f32 0.0, %v3503
        %v3505 = vpop.f32.mrb[0].mxu0
        %3506 = vmatprep.mubr.f32.mxu0 0.0
        %3507 = vmatmul.mubr.f32.gmra.mrb[0].mxu0 %v3362
        %v3508 = vpop.f32.mrb[0].mxu0
        %v3509 = vadd.f32 0.0, %v3508
        %v3510 = vpop.f32.mrb[0].mxu0
        %3511 = vdwg.mxu0
        %3512 = vxpose.xlu0.b32.start [1/16] %v284, 128
        %3513 = vxpose.xlu0.b32.cont [2/16] 0.0, 128
        %3514 = vxpose.xlu0.b32.cont [3/16] 0.0, 128
        %3515 = vxpose.xlu0.b32.cont [4/16] 0.0, 128
        %3516 = vxpose.xlu0.b32.cont [5/16] 0.0, 128
        %3517 = vxpose.xlu0.b32.cont [6/16] 0.0, 128
        %3518 = vxpose.xlu0.b32.cont [7/16] 0.0, 128
        %3519 = vxpose.xlu0.b32.cont [8/16] 0.0, 128
        %3520 = vxpose.xlu0.b32.cont [9/16] 0.0, 128
        %3521 = vxpose.xlu0.b32.cont [10/16] 0.0, 128
        %3522 = vxpose.xlu0.b32.cont [11/16] 0.0, 128
        %3523 = vxpose.xlu0.b32.cont [12/16] 0.0, 128
        %3524 = vxpose.xlu0.b32.cont [13/16] 0.0, 128
        %3525 = vxpose.xlu0.b32.cont [14/16] 0.0, 128
        %3526 = vxpose.xlu0.b32.cont [15/16] 0.0, 128
        %3527 = vxpose.xlu0.b32.end [16/16] 0.0, 128
        %v3528 = vpop.trf.xlu0
        %v3529 = vpop.trf.xlu0
        %v3530 = vpop.trf.xlu0
        %v3531 = vpop.trf.xlu0
        %v3532 = vpop.trf.xlu0
        %v3533 = vpop.trf.xlu0
        %v3534 = vpop.trf.xlu0
        %v3535 = vpop.trf.xlu0
        %v3536 = vpop.trf.xlu0
        %v3537 = vpop.trf.xlu0
        %v3538 = vpop.trf.xlu0
        %v3539 = vpop.trf.xlu0
        %v3540 = vpop.trf.xlu0
        %v3541 = vpop.trf.xlu0
        %v3542 = vpop.trf.xlu0
        %v3543 = vpop.trf.xlu0
        %v3545 = vsel %vm350, %v3528, 0
        %v3548 = vsel %vm350, %v3529, 0
        %v3551 = vsel %vm350, %v3530, 0
        %v3554 = vsel %vm350, %v3531, 0
        %v3557 = vsel %vm350, %v3532, 0
        %v3560 = vsel %vm350, %v3533, 0
        %v3563 = vsel %vm350, %v3534, 0
        %v3566 = vsel %vm350, %v3535, 0
        %v3569 = vsel %vm350, %v3536, 0
        %v3572 = vsel %vm350, %v3537, 0
        %v3575 = vsel %vm350, %v3538, 0
        %v3578 = vsel %vm350, %v3539, 0
        %v3581 = vsel %vm350, %v3540, 0
        %v3584 = vsel %vm350, %v3541, 0
        %v3587 = vsel %vm350, %v3542, 0
        %v3590 = vsel %vm350, %v3543, 0
        %v3593 = vsel %vm399, %v300, 0
        %3595 = vmatprep.subr.mxu0 0.0
        %3596 = vmatpush1.msra.mxu0 %v3593
        %3597 = vmatprep.subr.mxu0 0.0
        %3598 = vmatpush1.msra.mxu0 0.0
        %3599 = vmatprep.subr.mxu0 0.0
        %3600 = vmatpush1.msra.mxu0 0.0
        %3601 = vmatprep.subr.mxu0 0.0
        %3602 = vmatpush1.msra.mxu0 0.0
        %3603 = vmatprep.subr.mxu0 0.0
        %3604 = vmatpush1.msra.mxu0 0.0
        %3605 = vmatprep.subr.mxu0 0.0
        %3606 = vmatpush1.msra.mxu0 0.0
        %3607 = vmatprep.subr.mxu0 0.0
        %3608 = vmatpush1.msra.mxu0 0.0
        %3609 = vmatprep.subr.mxu0 0.0
        %3610 = vmatpush1.msra.mxu0 0.0
        %3611 = vmatprep.subr.mxu0 0.0
        %3612 = vmatpush1.msra.mxu0 0.0
        %3613 = vmatprep.subr.mxu0 0.0
        %3614 = vmatpush1.msra.mxu0 0.0
        %3615 = vmatprep.subr.mxu0 0.0
        %3616 = vmatpush1.msra.mxu0 0.0
        %3617 = vmatprep.subr.mxu0 0.0
        %3618 = vmatpush1.msra.mxu0 0.0
        %3619 = vmatprep.subr.mxu0 0.0
        %3620 = vmatpush1.msra.mxu0 0.0
        %3621 = vmatprep.subr.mxu0 0.0
        %3622 = vmatpush1.msra.mxu0 0.0
        %3623 = vmatprep.subr.mxu0 0.0
        %3624 = vmatpush1.msra.mxu0 0.0
        %3625 = vmatprep.subr.mxu0 0.0
        %3626 = vmatpush1.msra.mxu0 0.0
        %3627 = vmatprep.subr.mxu0 0.0
        %3628 = vmatpush1.msra.mxu0 0.0
        %3629 = vmatprep.subr.mxu0 0.0
        %3630 = vmatpush1.msra.mxu0 0.0
        %3631 = vmatprep.subr.mxu0 0.0
        %3632 = vmatpush1.msra.mxu0 0.0
        %3633 = vmatprep.subr.mxu0 0.0
        %3634 = vmatpush1.msra.mxu0 0.0
        %3635 = vmatprep.subr.mxu0 0.0
        %3636 = vmatpush1.msra.mxu0 0.0
        %3637 = vmatprep.subr.mxu0 0.0
        %3638 = vmatpush1.msra.mxu0 0.0
        %3639 = vmatprep.subr.mxu0 0.0
        %3640 = vmatpush1.msra.mxu0 0.0
        %3641 = vmatprep.subr.mxu0 0.0
        %3642 = vmatpush1.msra.mxu0 0.0
        %3643 = vmatprep.subr.mxu0 0.0
        %3644 = vmatpush1.msra.mxu0 0.0
        %3645 = vmatprep.subr.mxu0 0.0
        %3646 = vmatpush1.msra.mxu0 0.0
        %3647 = vmatprep.subr.mxu0 0.0
        %3648 = vmatpush1.msra.mxu0 0.0
        %3649 = vmatprep.subr.mxu0 0.0
        %3650 = vmatpush1.msra.mxu0 0.0
        %3651 = vmatprep.subr.mxu0 0.0
        %3652 = vmatpush1.msra.mxu0 0.0
        %3653 = vmatprep.subr.mxu0 0.0
        %3654 = vmatpush1.msra.mxu0 0.0
        %3655 = vmatprep.subr.mxu0 0.0
        %3656 = vmatpush1.msra.mxu0 0.0
        %3657 = vmatprep.subr.mxu0 0.0
        %3658 = vmatpush1.msra.mxu0 0.0
        %3659 = vmatprep.mubr.f32.mxu0 0.0
        %3660 = vmatmul.mubr.f32.gmra.mrb[0].mxu0 %v3545
        %v3661 = vpop.f32.mrb[0].mxu0
        %v3662 = vadd.f32 0.0, %v3661
        %v3663 = vpop.f32.mrb[0].mxu0
        %3664 = vmatprep.mubr.f32.mxu0 0.0
        %3665 = vmatmul.mubr.f32.gmra.mrb[0].mxu0 %v3548
        %v3666 = vpop.f32.mrb[0].mxu0
        %v3667 = vadd.f32 0.0, %v3666
        %v3668 = vpop.f32.mrb[0].mxu0
        %3669 = vmatprep.mubr.f32.mxu0 0.0
        %3670 = vmatmul.mubr.f32.gmra.mrb[0].mxu0 %v3551
        %v3671 = vpop.f32.mrb[0].mxu0
        %v3672 = vadd.f32 0.0, %v3671
        %v3673 = vpop.f32.mrb[0].mxu0
        %3674 = vmatprep.mubr.f32.mxu0 0.0
        %3675 = vmatmul.mubr.f32.gmra.mrb[0].mxu0 %v3554
        %v3676 = vpop.f32.mrb[0].mxu0
        %v3677 = vadd.f32 0.0, %v3676
        %v3678 = vpop.f32.mrb[0].mxu0
        %3679 = vmatprep.mubr.f32.mxu0 0.0
        %3680 = vmatmul.mubr.f32.gmra.mrb[0].mxu0 %v3557
        %v3681 = vpop.f32.mrb[0].mxu0
        %v3682 = vadd.f32 0.0, %v3681
        %v3683 = vpop.f32.mrb[0].mxu0
        %3684 = vmatprep.mubr.f32.mxu0 0.0
        %3685 = vmatmul.mubr.f32.gmra.mrb[0].mxu0 %v3560
        %v3686 = vpop.f32.mrb[0].mxu0
        %v3687 = vadd.f32 0.0, %v3686
        %v3688 = vpop.f32.mrb[0].mxu0
        %3689 = vmatprep.mubr.f32.mxu0 0.0
        %3690 = vmatmul.mubr.f32.gmra.mrb[0].mxu0 %v3563
        %v3691 = vpop.f32.mrb[0].mxu0
        %v3692 = vadd.f32 0.0, %v3691
        %v3693 = vpop.f32.mrb[0].mxu0
        %3694 = vmatprep.mubr.f32.mxu0 0.0
        %3695 = vmatmul.mubr.f32.gmra.mrb[0].mxu0 %v3566
        %v3696 = vpop.f32.mrb[0].mxu0
        %v3697 = vadd.f32 0.0, %v3696
        %v3698 = vpop.f32.mrb[0].mxu0
        %3699 = vmatprep.mubr.f32.mxu0 0.0
        %3700 = vmatmul.mubr.f32.gmra.mrb[0].mxu0 %v3569
        %v3701 = vpop.f32.mrb[0].mxu0
        %v3702 = vadd.f32 0.0, %v3701
        %v3703 = vpop.f32.mrb[0].mxu0
        %3704 = vmatprep.mubr.f32.mxu0 0.0
        %3705 = vmatmul.mubr.f32.gmra.mrb[0].mxu0 %v3572
        %v3706 = vpop.f32.mrb[0].mxu0
        %v3707 = vadd.f32 0.0, %v3706
        %v3708 = vpop.f32.mrb[0].mxu0
        %3709 = vmatprep.mubr.f32.mxu0 0.0
        %3710 = vmatmul.mubr.f32.gmra.mrb[0].mxu0 %v3575
        %v3711 = vpop.f32.mrb[0].mxu0
        %v3712 = vadd.f32 0.0, %v3711
        %v3713 = vpop.f32.mrb[0].mxu0
        %3714 = vmatprep.mubr.f32.mxu0 0.0
        %3715 = vmatmul.mubr.f32.gmra.mrb[0].mxu0 %v3578
        %v3716 = vpop.f32.mrb[0].mxu0
        %v3717 = vadd.f32 0.0, %v3716
        %v3718 = vpop.f32.mrb[0].mxu0
        %3719 = vmatprep.mubr.f32.mxu0 0.0
        %3720 = vmatmul.mubr.f32.gmra.mrb[0].mxu0 %v3581
        %v3721 = vpop.f32.mrb[0].mxu0
        %v3722 = vadd.f32 0.0, %v3721
        %v3723 = vpop.f32.mrb[0].mxu0
        %3724 = vmatprep.mubr.f32.mxu0 0.0
        %3725 = vmatmul.mubr.f32.gmra.mrb[0].mxu0 %v3584
        %v3726 = vpop.f32.mrb[0].mxu0
        %v3727 = vadd.f32 0.0, %v3726
        %v3728 = vpop.f32.mrb[0].mxu0
        %3729 = vmatprep.mubr.f32.mxu0 0.0
        %3730 = vmatmul.mubr.f32.gmra.mrb[0].mxu0 %v3587
        %v3731 = vpop.f32.mrb[0].mxu0
        %v3732 = vadd.f32 0.0, %v3731
        %v3733 = vpop.f32.mrb[0].mxu0
        %3734 = vmatprep.mubr.f32.mxu0 0.0
        %3735 = vmatmul.mubr.f32.gmra.mrb[0].mxu0 %v3590
        %v3736 = vpop.f32.mrb[0].mxu0
        %v3737 = vadd.f32 0.0, %v3736
        %v3738 = vpop.f32.mrb[0].mxu0
        %3739 = vdwg.mxu0
        %3740 = vxpose.xlu0.b32.start [1/16] %v285, 128
        %3741 = vxpose.xlu0.b32.cont [2/16] 0.0, 128
        %3742 = vxpose.xlu0.b32.cont [3/16] 0.0, 128
        %3743 = vxpose.xlu0.b32.cont [4/16] 0.0, 128
        %3744 = vxpose.xlu0.b32.cont [5/16] 0.0, 128
        %3745 = vxpose.xlu0.b32.cont [6/16] 0.0, 128
        %3746 = vxpose.xlu0.b32.cont [7/16] 0.0, 128
        %3747 = vxpose.xlu0.b32.cont [8/16] 0.0, 128
        %3748 = vxpose.xlu0.b32.cont [9/16] 0.0, 128
        %3749 = vxpose.xlu0.b32.cont [10/16] 0.0, 128
        %3750 = vxpose.xlu0.b32.cont [11/16] 0.0, 128
        %3751 = vxpose.xlu0.b32.cont [12/16] 0.0, 128
        %3752 = vxpose.xlu0.b32.cont [13/16] 0.0, 128
        %3753 = vxpose.xlu0.b32.cont [14/16] 0.0, 128
        %3754 = vxpose.xlu0.b32.cont [15/16] 0.0, 128
        %3755 = vxpose.xlu0.b32.end [16/16] 0.0, 128
        %v3756 = vpop.trf.xlu0
        %v3757 = vpop.trf.xlu0
        %v3758 = vpop.trf.xlu0
        %v3759 = vpop.trf.xlu0
        %v3760 = vpop.trf.xlu0
        %v3761 = vpop.trf.xlu0
        %v3762 = vpop.trf.xlu0
        %v3763 = vpop.trf.xlu0
        %v3764 = vpop.trf.xlu0
        %v3765 = vpop.trf.xlu0
        %v3766 = vpop.trf.xlu0
        %v3767 = vpop.trf.xlu0
        %v3768 = vpop.trf.xlu0
        %v3769 = vpop.trf.xlu0
        %v3770 = vpop.trf.xlu0
        %v3771 = vpop.trf.xlu0
        %v3773 = vsel %vm350, %v3756, 0
        %v3776 = vsel %vm350, %v3757, 0
        %v3779 = vsel %vm350, %v3758, 0
        %v3782 = vsel %vm350, %v3759, 0
        %v3785 = vsel %vm350, %v3760, 0
        %v3788 = vsel %vm350, %v3761, 0
        %v3791 = vsel %vm350, %v3762, 0
        %v3794 = vsel %vm350, %v3763, 0
        %v3797 = vsel %vm350, %v3764, 0
        %v3800 = vsel %vm350, %v3765, 0
        %v3803 = vsel %vm350, %v3766, 0
        %v3806 = vsel %vm350, %v3767, 0
        %v3809 = vsel %vm350, %v3768, 0
        %v3812 = vsel %vm350, %v3769, 0
        %v3815 = vsel %vm350, %v3770, 0
        %v3818 = vsel %vm350, %v3771, 0
        %v3821 = vsel %vm399, %v301, 0
        %3823 = vmatprep.subr.mxu0 0.0
        %3824 = vmatpush1.msra.mxu0 %v3821
        %3825 = vmatprep.subr.mxu0 0.0
        %3826 = vmatpush1.msra.mxu0 0.0
        %3827 = vmatprep.subr.mxu0 0.0
        %3828 = vmatpush1.msra.mxu0 0.0
        %3829 = vmatprep.subr.mxu0 0.0
        %3830 = vmatpush1.msra.mxu0 0.0
        %3831 = vmatprep.subr.mxu0 0.0
        %3832 = vmatpush1.msra.mxu0 0.0
        %3833 = vmatprep.subr.mxu0 0.0
        %3834 = vmatpush1.msra.mxu0 0.0
        %3835 = vmatprep.subr.mxu0 0.0
        %3836 = vmatpush1.msra.mxu0 0.0
        %3837 = vmatprep.subr.mxu0 0.0
        %3838 = vmatpush1.msra.mxu0 0.0
        %3839 = vmatprep.subr.mxu0 0.0
        %3840 = vmatpush1.msra.mxu0 0.0
        %3841 = vmatprep.subr.mxu0 0.0
        %3842 = vmatpush1.msra.mxu0 0.0
        %3843 = vmatprep.subr.mxu0 0.0
        %3844 = vmatpush1.msra.mxu0 0.0
        %3845 = vmatprep.subr.mxu0 0.0
        %3846 = vmatpush1.msra.mxu0 0.0
        %3847 = vmatprep.subr.mxu0 0.0
        %3848 = vmatpush1.msra.mxu0 0.0
        %3849 = vmatprep.subr.mxu0 0.0
        %3850 = vmatpush1.msra.mxu0 0.0
        %3851 = vmatprep.subr.mxu0 0.0
        %3852 = vmatpush1.msra.mxu0 0.0
        %3853 = vmatprep.subr.mxu0 0.0
        %3854 = vmatpush1.msra.mxu0 0.0
        %3855 = vmatprep.subr.mxu0 0.0
        %3856 = vmatpush1.msra.mxu0 0.0
        %3857 = vmatprep.subr.mxu0 0.0
        %3858 = vmatpush1.msra.mxu0 0.0
        %3859 = vmatprep.subr.mxu0 0.0
        %3860 = vmatpush1.msra.mxu0 0.0
        %3861 = vmatprep.subr.mxu0 0.0
        %3862 = vmatpush1.msra.mxu0 0.0
        %3863 = vmatprep.subr.mxu0 0.0
        %3864 = vmatpush1.msra.mxu0 0.0
        %3865 = vmatprep.subr.mxu0 0.0
        %3866 = vmatpush1.msra.mxu0 0.0
        %3867 = vmatprep.subr.mxu0 0.0
        %3868 = vmatpush1.msra.mxu0 0.0
        %3869 = vmatprep.subr.mxu0 0.0
        %3870 = vmatpush1.msra.mxu0 0.0
        %3871 = vmatprep.subr.mxu0 0.0
        %3872 = vmatpush1.msra.mxu0 0.0
        %3873 = vmatprep.subr.mxu0 0.0
        %3874 = vmatpush1.msra.mxu0 0.0
        %3875 = vmatprep.subr.mxu0 0.0
        %3876 = vmatpush1.msra.mxu0 0.0
        %3877 = vmatprep.subr.mxu0 0.0
        %3878 = vmatpush1.msra.mxu0 0.0
        %3879 = vmatprep.subr.mxu0 0.0
        %3880 = vmatpush1.msra.mxu0 0.0
        %3881 = vmatprep.subr.mxu0 0.0
        %3882 = vmatpush1.msra.mxu0 0.0
        %3883 = vmatprep.subr.mxu0 0.0
        %3884 = vmatpush1.msra.mxu0 0.0
        %3885 = vmatprep.subr.mxu0 0.0
        %3886 = vmatpush1.msra.mxu0 0.0
        %3887 = vmatprep.mubr.f32.mxu0 0.0
        %3888 = vmatmul.mubr.f32.gmra.mrb[0].mxu0 %v3773
        %v3889 = vpop.f32.mrb[0].mxu0
        %v3890 = vadd.f32 0.0, %v3889
        %v3891 = vpop.f32.mrb[0].mxu0
        %3892 = vmatprep.mubr.f32.mxu0 0.0
        %3893 = vmatmul.mubr.f32.gmra.mrb[0].mxu0 %v3776
        %v3894 = vpop.f32.mrb[0].mxu0
        %v3895 = vadd.f32 0.0, %v3894
        %v3896 = vpop.f32.mrb[0].mxu0
        %3897 = vmatprep.mubr.f32.mxu0 0.0
        %3898 = vmatmul.mubr.f32.gmra.mrb[0].mxu0 %v3779
        %v3899 = vpop.f32.mrb[0].mxu0
        %v3900 = vadd.f32 0.0, %v3899
        %v3901 = vpop.f32.mrb[0].mxu0
        %3902 = vmatprep.mubr.f32.mxu0 0.0
        %3903 = vmatmul.mubr.f32.gmra.mrb[0].mxu0 %v3782
        %v3904 = vpop.f32.mrb[0].mxu0
        %v3905 = vadd.f32 0.0, %v3904
        %v3906 = vpop.f32.mrb[0].mxu0
        %3907 = vmatprep.mubr.f32.mxu0 0.0
        %3908 = vmatmul.mubr.f32.gmra.mrb[0].mxu0 %v3785
        %v3909 = vpop.f32.mrb[0].mxu0
        %v3910 = vadd.f32 0.0, %v3909
        %v3911 = vpop.f32.mrb[0].mxu0
        %3912 = vmatprep.mubr.f32.mxu0 0.0
        %3913 = vmatmul.mubr.f32.gmra.mrb[0].mxu0 %v3788
        %v3914 = vpop.f32.mrb[0].mxu0
        %v3915 = vadd.f32 0.0, %v3914
        %v3916 = vpop.f32.mrb[0].mxu0
        %3917 = vmatprep.mubr.f32.mxu0 0.0
        %3918 = vmatmul.mubr.f32.gmra.mrb[0].mxu0 %v3791
        %v3919 = vpop.f32.mrb[0].mxu0
        %v3920 = vadd.f32 0.0, %v3919
        %v3921 = vpop.f32.mrb[0].mxu0
        %3922 = vmatprep.mubr.f32.mxu0 0.0
        %3923 = vmatmul.mubr.f32.gmra.mrb[0].mxu0 %v3794
        %v3924 = vpop.f32.mrb[0].mxu0
        %v3925 = vadd.f32 0.0, %v3924
        %v3926 = vpop.f32.mrb[0].mxu0
        %3927 = vmatprep.mubr.f32.mxu0 0.0
        %3928 = vmatmul.mubr.f32.gmra.mrb[0].mxu0 %v3797
        %v3929 = vpop.f32.mrb[0].mxu0
        %v3930 = vadd.f32 0.0, %v3929
        %v3931 = vpop.f32.mrb[0].mxu0
        %3932 = vmatprep.mubr.f32.mxu0 0.0
        %3933 = vmatmul.mubr.f32.gmra.mrb[0].mxu0 %v3800
        %v3934 = vpop.f32.mrb[0].mxu0
        %v3935 = vadd.f32 0.0, %v3934
        %v3936 = vpop.f32.mrb[0].mxu0
        %3937 = vmatprep.mubr.f32.mxu0 0.0
        %3938 = vmatmul.mubr.f32.gmra.mrb[0].mxu0 %v3803
        %v3939 = vpop.f32.mrb[0].mxu0
        %v3940 = vadd.f32 0.0, %v3939
        %v3941 = vpop.f32.mrb[0].mxu0
        %3942 = vmatprep.mubr.f32.mxu0 0.0
        %3943 = vmatmul.mubr.f32.gmra.mrb[0].mxu0 %v3806
        %v3944 = vpop.f32.mrb[0].mxu0
        %v3945 = vadd.f32 0.0, %v3944
        %v3946 = vpop.f32.mrb[0].mxu0
        %3947 = vmatprep.mubr.f32.mxu0 0.0
        %3948 = vmatmul.mubr.f32.gmra.mrb[0].mxu0 %v3809
        %v3949 = vpop.f32.mrb[0].mxu0
        %v3950 = vadd.f32 0.0, %v3949
        %v3951 = vpop.f32.mrb[0].mxu0
        %3952 = vmatprep.mubr.f32.mxu0 0.0
        %3953 = vmatmul.mubr.f32.gmra.mrb[0].mxu0 %v3812
        %v3954 = vpop.f32.mrb[0].mxu0
        %v3955 = vadd.f32 0.0, %v3954
        %v3956 = vpop.f32.mrb[0].mxu0
        %3957 = vmatprep.mubr.f32.mxu0 0.0
        %3958 = vmatmul.mubr.f32.gmra.mrb[0].mxu0 %v3815
        %v3959 = vpop.f32.mrb[0].mxu0
        %v3960 = vadd.f32 0.0, %v3959
        %v3961 = vpop.f32.mrb[0].mxu0
        %3962 = vmatprep.mubr.f32.mxu0 0.0
        %3963 = vmatmul.mubr.f32.gmra.mrb[0].mxu0 %v3818
        %v3964 = vpop.f32.mrb[0].mxu0
        %v3965 = vadd.f32 0.0, %v3964
        %v3966 = vpop.f32.mrb[0].mxu0
        %3967 = vdwg.mxu0
        %v3968 = vmul.f32 %v470, 0.5
        %v3969 = vmul.f32 %v475, 0.5
        %v3970 = vmul.f32 %v480, 0.5
        %v3971 = vmul.f32 %v485, 0.5
        %v3972 = vmul.f32 %v490, 0.5
        %v3973 = vmul.f32 %v495, 0.5
        %v3974 = vmul.f32 %v500, 0.5
        %v3975 = vmul.f32 %v505, 0.5
        %v3976 = vmul.f32 %v510, 0.5
        %v3977 = vmul.f32 %v515, 0.5
        %v3978 = vmul.f32 %v520, 0.5
        %v3979 = vmul.f32 %v525, 0.5
        %v3980 = vmul.f32 %v530, 0.5
        %v3981 = vmul.f32 %v535, 0.5
        %v3982 = vmul.f32 %v540, 0.5
        %v3983 = vmul.f32 %v545, 0.5
        %v3984 = vmul.f32 %v698, 0.5
        %v3985 = vmul.f32 %v703, 0.5
        %v3986 = vmul.f32 %v708, 0.5
        %v3987 = vmul.f32 %v713, 0.5
        %v3988 = vmul.f32 %v718, 0.5
        %v3989 = vmul.f32 %v723, 0.5
        %v3990 = vmul.f32 %v728, 0.5
        %v3991 = vmul.f32 %v733, 0.5
        %v3992 = vmul.f32 %v738, 0.5
        %v3993 = vmul.f32 %v743, 0.5
        %v3994 = vmul.f32 %v748, 0.5
        %v3995 = vmul.f32 %v753, 0.5
        %v3996 = vmul.f32 %v758, 0.5
        %v3997 = vmul.f32 %v763, 0.5
        %v3998 = vmul.f32 %v768, 0.5
        %v3999 = vmul.f32 %v773, 0.5
        %v4000 = vmul.f32 %v926, 0.5
        %v4001 = vmul.f32 %v931, 0.5
        %v4002 = vmul.f32 %v936, 0.5
        %v4003 = vmul.f32 %v941, 0.5
        %v4004 = vmul.f32 %v946, 0.5
        %v4005 = vmul.f32 %v951, 0.5
        %v4006 = vmul.f32 %v956, 0.5
        %v4007 = vmul.f32 %v961, 0.5
        %v4008 = vmul.f32 %v966, 0.5
        %v4009 = vmul.f32 %v971, 0.5
        %v4010 = vmul.f32 %v976, 0.5
        %v4011 = vmul.f32 %v981, 0.5
        %v4012 = vmul.f32 %v986, 0.5
        %v4013 = vmul.f32 %v991, 0.5
        %v4014 = vmul.f32 %v996, 0.5
        %v4015 = vmul.f32 %v1001, 0.5
        %v4016 = vmul.f32 %v1154, 0.5
        %v4017 = vmul.f32 %v1159, 0.5
        %v4018 = vmul.f32 %v1164, 0.5
        %v4019 = vmul.f32 %v1169, 0.5
        %v4020 = vmul.f32 %v1174, 0.5
        %v4021 = vmul.f32 %v1179, 0.5
        %v4022 = vmul.f32 %v1184, 0.5
        %v4023 = vmul.f32 %v1189, 0.5
        %v4024 = vmul.f32 %v1194, 0.5
        %v4025 = vmul.f32 %v1199, 0.5
        %v4026 = vmul.f32 %v1204, 0.5
        %v4027 = vmul.f32 %v1209, 0.5
        %v4028 = vmul.f32 %v1214, 0.5
        %v4029 = vmul.f32 %v1219, 0.5
        %v4030 = vmul.f32 %v1224, 0.5
        %v4031 = vmul.f32 %v1229, 0.5
        %v4032 = vmul.f32 %v1382, 0.5
        %v4033 = vmul.f32 %v1387, 0.5
        %v4034 = vmul.f32 %v1392, 0.5
        %v4035 = vmul.f32 %v1397, 0.5
        %v4036 = vmul.f32 %v1402, 0.5
        %v4037 = vmul.f32 %v1407, 0.5
        %v4038 = vmul.f32 %v1412, 0.5
        %v4039 = vmul.f32 %v1417, 0.5
        %v4040 = vmul.f32 %v1422, 0.5
        %v4041 = vmul.f32 %v1427, 0.5
        %v4042 = vmul.f32 %v1432, 0.5
        %v4043 = vmul.f32 %v1437, 0.5
        %v4044 = vmul.f32 %v1442, 0.5
        %v4045 = vmul.f32 %v1447, 0.5
        %v4046 = vmul.f32 %v1452, 0.5
        %v4047 = vmul.f32 %v1457, 0.5
        %v4048 = vmul.f32 %v1610, 0.5
        %v4049 = vmul.f32 %v1615, 0.5
        %v4050 = vmul.f32 %v1620, 0.5
        %v4051 = vmul.f32 %v1625, 0.5
        %v4052 = vmul.f32 %v1630, 0.5
        %v4053 = vmul.f32 %v1635, 0.5
        %v4054 = vmul.f32 %v1640, 0.5
        %v4055 = vmul.f32 %v1645, 0.5
        %v4056 = vmul.f32 %v1650, 0.5
        %v4057 = vmul.f32 %v1655, 0.5
        %v4058 = vmul.f32 %v1660, 0.5
        %v4059 = vmul.f32 %v1665, 0.5
        %v4060 = vmul.f32 %v1670, 0.5
        %v4061 = vmul.f32 %v1675, 0.5
        %v4062 = vmul.f32 %v1680, 0.5
        %v4063 = vmul.f32 %v1685, 0.5
        %v4064 = vmul.f32 %v1838, 0.5
        %v4065 = vmul.f32 %v1843, 0.5
        %v4066 = vmul.f32 %v1848, 0.5
        %v4067 = vmul.f32 %v1853, 0.5
        %v4068 = vmul.f32 %v1858, 0.5
        %v4069 = vmul.f32 %v1863, 0.5
        %v4070 = vmul.f32 %v1868, 0.5
        %v4071 = vmul.f32 %v1873, 0.5
        %v4072 = vmul.f32 %v1878, 0.5
        %v4073 = vmul.f32 %v1883, 0.5
        %v4074 = vmul.f32 %v1888, 0.5
        %v4075 = vmul.f32 %v1893, 0.5
        %v4076 = vmul.f32 %v1898, 0.5
        %v4077 = vmul.f32 %v1903, 0.5
        %v4078 = vmul.f32 %v1908, 0.5
        %v4079 = vmul.f32 %v1913, 0.5
        %v4080 = vmul.f32 %v2066, 0.5
        %v4081 = vmul.f32 %v2071, 0.5
        %v4082 = vmul.f32 %v2076, 0.5
        %v4083 = vmul.f32 %v2081, 0.5
        %v4084 = vmul.f32 %v2086, 0.5
        %v4085 = vmul.f32 %v2091, 0.5
        %v4086 = vmul.f32 %v2096, 0.5
        %v4087 = vmul.f32 %v2101, 0.5
        %v4088 = vmul.f32 %v2106, 0.5
        %v4089 = vmul.f32 %v2111, 0.5
        %v4090 = vmul.f32 %v2116, 0.5
        %v4091 = vmul.f32 %v2121, 0.5
        %v4092 = vmul.f32 %v2126, 0.5
        %v4093 = vmul.f32 %v2131, 0.5
        %v4094 = vmul.f32 %v2136, 0.5
        %v4095 = vmul.f32 %v2141, 0.5
        %v4096 = vmul.f32 %v2294, 0.5
        %v4097 = vmul.f32 %v2299, 0.5
        %v4098 = vmul.f32 %v2304, 0.5
        %v4099 = vmul.f32 %v2309, 0.5
        %v4100 = vmul.f32 %v2314, 0.5
        %v4101 = vmul.f32 %v2319, 0.5
        %v4102 = vmul.f32 %v2324, 0.5
        %v4103 = vmul.f32 %v2329, 0.5
        %v4104 = vmul.f32 %v2334, 0.5
        %v4105 = vmul.f32 %v2339, 0.5
        %v4106 = vmul.f32 %v2344, 0.5
        %v4107 = vmul.f32 %v2349, 0.5
        %v4108 = vmul.f32 %v2354, 0.5
        %v4109 = vmul.f32 %v2359, 0.5
        %v4110 = vmul.f32 %v2364, 0.5
        %v4111 = vmul.f32 %v2369, 0.5
        %v4112 = vmul.f32 %v2522, 0.5
        %v4113 = vmul.f32 %v2527, 0.5
        %v4114 = vmul.f32 %v2532, 0.5
        %v4115 = vmul.f32 %v2537, 0.5
        %v4116 = vmul.f32 %v2542, 0.5
        %v4117 = vmul.f32 %v2547, 0.5
        %v4118 = vmul.f32 %v2552, 0.5
        %v4119 = vmul.f32 %v2557, 0.5
        %v4120 = vmul.f32 %v2562, 0.5
        %v4121 = vmul.f32 %v2567, 0.5
        %v4122 = vmul.f32 %v2572, 0.5
        %v4123 = vmul.f32 %v2577, 0.5
        %v4124 = vmul.f32 %v2582, 0.5
        %v4125 = vmul.f32 %v2587, 0.5
        %v4126 = vmul.f32 %v2592, 0.5
        %v4127 = vmul.f32 %v2597, 0.5
        %v4128 = vmul.f32 %v2750, 0.5
        %v4129 = vmul.f32 %v2755, 0.5
        %v4130 = vmul.f32 %v2760, 0.5
        %v4131 = vmul.f32 %v2765, 0.5
        %v4132 = vmul.f32 %v2770, 0.5
        %v4133 = vmul.f32 %v2775, 0.5
        %v4134 = vmul.f32 %v2780, 0.5
        %v4135 = vmul.f32 %v2785, 0.5
        %v4136 = vmul.f32 %v2790, 0.5
        %v4137 = vmul.f32 %v2795, 0.5
        %v4138 = vmul.f32 %v2800, 0.5
        %v4139 = vmul.f32 %v2805, 0.5
        %v4140 = vmul.f32 %v2810, 0.5
        %v4141 = vmul.f32 %v2815, 0.5
        %v4142 = vmul.f32 %v2820, 0.5
        %v4143 = vmul.f32 %v2825, 0.5
        %v4144 = vmul.f32 %v2978, 0.5
        %v4145 = vmul.f32 %v2983, 0.5
        %v4146 = vmul.f32 %v2988, 0.5
        %v4147 = vmul.f32 %v2993, 0.5
        %v4148 = vmul.f32 %v2998, 0.5
        %v4149 = vmul.f32 %v3003, 0.5
        %v4150 = vmul.f32 %v3008, 0.5
        %v4151 = vmul.f32 %v3013, 0.5
        %v4152 = vmul.f32 %v3018, 0.5
        %v4153 = vmul.f32 %v3023, 0.5
        %v4154 = vmul.f32 %v3028, 0.5
        %v4155 = vmul.f32 %v3033, 0.5
        %v4156 = vmul.f32 %v3038, 0.5
        %v4157 = vmul.f32 %v3043, 0.5
        %v4158 = vmul.f32 %v3048, 0.5
        %v4159 = vmul.f32 %v3053, 0.5
        %v4160 = vmul.f32 %v3206, 0.5
        %v4161 = vmul.f32 %v3211, 0.5
        %v4162 = vmul.f32 %v3216, 0.5
        %v4163 = vmul.f32 %v3221, 0.5
        %v4164 = vmul.f32 %v3226, 0.5
        %v4165 = vmul.f32 %v3231, 0.5
        %v4166 = vmul.f32 %v3236, 0.5
        %v4167 = vmul.f32 %v3241, 0.5
        %v4168 = vmul.f32 %v3246, 0.5
        %v4169 = vmul.f32 %v3251, 0.5
        %v4170 = vmul.f32 %v3256, 0.5
        %v4171 = vmul.f32 %v3261, 0.5
        %v4172 = vmul.f32 %v3266, 0.5
        %v4173 = vmul.f32 %v3271, 0.5
        %v4174 = vmul.f32 %v3276, 0.5
        %v4175 = vmul.f32 %v3281, 0.5
        %v4176 = vmul.f32 %v3434, 0.5
        %v4177 = vmul.f32 %v3439, 0.5
        %v4178 = vmul.f32 %v3444, 0.5
        %v4179 = vmul.f32 %v3449, 0.5
        %v4180 = vmul.f32 %v3454, 0.5
        %v4181 = vmul.f32 %v3459, 0.5
        %v4182 = vmul.f32 %v3464, 0.5
        %v4183 = vmul.f32 %v3469, 0.5
        %v4184 = vmul.f32 %v3474, 0.5
        %v4185 = vmul.f32 %v3479, 0.5
        %v4186 = vmul.f32 %v3484, 0.5
        %v4187 = vmul.f32 %v3489, 0.5
        %v4188 = vmul.f32 %v3494, 0.5
        %v4189 = vmul.f32 %v3499, 0.5
        %v4190 = vmul.f32 %v3504, 0.5
        %v4191 = vmul.f32 %v3509, 0.5
        %v4192 = vmul.f32 %v3662, 0.5
        %v4193 = vmul.f32 %v3667, 0.5
        %v4194 = vmul.f32 %v3672, 0.5
        %v4195 = vmul.f32 %v3677, 0.5
        %v4196 = vmul.f32 %v3682, 0.5
        %v4197 = vmul.f32 %v3687, 0.5
        %v4198 = vmul.f32 %v3692, 0.5
        %v4199 = vmul.f32 %v3697, 0.5
        %v4200 = vmul.f32 %v3702, 0.5
        %v4201 = vmul.f32 %v3707, 0.5
        %v4202 = vmul.f32 %v3712, 0.5
        %v4203 = vmul.f32 %v3717, 0.5
        %v4204 = vmul.f32 %v3722, 0.5
        %v4205 = vmul.f32 %v3727, 0.5
        %v4206 = vmul.f32 %v3732, 0.5
        %v4207 = vmul.f32 %v3737, 0.5
        %v4208 = vmul.f32 %v3890, 0.5
        %v4209 = vmul.f32 %v3895, 0.5
        %v4210 = vmul.f32 %v3900, 0.5
        %v4211 = vmul.f32 %v3905, 0.5
        %v4212 = vmul.f32 %v3910, 0.5
        %v4213 = vmul.f32 %v3915, 0.5
        %v4214 = vmul.f32 %v3920, 0.5
        %v4215 = vmul.f32 %v3925, 0.5
        %v4216 = vmul.f32 %v3930, 0.5
        %v4217 = vmul.f32 %v3935, 0.5
        %v4218 = vmul.f32 %v3940, 0.5
        %v4219 = vmul.f32 %v3945, 0.5
        %v4220 = vmul.f32 %v3950, 0.5
        %v4221 = vmul.f32 %v3955, 0.5
        %v4222 = vmul.f32 %v3960, 0.5
        %v4223 = vmul.f32 %v3965, 0.5
        %4224 = vmax.xlane.f32.xlu0 %v3968
        %v4225 = vpop.xlane.xlu0 %4224
        %4226 = vmax.xlane.f32.xlu0 %v3969
        %v4227 = vpop.xlane.xlu0 %4226
        %4228 = vmax.xlane.f32.xlu0 %v3970
        %v4229 = vpop.xlane.xlu0 %4228
        %4230 = vmax.xlane.f32.xlu0 %v3971
        %v4231 = vpop.xlane.xlu0 %4230
        %4232 = vmax.xlane.f32.xlu0 %v3972
        %v4233 = vpop.xlane.xlu0 %4232
        %4234 = vmax.xlane.f32.xlu0 %v3973
        %v4235 = vpop.xlane.xlu0 %4234
        %4236 = vmax.xlane.f32.xlu0 %v3974
        %v4237 = vpop.xlane.xlu0 %4236
        %4238 = vmax.xlane.f32.xlu0 %v3975
        %v4239 = vpop.xlane.xlu0 %4238
        %4240 = vmax.xlane.f32.xlu0 %v3976
        %v4241 = vpop.xlane.xlu0 %4240
        %4242 = vmax.xlane.f32.xlu0 %v3977
        %v4243 = vpop.xlane.xlu0 %4242
        %4244 = vmax.xlane.f32.xlu0 %v3978
        %v4245 = vpop.xlane.xlu0 %4244
        %4246 = vmax.xlane.f32.xlu0 %v3979
        %v4247 = vpop.xlane.xlu0 %4246
        %4248 = vmax.xlane.f32.xlu0 %v3980
        %v4249 = vpop.xlane.xlu0 %4248
        %4250 = vmax.xlane.f32.xlu0 %v3981
        %v4251 = vpop.xlane.xlu0 %4250
        %4252 = vmax.xlane.f32.xlu0 %v3982
        %v4253 = vpop.xlane.xlu0 %4252
        %4254 = vmax.xlane.f32.xlu0 %v3983
        %v4255 = vpop.xlane.xlu0 %4254
        %4256 = vmax.xlane.f32.xlu0 %v3984
        %v4257 = vpop.xlane.xlu0 %4256
        %4258 = vmax.xlane.f32.xlu0 %v3985
        %v4259 = vpop.xlane.xlu0 %4258
        %4260 = vmax.xlane.f32.xlu0 %v3986
        %v4261 = vpop.xlane.xlu0 %4260
        %4262 = vmax.xlane.f32.xlu0 %v3987
        %v4263 = vpop.xlane.xlu0 %4262
        %4264 = vmax.xlane.f32.xlu0 %v3988
        %v4265 = vpop.xlane.xlu0 %4264
        %4266 = vmax.xlane.f32.xlu0 %v3989
        %v4267 = vpop.xlane.xlu0 %4266
        %4268 = vmax.xlane.f32.xlu0 %v3990
        %v4269 = vpop.xlane.xlu0 %4268
        %4270 = vmax.xlane.f32.xlu0 %v3991
        %v4271 = vpop.xlane.xlu0 %4270
        %4272 = vmax.xlane.f32.xlu0 %v3992
        %v4273 = vpop.xlane.xlu0 %4272
        %4274 = vmax.xlane.f32.xlu0 %v3993
        %v4275 = vpop.xlane.xlu0 %4274
        %4276 = vmax.xlane.f32.xlu0 %v3994
        %v4277 = vpop.xlane.xlu0 %4276
        %4278 = vmax.xlane.f32.xlu0 %v3995
        %v4279 = vpop.xlane.xlu0 %4278
        %4280 = vmax.xlane.f32.xlu0 %v3996
        %v4281 = vpop.xlane.xlu0 %4280
        %4282 = vmax.xlane.f32.xlu0 %v3997
        %v4283 = vpop.xlane.xlu0 %4282
        %4284 = vmax.xlane.f32.xlu0 %v3998
        %v4285 = vpop.xlane.xlu0 %4284
        %4286 = vmax.xlane.f32.xlu0 %v3999
        %v4287 = vpop.xlane.xlu0 %4286
        %4288 = vmax.xlane.f32.xlu0 %v4000
        %v4289 = vpop.xlane.xlu0 %4288
        %4290 = vmax.xlane.f32.xlu0 %v4001
        %v4291 = vpop.xlane.xlu0 %4290
        %4292 = vmax.xlane.f32.xlu0 %v4002
        %v4293 = vpop.xlane.xlu0 %4292
        %4294 = vmax.xlane.f32.xlu0 %v4003
        %v4295 = vpop.xlane.xlu0 %4294
        %4296 = vmax.xlane.f32.xlu0 %v4004
        %v4297 = vpop.xlane.xlu0 %4296
        %4298 = vmax.xlane.f32.xlu0 %v4005
        %v4299 = vpop.xlane.xlu0 %4298
        %4300 = vmax.xlane.f32.xlu0 %v4006
        %v4301 = vpop.xlane.xlu0 %4300
        %4302 = vmax.xlane.f32.xlu0 %v4007
        %v4303 = vpop.xlane.xlu0 %4302
        %4304 = vmax.xlane.f32.xlu0 %v4008
        %v4305 = vpop.xlane.xlu0 %4304
        %4306 = vmax.xlane.f32.xlu0 %v4009
        %v4307 = vpop.xlane.xlu0 %4306
        %4308 = vmax.xlane.f32.xlu0 %v4010
        %v4309 = vpop.xlane.xlu0 %4308
        %4310 = vmax.xlane.f32.xlu0 %v4011
        %v4311 = vpop.xlane.xlu0 %4310
        %4312 = vmax.xlane.f32.xlu0 %v4012
        %v4313 = vpop.xlane.xlu0 %4312
        %4314 = vmax.xlane.f32.xlu0 %v4013
        %v4315 = vpop.xlane.xlu0 %4314
        %4316 = vmax.xlane.f32.xlu0 %v4014
        %v4317 = vpop.xlane.xlu0 %4316
        %4318 = vmax.xlane.f32.xlu0 %v4015
        %v4319 = vpop.xlane.xlu0 %4318
        %4320 = vmax.xlane.f32.xlu0 %v4016
        %v4321 = vpop.xlane.xlu0 %4320
        %4322 = vmax.xlane.f32.xlu0 %v4017
        %v4323 = vpop.xlane.xlu0 %4322
        %4324 = vmax.xlane.f32.xlu0 %v4018
        %v4325 = vpop.xlane.xlu0 %4324
        %4326 = vmax.xlane.f32.xlu0 %v4019
        %v4327 = vpop.xlane.xlu0 %4326
        %4328 = vmax.xlane.f32.xlu0 %v4020
        %v4329 = vpop.xlane.xlu0 %4328
        %4330 = vmax.xlane.f32.xlu0 %v4021
        %v4331 = vpop.xlane.xlu0 %4330
        %4332 = vmax.xlane.f32.xlu0 %v4022
        %v4333 = vpop.xlane.xlu0 %4332
        %4334 = vmax.xlane.f32.xlu0 %v4023
        %v4335 = vpop.xlane.xlu0 %4334
        %4336 = vmax.xlane.f32.xlu0 %v4024
        %v4337 = vpop.xlane.xlu0 %4336
        %4338 = vmax.xlane.f32.xlu0 %v4025
        %v4339 = vpop.xlane.xlu0 %4338
        %4340 = vmax.xlane.f32.xlu0 %v4026
        %v4341 = vpop.xlane.xlu0 %4340
        %4342 = vmax.xlane.f32.xlu0 %v4027
        %v4343 = vpop.xlane.xlu0 %4342
        %4344 = vmax.xlane.f32.xlu0 %v4028
        %v4345 = vpop.xlane.xlu0 %4344
        %4346 = vmax.xlane.f32.xlu0 %v4029
        %v4347 = vpop.xlane.xlu0 %4346
        %4348 = vmax.xlane.f32.xlu0 %v4030
        %v4349 = vpop.xlane.xlu0 %4348
        %4350 = vmax.xlane.f32.xlu0 %v4031
        %v4351 = vpop.xlane.xlu0 %4350
        %4352 = vmax.xlane.f32.xlu0 %v4032
        %v4353 = vpop.xlane.xlu0 %4352
        %4354 = vmax.xlane.f32.xlu0 %v4033
        %v4355 = vpop.xlane.xlu0 %4354
        %4356 = vmax.xlane.f32.xlu0 %v4034
        %v4357 = vpop.xlane.xlu0 %4356
        %4358 = vmax.xlane.f32.xlu0 %v4035
        %v4359 = vpop.xlane.xlu0 %4358
        %4360 = vmax.xlane.f32.xlu0 %v4036
        %v4361 = vpop.xlane.xlu0 %4360
        %4362 = vmax.xlane.f32.xlu0 %v4037
        %v4363 = vpop.xlane.xlu0 %4362
        %4364 = vmax.xlane.f32.xlu0 %v4038
        %v4365 = vpop.xlane.xlu0 %4364
        %4366 = vmax.xlane.f32.xlu0 %v4039
        %v4367 = vpop.xlane.xlu0 %4366
        %4368 = vmax.xlane.f32.xlu0 %v4040
        %v4369 = vpop.xlane.xlu0 %4368
        %4370 = vmax.xlane.f32.xlu0 %v4041
        %v4371 = vpop.xlane.xlu0 %4370
        %4372 = vmax.xlane.f32.xlu0 %v4042
        %v4373 = vpop.xlane.xlu0 %4372
        %4374 = vmax.xlane.f32.xlu0 %v4043
        %v4375 = vpop.xlane.xlu0 %4374
        %4376 = vmax.xlane.f32.xlu0 %v4044
        %v4377 = vpop.xlane.xlu0 %4376
        %4378 = vmax.xlane.f32.xlu0 %v4045
        %v4379 = vpop.xlane.xlu0 %4378
        %4380 = vmax.xlane.f32.xlu0 %v4046
        %v4381 = vpop.xlane.xlu0 %4380
        %4382 = vmax.xlane.f32.xlu0 %v4047
        %v4383 = vpop.xlane.xlu0 %4382
        %4384 = vmax.xlane.f32.xlu0 %v4048
        %v4385 = vpop.xlane.xlu0 %4384
        %4386 = vmax.xlane.f32.xlu0 %v4049
        %v4387 = vpop.xlane.xlu0 %4386
        %4388 = vmax.xlane.f32.xlu0 %v4050
        %v4389 = vpop.xlane.xlu0 %4388
        %4390 = vmax.xlane.f32.xlu0 %v4051
        %v4391 = vpop.xlane.xlu0 %4390
        %4392 = vmax.xlane.f32.xlu0 %v4052
        %v4393 = vpop.xlane.xlu0 %4392
        %4394 = vmax.xlane.f32.xlu0 %v4053
        %v4395 = vpop.xlane.xlu0 %4394
        %4396 = vmax.xlane.f32.xlu0 %v4054
        %v4397 = vpop.xlane.xlu0 %4396
        %4398 = vmax.xlane.f32.xlu0 %v4055
        %v4399 = vpop.xlane.xlu0 %4398
        %4400 = vmax.xlane.f32.xlu0 %v4056
        %v4401 = vpop.xlane.xlu0 %4400
        %4402 = vmax.xlane.f32.xlu0 %v4057
        %v4403 = vpop.xlane.xlu0 %4402
        %4404 = vmax.xlane.f32.xlu0 %v4058
        %v4405 = vpop.xlane.xlu0 %4404
        %4406 = vmax.xlane.f32.xlu0 %v4059
        %v4407 = vpop.xlane.xlu0 %4406
        %4408 = vmax.xlane.f32.xlu0 %v4060
        %v4409 = vpop.xlane.xlu0 %4408
        %4410 = vmax.xlane.f32.xlu0 %v4061
        %v4411 = vpop.xlane.xlu0 %4410
        %4412 = vmax.xlane.f32.xlu0 %v4062
        %v4413 = vpop.xlane.xlu0 %4412
        %4414 = vmax.xlane.f32.xlu0 %v4063
        %v4415 = vpop.xlane.xlu0 %4414
        %4416 = vmax.xlane.f32.xlu0 %v4064
        %v4417 = vpop.xlane.xlu0 %4416
        %4418 = vmax.xlane.f32.xlu0 %v4065
        %v4419 = vpop.xlane.xlu0 %4418
        %4420 = vmax.xlane.f32.xlu0 %v4066
        %v4421 = vpop.xlane.xlu0 %4420
        %4422 = vmax.xlane.f32.xlu0 %v4067
        %v4423 = vpop.xlane.xlu0 %4422
        %4424 = vmax.xlane.f32.xlu0 %v4068
        %v4425 = vpop.xlane.xlu0 %4424
        %4426 = vmax.xlane.f32.xlu0 %v4069
        %v4427 = vpop.xlane.xlu0 %4426
        %4428 = vmax.xlane.f32.xlu0 %v4070
        %v4429 = vpop.xlane.xlu0 %4428
        %4430 = vmax.xlane.f32.xlu0 %v4071
        %v4431 = vpop.xlane.xlu0 %4430
        %4432 = vmax.xlane.f32.xlu0 %v4072
        %v4433 = vpop.xlane.xlu0 %4432
        %4434 = vmax.xlane.f32.xlu0 %v4073
        %v4435 = vpop.xlane.xlu0 %4434
        %4436 = vmax.xlane.f32.xlu0 %v4074
        %v4437 = vpop.xlane.xlu0 %4436
        %4438 = vmax.xlane.f32.xlu0 %v4075
        %v4439 = vpop.xlane.xlu0 %4438
        %4440 = vmax.xlane.f32.xlu0 %v4076
        %v4441 = vpop.xlane.xlu0 %4440
        %4442 = vmax.xlane.f32.xlu0 %v4077
        %v4443 = vpop.xlane.xlu0 %4442
        %4444 = vmax.xlane.f32.xlu0 %v4078
        %v4445 = vpop.xlane.xlu0 %4444
        %4446 = vmax.xlane.f32.xlu0 %v4079
        %v4447 = vpop.xlane.xlu0 %4446
        %4448 = vmax.xlane.f32.xlu0 %v4080
        %v4449 = vpop.xlane.xlu0 %4448
        %4450 = vmax.xlane.f32.xlu0 %v4081
        %v4451 = vpop.xlane.xlu0 %4450
        %4452 = vmax.xlane.f32.xlu0 %v4082
        %v4453 = vpop.xlane.xlu0 %4452
        %4454 = vmax.xlane.f32.xlu0 %v4083
        %v4455 = vpop.xlane.xlu0 %4454
        %4456 = vmax.xlane.f32.xlu0 %v4084
        %v4457 = vpop.xlane.xlu0 %4456
        %4458 = vmax.xlane.f32.xlu0 %v4085
        %v4459 = vpop.xlane.xlu0 %4458
        %4460 = vmax.xlane.f32.xlu0 %v4086
        %v4461 = vpop.xlane.xlu0 %4460
        %4462 = vmax.xlane.f32.xlu0 %v4087
        %v4463 = vpop.xlane.xlu0 %4462
        %4464 = vmax.xlane.f32.xlu0 %v4088
        %v4465 = vpop.xlane.xlu0 %4464
        %4466 = vmax.xlane.f32.xlu0 %v4089
        %v4467 = vpop.xlane.xlu0 %4466
        %4468 = vmax.xlane.f32.xlu0 %v4090
        %v4469 = vpop.xlane.xlu0 %4468
        %4470 = vmax.xlane.f32.xlu0 %v4091
        %v4471 = vpop.xlane.xlu0 %4470
        %4472 = vmax.xlane.f32.xlu0 %v4092
        %v4473 = vpop.xlane.xlu0 %4472
        %4474 = vmax.xlane.f32.xlu0 %v4093
        %v4475 = vpop.xlane.xlu0 %4474
        %4476 = vmax.xlane.f32.xlu0 %v4094
        %v4477 = vpop.xlane.xlu0 %4476
        %4478 = vmax.xlane.f32.xlu0 %v4095
        %v4479 = vpop.xlane.xlu0 %4478
        %4480 = vmax.xlane.f32.xlu0 %v4096
        %v4481 = vpop.xlane.xlu0 %4480
        %4482 = vmax.xlane.f32.xlu0 %v4097
        %v4483 = vpop.xlane.xlu0 %4482
        %4484 = vmax.xlane.f32.xlu0 %v4098
        %v4485 = vpop.xlane.xlu0 %4484
        %4486 = vmax.xlane.f32.xlu0 %v4099
        %v4487 = vpop.xlane.xlu0 %4486
        %4488 = vmax.xlane.f32.xlu0 %v4100
        %v4489 = vpop.xlane.xlu0 %4488
        %4490 = vmax.xlane.f32.xlu0 %v4101
        %v4491 = vpop.xlane.xlu0 %4490
        %4492 = vmax.xlane.f32.xlu0 %v4102
        %v4493 = vpop.xlane.xlu0 %4492
        %4494 = vmax.xlane.f32.xlu0 %v4103
        %v4495 = vpop.xlane.xlu0 %4494
        %4496 = vmax.xlane.f32.xlu0 %v4104
        %v4497 = vpop.xlane.xlu0 %4496
        %4498 = vmax.xlane.f32.xlu0 %v4105
        %v4499 = vpop.xlane.xlu0 %4498
        %4500 = vmax.xlane.f32.xlu0 %v4106
        %v4501 = vpop.xlane.xlu0 %4500
        %4502 = vmax.xlane.f32.xlu0 %v4107
        %v4503 = vpop.xlane.xlu0 %4502
        %4504 = vmax.xlane.f32.xlu0 %v4108
        %v4505 = vpop.xlane.xlu0 %4504
        %4506 = vmax.xlane.f32.xlu0 %v4109
        %v4507 = vpop.xlane.xlu0 %4506
        %4508 = vmax.xlane.f32.xlu0 %v4110
        %v4509 = vpop.xlane.xlu0 %4508
        %4510 = vmax.xlane.f32.xlu0 %v4111
        %v4511 = vpop.xlane.xlu0 %4510
        %4512 = vmax.xlane.f32.xlu0 %v4112
        %v4513 = vpop.xlane.xlu0 %4512
        %4514 = vmax.xlane.f32.xlu0 %v4113
        %v4515 = vpop.xlane.xlu0 %4514
        %4516 = vmax.xlane.f32.xlu0 %v4114
        %v4517 = vpop.xlane.xlu0 %4516
        %4518 = vmax.xlane.f32.xlu0 %v4115
        %v4519 = vpop.xlane.xlu0 %4518
        %4520 = vmax.xlane.f32.xlu0 %v4116
        %v4521 = vpop.xlane.xlu0 %4520
        %4522 = vmax.xlane.f32.xlu0 %v4117
        %v4523 = vpop.xlane.xlu0 %4522
        %4524 = vmax.xlane.f32.xlu0 %v4118
        %v4525 = vpop.xlane.xlu0 %4524
        %4526 = vmax.xlane.f32.xlu0 %v4119
        %v4527 = vpop.xlane.xlu0 %4526
        %4528 = vmax.xlane.f32.xlu0 %v4120
        %v4529 = vpop.xlane.xlu0 %4528
        %4530 = vmax.xlane.f32.xlu0 %v4121
        %v4531 = vpop.xlane.xlu0 %4530
        %4532 = vmax.xlane.f32.xlu0 %v4122
        %v4533 = vpop.xlane.xlu0 %4532
        %4534 = vmax.xlane.f32.xlu0 %v4123
        %v4535 = vpop.xlane.xlu0 %4534
        %4536 = vmax.xlane.f32.xlu0 %v4124
        %v4537 = vpop.xlane.xlu0 %4536
        %4538 = vmax.xlane.f32.xlu0 %v4125
        %v4539 = vpop.xlane.xlu0 %4538
        %4540 = vmax.xlane.f32.xlu0 %v4126
        %v4541 = vpop.xlane.xlu0 %4540
        %4542 = vmax.xlane.f32.xlu0 %v4127
        %v4543 = vpop.xlane.xlu0 %4542
        %4544 = vmax.xlane.f32.xlu0 %v4128
        %v4545 = vpop.xlane.xlu0 %4544
        %4546 = vmax.xlane.f32.xlu0 %v4129
        %v4547 = vpop.xlane.xlu0 %4546
        %4548 = vmax.xlane.f32.xlu0 %v4130
        %v4549 = vpop.xlane.xlu0 %4548
        %4550 = vmax.xlane.f32.xlu0 %v4131
        %v4551 = vpop.xlane.xlu0 %4550
        %4552 = vmax.xlane.f32.xlu0 %v4132
        %v4553 = vpop.xlane.xlu0 %4552
        %4554 = vmax.xlane.f32.xlu0 %v4133
        %v4555 = vpop.xlane.xlu0 %4554
        %4556 = vmax.xlane.f32.xlu0 %v4134
        %v4557 = vpop.xlane.xlu0 %4556
        %4558 = vmax.xlane.f32.xlu0 %v4135
        %v4559 = vpop.xlane.xlu0 %4558
        %4560 = vmax.xlane.f32.xlu0 %v4136
        %v4561 = vpop.xlane.xlu0 %4560
        %4562 = vmax.xlane.f32.xlu0 %v4137
        %v4563 = vpop.xlane.xlu0 %4562
        %4564 = vmax.xlane.f32.xlu0 %v4138
        %v4565 = vpop.xlane.xlu0 %4564
        %4566 = vmax.xlane.f32.xlu0 %v4139
        %v4567 = vpop.xlane.xlu0 %4566
        %4568 = vmax.xlane.f32.xlu0 %v4140
        %v4569 = vpop.xlane.xlu0 %4568
        %4570 = vmax.xlane.f32.xlu0 %v4141
        %v4571 = vpop.xlane.xlu0 %4570
        %4572 = vmax.xlane.f32.xlu0 %v4142
        %v4573 = vpop.xlane.xlu0 %4572
        %4574 = vmax.xlane.f32.xlu0 %v4143
        %v4575 = vpop.xlane.xlu0 %4574
        %4576 = vmax.xlane.f32.xlu0 %v4144
        %v4577 = vpop.xlane.xlu0 %4576
        %4578 = vmax.xlane.f32.xlu0 %v4145
        %v4579 = vpop.xlane.xlu0 %4578
        %4580 = vmax.xlane.f32.xlu0 %v4146
        %v4581 = vpop.xlane.xlu0 %4580
        %4582 = vmax.xlane.f32.xlu0 %v4147
        %v4583 = vpop.xlane.xlu0 %4582
        %4584 = vmax.xlane.f32.xlu0 %v4148
        %v4585 = vpop.xlane.xlu0 %4584
        %4586 = vmax.xlane.f32.xlu0 %v4149
        %v4587 = vpop.xlane.xlu0 %4586
        %4588 = vmax.xlane.f32.xlu0 %v4150
        %v4589 = vpop.xlane.xlu0 %4588
        %4590 = vmax.xlane.f32.xlu0 %v4151
        %v4591 = vpop.xlane.xlu0 %4590
        %4592 = vmax.xlane.f32.xlu0 %v4152
        %v4593 = vpop.xlane.xlu0 %4592
        %4594 = vmax.xlane.f32.xlu0 %v4153
        %v4595 = vpop.xlane.xlu0 %4594
        %4596 = vmax.xlane.f32.xlu0 %v4154
        %v4597 = vpop.xlane.xlu0 %4596
        %4598 = vmax.xlane.f32.xlu0 %v4155
        %v4599 = vpop.xlane.xlu0 %4598
        %4600 = vmax.xlane.f32.xlu0 %v4156
        %v4601 = vpop.xlane.xlu0 %4600
        %4602 = vmax.xlane.f32.xlu0 %v4157
        %v4603 = vpop.xlane.xlu0 %4602
        %4604 = vmax.xlane.f32.xlu0 %v4158
        %v4605 = vpop.xlane.xlu0 %4604
        %4606 = vmax.xlane.f32.xlu0 %v4159
        %v4607 = vpop.xlane.xlu0 %4606
        %4608 = vmax.xlane.f32.xlu0 %v4160
        %v4609 = vpop.xlane.xlu0 %4608
        %4610 = vmax.xlane.f32.xlu0 %v4161
        %v4611 = vpop.xlane.xlu0 %4610
        %4612 = vmax.xlane.f32.xlu0 %v4162
        %v4613 = vpop.xlane.xlu0 %4612
        %4614 = vmax.xlane.f32.xlu0 %v4163
        %v4615 = vpop.xlane.xlu0 %4614
        %4616 = vmax.xlane.f32.xlu0 %v4164
        %v4617 = vpop.xlane.xlu0 %4616
        %4618 = vmax.xlane.f32.xlu0 %v4165
        %v4619 = vpop.xlane.xlu0 %4618
        %4620 = vmax.xlane.f32.xlu0 %v4166
        %v4621 = vpop.xlane.xlu0 %4620
        %4622 = vmax.xlane.f32.xlu0 %v4167
        %v4623 = vpop.xlane.xlu0 %4622
        %4624 = vmax.xlane.f32.xlu0 %v4168
        %v4625 = vpop.xlane.xlu0 %4624
        %4626 = vmax.xlane.f32.xlu0 %v4169
        %v4627 = vpop.xlane.xlu0 %4626
        %4628 = vmax.xlane.f32.xlu0 %v4170
        %v4629 = vpop.xlane.xlu0 %4628
        %4630 = vmax.xlane.f32.xlu0 %v4171
        %v4631 = vpop.xlane.xlu0 %4630
        %4632 = vmax.xlane.f32.xlu0 %v4172
        %v4633 = vpop.xlane.xlu0 %4632
        %4634 = vmax.xlane.f32.xlu0 %v4173
        %v4635 = vpop.xlane.xlu0 %4634
        %4636 = vmax.xlane.f32.xlu0 %v4174
        %v4637 = vpop.xlane.xlu0 %4636
        %4638 = vmax.xlane.f32.xlu0 %v4175
        %v4639 = vpop.xlane.xlu0 %4638
        %4640 = vmax.xlane.f32.xlu0 %v4176
        %v4641 = vpop.xlane.xlu0 %4640
        %4642 = vmax.xlane.f32.xlu0 %v4177
        %v4643 = vpop.xlane.xlu0 %4642
        %4644 = vmax.xlane.f32.xlu0 %v4178
        %v4645 = vpop.xlane.xlu0 %4644
        %4646 = vmax.xlane.f32.xlu0 %v4179
        %v4647 = vpop.xlane.xlu0 %4646
        %4648 = vmax.xlane.f32.xlu0 %v4180
        %v4649 = vpop.xlane.xlu0 %4648
        %4650 = vmax.xlane.f32.xlu0 %v4181
        %v4651 = vpop.xlane.xlu0 %4650
        %4652 = vmax.xlane.f32.xlu0 %v4182
        %v4653 = vpop.xlane.xlu0 %4652
        %4654 = vmax.xlane.f32.xlu0 %v4183
        %v4655 = vpop.xlane.xlu0 %4654
        %4656 = vmax.xlane.f32.xlu0 %v4184
        %v4657 = vpop.xlane.xlu0 %4656
        %4658 = vmax.xlane.f32.xlu0 %v4185
        %v4659 = vpop.xlane.xlu0 %4658
        %4660 = vmax.xlane.f32.xlu0 %v4186
        %v4661 = vpop.xlane.xlu0 %4660
        %4662 = vmax.xlane.f32.xlu0 %v4187
        %v4663 = vpop.xlane.xlu0 %4662
        %4664 = vmax.xlane.f32.xlu0 %v4188
        %v4665 = vpop.xlane.xlu0 %4664
        %4666 = vmax.xlane.f32.xlu0 %v4189
        %v4667 = vpop.xlane.xlu0 %4666
        %4668 = vmax.xlane.f32.xlu0 %v4190
        %v4669 = vpop.xlane.xlu0 %4668
        %4670 = vmax.xlane.f32.xlu0 %v4191
        %v4671 = vpop.xlane.xlu0 %4670
        %4672 = vmax.xlane.f32.xlu0 %v4192
        %v4673 = vpop.xlane.xlu0 %4672
        %4674 = vmax.xlane.f32.xlu0 %v4193
        %v4675 = vpop.xlane.xlu0 %4674
        %4676 = vmax.xlane.f32.xlu0 %v4194
        %v4677 = vpop.xlane.xlu0 %4676
        %4678 = vmax.xlane.f32.xlu0 %v4195
        %v4679 = vpop.xlane.xlu0 %4678
        %4680 = vmax.xlane.f32.xlu0 %v4196
        %v4681 = vpop.xlane.xlu0 %4680
        %4682 = vmax.xlane.f32.xlu0 %v4197
        %v4683 = vpop.xlane.xlu0 %4682
        %4684 = vmax.xlane.f32.xlu0 %v4198
        %v4685 = vpop.xlane.xlu0 %4684
        %4686 = vmax.xlane.f32.xlu0 %v4199
        %v4687 = vpop.xlane.xlu0 %4686
        %4688 = vmax.xlane.f32.xlu0 %v4200
        %v4689 = vpop.xlane.xlu0 %4688
        %4690 = vmax.xlane.f32.xlu0 %v4201
        %v4691 = vpop.xlane.xlu0 %4690
        %4692 = vmax.xlane.f32.xlu0 %v4202
        %v4693 = vpop.xlane.xlu0 %4692
        %4694 = vmax.xlane.f32.xlu0 %v4203
        %v4695 = vpop.xlane.xlu0 %4694
        %4696 = vmax.xlane.f32.xlu0 %v4204
        %v4697 = vpop.xlane.xlu0 %4696
        %4698 = vmax.xlane.f32.xlu0 %v4205
        %v4699 = vpop.xlane.xlu0 %4698
        %4700 = vmax.xlane.f32.xlu0 %v4206
        %v4701 = vpop.xlane.xlu0 %4700
        %4702 = vmax.xlane.f32.xlu0 %v4207
        %v4703 = vpop.xlane.xlu0 %4702
        %4704 = vmax.xlane.f32.xlu0 %v4208
        %v4705 = vpop.xlane.xlu0 %4704
        %4706 = vmax.xlane.f32.xlu0 %v4209
        %v4707 = vpop.xlane.xlu0 %4706
        %4708 = vmax.xlane.f32.xlu0 %v4210
        %v4709 = vpop.xlane.xlu0 %4708
        %4710 = vmax.xlane.f32.xlu0 %v4211
        %v4711 = vpop.xlane.xlu0 %4710
        %4712 = vmax.xlane.f32.xlu0 %v4212
        %v4713 = vpop.xlane.xlu0 %4712
        %4714 = vmax.xlane.f32.xlu0 %v4213
        %v4715 = vpop.xlane.xlu0 %4714
        %4716 = vmax.xlane.f32.xlu0 %v4214
        %v4717 = vpop.xlane.xlu0 %4716
        %4718 = vmax.xlane.f32.xlu0 %v4215
        %v4719 = vpop.xlane.xlu0 %4718
        %4720 = vmax.xlane.f32.xlu0 %v4216
        %v4721 = vpop.xlane.xlu0 %4720
        %4722 = vmax.xlane.f32.xlu0 %v4217
        %v4723 = vpop.xlane.xlu0 %4722
        %4724 = vmax.xlane.f32.xlu0 %v4218
        %v4725 = vpop.xlane.xlu0 %4724
        %4726 = vmax.xlane.f32.xlu0 %v4219
        %v4727 = vpop.xlane.xlu0 %4726
        %4728 = vmax.xlane.f32.xlu0 %v4220
        %v4729 = vpop.xlane.xlu0 %4728
        %4730 = vmax.xlane.f32.xlu0 %v4221
        %v4731 = vpop.xlane.xlu0 %4730
        %4732 = vmax.xlane.f32.xlu0 %v4222
        %v4733 = vpop.xlane.xlu0 %4732
        %4734 = vmax.xlane.f32.xlu0 %v4223
        %v4735 = vpop.xlane.xlu0 %4734
        %v4736 = vsub.f32 %v3968, %v4225
        %v4737 = vsub.f32 %v3969, %v4227
        %v4738 = vsub.f32 %v3970, %v4229
        %v4739 = vsub.f32 %v3971, %v4231
        %v4740 = vsub.f32 %v3972, %v4233
        %v4741 = vsub.f32 %v3973, %v4235
        %v4742 = vsub.f32 %v3974, %v4237
        %v4743 = vsub.f32 %v3975, %v4239
        %v4744 = vsub.f32 %v3976, %v4241
        %v4745 = vsub.f32 %v3977, %v4243
        %v4746 = vsub.f32 %v3978, %v4245
        %v4747 = vsub.f32 %v3979, %v4247
        %v4748 = vsub.f32 %v3980, %v4249
        %v4749 = vsub.f32 %v3981, %v4251
        %v4750 = vsub.f32 %v3982, %v4253
        %v4751 = vsub.f32 %v3983, %v4255
        %v4752 = vsub.f32 %v3984, %v4257
        %v4753 = vsub.f32 %v3985, %v4259
        %v4754 = vsub.f32 %v3986, %v4261
        %v4755 = vsub.f32 %v3987, %v4263
        %v4756 = vsub.f32 %v3988, %v4265
        %v4757 = vsub.f32 %v3989, %v4267
        %v4758 = vsub.f32 %v3990, %v4269
        %v4759 = vsub.f32 %v3991, %v4271
        %v4760 = vsub.f32 %v3992, %v4273
        %v4761 = vsub.f32 %v3993, %v4275
        %v4762 = vsub.f32 %v3994, %v4277
        %v4763 = vsub.f32 %v3995, %v4279
        %v4764 = vsub.f32 %v3996, %v4281
        %v4765 = vsub.f32 %v3997, %v4283
        %v4766 = vsub.f32 %v3998, %v4285
        %v4767 = vsub.f32 %v3999, %v4287
        %v4768 = vsub.f32 %v4000, %v4289
        %v4769 = vsub.f32 %v4001, %v4291
        %v4770 = vsub.f32 %v4002, %v4293
        %v4771 = vsub.f32 %v4003, %v4295
        %v4772 = vsub.f32 %v4004, %v4297
        %v4773 = vsub.f32 %v4005, %v4299
        %v4774 = vsub.f32 %v4006, %v4301
        %v4775 = vsub.f32 %v4007, %v4303
        %v4776 = vsub.f32 %v4008, %v4305
        %v4777 = vsub.f32 %v4009, %v4307
        %v4778 = vsub.f32 %v4010, %v4309
        %v4779 = vsub.f32 %v4011, %v4311
        %v4780 = vsub.f32 %v4012, %v4313
        %v4781 = vsub.f32 %v4013, %v4315
        %v4782 = vsub.f32 %v4014, %v4317
        %v4783 = vsub.f32 %v4015, %v4319
        %v4784 = vsub.f32 %v4016, %v4321
        %v4785 = vsub.f32 %v4017, %v4323
        %v4786 = vsub.f32 %v4018, %v4325
        %v4787 = vsub.f32 %v4019, %v4327
        %v4788 = vsub.f32 %v4020, %v4329
        %v4789 = vsub.f32 %v4021, %v4331
        %v4790 = vsub.f32 %v4022, %v4333
        %v4791 = vsub.f32 %v4023, %v4335
        %v4792 = vsub.f32 %v4024, %v4337
        %v4793 = vsub.f32 %v4025, %v4339
        %v4794 = vsub.f32 %v4026, %v4341
        %v4795 = vsub.f32 %v4027, %v4343
        %v4796 = vsub.f32 %v4028, %v4345
        %v4797 = vsub.f32 %v4029, %v4347
        %v4798 = vsub.f32 %v4030, %v4349
        %v4799 = vsub.f32 %v4031, %v4351
        %v4800 = vsub.f32 %v4032, %v4353
        %v4801 = vsub.f32 %v4033, %v4355
        %v4802 = vsub.f32 %v4034, %v4357
        %v4803 = vsub.f32 %v4035, %v4359
        %v4804 = vsub.f32 %v4036, %v4361
        %v4805 = vsub.f32 %v4037, %v4363
        %v4806 = vsub.f32 %v4038, %v4365
        %v4807 = vsub.f32 %v4039, %v4367
        %v4808 = vsub.f32 %v4040, %v4369
        %v4809 = vsub.f32 %v4041, %v4371
        %v4810 = vsub.f32 %v4042, %v4373
        %v4811 = vsub.f32 %v4043, %v4375
        %v4812 = vsub.f32 %v4044, %v4377
        %v4813 = vsub.f32 %v4045, %v4379
        %v4814 = vsub.f32 %v4046, %v4381
        %v4815 = vsub.f32 %v4047, %v4383
        %v4816 = vsub.f32 %v4048, %v4385
        %v4817 = vsub.f32 %v4049, %v4387
        %v4818 = vsub.f32 %v4050, %v4389
        %v4819 = vsub.f32 %v4051, %v4391
        %v4820 = vsub.f32 %v4052, %v4393
        %v4821 = vsub.f32 %v4053, %v4395
        %v4822 = vsub.f32 %v4054, %v4397
        %v4823 = vsub.f32 %v4055, %v4399
        %v4824 = vsub.f32 %v4056, %v4401
        %v4825 = vsub.f32 %v4057, %v4403
        %v4826 = vsub.f32 %v4058, %v4405
        %v4827 = vsub.f32 %v4059, %v4407
        %v4828 = vsub.f32 %v4060, %v4409
        %v4829 = vsub.f32 %v4061, %v4411
        %v4830 = vsub.f32 %v4062, %v4413
        %v4831 = vsub.f32 %v4063, %v4415
        %v4832 = vsub.f32 %v4064, %v4417
        %v4833 = vsub.f32 %v4065, %v4419
        %v4834 = vsub.f32 %v4066, %v4421
        %v4835 = vsub.f32 %v4067, %v4423
        %v4836 = vsub.f32 %v4068, %v4425
        %v4837 = vsub.f32 %v4069, %v4427
        %v4838 = vsub.f32 %v4070, %v4429
        %v4839 = vsub.f32 %v4071, %v4431
        %v4840 = vsub.f32 %v4072, %v4433
        %v4841 = vsub.f32 %v4073, %v4435
        %v4842 = vsub.f32 %v4074, %v4437
        %v4843 = vsub.f32 %v4075, %v4439
        %v4844 = vsub.f32 %v4076, %v4441
        %v4845 = vsub.f32 %v4077, %v4443
        %v4846 = vsub.f32 %v4078, %v4445
        %v4847 = vsub.f32 %v4079, %v4447
        %v4848 = vsub.f32 %v4080, %v4449
        %v4849 = vsub.f32 %v4081, %v4451
        %v4850 = vsub.f32 %v4082, %v4453
        %v4851 = vsub.f32 %v4083, %v4455
        %v4852 = vsub.f32 %v4084, %v4457
        %v4853 = vsub.f32 %v4085, %v4459
        %v4854 = vsub.f32 %v4086, %v4461
        %v4855 = vsub.f32 %v4087, %v4463
        %v4856 = vsub.f32 %v4088, %v4465
        %v4857 = vsub.f32 %v4089, %v4467
        %v4858 = vsub.f32 %v4090, %v4469
        %v4859 = vsub.f32 %v4091, %v4471
        %v4860 = vsub.f32 %v4092, %v4473
        %v4861 = vsub.f32 %v4093, %v4475
        %v4862 = vsub.f32 %v4094, %v4477
        %v4863 = vsub.f32 %v4095, %v4479
        %v4864 = vsub.f32 %v4096, %v4481
        %v4865 = vsub.f32 %v4097, %v4483
        %v4866 = vsub.f32 %v4098, %v4485
        %v4867 = vsub.f32 %v4099, %v4487
        %v4868 = vsub.f32 %v4100, %v4489
        %v4869 = vsub.f32 %v4101, %v4491
        %v4870 = vsub.f32 %v4102, %v4493
        %v4871 = vsub.f32 %v4103, %v4495
        %v4872 = vsub.f32 %v4104, %v4497
        %v4873 = vsub.f32 %v4105, %v4499
        %v4874 = vsub.f32 %v4106, %v4501
        %v4875 = vsub.f32 %v4107, %v4503
        %v4876 = vsub.f32 %v4108, %v4505
        %v4877 = vsub.f32 %v4109, %v4507
        %v4878 = vsub.f32 %v4110, %v4509
        %v4879 = vsub.f32 %v4111, %v4511
        %v4880 = vsub.f32 %v4112, %v4513
        %v4881 = vsub.f32 %v4113, %v4515
        %v4882 = vsub.f32 %v4114, %v4517
        %v4883 = vsub.f32 %v4115, %v4519
        %v4884 = vsub.f32 %v4116, %v4521
        %v4885 = vsub.f32 %v4117, %v4523
        %v4886 = vsub.f32 %v4118, %v4525
        %v4887 = vsub.f32 %v4119, %v4527
        %v4888 = vsub.f32 %v4120, %v4529
        %v4889 = vsub.f32 %v4121, %v4531
        %v4890 = vsub.f32 %v4122, %v4533
        %v4891 = vsub.f32 %v4123, %v4535
        %v4892 = vsub.f32 %v4124, %v4537
        %v4893 = vsub.f32 %v4125, %v4539
        %v4894 = vsub.f32 %v4126, %v4541
        %v4895 = vsub.f32 %v4127, %v4543
        %v4896 = vsub.f32 %v4128, %v4545
        %v4897 = vsub.f32 %v4129, %v4547
        %v4898 = vsub.f32 %v4130, %v4549
        %v4899 = vsub.f32 %v4131, %v4551
        %v4900 = vsub.f32 %v4132, %v4553
        %v4901 = vsub.f32 %v4133, %v4555
        %v4902 = vsub.f32 %v4134, %v4557
        %v4903 = vsub.f32 %v4135, %v4559
        %v4904 = vsub.f32 %v4136, %v4561
        %v4905 = vsub.f32 %v4137, %v4563
        %v4906 = vsub.f32 %v4138, %v4565
        %v4907 = vsub.f32 %v4139, %v4567
        %v4908 = vsub.f32 %v4140, %v4569
        %v4909 = vsub.f32 %v4141, %v4571
        %v4910 = vsub.f32 %v4142, %v4573
        %v4911 = vsub.f32 %v4143, %v4575
        %v4912 = vsub.f32 %v4144, %v4577
        %v4913 = vsub.f32 %v4145, %v4579
        %v4914 = vsub.f32 %v4146, %v4581
        %v4915 = vsub.f32 %v4147, %v4583
        %v4916 = vsub.f32 %v4148, %v4585
        %v4917 = vsub.f32 %v4149, %v4587
        %v4918 = vsub.f32 %v4150, %v4589
        %v4919 = vsub.f32 %v4151, %v4591
        %v4920 = vsub.f32 %v4152, %v4593
        %v4921 = vsub.f32 %v4153, %v4595
        %v4922 = vsub.f32 %v4154, %v4597
        %v4923 = vsub.f32 %v4155, %v4599
        %v4924 = vsub.f32 %v4156, %v4601
        %v4925 = vsub.f32 %v4157, %v4603
        %v4926 = vsub.f32 %v4158, %v4605
        %v4927 = vsub.f32 %v4159, %v4607
        %v4928 = vsub.f32 %v4160, %v4609
        %v4929 = vsub.f32 %v4161, %v4611
        %v4930 = vsub.f32 %v4162, %v4613
        %v4931 = vsub.f32 %v4163, %v4615
        %v4932 = vsub.f32 %v4164, %v4617
        %v4933 = vsub.f32 %v4165, %v4619
        %v4934 = vsub.f32 %v4166, %v4621
        %v4935 = vsub.f32 %v4167, %v4623
        %v4936 = vsub.f32 %v4168, %v4625
        %v4937 = vsub.f32 %v4169, %v4627
        %v4938 = vsub.f32 %v4170, %v4629
        %v4939 = vsub.f32 %v4171, %v4631
        %v4940 = vsub.f32 %v4172, %v4633
        %v4941 = vsub.f32 %v4173, %v4635
        %v4942 = vsub.f32 %v4174, %v4637
        %v4943 = vsub.f32 %v4175, %v4639
        %v4944 = vsub.f32 %v4176, %v4641
        %v4945 = vsub.f32 %v4177, %v4643
        %v4946 = vsub.f32 %v4178, %v4645
        %v4947 = vsub.f32 %v4179, %v4647
        %v4948 = vsub.f32 %v4180, %v4649
        %v4949 = vsub.f32 %v4181, %v4651
        %v4950 = vsub.f32 %v4182, %v4653
        %v4951 = vsub.f32 %v4183, %v4655
        %v4952 = vsub.f32 %v4184, %v4657
        %v4953 = vsub.f32 %v4185, %v4659
        %v4954 = vsub.f32 %v4186, %v4661
        %v4955 = vsub.f32 %v4187, %v4663
        %v4956 = vsub.f32 %v4188, %v4665
        %v4957 = vsub.f32 %v4189, %v4667
        %v4958 = vsub.f32 %v4190, %v4669
        %v4959 = vsub.f32 %v4191, %v4671
        %v4960 = vsub.f32 %v4192, %v4673
        %v4961 = vsub.f32 %v4193, %v4675
        %v4962 = vsub.f32 %v4194, %v4677
        %v4963 = vsub.f32 %v4195, %v4679
        %v4964 = vsub.f32 %v4196, %v4681
        %v4965 = vsub.f32 %v4197, %v4683
        %v4966 = vsub.f32 %v4198, %v4685
        %v4967 = vsub.f32 %v4199, %v4687
        %v4968 = vsub.f32 %v4200, %v4689
        %v4969 = vsub.f32 %v4201, %v4691
        %v4970 = vsub.f32 %v4202, %v4693
        %v4971 = vsub.f32 %v4203, %v4695
        %v4972 = vsub.f32 %v4204, %v4697
        %v4973 = vsub.f32 %v4205, %v4699
        %v4974 = vsub.f32 %v4206, %v4701
        %v4975 = vsub.f32 %v4207, %v4703
        %v4976 = vsub.f32 %v4208, %v4705
        %v4977 = vsub.f32 %v4209, %v4707
        %v4978 = vsub.f32 %v4210, %v4709
        %v4979 = vsub.f32 %v4211, %v4711
        %v4980 = vsub.f32 %v4212, %v4713
        %v4981 = vsub.f32 %v4213, %v4715
        %v4982 = vsub.f32 %v4214, %v4717
        %v4983 = vsub.f32 %v4215, %v4719
        %v4984 = vsub.f32 %v4216, %v4721
        %v4985 = vsub.f32 %v4217, %v4723
        %v4986 = vsub.f32 %v4218, %v4725
        %v4987 = vsub.f32 %v4219, %v4727
        %v4988 = vsub.f32 %v4220, %v4729
        %v4989 = vsub.f32 %v4221, %v4731
        %v4990 = vsub.f32 %v4222, %v4733
        %v4991 = vsub.f32 %v4223, %v4735
        %v4992 = vmul.f32 %v4736, 1.442695
        %v4993 = vpow.pop %v4992
        %v4994 = vmul.f32 %v4737, 1.442695
        %v4995 = vpow.pop %v4994
        %v4996 = vmul.f32 %v4738, 1.442695
        %v4997 = vpow.pop %v4996
        %v4998 = vmul.f32 %v4739, 1.442695
        %v4999 = vpow.pop %v4998
        %v5000 = vmul.f32 %v4740, 1.442695
        %v5001 = vpow.pop %v5000
        %v5002 = vmul.f32 %v4741, 1.442695
        %v5003 = vpow.pop %v5002
        %v5004 = vmul.f32 %v4742, 1.442695
        %v5005 = vpow.pop %v5004
        %v5006 = vmul.f32 %v4743, 1.442695
        %v5007 = vpow.pop %v5006
        %v5008 = vmul.f32 %v4744, 1.442695
        %v5009 = vpow.pop %v5008
        %v5010 = vmul.f32 %v4745, 1.442695
        %v5011 = vpow.pop %v5010
        %v5012 = vmul.f32 %v4746, 1.442695
        %v5013 = vpow.pop %v5012
        %v5014 = vmul.f32 %v4747, 1.442695
        %v5015 = vpow.pop %v5014
        %v5016 = vmul.f32 %v4748, 1.442695
        %v5017 = vpow.pop %v5016
        %v5018 = vmul.f32 %v4749, 1.442695
        %v5019 = vpow.pop %v5018
        %v5020 = vmul.f32 %v4750, 1.442695
        %v5021 = vpow.pop %v5020
        %v5022 = vmul.f32 %v4751, 1.442695
        %v5023 = vpow.pop %v5022
        %v5024 = vmul.f32 %v4752, 1.442695
        %v5025 = vpow.pop %v5024
        %v5026 = vmul.f32 %v4753, 1.442695
        %v5027 = vpow.pop %v5026
        %v5028 = vmul.f32 %v4754, 1.442695
        %v5029 = vpow.pop %v5028
        %v5030 = vmul.f32 %v4755, 1.442695
        %v5031 = vpow.pop %v5030
        %v5032 = vmul.f32 %v4756, 1.442695
        %v5033 = vpow.pop %v5032
        %v5034 = vmul.f32 %v4757, 1.442695
        %v5035 = vpow.pop %v5034
        %v5036 = vmul.f32 %v4758, 1.442695
        %v5037 = vpow.pop %v5036
        %v5038 = vmul.f32 %v4759, 1.442695
        %v5039 = vpow.pop %v5038
        %v5040 = vmul.f32 %v4760, 1.442695
        %v5041 = vpow.pop %v5040
        %v5042 = vmul.f32 %v4761, 1.442695
        %v5043 = vpow.pop %v5042
        %v5044 = vmul.f32 %v4762, 1.442695
        %v5045 = vpow.pop %v5044
        %v5046 = vmul.f32 %v4763, 1.442695
        %v5047 = vpow.pop %v5046
        %v5048 = vmul.f32 %v4764, 1.442695
        %v5049 = vpow.pop %v5048
        %v5050 = vmul.f32 %v4765, 1.442695
        %v5051 = vpow.pop %v5050
        %v5052 = vmul.f32 %v4766, 1.442695
        %v5053 = vpow.pop %v5052
        %v5054 = vmul.f32 %v4767, 1.442695
        %v5055 = vpow.pop %v5054
        %v5056 = vmul.f32 %v4768, 1.442695
        %v5057 = vpow.pop %v5056
        %v5058 = vmul.f32 %v4769, 1.442695
        %v5059 = vpow.pop %v5058
        %v5060 = vmul.f32 %v4770, 1.442695
        %v5061 = vpow.pop %v5060
        %v5062 = vmul.f32 %v4771, 1.442695
        %v5063 = vpow.pop %v5062
        %v5064 = vmul.f32 %v4772, 1.442695
        %v5065 = vpow.pop %v5064
        %v5066 = vmul.f32 %v4773, 1.442695
        %v5067 = vpow.pop %v5066
        %v5068 = vmul.f32 %v4774, 1.442695
        %v5069 = vpow.pop %v5068
        %v5070 = vmul.f32 %v4775, 1.442695
        %v5071 = vpow.pop %v5070
        %v5072 = vmul.f32 %v4776, 1.442695
        %v5073 = vpow.pop %v5072
        %v5074 = vmul.f32 %v4777, 1.442695
        %v5075 = vpow.pop %v5074
        %v5076 = vmul.f32 %v4778, 1.442695
        %v5077 = vpow.pop %v5076
        %v5078 = vmul.f32 %v4779, 1.442695
        %v5079 = vpow.pop %v5078
        %v5080 = vmul.f32 %v4780, 1.442695
        %v5081 = vpow.pop %v5080
        %v5082 = vmul.f32 %v4781, 1.442695
        %v5083 = vpow.pop %v5082
        %v5084 = vmul.f32 %v4782, 1.442695
        %v5085 = vpow.pop %v5084
        %v5086 = vmul.f32 %v4783, 1.442695
        %v5087 = vpow.pop %v5086
        %v5088 = vmul.f32 %v4784, 1.442695
        %v5089 = vpow.pop %v5088
        %v5090 = vmul.f32 %v4785, 1.442695
        %v5091 = vpow.pop %v5090
        %v5092 = vmul.f32 %v4786, 1.442695
        %v5093 = vpow.pop %v5092
        %v5094 = vmul.f32 %v4787, 1.442695
        %v5095 = vpow.pop %v5094
        %v5096 = vmul.f32 %v4788, 1.442695
        %v5097 = vpow.pop %v5096
        %v5098 = vmul.f32 %v4789, 1.442695
        %v5099 = vpow.pop %v5098
        %v5100 = vmul.f32 %v4790, 1.442695
        %v5101 = vpow.pop %v5100
        %v5102 = vmul.f32 %v4791, 1.442695
        %v5103 = vpow.pop %v5102
        %v5104 = vmul.f32 %v4792, 1.442695
        %v5105 = vpow.pop %v5104
        %v5106 = vmul.f32 %v4793, 1.442695
        %v5107 = vpow.pop %v5106
        %v5108 = vmul.f32 %v4794, 1.442695
        %v5109 = vpow.pop %v5108
        %v5110 = vmul.f32 %v4795, 1.442695
        %v5111 = vpow.pop %v5110
        %v5112 = vmul.f32 %v4796, 1.442695
        %v5113 = vpow.pop %v5112
        %v5114 = vmul.f32 %v4797, 1.442695
        %v5115 = vpow.pop %v5114
        %v5116 = vmul.f32 %v4798, 1.442695
        %v5117 = vpow.pop %v5116
        %v5118 = vmul.f32 %v4799, 1.442695
        %v5119 = vpow.pop %v5118
        %v5120 = vmul.f32 %v4800, 1.442695
        %v5121 = vpow.pop %v5120
        %v5122 = vmul.f32 %v4801, 1.442695
        %v5123 = vpow.pop %v5122
        %v5124 = vmul.f32 %v4802, 1.442695
        %v5125 = vpow.pop %v5124
        %v5126 = vmul.f32 %v4803, 1.442695
        %v5127 = vpow.pop %v5126
        %v5128 = vmul.f32 %v4804, 1.442695
        %v5129 = vpow.pop %v5128
        %v5130 = vmul.f32 %v4805, 1.442695
        %v5131 = vpow.pop %v5130
        %v5132 = vmul.f32 %v4806, 1.442695
        %v5133 = vpow.pop %v5132
        %v5134 = vmul.f32 %v4807, 1.442695
        %v5135 = vpow.pop %v5134
        %v5136 = vmul.f32 %v4808, 1.442695
        %v5137 = vpow.pop %v5136
        %v5138 = vmul.f32 %v4809, 1.442695
        %v5139 = vpow.pop %v5138
        %v5140 = vmul.f32 %v4810, 1.442695
        %v5141 = vpow.pop %v5140
        %v5142 = vmul.f32 %v4811, 1.442695
        %v5143 = vpow.pop %v5142
        %v5144 = vmul.f32 %v4812, 1.442695
        %v5145 = vpow.pop %v5144
        %v5146 = vmul.f32 %v4813, 1.442695
        %v5147 = vpow.pop %v5146
        %v5148 = vmul.f32 %v4814, 1.442695
        %v5149 = vpow.pop %v5148
        %v5150 = vmul.f32 %v4815, 1.442695
        %v5151 = vpow.pop %v5150
        %v5152 = vmul.f32 %v4816, 1.442695
        %v5153 = vpow.pop %v5152
        %v5154 = vmul.f32 %v4817, 1.442695
        %v5155 = vpow.pop %v5154
        %v5156 = vmul.f32 %v4818, 1.442695
        %v5157 = vpow.pop %v5156
        %v5158 = vmul.f32 %v4819, 1.442695
        %v5159 = vpow.pop %v5158
        %v5160 = vmul.f32 %v4820, 1.442695
        %v5161 = vpow.pop %v5160
        %v5162 = vmul.f32 %v4821, 1.442695
        %v5163 = vpow.pop %v5162
        %v5164 = vmul.f32 %v4822, 1.442695
        %v5165 = vpow.pop %v5164
        %v5166 = vmul.f32 %v4823, 1.442695
        %v5167 = vpow.pop %v5166
        %v5168 = vmul.f32 %v4824, 1.442695
        %v5169 = vpow.pop %v5168
        %v5170 = vmul.f32 %v4825, 1.442695
        %v5171 = vpow.pop %v5170
        %v5172 = vmul.f32 %v4826, 1.442695
        %v5173 = vpow.pop %v5172
        %v5174 = vmul.f32 %v4827, 1.442695
        %v5175 = vpow.pop %v5174
        %v5176 = vmul.f32 %v4828, 1.442695
        %v5177 = vpow.pop %v5176
        %v5178 = vmul.f32 %v4829, 1.442695
        %v5179 = vpow.pop %v5178
        %v5180 = vmul.f32 %v4830, 1.442695
        %v5181 = vpow.pop %v5180
        %v5182 = vmul.f32 %v4831, 1.442695
        %v5183 = vpow.pop %v5182
        %v5184 = vmul.f32 %v4832, 1.442695
        %v5185 = vpow.pop %v5184
        %v5186 = vmul.f32 %v4833, 1.442695
        %v5187 = vpow.pop %v5186
        %v5188 = vmul.f32 %v4834, 1.442695
        %v5189 = vpow.pop %v5188
        %v5190 = vmul.f32 %v4835, 1.442695
        %v5191 = vpow.pop %v5190
        %v5192 = vmul.f32 %v4836, 1.442695
        %v5193 = vpow.pop %v5192
        %v5194 = vmul.f32 %v4837, 1.442695
        %v5195 = vpow.pop %v5194
        %v5196 = vmul.f32 %v4838, 1.442695
        %v5197 = vpow.pop %v5196
        %v5198 = vmul.f32 %v4839, 1.442695
        %v5199 = vpow.pop %v5198
        %v5200 = vmul.f32 %v4840, 1.442695
        %v5201 = vpow.pop %v5200
        %v5202 = vmul.f32 %v4841, 1.442695
        %v5203 = vpow.pop %v5202
        %v5204 = vmul.f32 %v4842, 1.442695
        %v5205 = vpow.pop %v5204
        %v5206 = vmul.f32 %v4843, 1.442695
        %v5207 = vpow.pop %v5206
        %v5208 = vmul.f32 %v4844, 1.442695
        %v5209 = vpow.pop %v5208
        %v5210 = vmul.f32 %v4845, 1.442695
        %v5211 = vpow.pop %v5210
        %v5212 = vmul.f32 %v4846, 1.442695
        %v5213 = vpow.pop %v5212
        %v5214 = vmul.f32 %v4847, 1.442695
        %v5215 = vpow.pop %v5214
        %v5216 = vmul.f32 %v4848, 1.442695
        %v5217 = vpow.pop %v5216
        %v5218 = vmul.f32 %v4849, 1.442695
        %v5219 = vpow.pop %v5218
        %v5220 = vmul.f32 %v4850, 1.442695
        %v5221 = vpow.pop %v5220
        %v5222 = vmul.f32 %v4851, 1.442695
        %v5223 = vpow.pop %v5222
        %v5224 = vmul.f32 %v4852, 1.442695
        %v5225 = vpow.pop %v5224
        %v5226 = vmul.f32 %v4853, 1.442695
        %v5227 = vpow.pop %v5226
        %v5228 = vmul.f32 %v4854, 1.442695
        %v5229 = vpow.pop %v5228
        %v5230 = vmul.f32 %v4855, 1.442695
        %v5231 = vpow.pop %v5230
        %v5232 = vmul.f32 %v4856, 1.442695
        %v5233 = vpow.pop %v5232
        %v5234 = vmul.f32 %v4857, 1.442695
        %v5235 = vpow.pop %v5234
        %v5236 = vmul.f32 %v4858, 1.442695
        %v5237 = vpow.pop %v5236
        %v5238 = vmul.f32 %v4859, 1.442695
        %v5239 = vpow.pop %v5238
        %v5240 = vmul.f32 %v4860, 1.442695
        %v5241 = vpow.pop %v5240
        %v5242 = vmul.f32 %v4861, 1.442695
        %v5243 = vpow.pop %v5242
        %v5244 = vmul.f32 %v4862, 1.442695
        %v5245 = vpow.pop %v5244
        %v5246 = vmul.f32 %v4863, 1.442695
        %v5247 = vpow.pop %v5246
        %v5248 = vmul.f32 %v4864, 1.442695
        %v5249 = vpow.pop %v5248
        %v5250 = vmul.f32 %v4865, 1.442695
        %v5251 = vpow.pop %v5250
        %v5252 = vmul.f32 %v4866, 1.442695
        %v5253 = vpow.pop %v5252
        %v5254 = vmul.f32 %v4867, 1.442695
        %v5255 = vpow.pop %v5254
        %v5256 = vmul.f32 %v4868, 1.442695
        %v5257 = vpow.pop %v5256
        %v5258 = vmul.f32 %v4869, 1.442695
        %v5259 = vpow.pop %v5258
        %v5260 = vmul.f32 %v4870, 1.442695
        %v5261 = vpow.pop %v5260
        %v5262 = vmul.f32 %v4871, 1.442695
        %v5263 = vpow.pop %v5262
        %v5264 = vmul.f32 %v4872, 1.442695
        %v5265 = vpow.pop %v5264
        %v5266 = vmul.f32 %v4873, 1.442695
        %v5267 = vpow.pop %v5266
        %v5268 = vmul.f32 %v4874, 1.442695
        %v5269 = vpow.pop %v5268
        %v5270 = vmul.f32 %v4875, 1.442695
        %v5271 = vpow.pop %v5270
        %v5272 = vmul.f32 %v4876, 1.442695
        %v5273 = vpow.pop %v5272
        %v5274 = vmul.f32 %v4877, 1.442695
        %v5275 = vpow.pop %v5274
        %v5276 = vmul.f32 %v4878, 1.442695
        %v5277 = vpow.pop %v5276
        %v5278 = vmul.f32 %v4879, 1.442695
        %v5279 = vpow.pop %v5278
        %v5280 = vmul.f32 %v4880, 1.442695
        %v5281 = vpow.pop %v5280
        %v5282 = vmul.f32 %v4881, 1.442695
        %v5283 = vpow.pop %v5282
        %v5284 = vmul.f32 %v4882, 1.442695
        %v5285 = vpow.pop %v5284
        %v5286 = vmul.f32 %v4883, 1.442695
        %v5287 = vpow.pop %v5286
        %v5288 = vmul.f32 %v4884, 1.442695
        %v5289 = vpow.pop %v5288
        %v5290 = vmul.f32 %v4885, 1.442695
        %v5291 = vpow.pop %v5290
        %v5292 = vmul.f32 %v4886, 1.442695
        %v5293 = vpow.pop %v5292
        %v5294 = vmul.f32 %v4887, 1.442695
        %v5295 = vpow.pop %v5294
        %v5296 = vmul.f32 %v4888, 1.442695
        %v5297 = vpow.pop %v5296
        %v5298 = vmul.f32 %v4889, 1.442695
        %v5299 = vpow.pop %v5298
        %v5300 = vmul.f32 %v4890, 1.442695
        %v5301 = vpow.pop %v5300
        %v5302 = vmul.f32 %v4891, 1.442695
        %v5303 = vpow.pop %v5302
        %v5304 = vmul.f32 %v4892, 1.442695
        %v5305 = vpow.pop %v5304
        %v5306 = vmul.f32 %v4893, 1.442695
        %v5307 = vpow.pop %v5306
        %v5308 = vmul.f32 %v4894, 1.442695
        %v5309 = vpow.pop %v5308
        %v5310 = vmul.f32 %v4895, 1.442695
        %v5311 = vpow.pop %v5310
        %v5312 = vmul.f32 %v4896, 1.442695
        %v5313 = vpow.pop %v5312
        %v5314 = vmul.f32 %v4897, 1.442695
        %v5315 = vpow.pop %v5314
        %v5316 = vmul.f32 %v4898, 1.442695
        %v5317 = vpow.pop %v5316
        %v5318 = vmul.f32 %v4899, 1.442695
        %v5319 = vpow.pop %v5318
        %v5320 = vmul.f32 %v4900, 1.442695
        %v5321 = vpow.pop %v5320
        %v5322 = vmul.f32 %v4901, 1.442695
        %v5323 = vpow.pop %v5322
        %v5324 = vmul.f32 %v4902, 1.442695
        %v5325 = vpow.pop %v5324
        %v5326 = vmul.f32 %v4903, 1.442695
        %v5327 = vpow.pop %v5326
        %v5328 = vmul.f32 %v4904, 1.442695
        %v5329 = vpow.pop %v5328
        %v5330 = vmul.f32 %v4905, 1.442695
        %v5331 = vpow.pop %v5330
        %v5332 = vmul.f32 %v4906, 1.442695
        %v5333 = vpow.pop %v5332
        %v5334 = vmul.f32 %v4907, 1.442695
        %v5335 = vpow.pop %v5334
        %v5336 = vmul.f32 %v4908, 1.442695
        %v5337 = vpow.pop %v5336
        %v5338 = vmul.f32 %v4909, 1.442695
        %v5339 = vpow.pop %v5338
        %v5340 = vmul.f32 %v4910, 1.442695
        %v5341 = vpow.pop %v5340
        %v5342 = vmul.f32 %v4911, 1.442695
        %v5343 = vpow.pop %v5342
        %v5344 = vmul.f32 %v4912, 1.442695
        %v5345 = vpow.pop %v5344
        %v5346 = vmul.f32 %v4913, 1.442695
        %v5347 = vpow.pop %v5346
        %v5348 = vmul.f32 %v4914, 1.442695
        %v5349 = vpow.pop %v5348
        %v5350 = vmul.f32 %v4915, 1.442695
        %v5351 = vpow.pop %v5350
        %v5352 = vmul.f32 %v4916, 1.442695
        %v5353 = vpow.pop %v5352
        %v5354 = vmul.f32 %v4917, 1.442695
        %v5355 = vpow.pop %v5354
        %v5356 = vmul.f32 %v4918, 1.442695
        %v5357 = vpow.pop %v5356
        %v5358 = vmul.f32 %v4919, 1.442695
        %v5359 = vpow.pop %v5358
        %v5360 = vmul.f32 %v4920, 1.442695
        %v5361 = vpow.pop %v5360
        %v5362 = vmul.f32 %v4921, 1.442695
        %v5363 = vpow.pop %v5362
        %v5364 = vmul.f32 %v4922, 1.442695
        %v5365 = vpow.pop %v5364
        %v5366 = vmul.f32 %v4923, 1.442695
        %v5367 = vpow.pop %v5366
        %v5368 = vmul.f32 %v4924, 1.442695
        %v5369 = vpow.pop %v5368
        %v5370 = vmul.f32 %v4925, 1.442695
        %v5371 = vpow.pop %v5370
        %v5372 = vmul.f32 %v4926, 1.442695
        %v5373 = vpow.pop %v5372
        %v5374 = vmul.f32 %v4927, 1.442695
        %v5375 = vpow.pop %v5374
        %v5376 = vmul.f32 %v4928, 1.442695
        %v5377 = vpow.pop %v5376
        %v5378 = vmul.f32 %v4929, 1.442695
        %v5379 = vpow.pop %v5378
        %v5380 = vmul.f32 %v4930, 1.442695
        %v5381 = vpow.pop %v5380
        %v5382 = vmul.f32 %v4931, 1.442695
        %v5383 = vpow.pop %v5382
        %v5384 = vmul.f32 %v4932, 1.442695
        %v5385 = vpow.pop %v5384
        %v5386 = vmul.f32 %v4933, 1.442695
        %v5387 = vpow.pop %v5386
        %v5388 = vmul.f32 %v4934, 1.442695
        %v5389 = vpow.pop %v5388
        %v5390 = vmul.f32 %v4935, 1.442695
        %v5391 = vpow.pop %v5390
        %v5392 = vmul.f32 %v4936, 1.442695
        %v5393 = vpow.pop %v5392
        %v5394 = vmul.f32 %v4937, 1.442695
        %v5395 = vpow.pop %v5394
        %v5396 = vmul.f32 %v4938, 1.442695
        %v5397 = vpow.pop %v5396
        %v5398 = vmul.f32 %v4939, 1.442695
        %v5399 = vpow.pop %v5398
        %v5400 = vmul.f32 %v4940, 1.442695
        %v5401 = vpow.pop %v5400
        %v5402 = vmul.f32 %v4941, 1.442695
        %v5403 = vpow.pop %v5402
        %v5404 = vmul.f32 %v4942, 1.442695
        %v5405 = vpow.pop %v5404
        %v5406 = vmul.f32 %v4943, 1.442695
        %v5407 = vpow.pop %v5406
        %v5408 = vmul.f32 %v4944, 1.442695
        %v5409 = vpow.pop %v5408
        %v5410 = vmul.f32 %v4945, 1.442695
        %v5411 = vpow.pop %v5410
        %v5412 = vmul.f32 %v4946, 1.442695
        %v5413 = vpow.pop %v5412
        %v5414 = vmul.f32 %v4947, 1.442695
        %v5415 = vpow.pop %v5414
        %v5416 = vmul.f32 %v4948, 1.442695
        %v5417 = vpow.pop %v5416
        %v5418 = vmul.f32 %v4949, 1.442695
        %v5419 = vpow.pop %v5418
        %v5420 = vmul.f32 %v4950, 1.442695
        %v5421 = vpow.pop %v5420
        %v5422 = vmul.f32 %v4951, 1.442695
        %v5423 = vpow.pop %v5422
        %v5424 = vmul.f32 %v4952, 1.442695
        %v5425 = vpow.pop %v5424
        %v5426 = vmul.f32 %v4953, 1.442695
        %v5427 = vpow.pop %v5426
        %v5428 = vmul.f32 %v4954, 1.442695
        %v5429 = vpow.pop %v5428
        %v5430 = vmul.f32 %v4955, 1.442695
        %v5431 = vpow.pop %v5430
        %v5432 = vmul.f32 %v4956, 1.442695
        %v5433 = vpow.pop %v5432
        %v5434 = vmul.f32 %v4957, 1.442695
        %v5435 = vpow.pop %v5434
        %v5436 = vmul.f32 %v4958, 1.442695
        %v5437 = vpow.pop %v5436
        %v5438 = vmul.f32 %v4959, 1.442695
        %v5439 = vpow.pop %v5438
        %v5440 = vmul.f32 %v4960, 1.442695
        %v5441 = vpow.pop %v5440
        %v5442 = vmul.f32 %v4961, 1.442695
        %v5443 = vpow.pop %v5442
        %v5444 = vmul.f32 %v4962, 1.442695
        %v5445 = vpow.pop %v5444
        %v5446 = vmul.f32 %v4963, 1.442695
        %v5447 = vpow.pop %v5446
        %v5448 = vmul.f32 %v4964, 1.442695
        %v5449 = vpow.pop %v5448
        %v5450 = vmul.f32 %v4965, 1.442695
        %v5451 = vpow.pop %v5450
        %v5452 = vmul.f32 %v4966, 1.442695
        %v5453 = vpow.pop %v5452
        %v5454 = vmul.f32 %v4967, 1.442695
        %v5455 = vpow.pop %v5454
        %v5456 = vmul.f32 %v4968, 1.442695
        %v5457 = vpow.pop %v5456
        %v5458 = vmul.f32 %v4969, 1.442695
        %v5459 = vpow.pop %v5458
        %v5460 = vmul.f32 %v4970, 1.442695
        %v5461 = vpow.pop %v5460
        %v5462 = vmul.f32 %v4971, 1.442695
        %v5463 = vpow.pop %v5462
        %v5464 = vmul.f32 %v4972, 1.442695
        %v5465 = vpow.pop %v5464
        %v5466 = vmul.f32 %v4973, 1.442695
        %v5467 = vpow.pop %v5466
        %v5468 = vmul.f32 %v4974, 1.442695
        %v5469 = vpow.pop %v5468
        %v5470 = vmul.f32 %v4975, 1.442695
        %v5471 = vpow.pop %v5470
        %v5472 = vmul.f32 %v4976, 1.442695
        %v5473 = vpow.pop %v5472
        %v5474 = vmul.f32 %v4977, 1.442695
        %v5475 = vpow.pop %v5474
        %v5476 = vmul.f32 %v4978, 1.442695
        %v5477 = vpow.pop %v5476
        %v5478 = vmul.f32 %v4979, 1.442695
        %v5479 = vpow.pop %v5478
        %v5480 = vmul.f32 %v4980, 1.442695
        %v5481 = vpow.pop %v5480
        %v5482 = vmul.f32 %v4981, 1.442695
        %v5483 = vpow.pop %v5482
        %v5484 = vmul.f32 %v4982, 1.442695
        %v5485 = vpow.pop %v5484
        %v5486 = vmul.f32 %v4983, 1.442695
        %v5487 = vpow.pop %v5486
        %v5488 = vmul.f32 %v4984, 1.442695
        %v5489 = vpow.pop %v5488
        %v5490 = vmul.f32 %v4985, 1.442695
        %v5491 = vpow.pop %v5490
        %v5492 = vmul.f32 %v4986, 1.442695
        %v5493 = vpow.pop %v5492
        %v5494 = vmul.f32 %v4987, 1.442695
        %v5495 = vpow.pop %v5494
        %v5496 = vmul.f32 %v4988, 1.442695
        %v5497 = vpow.pop %v5496
        %v5498 = vmul.f32 %v4989, 1.442695
        %v5499 = vpow.pop %v5498
        %v5500 = vmul.f32 %v4990, 1.442695
        %v5501 = vpow.pop %v5500
        %v5502 = vmul.f32 %v4991, 1.442695
        %v5503 = vpow.pop %v5502
        %5504 = vadd.xlane.f32.xlu0 %v4993
        %v5505 = vpop.xlane.xlu0 %5504
        %5506 = vadd.xlane.f32.xlu0 %v4995
        %v5507 = vpop.xlane.xlu0 %5506
        %5508 = vadd.xlane.f32.xlu0 %v4997
        %v5509 = vpop.xlane.xlu0 %5508
        %5510 = vadd.xlane.f32.xlu0 %v4999
        %v5511 = vpop.xlane.xlu0 %5510
        %5512 = vadd.xlane.f32.xlu0 %v5001
        %v5513 = vpop.xlane.xlu0 %5512
        %5514 = vadd.xlane.f32.xlu0 %v5003
        %v5515 = vpop.xlane.xlu0 %5514
        %5516 = vadd.xlane.f32.xlu0 %v5005
        %v5517 = vpop.xlane.xlu0 %5516
        %5518 = vadd.xlane.f32.xlu0 %v5007
        %v5519 = vpop.xlane.xlu0 %5518
        %5520 = vadd.xlane.f32.xlu0 %v5009
        %v5521 = vpop.xlane.xlu0 %5520
        %5522 = vadd.xlane.f32.xlu0 %v5011
        %v5523 = vpop.xlane.xlu0 %5522
        %5524 = vadd.xlane.f32.xlu0 %v5013
        %v5525 = vpop.xlane.xlu0 %5524
        %5526 = vadd.xlane.f32.xlu0 %v5015
        %v5527 = vpop.xlane.xlu0 %5526
        %5528 = vadd.xlane.f32.xlu0 %v5017
        %v5529 = vpop.xlane.xlu0 %5528
        %5530 = vadd.xlane.f32.xlu0 %v5019
        %v5531 = vpop.xlane.xlu0 %5530
        %5532 = vadd.xlane.f32.xlu0 %v5021
        %v5533 = vpop.xlane.xlu0 %5532
        %5534 = vadd.xlane.f32.xlu0 %v5023
        %v5535 = vpop.xlane.xlu0 %5534
        %5536 = vadd.xlane.f32.xlu0 %v5025
        %v5537 = vpop.xlane.xlu0 %5536
        %5538 = vadd.xlane.f32.xlu0 %v5027
        %v5539 = vpop.xlane.xlu0 %5538
        %5540 = vadd.xlane.f32.xlu0 %v5029
        %v5541 = vpop.xlane.xlu0 %5540
        %5542 = vadd.xlane.f32.xlu0 %v5031
        %v5543 = vpop.xlane.xlu0 %5542
        %5544 = vadd.xlane.f32.xlu0 %v5033
        %v5545 = vpop.xlane.xlu0 %5544
        %5546 = vadd.xlane.f32.xlu0 %v5035
        %v5547 = vpop.xlane.xlu0 %5546
        %5548 = vadd.xlane.f32.xlu0 %v5037
        %v5549 = vpop.xlane.xlu0 %5548
        %5550 = vadd.xlane.f32.xlu0 %v5039
        %v5551 = vpop.xlane.xlu0 %5550
        %5552 = vadd.xlane.f32.xlu0 %v5041
        %v5553 = vpop.xlane.xlu0 %5552
        %5554 = vadd.xlane.f32.xlu0 %v5043
        %v5555 = vpop.xlane.xlu0 %5554
        %5556 = vadd.xlane.f32.xlu0 %v5045
        %v5557 = vpop.xlane.xlu0 %5556
        %5558 = vadd.xlane.f32.xlu0 %v5047
        %v5559 = vpop.xlane.xlu0 %5558
        %5560 = vadd.xlane.f32.xlu0 %v5049
        %v5561 = vpop.xlane.xlu0 %5560
        %5562 = vadd.xlane.f32.xlu0 %v5051
        %v5563 = vpop.xlane.xlu0 %5562
        %5564 = vadd.xlane.f32.xlu0 %v5053
        %v5565 = vpop.xlane.xlu0 %5564
        %5566 = vadd.xlane.f32.xlu0 %v5055
        %v5567 = vpop.xlane.xlu0 %5566
        %5568 = vadd.xlane.f32.xlu0 %v5057
        %v5569 = vpop.xlane.xlu0 %5568
        %5570 = vadd.xlane.f32.xlu0 %v5059
        %v5571 = vpop.xlane.xlu0 %5570
        %5572 = vadd.xlane.f32.xlu0 %v5061
        %v5573 = vpop.xlane.xlu0 %5572
        %5574 = vadd.xlane.f32.xlu0 %v5063
        %v5575 = vpop.xlane.xlu0 %5574
        %5576 = vadd.xlane.f32.xlu0 %v5065
        %v5577 = vpop.xlane.xlu0 %5576
        %5578 = vadd.xlane.f32.xlu0 %v5067
        %v5579 = vpop.xlane.xlu0 %5578
        %5580 = vadd.xlane.f32.xlu0 %v5069
        %v5581 = vpop.xlane.xlu0 %5580
        %5582 = vadd.xlane.f32.xlu0 %v5071
        %v5583 = vpop.xlane.xlu0 %5582
        %5584 = vadd.xlane.f32.xlu0 %v5073
        %v5585 = vpop.xlane.xlu0 %5584
        %5586 = vadd.xlane.f32.xlu0 %v5075
        %v5587 = vpop.xlane.xlu0 %5586
        %5588 = vadd.xlane.f32.xlu0 %v5077
        %v5589 = vpop.xlane.xlu0 %5588
        %5590 = vadd.xlane.f32.xlu0 %v5079
        %v5591 = vpop.xlane.xlu0 %5590
        %5592 = vadd.xlane.f32.xlu0 %v5081
        %v5593 = vpop.xlane.xlu0 %5592
        %5594 = vadd.xlane.f32.xlu0 %v5083
        %v5595 = vpop.xlane.xlu0 %5594
        %5596 = vadd.xlane.f32.xlu0 %v5085
        %v5597 = vpop.xlane.xlu0 %5596
        %5598 = vadd.xlane.f32.xlu0 %v5087
        %v5599 = vpop.xlane.xlu0 %5598
        %5600 = vadd.xlane.f32.xlu0 %v5089
        %v5601 = vpop.xlane.xlu0 %5600
        %5602 = vadd.xlane.f32.xlu0 %v5091
        %v5603 = vpop.xlane.xlu0 %5602
        %5604 = vadd.xlane.f32.xlu0 %v5093
        %v5605 = vpop.xlane.xlu0 %5604
        %5606 = vadd.xlane.f32.xlu0 %v5095
        %v5607 = vpop.xlane.xlu0 %5606
        %5608 = vadd.xlane.f32.xlu0 %v5097
        %v5609 = vpop.xlane.xlu0 %5608
        %5610 = vadd.xlane.f32.xlu0 %v5099
        %v5611 = vpop.xlane.xlu0 %5610
        %5612 = vadd.xlane.f32.xlu0 %v5101
        %v5613 = vpop.xlane.xlu0 %5612
        %5614 = vadd.xlane.f32.xlu0 %v5103
        %v5615 = vpop.xlane.xlu0 %5614
        %5616 = vadd.xlane.f32.xlu0 %v5105
        %v5617 = vpop.xlane.xlu0 %5616
        %5618 = vadd.xlane.f32.xlu0 %v5107
        %v5619 = vpop.xlane.xlu0 %5618
        %5620 = vadd.xlane.f32.xlu0 %v5109
        %v5621 = vpop.xlane.xlu0 %5620
        %5622 = vadd.xlane.f32.xlu0 %v5111
        %v5623 = vpop.xlane.xlu0 %5622
        %5624 = vadd.xlane.f32.xlu0 %v5113
        %v5625 = vpop.xlane.xlu0 %5624
        %5626 = vadd.xlane.f32.xlu0 %v5115
        %v5627 = vpop.xlane.xlu0 %5626
        %5628 = vadd.xlane.f32.xlu0 %v5117
        %v5629 = vpop.xlane.xlu0 %5628
        %5630 = vadd.xlane.f32.xlu0 %v5119
        %v5631 = vpop.xlane.xlu0 %5630
        %5632 = vadd.xlane.f32.xlu0 %v5121
        %v5633 = vpop.xlane.xlu0 %5632
        %5634 = vadd.xlane.f32.xlu0 %v5123
        %v5635 = vpop.xlane.xlu0 %5634
        %5636 = vadd.xlane.f32.xlu0 %v5125
        %v5637 = vpop.xlane.xlu0 %5636
        %5638 = vadd.xlane.f32.xlu0 %v5127
        %v5639 = vpop.xlane.xlu0 %5638
        %5640 = vadd.xlane.f32.xlu0 %v5129
        %v5641 = vpop.xlane.xlu0 %5640
        %5642 = vadd.xlane.f32.xlu0 %v5131
        %v5643 = vpop.xlane.xlu0 %5642
        %5644 = vadd.xlane.f32.xlu0 %v5133
        %v5645 = vpop.xlane.xlu0 %5644
        %5646 = vadd.xlane.f32.xlu0 %v5135
        %v5647 = vpop.xlane.xlu0 %5646
        %5648 = vadd.xlane.f32.xlu0 %v5137
        %v5649 = vpop.xlane.xlu0 %5648
        %5650 = vadd.xlane.f32.xlu0 %v5139
        %v5651 = vpop.xlane.xlu0 %5650
        %5652 = vadd.xlane.f32.xlu0 %v5141
        %v5653 = vpop.xlane.xlu0 %5652
        %5654 = vadd.xlane.f32.xlu0 %v5143
        %v5655 = vpop.xlane.xlu0 %5654
        %5656 = vadd.xlane.f32.xlu0 %v5145
        %v5657 = vpop.xlane.xlu0 %5656
        %5658 = vadd.xlane.f32.xlu0 %v5147
        %v5659 = vpop.xlane.xlu0 %5658
        %5660 = vadd.xlane.f32.xlu0 %v5149
        %v5661 = vpop.xlane.xlu0 %5660
        %5662 = vadd.xlane.f32.xlu0 %v5151
        %v5663 = vpop.xlane.xlu0 %5662
        %5664 = vadd.xlane.f32.xlu0 %v5153
        %v5665 = vpop.xlane.xlu0 %5664
        %5666 = vadd.xlane.f32.xlu0 %v5155
        %v5667 = vpop.xlane.xlu0 %5666
        %5668 = vadd.xlane.f32.xlu0 %v5157
        %v5669 = vpop.xlane.xlu0 %5668
        %5670 = vadd.xlane.f32.xlu0 %v5159
        %v5671 = vpop.xlane.xlu0 %5670
        %5672 = vadd.xlane.f32.xlu0 %v5161
        %v5673 = vpop.xlane.xlu0 %5672
        %5674 = vadd.xlane.f32.xlu0 %v5163
        %v5675 = vpop.xlane.xlu0 %5674
        %5676 = vadd.xlane.f32.xlu0 %v5165
        %v5677 = vpop.xlane.xlu0 %5676
        %5678 = vadd.xlane.f32.xlu0 %v5167
        %v5679 = vpop.xlane.xlu0 %5678
        %5680 = vadd.xlane.f32.xlu0 %v5169
        %v5681 = vpop.xlane.xlu0 %5680
        %5682 = vadd.xlane.f32.xlu0 %v5171
        %v5683 = vpop.xlane.xlu0 %5682
        %5684 = vadd.xlane.f32.xlu0 %v5173
        %v5685 = vpop.xlane.xlu0 %5684
        %5686 = vadd.xlane.f32.xlu0 %v5175
        %v5687 = vpop.xlane.xlu0 %5686
        %5688 = vadd.xlane.f32.xlu0 %v5177
        %v5689 = vpop.xlane.xlu0 %5688
        %5690 = vadd.xlane.f32.xlu0 %v5179
        %v5691 = vpop.xlane.xlu0 %5690
        %5692 = vadd.xlane.f32.xlu0 %v5181
        %v5693 = vpop.xlane.xlu0 %5692
        %5694 = vadd.xlane.f32.xlu0 %v5183
        %v5695 = vpop.xlane.xlu0 %5694
        %5696 = vadd.xlane.f32.xlu0 %v5185
        %v5697 = vpop.xlane.xlu0 %5696
        %5698 = vadd.xlane.f32.xlu0 %v5187
        %v5699 = vpop.xlane.xlu0 %5698
        %5700 = vadd.xlane.f32.xlu0 %v5189
        %v5701 = vpop.xlane.xlu0 %5700
        %5702 = vadd.xlane.f32.xlu0 %v5191
        %v5703 = vpop.xlane.xlu0 %5702
        %5704 = vadd.xlane.f32.xlu0 %v5193
        %v5705 = vpop.xlane.xlu0 %5704
        %5706 = vadd.xlane.f32.xlu0 %v5195
        %v5707 = vpop.xlane.xlu0 %5706
        %5708 = vadd.xlane.f32.xlu0 %v5197
        %v5709 = vpop.xlane.xlu0 %5708
        %5710 = vadd.xlane.f32.xlu0 %v5199
        %v5711 = vpop.xlane.xlu0 %5710
        %5712 = vadd.xlane.f32.xlu0 %v5201
        %v5713 = vpop.xlane.xlu0 %5712
        %5714 = vadd.xlane.f32.xlu0 %v5203
        %v5715 = vpop.xlane.xlu0 %5714
        %5716 = vadd.xlane.f32.xlu0 %v5205
        %v5717 = vpop.xlane.xlu0 %5716
        %5718 = vadd.xlane.f32.xlu0 %v5207
        %v5719 = vpop.xlane.xlu0 %5718
        %5720 = vadd.xlane.f32.xlu0 %v5209
        %v5721 = vpop.xlane.xlu0 %5720
        %5722 = vadd.xlane.f32.xlu0 %v5211
        %v5723 = vpop.xlane.xlu0 %5722
        %5724 = vadd.xlane.f32.xlu0 %v5213
        %v5725 = vpop.xlane.xlu0 %5724
        %5726 = vadd.xlane.f32.xlu0 %v5215
        %v5727 = vpop.xlane.xlu0 %5726
        %5728 = vadd.xlane.f32.xlu0 %v5217
        %v5729 = vpop.xlane.xlu0 %5728
        %5730 = vadd.xlane.f32.xlu0 %v5219
        %v5731 = vpop.xlane.xlu0 %5730
        %5732 = vadd.xlane.f32.xlu0 %v5221
        %v5733 = vpop.xlane.xlu0 %5732
        %5734 = vadd.xlane.f32.xlu0 %v5223
        %v5735 = vpop.xlane.xlu0 %5734
        %5736 = vadd.xlane.f32.xlu0 %v5225
        %v5737 = vpop.xlane.xlu0 %5736
        %5738 = vadd.xlane.f32.xlu0 %v5227
        %v5739 = vpop.xlane.xlu0 %5738
        %5740 = vadd.xlane.f32.xlu0 %v5229
        %v5741 = vpop.xlane.xlu0 %5740
        %5742 = vadd.xlane.f32.xlu0 %v5231
        %v5743 = vpop.xlane.xlu0 %5742
        %5744 = vadd.xlane.f32.xlu0 %v5233
        %v5745 = vpop.xlane.xlu0 %5744
        %5746 = vadd.xlane.f32.xlu0 %v5235
        %v5747 = vpop.xlane.xlu0 %5746
        %5748 = vadd.xlane.f32.xlu0 %v5237
        %v5749 = vpop.xlane.xlu0 %5748
        %5750 = vadd.xlane.f32.xlu0 %v5239
        %v5751 = vpop.xlane.xlu0 %5750
        %5752 = vadd.xlane.f32.xlu0 %v5241
        %v5753 = vpop.xlane.xlu0 %5752
        %5754 = vadd.xlane.f32.xlu0 %v5243
        %v5755 = vpop.xlane.xlu0 %5754
        %5756 = vadd.xlane.f32.xlu0 %v5245
        %v5757 = vpop.xlane.xlu0 %5756
        %5758 = vadd.xlane.f32.xlu0 %v5247
        %v5759 = vpop.xlane.xlu0 %5758
        %5760 = vadd.xlane.f32.xlu0 %v5249
        %v5761 = vpop.xlane.xlu0 %5760
        %5762 = vadd.xlane.f32.xlu0 %v5251
        %v5763 = vpop.xlane.xlu0 %5762
        %5764 = vadd.xlane.f32.xlu0 %v5253
        %v5765 = vpop.xlane.xlu0 %5764
        %5766 = vadd.xlane.f32.xlu0 %v5255
        %v5767 = vpop.xlane.xlu0 %5766
        %5768 = vadd.xlane.f32.xlu0 %v5257
        %v5769 = vpop.xlane.xlu0 %5768
        %5770 = vadd.xlane.f32.xlu0 %v5259
        %v5771 = vpop.xlane.xlu0 %5770
        %5772 = vadd.xlane.f32.xlu0 %v5261
        %v5773 = vpop.xlane.xlu0 %5772
        %5774 = vadd.xlane.f32.xlu0 %v5263
        %v5775 = vpop.xlane.xlu0 %5774
        %5776 = vadd.xlane.f32.xlu0 %v5265
        %v5777 = vpop.xlane.xlu0 %5776
        %5778 = vadd.xlane.f32.xlu0 %v5267
        %v5779 = vpop.xlane.xlu0 %5778
        %5780 = vadd.xlane.f32.xlu0 %v5269
        %v5781 = vpop.xlane.xlu0 %5780
        %5782 = vadd.xlane.f32.xlu0 %v5271
        %v5783 = vpop.xlane.xlu0 %5782
        %5784 = vadd.xlane.f32.xlu0 %v5273
        %v5785 = vpop.xlane.xlu0 %5784
        %5786 = vadd.xlane.f32.xlu0 %v5275
        %v5787 = vpop.xlane.xlu0 %5786
        %5788 = vadd.xlane.f32.xlu0 %v5277
        %v5789 = vpop.xlane.xlu0 %5788
        %5790 = vadd.xlane.f32.xlu0 %v5279
        %v5791 = vpop.xlane.xlu0 %5790
        %5792 = vadd.xlane.f32.xlu0 %v5281
        %v5793 = vpop.xlane.xlu0 %5792
        %5794 = vadd.xlane.f32.xlu0 %v5283
        %v5795 = vpop.xlane.xlu0 %5794
        %5796 = vadd.xlane.f32.xlu0 %v5285
        %v5797 = vpop.xlane.xlu0 %5796
        %5798 = vadd.xlane.f32.xlu0 %v5287
        %v5799 = vpop.xlane.xlu0 %5798
        %5800 = vadd.xlane.f32.xlu0 %v5289
        %v5801 = vpop.xlane.xlu0 %5800
        %5802 = vadd.xlane.f32.xlu0 %v5291
        %v5803 = vpop.xlane.xlu0 %5802
        %5804 = vadd.xlane.f32.xlu0 %v5293
        %v5805 = vpop.xlane.xlu0 %5804
        %5806 = vadd.xlane.f32.xlu0 %v5295
        %v5807 = vpop.xlane.xlu0 %5806
        %5808 = vadd.xlane.f32.xlu0 %v5297
        %v5809 = vpop.xlane.xlu0 %5808
        %5810 = vadd.xlane.f32.xlu0 %v5299
        %v5811 = vpop.xlane.xlu0 %5810
        %5812 = vadd.xlane.f32.xlu0 %v5301
        %v5813 = vpop.xlane.xlu0 %5812
        %5814 = vadd.xlane.f32.xlu0 %v5303
        %v5815 = vpop.xlane.xlu0 %5814
        %5816 = vadd.xlane.f32.xlu0 %v5305
        %v5817 = vpop.xlane.xlu0 %5816
        %5818 = vadd.xlane.f32.xlu0 %v5307
        %v5819 = vpop.xlane.xlu0 %5818
        %5820 = vadd.xlane.f32.xlu0 %v5309
        %v5821 = vpop.xlane.xlu0 %5820
        %5822 = vadd.xlane.f32.xlu0 %v5311
        %v5823 = vpop.xlane.xlu0 %5822
        %5824 = vadd.xlane.f32.xlu0 %v5313
        %v5825 = vpop.xlane.xlu0 %5824
        %5826 = vadd.xlane.f32.xlu0 %v5315
        %v5827 = vpop.xlane.xlu0 %5826
        %5828 = vadd.xlane.f32.xlu0 %v5317
        %v5829 = vpop.xlane.xlu0 %5828
        %5830 = vadd.xlane.f32.xlu0 %v5319
        %v5831 = vpop.xlane.xlu0 %5830
        %5832 = vadd.xlane.f32.xlu0 %v5321
        %v5833 = vpop.xlane.xlu0 %5832
        %5834 = vadd.xlane.f32.xlu0 %v5323
        %v5835 = vpop.xlane.xlu0 %5834
        %5836 = vadd.xlane.f32.xlu0 %v5325
        %v5837 = vpop.xlane.xlu0 %5836
        %5838 = vadd.xlane.f32.xlu0 %v5327
        %v5839 = vpop.xlane.xlu0 %5838
        %5840 = vadd.xlane.f32.xlu0 %v5329
        %v5841 = vpop.xlane.xlu0 %5840
        %5842 = vadd.xlane.f32.xlu0 %v5331
        %v5843 = vpop.xlane.xlu0 %5842
        %5844 = vadd.xlane.f32.xlu0 %v5333
        %v5845 = vpop.xlane.xlu0 %5844
        %5846 = vadd.xlane.f32.xlu0 %v5335
        %v5847 = vpop.xlane.xlu0 %5846
        %5848 = vadd.xlane.f32.xlu0 %v5337
        %v5849 = vpop.xlane.xlu0 %5848
        %5850 = vadd.xlane.f32.xlu0 %v5339
        %v5851 = vpop.xlane.xlu0 %5850
        %5852 = vadd.xlane.f32.xlu0 %v5341
        %v5853 = vpop.xlane.xlu0 %5852
        %5854 = vadd.xlane.f32.xlu0 %v5343
        %v5855 = vpop.xlane.xlu0 %5854
        %5856 = vadd.xlane.f32.xlu0 %v5345
        %v5857 = vpop.xlane.xlu0 %5856
        %5858 = vadd.xlane.f32.xlu0 %v5347
        %v5859 = vpop.xlane.xlu0 %5858
        %5860 = vadd.xlane.f32.xlu0 %v5349
        %v5861 = vpop.xlane.xlu0 %5860
        %5862 = vadd.xlane.f32.xlu0 %v5351
        %v5863 = vpop.xlane.xlu0 %5862
        %5864 = vadd.xlane.f32.xlu0 %v5353
        %v5865 = vpop.xlane.xlu0 %5864
        %5866 = vadd.xlane.f32.xlu0 %v5355
        %v5867 = vpop.xlane.xlu0 %5866
        %5868 = vadd.xlane.f32.xlu0 %v5357
        %v5869 = vpop.xlane.xlu0 %5868
        %5870 = vadd.xlane.f32.xlu0 %v5359
        %v5871 = vpop.xlane.xlu0 %5870
        %5872 = vadd.xlane.f32.xlu0 %v5361
        %v5873 = vpop.xlane.xlu0 %5872
        %5874 = vadd.xlane.f32.xlu0 %v5363
        %v5875 = vpop.xlane.xlu0 %5874
        %5876 = vadd.xlane.f32.xlu0 %v5365
        %v5877 = vpop.xlane.xlu0 %5876
        %5878 = vadd.xlane.f32.xlu0 %v5367
        %v5879 = vpop.xlane.xlu0 %5878
        %5880 = vadd.xlane.f32.xlu0 %v5369
        %v5881 = vpop.xlane.xlu0 %5880
        %5882 = vadd.xlane.f32.xlu0 %v5371
        %v5883 = vpop.xlane.xlu0 %5882
        %5884 = vadd.xlane.f32.xlu0 %v5373
        %v5885 = vpop.xlane.xlu0 %5884
        %5886 = vadd.xlane.f32.xlu0 %v5375
        %v5887 = vpop.xlane.xlu0 %5886
        %5888 = vadd.xlane.f32.xlu0 %v5377
        %v5889 = vpop.xlane.xlu0 %5888
        %5890 = vadd.xlane.f32.xlu0 %v5379
        %v5891 = vpop.xlane.xlu0 %5890
        %5892 = vadd.xlane.f32.xlu0 %v5381
        %v5893 = vpop.xlane.xlu0 %5892
        %5894 = vadd.xlane.f32.xlu0 %v5383
        %v5895 = vpop.xlane.xlu0 %5894
        %5896 = vadd.xlane.f32.xlu0 %v5385
        %v5897 = vpop.xlane.xlu0 %5896
        %5898 = vadd.xlane.f32.xlu0 %v5387
        %v5899 = vpop.xlane.xlu0 %5898
        %5900 = vadd.xlane.f32.xlu0 %v5389
        %v5901 = vpop.xlane.xlu0 %5900
        %5902 = vadd.xlane.f32.xlu0 %v5391
        %v5903 = vpop.xlane.xlu0 %5902
        %5904 = vadd.xlane.f32.xlu0 %v5393
        %v5905 = vpop.xlane.xlu0 %5904
        %5906 = vadd.xlane.f32.xlu0 %v5395
        %v5907 = vpop.xlane.xlu0 %5906
        %5908 = vadd.xlane.f32.xlu0 %v5397
        %v5909 = vpop.xlane.xlu0 %5908
        %5910 = vadd.xlane.f32.xlu0 %v5399
        %v5911 = vpop.xlane.xlu0 %5910
        %5912 = vadd.xlane.f32.xlu0 %v5401
        %v5913 = vpop.xlane.xlu0 %5912
        %5914 = vadd.xlane.f32.xlu0 %v5403
        %v5915 = vpop.xlane.xlu0 %5914
        %5916 = vadd.xlane.f32.xlu0 %v5405
        %v5917 = vpop.xlane.xlu0 %5916
        %5918 = vadd.xlane.f32.xlu0 %v5407
        %v5919 = vpop.xlane.xlu0 %5918
        %5920 = vadd.xlane.f32.xlu0 %v5409
        %v5921 = vpop.xlane.xlu0 %5920
        %5922 = vadd.xlane.f32.xlu0 %v5411
        %v5923 = vpop.xlane.xlu0 %5922
        %5924 = vadd.xlane.f32.xlu0 %v5413
        %v5925 = vpop.xlane.xlu0 %5924
        %5926 = vadd.xlane.f32.xlu0 %v5415
        %v5927 = vpop.xlane.xlu0 %5926
        %5928 = vadd.xlane.f32.xlu0 %v5417
        %v5929 = vpop.xlane.xlu0 %5928
        %5930 = vadd.xlane.f32.xlu0 %v5419
        %v5931 = vpop.xlane.xlu0 %5930
        %5932 = vadd.xlane.f32.xlu0 %v5421
        %v5933 = vpop.xlane.xlu0 %5932
        %5934 = vadd.xlane.f32.xlu0 %v5423
        %v5935 = vpop.xlane.xlu0 %5934
        %5936 = vadd.xlane.f32.xlu0 %v5425
        %v5937 = vpop.xlane.xlu0 %5936
        %5938 = vadd.xlane.f32.xlu0 %v5427
        %v5939 = vpop.xlane.xlu0 %5938
        %5940 = vadd.xlane.f32.xlu0 %v5429
        %v5941 = vpop.xlane.xlu0 %5940
        %5942 = vadd.xlane.f32.xlu0 %v5431
        %v5943 = vpop.xlane.xlu0 %5942
        %5944 = vadd.xlane.f32.xlu0 %v5433
        %v5945 = vpop.xlane.xlu0 %5944
        %5946 = vadd.xlane.f32.xlu0 %v5435
        %v5947 = vpop.xlane.xlu0 %5946
        %5948 = vadd.xlane.f32.xlu0 %v5437
        %v5949 = vpop.xlane.xlu0 %5948
        %5950 = vadd.xlane.f32.xlu0 %v5439
        %v5951 = vpop.xlane.xlu0 %5950
        %5952 = vadd.xlane.f32.xlu0 %v5441
        %v5953 = vpop.xlane.xlu0 %5952
        %5954 = vadd.xlane.f32.xlu0 %v5443
        %v5955 = vpop.xlane.xlu0 %5954
        %5956 = vadd.xlane.f32.xlu0 %v5445
        %v5957 = vpop.xlane.xlu0 %5956
        %5958 = vadd.xlane.f32.xlu0 %v5447
        %v5959 = vpop.xlane.xlu0 %5958
        %5960 = vadd.xlane.f32.xlu0 %v5449
        %v5961 = vpop.xlane.xlu0 %5960
        %5962 = vadd.xlane.f32.xlu0 %v5451
        %v5963 = vpop.xlane.xlu0 %5962
        %5964 = vadd.xlane.f32.xlu0 %v5453
        %v5965 = vpop.xlane.xlu0 %5964
        %5966 = vadd.xlane.f32.xlu0 %v5455
        %v5967 = vpop.xlane.xlu0 %5966
        %5968 = vadd.xlane.f32.xlu0 %v5457
        %v5969 = vpop.xlane.xlu0 %5968
        %5970 = vadd.xlane.f32.xlu0 %v5459
        %v5971 = vpop.xlane.xlu0 %5970
        %5972 = vadd.xlane.f32.xlu0 %v5461
        %v5973 = vpop.xlane.xlu0 %5972
        %5974 = vadd.xlane.f32.xlu0 %v5463
        %v5975 = vpop.xlane.xlu0 %5974
        %5976 = vadd.xlane.f32.xlu0 %v5465
        %v5977 = vpop.xlane.xlu0 %5976
        %5978 = vadd.xlane.f32.xlu0 %v5467
        %v5979 = vpop.xlane.xlu0 %5978
        %5980 = vadd.xlane.f32.xlu0 %v5469
        %v5981 = vpop.xlane.xlu0 %5980
        %5982 = vadd.xlane.f32.xlu0 %v5471
        %v5983 = vpop.xlane.xlu0 %5982
        %5984 = vadd.xlane.f32.xlu0 %v5473
        %v5985 = vpop.xlane.xlu0 %5984
        %5986 = vadd.xlane.f32.xlu0 %v5475
        %v5987 = vpop.xlane.xlu0 %5986
        %5988 = vadd.xlane.f32.xlu0 %v5477
        %v5989 = vpop.xlane.xlu0 %5988
        %5990 = vadd.xlane.f32.xlu0 %v5479
        %v5991 = vpop.xlane.xlu0 %5990
        %5992 = vadd.xlane.f32.xlu0 %v5481
        %v5993 = vpop.xlane.xlu0 %5992
        %5994 = vadd.xlane.f32.xlu0 %v5483
        %v5995 = vpop.xlane.xlu0 %5994
        %5996 = vadd.xlane.f32.xlu0 %v5485
        %v5997 = vpop.xlane.xlu0 %5996
        %5998 = vadd.xlane.f32.xlu0 %v5487
        %v5999 = vpop.xlane.xlu0 %5998
        %6000 = vadd.xlane.f32.xlu0 %v5489
        %v6001 = vpop.xlane.xlu0 %6000
        %6002 = vadd.xlane.f32.xlu0 %v5491
        %v6003 = vpop.xlane.xlu0 %6002
        %6004 = vadd.xlane.f32.xlu0 %v5493
        %v6005 = vpop.xlane.xlu0 %6004
        %6006 = vadd.xlane.f32.xlu0 %v5495
        %v6007 = vpop.xlane.xlu0 %6006
        %6008 = vadd.xlane.f32.xlu0 %v5497
        %v6009 = vpop.xlane.xlu0 %6008
        %6010 = vadd.xlane.f32.xlu0 %v5499
        %v6011 = vpop.xlane.xlu0 %6010
        %6012 = vadd.xlane.f32.xlu0 %v5501
        %v6013 = vpop.xlane.xlu0 %6012
        %6014 = vadd.xlane.f32.xlu0 %v5503
        %v6015 = vpop.xlane.xlu0 %6014
        %v6016 = vrcp.pop %v5505
        %v6017 = vrcp.pop %v5507
        %v6018 = vrcp.pop %v5509
        %v6019 = vrcp.pop %v5511
        %v6020 = vrcp.pop %v5513
        %v6021 = vrcp.pop %v5515
        %v6022 = vrcp.pop %v5517
        %v6023 = vrcp.pop %v5519
        %v6024 = vrcp.pop %v5521
        %v6025 = vrcp.pop %v5523
        %v6026 = vrcp.pop %v5525
        %v6027 = vrcp.pop %v5527
        %v6028 = vrcp.pop %v5529
        %v6029 = vrcp.pop %v5531
        %v6030 = vrcp.pop %v5533
        %v6031 = vrcp.pop %v5535
        %v6032 = vrcp.pop %v5537
        %v6033 = vrcp.pop %v5539
        %v6034 = vrcp.pop %v5541
        %v6035 = vrcp.pop %v5543
        %v6036 = vrcp.pop %v5545
        %v6037 = vrcp.pop %v5547
        %v6038 = vrcp.pop %v5549
        %v6039 = vrcp.pop %v5551
        %v6040 = vrcp.pop %v5553
        %v6041 = vrcp.pop %v5555
        %v6042 = vrcp.pop %v5557
        %v6043 = vrcp.pop %v5559
        %v6044 = vrcp.pop %v5561
        %v6045 = vrcp.pop %v5563
        %v6046 = vrcp.pop %v5565
        %v6047 = vrcp.pop %v5567
        %v6048 = vrcp.pop %v5569
        %v6049 = vrcp.pop %v5571
        %v6050 = vrcp.pop %v5573
        %v6051 = vrcp.pop %v5575
        %v6052 = vrcp.pop %v5577
        %v6053 = vrcp.pop %v5579
        %v6054 = vrcp.pop %v5581
        %v6055 = vrcp.pop %v5583
        %v6056 = vrcp.pop %v5585
        %v6057 = vrcp.pop %v5587
        %v6058 = vrcp.pop %v5589
        %v6059 = vrcp.pop %v5591
        %v6060 = vrcp.pop %v5593
        %v6061 = vrcp.pop %v5595
        %v6062 = vrcp.pop %v5597
        %v6063 = vrcp.pop %v5599
        %v6064 = vrcp.pop %v5601
        %v6065 = vrcp.pop %v5603
        %v6066 = vrcp.pop %v5605
        %v6067 = vrcp.pop %v5607
        %v6068 = vrcp.pop %v5609
        %v6069 = vrcp.pop %v5611
        %v6070 = vrcp.pop %v5613
        %v6071 = vrcp.pop %v5615
        %v6072 = vrcp.pop %v5617
        %v6073 = vrcp.pop %v5619
        %v6074 = vrcp.pop %v5621
        %v6075 = vrcp.pop %v5623
        %v6076 = vrcp.pop %v5625
        %v6077 = vrcp.pop %v5627
        %v6078 = vrcp.pop %v5629
        %v6079 = vrcp.pop %v5631
        %v6080 = vrcp.pop %v5633
        %v6081 = vrcp.pop %v5635
        %v6082 = vrcp.pop %v5637
        %v6083 = vrcp.pop %v5639
        %v6084 = vrcp.pop %v5641
        %v6085 = vrcp.pop %v5643
        %v6086 = vrcp.pop %v5645
        %v6087 = vrcp.pop %v5647
        %v6088 = vrcp.pop %v5649
        %v6089 = vrcp.pop %v5651
        %v6090 = vrcp.pop %v5653
        %v6091 = vrcp.pop %v5655
        %v6092 = vrcp.pop %v5657
        %v6093 = vrcp.pop %v5659
        %v6094 = vrcp.pop %v5661
        %v6095 = vrcp.pop %v5663
        %v6096 = vrcp.pop %v5665
        %v6097 = vrcp.pop %v5667
        %v6098 = vrcp.pop %v5669
        %v6099 = vrcp.pop %v5671
        %v6100 = vrcp.pop %v5673
        %v6101 = vrcp.pop %v5675
        %v6102 = vrcp.pop %v5677
        %v6103 = vrcp.pop %v5679
        %v6104 = vrcp.pop %v5681
        %v6105 = vrcp.pop %v5683
        %v6106 = vrcp.pop %v5685
        %v6107 = vrcp.pop %v5687
        %v6108 = vrcp.pop %v5689
        %v6109 = vrcp.pop %v5691
        %v6110 = vrcp.pop %v5693
        %v6111 = vrcp.pop %v5695
        %v6112 = vrcp.pop %v5697
        %v6113 = vrcp.pop %v5699
        %v6114 = vrcp.pop %v5701
        %v6115 = vrcp.pop %v5703
        %v6116 = vrcp.pop %v5705
        %v6117 = vrcp.pop %v5707
        %v6118 = vrcp.pop %v5709
        %v6119 = vrcp.pop %v5711
        %v6120 = vrcp.pop %v5713
        %v6121 = vrcp.pop %v5715
        %v6122 = vrcp.pop %v5717
        %v6123 = vrcp.pop %v5719
        %v6124 = vrcp.pop %v5721
        %v6125 = vrcp.pop %v5723
        %v6126 = vrcp.pop %v5725
        %v6127 = vrcp.pop %v5727
        %v6128 = vrcp.pop %v5729
        %v6129 = vrcp.pop %v5731
        %v6130 = vrcp.pop %v5733
        %v6131 = vrcp.pop %v5735
        %v6132 = vrcp.pop %v5737
        %v6133 = vrcp.pop %v5739
        %v6134 = vrcp.pop %v5741
        %v6135 = vrcp.pop %v5743
        %v6136 = vrcp.pop %v5745
        %v6137 = vrcp.pop %v5747
        %v6138 = vrcp.pop %v5749
        %v6139 = vrcp.pop %v5751
        %v6140 = vrcp.pop %v5753
        %v6141 = vrcp.pop %v5755
        %v6142 = vrcp.pop %v5757
        %v6143 = vrcp.pop %v5759
        %v6144 = vrcp.pop %v5761
        %v6145 = vrcp.pop %v5763
        %v6146 = vrcp.pop %v5765
        %v6147 = vrcp.pop %v5767
        %v6148 = vrcp.pop %v5769
        %v6149 = vrcp.pop %v5771
        %v6150 = vrcp.pop %v5773
        %v6151 = vrcp.pop %v5775
        %v6152 = vrcp.pop %v5777
        %v6153 = vrcp.pop %v5779
        %v6154 = vrcp.pop %v5781
        %v6155 = vrcp.pop %v5783
        %v6156 = vrcp.pop %v5785
        %v6157 = vrcp.pop %v5787
        %v6158 = vrcp.pop %v5789
        %v6159 = vrcp.pop %v5791
        %v6160 = vrcp.pop %v5793
        %v6161 = vrcp.pop %v5795
        %v6162 = vrcp.pop %v5797
        %v6163 = vrcp.pop %v5799
        %v6164 = vrcp.pop %v5801
        %v6165 = vrcp.pop %v5803
        %v6166 = vrcp.pop %v5805
        %v6167 = vrcp.pop %v5807
        %v6168 = vrcp.pop %v5809
        %v6169 = vrcp.pop %v5811
        %v6170 = vrcp.pop %v5813
        %v6171 = vrcp.pop %v5815
        %v6172 = vrcp.pop %v5817
        %v6173 = vrcp.pop %v5819
        %v6174 = vrcp.pop %v5821
        %v6175 = vrcp.pop %v5823
        %v6176 = vrcp.pop %v5825
        %v6177 = vrcp.pop %v5827
        %v6178 = vrcp.pop %v5829
        %v6179 = vrcp.pop %v5831
        %v6180 = vrcp.pop %v5833
        %v6181 = vrcp.pop %v5835
        %v6182 = vrcp.pop %v5837
        %v6183 = vrcp.pop %v5839
        %v6184 = vrcp.pop %v5841
        %v6185 = vrcp.pop %v5843
        %v6186 = vrcp.pop %v5845
        %v6187 = vrcp.pop %v5847
        %v6188 = vrcp.pop %v5849
        %v6189 = vrcp.pop %v5851
        %v6190 = vrcp.pop %v5853
        %v6191 = vrcp.pop %v5855
        %v6192 = vrcp.pop %v5857
        %v6193 = vrcp.pop %v5859
        %v6194 = vrcp.pop %v5861
        %v6195 = vrcp.pop %v5863
        %v6196 = vrcp.pop %v5865
        %v6197 = vrcp.pop %v5867
        %v6198 = vrcp.pop %v5869
        %v6199 = vrcp.pop %v5871
        %v6200 = vrcp.pop %v5873
        %v6201 = vrcp.pop %v5875
        %v6202 = vrcp.pop %v5877
        %v6203 = vrcp.pop %v5879
        %v6204 = vrcp.pop %v5881
        %v6205 = vrcp.pop %v5883
        %v6206 = vrcp.pop %v5885
        %v6207 = vrcp.pop %v5887
        %v6208 = vrcp.pop %v5889
        %v6209 = vrcp.pop %v5891
        %v6210 = vrcp.pop %v5893
        %v6211 = vrcp.pop %v5895
        %v6212 = vrcp.pop %v5897
        %v6213 = vrcp.pop %v5899
        %v6214 = vrcp.pop %v5901
        %v6215 = vrcp.pop %v5903
        %v6216 = vrcp.pop %v5905
        %v6217 = vrcp.pop %v5907
        %v6218 = vrcp.pop %v5909
        %v6219 = vrcp.pop %v5911
        %v6220 = vrcp.pop %v5913
        %v6221 = vrcp.pop %v5915
        %v6222 = vrcp.pop %v5917
        %v6223 = vrcp.pop %v5919
        %v6224 = vrcp.pop %v5921
        %v6225 = vrcp.pop %v5923
        %v6226 = vrcp.pop %v5925
        %v6227 = vrcp.pop %v5927
        %v6228 = vrcp.pop %v5929
        %v6229 = vrcp.pop %v5931
        %v6230 = vrcp.pop %v5933
        %v6231 = vrcp.pop %v5935
        %v6232 = vrcp.pop %v5937
        %v6233 = vrcp.pop %v5939
        %v6234 = vrcp.pop %v5941
        %v6235 = vrcp.pop %v5943
        %v6236 = vrcp.pop %v5945
        %v6237 = vrcp.pop %v5947
        %v6238 = vrcp.pop %v5949
        %v6239 = vrcp.pop %v5951
        %v6240 = vrcp.pop %v5953
        %v6241 = vrcp.pop %v5955
        %v6242 = vrcp.pop %v5957
        %v6243 = vrcp.pop %v5959
        %v6244 = vrcp.pop %v5961
        %v6245 = vrcp.pop %v5963
        %v6246 = vrcp.pop %v5965
        %v6247 = vrcp.pop %v5967
        %v6248 = vrcp.pop %v5969
        %v6249 = vrcp.pop %v5971
        %v6250 = vrcp.pop %v5973
        %v6251 = vrcp.pop %v5975
        %v6252 = vrcp.pop %v5977
        %v6253 = vrcp.pop %v5979
        %v6254 = vrcp.pop %v5981
        %v6255 = vrcp.pop %v5983
        %v6256 = vrcp.pop %v5985
        %v6257 = vrcp.pop %v5987
        %v6258 = vrcp.pop %v5989
        %v6259 = vrcp.pop %v5991
        %v6260 = vrcp.pop %v5993
        %v6261 = vrcp.pop %v5995
        %v6262 = vrcp.pop %v5997
        %v6263 = vrcp.pop %v5999
        %v6264 = vrcp.pop %v6001
        %v6265 = vrcp.pop %v6003
        %v6266 = vrcp.pop %v6005
        %v6267 = vrcp.pop %v6007
        %v6268 = vrcp.pop %v6009
        %v6269 = vrcp.pop %v6011
        %v6270 = vrcp.pop %v6013
        %v6271 = vrcp.pop %v6015
        %v6272 = vmul.f32 %v4993, %v6016
        %v6273 = vmul.f32 %v4995, %v6017
        %v6274 = vmul.f32 %v4997, %v6018
        %v6275 = vmul.f32 %v4999, %v6019
        %v6276 = vmul.f32 %v5001, %v6020
        %v6277 = vmul.f32 %v5003, %v6021
        %v6278 = vmul.f32 %v5005, %v6022
        %v6279 = vmul.f32 %v5007, %v6023
        %v6280 = vmul.f32 %v5009, %v6024
        %v6281 = vmul.f32 %v5011, %v6025
        %v6282 = vmul.f32 %v5013, %v6026
        %v6283 = vmul.f32 %v5015, %v6027
        %v6284 = vmul.f32 %v5017, %v6028
        %v6285 = vmul.f32 %v5019, %v6029
        %v6286 = vmul.f32 %v5021, %v6030
        %v6287 = vmul.f32 %v5023, %v6031
        %v6288 = vmul.f32 %v5025, %v6032
        %v6289 = vmul.f32 %v5027, %v6033
        %v6290 = vmul.f32 %v5029, %v6034
        %v6291 = vmul.f32 %v5031, %v6035
        %v6292 = vmul.f32 %v5033, %v6036
        %v6293 = vmul.f32 %v5035, %v6037
        %v6294 = vmul.f32 %v5037, %v6038
        %v6295 = vmul.f32 %v5039, %v6039
        %v6296 = vmul.f32 %v5041, %v6040
        %v6297 = vmul.f32 %v5043, %v6041
        %v6298 = vmul.f32 %v5045, %v6042
        %v6299 = vmul.f32 %v5047, %v6043
        %v6300 = vmul.f32 %v5049, %v6044
        %v6301 = vmul.f32 %v5051, %v6045
        %v6302 = vmul.f32 %v5053, %v6046
        %v6303 = vmul.f32 %v5055, %v6047
        %v6304 = vmul.f32 %v5057, %v6048
        %v6305 = vmul.f32 %v5059, %v6049
        %v6306 = vmul.f32 %v5061, %v6050
        %v6307 = vmul.f32 %v5063, %v6051
        %v6308 = vmul.f32 %v5065, %v6052
        %v6309 = vmul.f32 %v5067, %v6053
        %v6310 = vmul.f32 %v5069, %v6054
        %v6311 = vmul.f32 %v5071, %v6055
        %v6312 = vmul.f32 %v5073, %v6056
        %v6313 = vmul.f32 %v5075, %v6057
        %v6314 = vmul.f32 %v5077, %v6058
        %v6315 = vmul.f32 %v5079, %v6059
        %v6316 = vmul.f32 %v5081, %v6060
        %v6317 = vmul.f32 %v5083, %v6061
        %v6318 = vmul.f32 %v5085, %v6062
        %v6319 = vmul.f32 %v5087, %v6063
        %v6320 = vmul.f32 %v5089, %v6064
        %v6321 = vmul.f32 %v5091, %v6065
        %v6322 = vmul.f32 %v5093, %v6066
        %v6323 = vmul.f32 %v5095, %v6067
        %v6324 = vmul.f32 %v5097, %v6068
        %v6325 = vmul.f32 %v5099, %v6069
        %v6326 = vmul.f32 %v5101, %v6070
        %v6327 = vmul.f32 %v5103, %v6071
        %v6328 = vmul.f32 %v5105, %v6072
        %v6329 = vmul.f32 %v5107, %v6073
        %v6330 = vmul.f32 %v5109, %v6074
        %v6331 = vmul.f32 %v5111, %v6075
        %v6332 = vmul.f32 %v5113, %v6076
        %v6333 = vmul.f32 %v5115, %v6077
        %v6334 = vmul.f32 %v5117, %v6078
        %v6335 = vmul.f32 %v5119, %v6079
        %v6336 = vmul.f32 %v5121, %v6080
        %v6337 = vmul.f32 %v5123, %v6081
        %v6338 = vmul.f32 %v5125, %v6082
        %v6339 = vmul.f32 %v5127, %v6083
        %v6340 = vmul.f32 %v5129, %v6084
        %v6341 = vmul.f32 %v5131, %v6085
        %v6342 = vmul.f32 %v5133, %v6086
        %v6343 = vmul.f32 %v5135, %v6087
        %v6344 = vmul.f32 %v5137, %v6088
        %v6345 = vmul.f32 %v5139, %v6089
        %v6346 = vmul.f32 %v5141, %v6090
        %v6347 = vmul.f32 %v5143, %v6091
        %v6348 = vmul.f32 %v5145, %v6092
        %v6349 = vmul.f32 %v5147, %v6093
        %v6350 = vmul.f32 %v5149, %v6094
        %v6351 = vmul.f32 %v5151, %v6095
        %v6352 = vmul.f32 %v5153, %v6096
        %v6353 = vmul.f32 %v5155, %v6097
        %v6354 = vmul.f32 %v5157, %v6098
        %v6355 = vmul.f32 %v5159, %v6099
        %v6356 = vmul.f32 %v5161, %v6100
        %v6357 = vmul.f32 %v5163, %v6101
        %v6358 = vmul.f32 %v5165, %v6102
        %v6359 = vmul.f32 %v5167, %v6103
        %v6360 = vmul.f32 %v5169, %v6104
        %v6361 = vmul.f32 %v5171, %v6105
        %v6362 = vmul.f32 %v5173, %v6106
        %v6363 = vmul.f32 %v5175, %v6107
        %v6364 = vmul.f32 %v5177, %v6108
        %v6365 = vmul.f32 %v5179, %v6109
        %v6366 = vmul.f32 %v5181, %v6110
        %v6367 = vmul.f32 %v5183, %v6111
        %v6368 = vmul.f32 %v5185, %v6112
        %v6369 = vmul.f32 %v5187, %v6113
        %v6370 = vmul.f32 %v5189, %v6114
        %v6371 = vmul.f32 %v5191, %v6115
        %v6372 = vmul.f32 %v5193, %v6116
        %v6373 = vmul.f32 %v5195, %v6117
        %v6374 = vmul.f32 %v5197, %v6118
        %v6375 = vmul.f32 %v5199, %v6119
        %v6376 = vmul.f32 %v5201, %v6120
        %v6377 = vmul.f32 %v5203, %v6121
        %v6378 = vmul.f32 %v5205, %v6122
        %v6379 = vmul.f32 %v5207, %v6123
        %v6380 = vmul.f32 %v5209, %v6124
        %v6381 = vmul.f32 %v5211, %v6125
        %v6382 = vmul.f32 %v5213, %v6126
        %v6383 = vmul.f32 %v5215, %v6127
        %v6384 = vmul.f32 %v5217, %v6128
        %v6385 = vmul.f32 %v5219, %v6129
        %v6386 = vmul.f32 %v5221, %v6130
        %v6387 = vmul.f32 %v5223, %v6131
        %v6388 = vmul.f32 %v5225, %v6132
        %v6389 = vmul.f32 %v5227, %v6133
        %v6390 = vmul.f32 %v5229, %v6134
        %v6391 = vmul.f32 %v5231, %v6135
        %v6392 = vmul.f32 %v5233, %v6136
        %v6393 = vmul.f32 %v5235, %v6137
        %v6394 = vmul.f32 %v5237, %v6138
        %v6395 = vmul.f32 %v5239, %v6139
        %v6396 = vmul.f32 %v5241, %v6140
        %v6397 = vmul.f32 %v5243, %v6141
        %v6398 = vmul.f32 %v5245, %v6142
        %v6399 = vmul.f32 %v5247, %v6143
        %v6400 = vmul.f32 %v5249, %v6144
        %v6401 = vmul.f32 %v5251, %v6145
        %v6402 = vmul.f32 %v5253, %v6146
        %v6403 = vmul.f32 %v5255, %v6147
        %v6404 = vmul.f32 %v5257, %v6148
        %v6405 = vmul.f32 %v5259, %v6149
        %v6406 = vmul.f32 %v5261, %v6150
        %v6407 = vmul.f32 %v5263, %v6151
        %v6408 = vmul.f32 %v5265, %v6152
        %v6409 = vmul.f32 %v5267, %v6153
        %v6410 = vmul.f32 %v5269, %v6154
        %v6411 = vmul.f32 %v5271, %v6155
        %v6412 = vmul.f32 %v5273, %v6156
        %v6413 = vmul.f32 %v5275, %v6157
        %v6414 = vmul.f32 %v5277, %v6158
        %v6415 = vmul.f32 %v5279, %v6159
        %v6416 = vmul.f32 %v5281, %v6160
        %v6417 = vmul.f32 %v5283, %v6161
        %v6418 = vmul.f32 %v5285, %v6162
        %v6419 = vmul.f32 %v5287, %v6163
        %v6420 = vmul.f32 %v5289, %v6164
        %v6421 = vmul.f32 %v5291, %v6165
        %v6422 = vmul.f32 %v5293, %v6166
        %v6423 = vmul.f32 %v5295, %v6167
        %v6424 = vmul.f32 %v5297, %v6168
        %v6425 = vmul.f32 %v5299, %v6169
        %v6426 = vmul.f32 %v5301, %v6170
        %v6427 = vmul.f32 %v5303, %v6171
        %v6428 = vmul.f32 %v5305, %v6172
        %v6429 = vmul.f32 %v5307, %v6173
        %v6430 = vmul.f32 %v5309, %v6174
        %v6431 = vmul.f32 %v5311, %v6175
        %v6432 = vmul.f32 %v5313, %v6176
        %v6433 = vmul.f32 %v5315, %v6177
        %v6434 = vmul.f32 %v5317, %v6178
        %v6435 = vmul.f32 %v5319, %v6179
        %v6436 = vmul.f32 %v5321, %v6180
        %v6437 = vmul.f32 %v5323, %v6181
        %v6438 = vmul.f32 %v5325, %v6182
        %v6439 = vmul.f32 %v5327, %v6183
        %v6440 = vmul.f32 %v5329, %v6184
        %v6441 = vmul.f32 %v5331, %v6185
        %v6442 = vmul.f32 %v5333, %v6186
        %v6443 = vmul.f32 %v5335, %v6187
        %v6444 = vmul.f32 %v5337, %v6188
        %v6445 = vmul.f32 %v5339, %v6189
        %v6446 = vmul.f32 %v5341, %v6190
        %v6447 = vmul.f32 %v5343, %v6191
        %v6448 = vmul.f32 %v5345, %v6192
        %v6449 = vmul.f32 %v5347, %v6193
        %v6450 = vmul.f32 %v5349, %v6194
        %v6451 = vmul.f32 %v5351, %v6195
        %v6452 = vmul.f32 %v5353, %v6196
        %v6453 = vmul.f32 %v5355, %v6197
        %v6454 = vmul.f32 %v5357, %v6198
        %v6455 = vmul.f32 %v5359, %v6199
        %v6456 = vmul.f32 %v5361, %v6200
        %v6457 = vmul.f32 %v5363, %v6201
        %v6458 = vmul.f32 %v5365, %v6202
        %v6459 = vmul.f32 %v5367, %v6203
        %v6460 = vmul.f32 %v5369, %v6204
        %v6461 = vmul.f32 %v5371, %v6205
        %v6462 = vmul.f32 %v5373, %v6206
        %v6463 = vmul.f32 %v5375, %v6207
        %v6464 = vmul.f32 %v5377, %v6208
        %v6465 = vmul.f32 %v5379, %v6209
        %v6466 = vmul.f32 %v5381, %v6210
        %v6467 = vmul.f32 %v5383, %v6211
        %v6468 = vmul.f32 %v5385, %v6212
        %v6469 = vmul.f32 %v5387, %v6213
        %v6470 = vmul.f32 %v5389, %v6214
        %v6471 = vmul.f32 %v5391, %v6215
        %v6472 = vmul.f32 %v5393, %v6216
        %v6473 = vmul.f32 %v5395, %v6217
        %v6474 = vmul.f32 %v5397, %v6218
        %v6475 = vmul.f32 %v5399, %v6219
        %v6476 = vmul.f32 %v5401, %v6220
        %v6477 = vmul.f32 %v5403, %v6221
        %v6478 = vmul.f32 %v5405, %v6222
        %v6479 = vmul.f32 %v5407, %v6223
        %v6480 = vmul.f32 %v5409, %v6224
        %v6481 = vmul.f32 %v5411, %v6225
        %v6482 = vmul.f32 %v5413, %v6226
        %v6483 = vmul.f32 %v5415, %v6227
        %v6484 = vmul.f32 %v5417, %v6228
        %v6485 = vmul.f32 %v5419, %v6229
        %v6486 = vmul.f32 %v5421, %v6230
        %v6487 = vmul.f32 %v5423, %v6231
        %v6488 = vmul.f32 %v5425, %v6232
        %v6489 = vmul.f32 %v5427, %v6233
        %v6490 = vmul.f32 %v5429, %v6234
        %v6491 = vmul.f32 %v5431, %v6235
        %v6492 = vmul.f32 %v5433, %v6236
        %v6493 = vmul.f32 %v5435, %v6237
        %v6494 = vmul.f32 %v5437, %v6238
        %v6495 = vmul.f32 %v5439, %v6239
        %v6496 = vmul.f32 %v5441, %v6240
        %v6497 = vmul.f32 %v5443, %v6241
        %v6498 = vmul.f32 %v5445, %v6242
        %v6499 = vmul.f32 %v5447, %v6243
        %v6500 = vmul.f32 %v5449, %v6244
        %v6501 = vmul.f32 %v5451, %v6245
        %v6502 = vmul.f32 %v5453, %v6246
        %v6503 = vmul.f32 %v5455, %v6247
        %v6504 = vmul.f32 %v5457, %v6248
        %v6505 = vmul.f32 %v5459, %v6249
        %v6506 = vmul.f32 %v5461, %v6250
        %v6507 = vmul.f32 %v5463, %v6251
        %v6508 = vmul.f32 %v5465, %v6252
        %v6509 = vmul.f32 %v5467, %v6253
        %v6510 = vmul.f32 %v5469, %v6254
        %v6511 = vmul.f32 %v5471, %v6255
        %v6512 = vmul.f32 %v5473, %v6256
        %v6513 = vmul.f32 %v5475, %v6257
        %v6514 = vmul.f32 %v5477, %v6258
        %v6515 = vmul.f32 %v5479, %v6259
        %v6516 = vmul.f32 %v5481, %v6260
        %v6517 = vmul.f32 %v5483, %v6261
        %v6518 = vmul.f32 %v5485, %v6262
        %v6519 = vmul.f32 %v5487, %v6263
        %v6520 = vmul.f32 %v5489, %v6264
        %v6521 = vmul.f32 %v5491, %v6265
        %v6522 = vmul.f32 %v5493, %v6266
        %v6523 = vmul.f32 %v5495, %v6267
        %v6524 = vmul.f32 %v5497, %v6268
        %v6525 = vmul.f32 %v5499, %v6269
        %v6526 = vmul.f32 %v5501, %v6270
        %v6527 = vmul.f32 %v5503, %v6271
        %6528 = vmatprep.subr.mxu0 0.0
        %6529 = vmatpush1.xpose.msra.mxu0 %v6272
        %6530 = vmatprep.subr.mxu0 0.0
        %6531 = vmatpush1.xpose.msra.mxu0 %v6273
        %6532 = vmatprep.subr.mxu0 0.0
        %6533 = vmatpush1.xpose.msra.mxu0 %v6274
        %6534 = vmatprep.subr.mxu0 0.0
        %6535 = vmatpush1.xpose.msra.mxu0 %v6275
        %6536 = vmatprep.subr.mxu0 0.0
        %6537 = vmatpush1.xpose.msra.mxu0 %v6276
        %6538 = vmatprep.subr.mxu0 0.0
        %6539 = vmatpush1.xpose.msra.mxu0 %v6277
        %6540 = vmatprep.subr.mxu0 0.0
        %6541 = vmatpush1.xpose.msra.mxu0 %v6278
        %6542 = vmatprep.subr.mxu0 0.0
        %6543 = vmatpush1.xpose.msra.mxu0 %v6279
        %6544 = vmatprep.subr.mxu0 0.0
        %6545 = vmatpush1.xpose.msra.mxu0 %v6280
        %6546 = vmatprep.subr.mxu0 0.0
        %6547 = vmatpush1.xpose.msra.mxu0 %v6281
        %6548 = vmatprep.subr.mxu0 0.0
        %6549 = vmatpush1.xpose.msra.mxu0 %v6282
        %6550 = vmatprep.subr.mxu0 0.0
        %6551 = vmatpush1.xpose.msra.mxu0 %v6283
        %6552 = vmatprep.subr.mxu0 0.0
        %6553 = vmatpush1.xpose.msra.mxu0 %v6284
        %6554 = vmatprep.subr.mxu0 0.0
        %6555 = vmatpush1.xpose.msra.mxu0 %v6285
        %6556 = vmatprep.subr.mxu0 0.0
        %6557 = vmatpush1.xpose.msra.mxu0 %v6286
        %6558 = vmatprep.subr.mxu0 0.0
        %6559 = vmatpush1.xpose.msra.mxu0 %v6287
        %6560 = vmatprep.subr.mxu0 0.0
        %6561 = vmatpush1.xpose.msra.mxu0 0.0
        %6562 = vmatprep.subr.mxu0 0.0
        %6563 = vmatpush1.xpose.msra.mxu0 0.0
        %6564 = vmatprep.subr.mxu0 0.0
        %6565 = vmatpush1.xpose.msra.mxu0 0.0
        %6566 = vmatprep.subr.mxu0 0.0
        %6567 = vmatpush1.xpose.msra.mxu0 0.0
        %6568 = vmatprep.subr.mxu0 0.0
        %6569 = vmatpush1.xpose.msra.mxu0 0.0
        %6570 = vmatprep.subr.mxu0 0.0
        %6571 = vmatpush1.xpose.msra.mxu0 0.0
        %6572 = vmatprep.subr.mxu0 0.0
        %6573 = vmatpush1.xpose.msra.mxu0 0.0
        %6574 = vmatprep.subr.mxu0 0.0
        %6575 = vmatpush1.xpose.msra.mxu0 0.0
        %6576 = vmatprep.subr.mxu0 0.0
        %6577 = vmatpush1.xpose.msra.mxu0 0.0
        %6578 = vmatprep.subr.mxu0 0.0
        %6579 = vmatpush1.xpose.msra.mxu0 0.0
        %6580 = vmatprep.subr.mxu0 0.0
        %6581 = vmatpush1.xpose.msra.mxu0 0.0
        %6582 = vmatprep.subr.mxu0 0.0
        %6583 = vmatpush1.xpose.msra.mxu0 0.0
        %6584 = vmatprep.subr.mxu0 0.0
        %6585 = vmatpush1.xpose.msra.mxu0 0.0
        %6586 = vmatprep.subr.mxu0 0.0
        %6587 = vmatpush1.xpose.msra.mxu0 0.0
        %6588 = vmatprep.subr.mxu0 0.0
        %6589 = vmatpush1.xpose.msra.mxu0 0.0
        %6590 = vmatprep.subr.mxu0 0.0
        %6591 = vmatpush1.xpose.msra.mxu0 0.0
        %6592 = vmatprep.mubr.f32.mxu0 0.0
        %6593 = vmatmul.mubr.f32.gmra.mrb[0].mxu0 %v302
        %v6594 = vpop.f32.mrb[0].mxu0
        %v6595 = vadd.f32 0.0, %v6594
        %v6596 = vpop.f32.mrb[0].mxu0
        %6597 = vdwg.mxu0
        %6598 = vmatprep.subr.mxu0 0.0
        %6599 = vmatpush1.xpose.msra.mxu0 %v6288
        %6600 = vmatprep.subr.mxu0 0.0
        %6601 = vmatpush1.xpose.msra.mxu0 %v6289
        %6602 = vmatprep.subr.mxu0 0.0
        %6603 = vmatpush1.xpose.msra.mxu0 %v6290
        %6604 = vmatprep.subr.mxu0 0.0
        %6605 = vmatpush1.xpose.msra.mxu0 %v6291
        %6606 = vmatprep.subr.mxu0 0.0
        %6607 = vmatpush1.xpose.msra.mxu0 %v6292
        %6608 = vmatprep.subr.mxu0 0.0
        %6609 = vmatpush1.xpose.msra.mxu0 %v6293
        %6610 = vmatprep.subr.mxu0 0.0
        %6611 = vmatpush1.xpose.msra.mxu0 %v6294
        %6612 = vmatprep.subr.mxu0 0.0
        %6613 = vmatpush1.xpose.msra.mxu0 %v6295
        %6614 = vmatprep.subr.mxu0 0.0
        %6615 = vmatpush1.xpose.msra.mxu0 %v6296
        %6616 = vmatprep.subr.mxu0 0.0
        %6617 = vmatpush1.xpose.msra.mxu0 %v6297
        %6618 = vmatprep.subr.mxu0 0.0
        %6619 = vmatpush1.xpose.msra.mxu0 %v6298
        %6620 = vmatprep.subr.mxu0 0.0
        %6621 = vmatpush1.xpose.msra.mxu0 %v6299
        %6622 = vmatprep.subr.mxu0 0.0
        %6623 = vmatpush1.xpose.msra.mxu0 %v6300
        %6624 = vmatprep.subr.mxu0 0.0
        %6625 = vmatpush1.xpose.msra.mxu0 %v6301
        %6626 = vmatprep.subr.mxu0 0.0
        %6627 = vmatpush1.xpose.msra.mxu0 %v6302
        %6628 = vmatprep.subr.mxu0 0.0
        %6629 = vmatpush1.xpose.msra.mxu0 %v6303
        %6630 = vmatprep.subr.mxu0 0.0
        %6631 = vmatpush1.xpose.msra.mxu0 0.0
        %6632 = vmatprep.subr.mxu0 0.0
        %6633 = vmatpush1.xpose.msra.mxu0 0.0
        %6634 = vmatprep.subr.mxu0 0.0
        %6635 = vmatpush1.xpose.msra.mxu0 0.0
        %6636 = vmatprep.subr.mxu0 0.0
        %6637 = vmatpush1.xpose.msra.mxu0 0.0
        %6638 = vmatprep.subr.mxu0 0.0
        %6639 = vmatpush1.xpose.msra.mxu0 0.0
        %6640 = vmatprep.subr.mxu0 0.0
        %6641 = vmatpush1.xpose.msra.mxu0 0.0
        %6642 = vmatprep.subr.mxu0 0.0
        %6643 = vmatpush1.xpose.msra.mxu0 0.0
        %6644 = vmatprep.subr.mxu0 0.0
        %6645 = vmatpush1.xpose.msra.mxu0 0.0
        %6646 = vmatprep.subr.mxu0 0.0
        %6647 = vmatpush1.xpose.msra.mxu0 0.0
        %6648 = vmatprep.subr.mxu0 0.0
        %6649 = vmatpush1.xpose.msra.mxu0 0.0
        %6650 = vmatprep.subr.mxu0 0.0
        %6651 = vmatpush1.xpose.msra.mxu0 0.0
        %6652 = vmatprep.subr.mxu0 0.0
        %6653 = vmatpush1.xpose.msra.mxu0 0.0
        %6654 = vmatprep.subr.mxu0 0.0
        %6655 = vmatpush1.xpose.msra.mxu0 0.0
        %6656 = vmatprep.subr.mxu0 0.0
        %6657 = vmatpush1.xpose.msra.mxu0 0.0
        %6658 = vmatprep.subr.mxu0 0.0
        %6659 = vmatpush1.xpose.msra.mxu0 0.0
        %6660 = vmatprep.subr.mxu0 0.0
        %6661 = vmatpush1.xpose.msra.mxu0 0.0
        %6662 = vmatprep.mubr.f32.mxu0 0.0
        %6663 = vmatmul.mubr.f32.gmra.mrb[0].mxu0 %v303
        %v6664 = vpop.f32.mrb[0].mxu0
        %v6665 = vadd.f32 0.0, %v6664
        %v6666 = vpop.f32.mrb[0].mxu0
        %6667 = vdwg.mxu0
        %6668 = vmatprep.subr.mxu0 0.0
        %6669 = vmatpush1.xpose.msra.mxu0 %v6304
        %6670 = vmatprep.subr.mxu0 0.0
        %6671 = vmatpush1.xpose.msra.mxu0 %v6305
        %6672 = vmatprep.subr.mxu0 0.0
        %6673 = vmatpush1.xpose.msra.mxu0 %v6306
        %6674 = vmatprep.subr.mxu0 0.0
        %6675 = vmatpush1.xpose.msra.mxu0 %v6307
        %6676 = vmatprep.subr.mxu0 0.0
        %6677 = vmatpush1.xpose.msra.mxu0 %v6308
        %6678 = vmatprep.subr.mxu0 0.0
        %6679 = vmatpush1.xpose.msra.mxu0 %v6309
        %6680 = vmatprep.subr.mxu0 0.0
        %6681 = vmatpush1.xpose.msra.mxu0 %v6310
        %6682 = vmatprep.subr.mxu0 0.0
        %6683 = vmatpush1.xpose.msra.mxu0 %v6311
        %6684 = vmatprep.subr.mxu0 0.0
        %6685 = vmatpush1.xpose.msra.mxu0 %v6312
        %6686 = vmatprep.subr.mxu0 0.0
        %6687 = vmatpush1.xpose.msra.mxu0 %v6313
        %6688 = vmatprep.subr.mxu0 0.0
        %6689 = vmatpush1.xpose.msra.mxu0 %v6314
        %6690 = vmatprep.subr.mxu0 0.0
        %6691 = vmatpush1.xpose.msra.mxu0 %v6315
        %6692 = vmatprep.subr.mxu0 0.0
        %6693 = vmatpush1.xpose.msra.mxu0 %v6316
        %6694 = vmatprep.subr.mxu0 0.0
        %6695 = vmatpush1.xpose.msra.mxu0 %v6317
        %6696 = vmatprep.subr.mxu0 0.0
        %6697 = vmatpush1.xpose.msra.mxu0 %v6318
        %6698 = vmatprep.subr.mxu0 0.0
        %6699 = vmatpush1.xpose.msra.mxu0 %v6319
        %6700 = vmatprep.subr.mxu0 0.0
        %6701 = vmatpush1.xpose.msra.mxu0 0.0
        %6702 = vmatprep.subr.mxu0 0.0
        %6703 = vmatpush1.xpose.msra.mxu0 0.0
        %6704 = vmatprep.subr.mxu0 0.0
        %6705 = vmatpush1.xpose.msra.mxu0 0.0
        %6706 = vmatprep.subr.mxu0 0.0
        %6707 = vmatpush1.xpose.msra.mxu0 0.0
        %6708 = vmatprep.subr.mxu0 0.0
        %6709 = vmatpush1.xpose.msra.mxu0 0.0
        %6710 = vmatprep.subr.mxu0 0.0
        %6711 = vmatpush1.xpose.msra.mxu0 0.0
        %6712 = vmatprep.subr.mxu0 0.0
        %6713 = vmatpush1.xpose.msra.mxu0 0.0
        %6714 = vmatprep.subr.mxu0 0.0
        %6715 = vmatpush1.xpose.msra.mxu0 0.0
        %6716 = vmatprep.subr.mxu0 0.0
        %6717 = vmatpush1.xpose.msra.mxu0 0.0
        %6718 = vmatprep.subr.mxu0 0.0
        %6719 = vmatpush1.xpose.msra.mxu0 0.0
        %6720 = vmatprep.subr.mxu0 0.0
        %6721 = vmatpush1.xpose.msra.mxu0 0.0
        %6722 = vmatprep.subr.mxu0 0.0
        %6723 = vmatpush1.xpose.msra.mxu0 0.0
        %6724 = vmatprep.subr.mxu0 0.0
        %6725 = vmatpush1.xpose.msra.mxu0 0.0
        %6726 = vmatprep.subr.mxu0 0.0
        %6727 = vmatpush1.xpose.msra.mxu0 0.0
        %6728 = vmatprep.subr.mxu0 0.0
        %6729 = vmatpush1.xpose.msra.mxu0 0.0
        %6730 = vmatprep.subr.mxu0 0.0
        %6731 = vmatpush1.xpose.msra.mxu0 0.0
        %6732 = vmatprep.mubr.f32.mxu0 0.0
        %6733 = vmatmul.mubr.f32.gmra.mrb[0].mxu0 %v304
        %v6734 = vpop.f32.mrb[0].mxu0
        %v6735 = vadd.f32 0.0, %v6734
        %v6736 = vpop.f32.mrb[0].mxu0
        %6737 = vdwg.mxu0
        %6738 = vmatprep.subr.mxu0 0.0
        %6739 = vmatpush1.xpose.msra.mxu0 %v6320
        %6740 = vmatprep.subr.mxu0 0.0
        %6741 = vmatpush1.xpose.msra.mxu0 %v6321
        %6742 = vmatprep.subr.mxu0 0.0
        %6743 = vmatpush1.xpose.msra.mxu0 %v6322
        %6744 = vmatprep.subr.mxu0 0.0
        %6745 = vmatpush1.xpose.msra.mxu0 %v6323
        %6746 = vmatprep.subr.mxu0 0.0
        %6747 = vmatpush1.xpose.msra.mxu0 %v6324
        %6748 = vmatprep.subr.mxu0 0.0
        %6749 = vmatpush1.xpose.msra.mxu0 %v6325
        %6750 = vmatprep.subr.mxu0 0.0
        %6751 = vmatpush1.xpose.msra.mxu0 %v6326
        %6752 = vmatprep.subr.mxu0 0.0
        %6753 = vmatpush1.xpose.msra.mxu0 %v6327
        %6754 = vmatprep.subr.mxu0 0.0
        %6755 = vmatpush1.xpose.msra.mxu0 %v6328
        %6756 = vmatprep.subr.mxu0 0.0
        %6757 = vmatpush1.xpose.msra.mxu0 %v6329
        %6758 = vmatprep.subr.mxu0 0.0
        %6759 = vmatpush1.xpose.msra.mxu0 %v6330
        %6760 = vmatprep.subr.mxu0 0.0
        %6761 = vmatpush1.xpose.msra.mxu0 %v6331
        %6762 = vmatprep.subr.mxu0 0.0
        %6763 = vmatpush1.xpose.msra.mxu0 %v6332
        %6764 = vmatprep.subr.mxu0 0.0
        %6765 = vmatpush1.xpose.msra.mxu0 %v6333
        %6766 = vmatprep.subr.mxu0 0.0
        %6767 = vmatpush1.xpose.msra.mxu0 %v6334
        %6768 = vmatprep.subr.mxu0 0.0
        %6769 = vmatpush1.xpose.msra.mxu0 %v6335
        %6770 = vmatprep.subr.mxu0 0.0
        %6771 = vmatpush1.xpose.msra.mxu0 0.0
        %6772 = vmatprep.subr.mxu0 0.0
        %6773 = vmatpush1.xpose.msra.mxu0 0.0
        %6774 = vmatprep.subr.mxu0 0.0
        %6775 = vmatpush1.xpose.msra.mxu0 0.0
        %6776 = vmatprep.subr.mxu0 0.0
        %6777 = vmatpush1.xpose.msra.mxu0 0.0
        %6778 = vmatprep.subr.mxu0 0.0
        %6779 = vmatpush1.xpose.msra.mxu0 0.0
        %6780 = vmatprep.subr.mxu0 0.0
        %6781 = vmatpush1.xpose.msra.mxu0 0.0
        %6782 = vmatprep.subr.mxu0 0.0
        %6783 = vmatpush1.xpose.msra.mxu0 0.0
        %6784 = vmatprep.subr.mxu0 0.0
        %6785 = vmatpush1.xpose.msra.mxu0 0.0
        %6786 = vmatprep.subr.mxu0 0.0
        %6787 = vmatpush1.xpose.msra.mxu0 0.0
        %6788 = vmatprep.subr.mxu0 0.0
        %6789 = vmatpush1.xpose.msra.mxu0 0.0
        %6790 = vmatprep.subr.mxu0 0.0
        %6791 = vmatpush1.xpose.msra.mxu0 0.0
        %6792 = vmatprep.subr.mxu0 0.0
        %6793 = vmatpush1.xpose.msra.mxu0 0.0
        %6794 = vmatprep.subr.mxu0 0.0
        %6795 = vmatpush1.xpose.msra.mxu0 0.0
        %6796 = vmatprep.subr.mxu0 0.0
        %6797 = vmatpush1.xpose.msra.mxu0 0.0
        %6798 = vmatprep.subr.mxu0 0.0
        %6799 = vmatpush1.xpose.msra.mxu0 0.0
        %6800 = vmatprep.subr.mxu0 0.0
        %6801 = vmatpush1.xpose.msra.mxu0 0.0
        %6802 = vmatprep.mubr.f32.mxu0 0.0
        %6803 = vmatmul.mubr.f32.gmra.mrb[0].mxu0 %v305
        %v6804 = vpop.f32.mrb[0].mxu0
        %v6805 = vadd.f32 0.0, %v6804
        %v6806 = vpop.f32.mrb[0].mxu0
        %6807 = vdwg.mxu0
        %6808 = vmatprep.subr.mxu0 0.0
        %6809 = vmatpush1.xpose.msra.mxu0 %v6336
        %6810 = vmatprep.subr.mxu0 0.0
        %6811 = vmatpush1.xpose.msra.mxu0 %v6337
        %6812 = vmatprep.subr.mxu0 0.0
        %6813 = vmatpush1.xpose.msra.mxu0 %v6338
        %6814 = vmatprep.subr.mxu0 0.0
        %6815 = vmatpush1.xpose.msra.mxu0 %v6339
        %6816 = vmatprep.subr.mxu0 0.0
        %6817 = vmatpush1.xpose.msra.mxu0 %v6340
        %6818 = vmatprep.subr.mxu0 0.0
        %6819 = vmatpush1.xpose.msra.mxu0 %v6341
        %6820 = vmatprep.subr.mxu0 0.0
        %6821 = vmatpush1.xpose.msra.mxu0 %v6342
        %6822 = vmatprep.subr.mxu0 0.0
        %6823 = vmatpush1.xpose.msra.mxu0 %v6343
        %6824 = vmatprep.subr.mxu0 0.0
        %6825 = vmatpush1.xpose.msra.mxu0 %v6344
        %6826 = vmatprep.subr.mxu0 0.0
        %6827 = vmatpush1.xpose.msra.mxu0 %v6345
        %6828 = vmatprep.subr.mxu0 0.0
        %6829 = vmatpush1.xpose.msra.mxu0 %v6346
        %6830 = vmatprep.subr.mxu0 0.0
        %6831 = vmatpush1.xpose.msra.mxu0 %v6347
        %6832 = vmatprep.subr.mxu0 0.0
        %6833 = vmatpush1.xpose.msra.mxu0 %v6348
        %6834 = vmatprep.subr.mxu0 0.0
        %6835 = vmatpush1.xpose.msra.mxu0 %v6349
        %6836 = vmatprep.subr.mxu0 0.0
        %6837 = vmatpush1.xpose.msra.mxu0 %v6350
        %6838 = vmatprep.subr.mxu0 0.0
        %6839 = vmatpush1.xpose.msra.mxu0 %v6351
        %6840 = vmatprep.subr.mxu0 0.0
        %6841 = vmatpush1.xpose.msra.mxu0 0.0
        %6842 = vmatprep.subr.mxu0 0.0
        %6843 = vmatpush1.xpose.msra.mxu0 0.0
        %6844 = vmatprep.subr.mxu0 0.0
        %6845 = vmatpush1.xpose.msra.mxu0 0.0
        %6846 = vmatprep.subr.mxu0 0.0
        %6847 = vmatpush1.xpose.msra.mxu0 0.0
        %6848 = vmatprep.subr.mxu0 0.0
        %6849 = vmatpush1.xpose.msra.mxu0 0.0
        %6850 = vmatprep.subr.mxu0 0.0
        %6851 = vmatpush1.xpose.msra.mxu0 0.0
        %6852 = vmatprep.subr.mxu0 0.0
        %6853 = vmatpush1.xpose.msra.mxu0 0.0
        %6854 = vmatprep.subr.mxu0 0.0
        %6855 = vmatpush1.xpose.msra.mxu0 0.0
        %6856 = vmatprep.subr.mxu0 0.0
        %6857 = vmatpush1.xpose.msra.mxu0 0.0
        %6858 = vmatprep.subr.mxu0 0.0
        %6859 = vmatpush1.xpose.msra.mxu0 0.0
        %6860 = vmatprep.subr.mxu0 0.0
        %6861 = vmatpush1.xpose.msra.mxu0 0.0
        %6862 = vmatprep.subr.mxu0 0.0
        %6863 = vmatpush1.xpose.msra.mxu0 0.0
        %6864 = vmatprep.subr.mxu0 0.0
        %6865 = vmatpush1.xpose.msra.mxu0 0.0
        %6866 = vmatprep.subr.mxu0 0.0
        %6867 = vmatpush1.xpose.msra.mxu0 0.0
        %6868 = vmatprep.subr.mxu0 0.0
        %6869 = vmatpush1.xpose.msra.mxu0 0.0
        %6870 = vmatprep.subr.mxu0 0.0
        %6871 = vmatpush1.xpose.msra.mxu0 0.0
        %6872 = vmatprep.mubr.f32.mxu0 0.0
        %6873 = vmatmul.mubr.f32.gmra.mrb[0].mxu0 %v306
        %v6874 = vpop.f32.mrb[0].mxu0
        %v6875 = vadd.f32 0.0, %v6874
        %v6876 = vpop.f32.mrb[0].mxu0
        %6877 = vdwg.mxu0
        %6878 = vmatprep.subr.mxu0 0.0
        %6879 = vmatpush1.xpose.msra.mxu0 %v6352
        %6880 = vmatprep.subr.mxu0 0.0
        %6881 = vmatpush1.xpose.msra.mxu0 %v6353
        %6882 = vmatprep.subr.mxu0 0.0
        %6883 = vmatpush1.xpose.msra.mxu0 %v6354
        %6884 = vmatprep.subr.mxu0 0.0
        %6885 = vmatpush1.xpose.msra.mxu0 %v6355
        %6886 = vmatprep.subr.mxu0 0.0
        %6887 = vmatpush1.xpose.msra.mxu0 %v6356
        %6888 = vmatprep.subr.mxu0 0.0
        %6889 = vmatpush1.xpose.msra.mxu0 %v6357
        %6890 = vmatprep.subr.mxu0 0.0
        %6891 = vmatpush1.xpose.msra.mxu0 %v6358
        %6892 = vmatprep.subr.mxu0 0.0
        %6893 = vmatpush1.xpose.msra.mxu0 %v6359
        %6894 = vmatprep.subr.mxu0 0.0
        %6895 = vmatpush1.xpose.msra.mxu0 %v6360
        %6896 = vmatprep.subr.mxu0 0.0
        %6897 = vmatpush1.xpose.msra.mxu0 %v6361
        %6898 = vmatprep.subr.mxu0 0.0
        %6899 = vmatpush1.xpose.msra.mxu0 %v6362
        %6900 = vmatprep.subr.mxu0 0.0
        %6901 = vmatpush1.xpose.msra.mxu0 %v6363
        %6902 = vmatprep.subr.mxu0 0.0
        %6903 = vmatpush1.xpose.msra.mxu0 %v6364
        %6904 = vmatprep.subr.mxu0 0.0
        %6905 = vmatpush1.xpose.msra.mxu0 %v6365
        %6906 = vmatprep.subr.mxu0 0.0
        %6907 = vmatpush1.xpose.msra.mxu0 %v6366
        %6908 = vmatprep.subr.mxu0 0.0
        %6909 = vmatpush1.xpose.msra.mxu0 %v6367
        %6910 = vmatprep.subr.mxu0 0.0
        %6911 = vmatpush1.xpose.msra.mxu0 0.0
        %6912 = vmatprep.subr.mxu0 0.0
        %6913 = vmatpush1.xpose.msra.mxu0 0.0
        %6914 = vmatprep.subr.mxu0 0.0
        %6915 = vmatpush1.xpose.msra.mxu0 0.0
        %6916 = vmatprep.subr.mxu0 0.0
        %6917 = vmatpush1.xpose.msra.mxu0 0.0
        %6918 = vmatprep.subr.mxu0 0.0
        %6919 = vmatpush1.xpose.msra.mxu0 0.0
        %6920 = vmatprep.subr.mxu0 0.0
        %6921 = vmatpush1.xpose.msra.mxu0 0.0
        %6922 = vmatprep.subr.mxu0 0.0
        %6923 = vmatpush1.xpose.msra.mxu0 0.0
        %6924 = vmatprep.subr.mxu0 0.0
        %6925 = vmatpush1.xpose.msra.mxu0 0.0
        %6926 = vmatprep.subr.mxu0 0.0
        %6927 = vmatpush1.xpose.msra.mxu0 0.0
        %6928 = vmatprep.subr.mxu0 0.0
        %6929 = vmatpush1.xpose.msra.mxu0 0.0
        %6930 = vmatprep.subr.mxu0 0.0
        %6931 = vmatpush1.xpose.msra.mxu0 0.0
        %6932 = vmatprep.subr.mxu0 0.0
        %6933 = vmatpush1.xpose.msra.mxu0 0.0
        %6934 = vmatprep.subr.mxu0 0.0
        %6935 = vmatpush1.xpose.msra.mxu0 0.0
        %6936 = vmatprep.subr.mxu0 0.0
        %6937 = vmatpush1.xpose.msra.mxu0 0.0
        %6938 = vmatprep.subr.mxu0 0.0
        %6939 = vmatpush1.xpose.msra.mxu0 0.0
        %6940 = vmatprep.subr.mxu0 0.0
        %6941 = vmatpush1.xpose.msra.mxu0 0.0
        %6942 = vmatprep.mubr.f32.mxu0 0.0
        %6943 = vmatmul.mubr.f32.gmra.mrb[0].mxu0 %v307
        %v6944 = vpop.f32.mrb[0].mxu0
        %v6945 = vadd.f32 0.0, %v6944
        %v6946 = vpop.f32.mrb[0].mxu0
        %6947 = vdwg.mxu0
        %6948 = vmatprep.subr.mxu0 0.0
        %6949 = vmatpush1.xpose.msra.mxu0 %v6368
        %6950 = vmatprep.subr.mxu0 0.0
        %6951 = vmatpush1.xpose.msra.mxu0 %v6369
        %6952 = vmatprep.subr.mxu0 0.0
        %6953 = vmatpush1.xpose.msra.mxu0 %v6370
        %6954 = vmatprep.subr.mxu0 0.0
        %6955 = vmatpush1.xpose.msra.mxu0 %v6371
        %6956 = vmatprep.subr.mxu0 0.0
        %6957 = vmatpush1.xpose.msra.mxu0 %v6372
        %6958 = vmatprep.subr.mxu0 0.0
        %6959 = vmatpush1.xpose.msra.mxu0 %v6373
        %6960 = vmatprep.subr.mxu0 0.0
        %6961 = vmatpush1.xpose.msra.mxu0 %v6374
        %6962 = vmatprep.subr.mxu0 0.0
        %6963 = vmatpush1.xpose.msra.mxu0 %v6375
        %6964 = vmatprep.subr.mxu0 0.0
        %6965 = vmatpush1.xpose.msra.mxu0 %v6376
        %6966 = vmatprep.subr.mxu0 0.0
        %6967 = vmatpush1.xpose.msra.mxu0 %v6377
        %6968 = vmatprep.subr.mxu0 0.0
        %6969 = vmatpush1.xpose.msra.mxu0 %v6378
        %6970 = vmatprep.subr.mxu0 0.0
        %6971 = vmatpush1.xpose.msra.mxu0 %v6379
        %6972 = vmatprep.subr.mxu0 0.0
        %6973 = vmatpush1.xpose.msra.mxu0 %v6380
        %6974 = vmatprep.subr.mxu0 0.0
        %6975 = vmatpush1.xpose.msra.mxu0 %v6381
        %6976 = vmatprep.subr.mxu0 0.0
        %6977 = vmatpush1.xpose.msra.mxu0 %v6382
        %6978 = vmatprep.subr.mxu0 0.0
        %6979 = vmatpush1.xpose.msra.mxu0 %v6383
        %6980 = vmatprep.subr.mxu0 0.0
        %6981 = vmatpush1.xpose.msra.mxu0 0.0
        %6982 = vmatprep.subr.mxu0 0.0
        %6983 = vmatpush1.xpose.msra.mxu0 0.0
        %6984 = vmatprep.subr.mxu0 0.0
        %6985 = vmatpush1.xpose.msra.mxu0 0.0
        %6986 = vmatprep.subr.mxu0 0.0
        %6987 = vmatpush1.xpose.msra.mxu0 0.0
        %6988 = vmatprep.subr.mxu0 0.0
        %6989 = vmatpush1.xpose.msra.mxu0 0.0
        %6990 = vmatprep.subr.mxu0 0.0
        %6991 = vmatpush1.xpose.msra.mxu0 0.0
        %6992 = vmatprep.subr.mxu0 0.0
        %6993 = vmatpush1.xpose.msra.mxu0 0.0
        %6994 = vmatprep.subr.mxu0 0.0
        %6995 = vmatpush1.xpose.msra.mxu0 0.0
        %6996 = vmatprep.subr.mxu0 0.0
        %6997 = vmatpush1.xpose.msra.mxu0 0.0
        %6998 = vmatprep.subr.mxu0 0.0
        %6999 = vmatpush1.xpose.msra.mxu0 0.0
        %7000 = vmatprep.subr.mxu0 0.0
        %7001 = vmatpush1.xpose.msra.mxu0 0.0
        %7002 = vmatprep.subr.mxu0 0.0
        %7003 = vmatpush1.xpose.msra.mxu0 0.0
        %7004 = vmatprep.subr.mxu0 0.0
        %7005 = vmatpush1.xpose.msra.mxu0 0.0
        %7006 = vmatprep.subr.mxu0 0.0
        %7007 = vmatpush1.xpose.msra.mxu0 0.0
        %7008 = vmatprep.subr.mxu0 0.0
        %7009 = vmatpush1.xpose.msra.mxu0 0.0
        %7010 = vmatprep.subr.mxu0 0.0
        %7011 = vmatpush1.xpose.msra.mxu0 0.0
        %7012 = vmatprep.mubr.f32.mxu0 0.0
        %7013 = vmatmul.mubr.f32.gmra.mrb[0].mxu0 %v308
        %v7014 = vpop.f32.mrb[0].mxu0
        %v7015 = vadd.f32 0.0, %v7014
        %v7016 = vpop.f32.mrb[0].mxu0
        %7017 = vdwg.mxu0
        %7018 = vmatprep.subr.mxu0 0.0
        %7019 = vmatpush1.xpose.msra.mxu0 %v6384
        %7020 = vmatprep.subr.mxu0 0.0
        %7021 = vmatpush1.xpose.msra.mxu0 %v6385
        %7022 = vmatprep.subr.mxu0 0.0
        %7023 = vmatpush1.xpose.msra.mxu0 %v6386
        %7024 = vmatprep.subr.mxu0 0.0
        %7025 = vmatpush1.xpose.msra.mxu0 %v6387
        %7026 = vmatprep.subr.mxu0 0.0
        %7027 = vmatpush1.xpose.msra.mxu0 %v6388
        %7028 = vmatprep.subr.mxu0 0.0
        %7029 = vmatpush1.xpose.msra.mxu0 %v6389
        %7030 = vmatprep.subr.mxu0 0.0
        %7031 = vmatpush1.xpose.msra.mxu0 %v6390
        %7032 = vmatprep.subr.mxu0 0.0
        %7033 = vmatpush1.xpose.msra.mxu0 %v6391
        %7034 = vmatprep.subr.mxu0 0.0
        %7035 = vmatpush1.xpose.msra.mxu0 %v6392
        %7036 = vmatprep.subr.mxu0 0.0
        %7037 = vmatpush1.xpose.msra.mxu0 %v6393
        %7038 = vmatprep.subr.mxu0 0.0
        %7039 = vmatpush1.xpose.msra.mxu0 %v6394
        %7040 = vmatprep.subr.mxu0 0.0
        %7041 = vmatpush1.xpose.msra.mxu0 %v6395
        %7042 = vmatprep.subr.mxu0 0.0
        %7043 = vmatpush1.xpose.msra.mxu0 %v6396
        %7044 = vmatprep.subr.mxu0 0.0
        %7045 = vmatpush1.xpose.msra.mxu0 %v6397
        %7046 = vmatprep.subr.mxu0 0.0
        %7047 = vmatpush1.xpose.msra.mxu0 %v6398
        %7048 = vmatprep.subr.mxu0 0.0
        %7049 = vmatpush1.xpose.msra.mxu0 %v6399
        %7050 = vmatprep.subr.mxu0 0.0
        %7051 = vmatpush1.xpose.msra.mxu0 0.0
        %7052 = vmatprep.subr.mxu0 0.0
        %7053 = vmatpush1.xpose.msra.mxu0 0.0
        %7054 = vmatprep.subr.mxu0 0.0
        %7055 = vmatpush1.xpose.msra.mxu0 0.0
        %7056 = vmatprep.subr.mxu0 0.0
        %7057 = vmatpush1.xpose.msra.mxu0 0.0
        %7058 = vmatprep.subr.mxu0 0.0
        %7059 = vmatpush1.xpose.msra.mxu0 0.0
        %7060 = vmatprep.subr.mxu0 0.0
        %7061 = vmatpush1.xpose.msra.mxu0 0.0
        %7062 = vmatprep.subr.mxu0 0.0
        %7063 = vmatpush1.xpose.msra.mxu0 0.0
        %7064 = vmatprep.subr.mxu0 0.0
        %7065 = vmatpush1.xpose.msra.mxu0 0.0
        %7066 = vmatprep.subr.mxu0 0.0
        %7067 = vmatpush1.xpose.msra.mxu0 0.0
        %7068 = vmatprep.subr.mxu0 0.0
        %7069 = vmatpush1.xpose.msra.mxu0 0.0
        %7070 = vmatprep.subr.mxu0 0.0
        %7071 = vmatpush1.xpose.msra.mxu0 0.0
        %7072 = vmatprep.subr.mxu0 0.0
        %7073 = vmatpush1.xpose.msra.mxu0 0.0
        %7074 = vmatprep.subr.mxu0 0.0
        %7075 = vmatpush1.xpose.msra.mxu0 0.0
        %7076 = vmatprep.subr.mxu0 0.0
        %7077 = vmatpush1.xpose.msra.mxu0 0.0
        %7078 = vmatprep.subr.mxu0 0.0
        %7079 = vmatpush1.xpose.msra.mxu0 0.0
        %7080 = vmatprep.subr.mxu0 0.0
        %7081 = vmatpush1.xpose.msra.mxu0 0.0
        %7082 = vmatprep.mubr.f32.mxu0 0.0
        %7083 = vmatmul.mubr.f32.gmra.mrb[0].mxu0 %v309
        %v7084 = vpop.f32.mrb[0].mxu0
        %v7085 = vadd.f32 0.0, %v7084
        %v7086 = vpop.f32.mrb[0].mxu0
        %7087 = vdwg.mxu0
        %7088 = vmatprep.subr.mxu0 0.0
        %7089 = vmatpush1.xpose.msra.mxu0 %v6400
        %7090 = vmatprep.subr.mxu0 0.0
        %7091 = vmatpush1.xpose.msra.mxu0 %v6401
        %7092 = vmatprep.subr.mxu0 0.0
        %7093 = vmatpush1.xpose.msra.mxu0 %v6402
        %7094 = vmatprep.subr.mxu0 0.0
        %7095 = vmatpush1.xpose.msra.mxu0 %v6403
        %7096 = vmatprep.subr.mxu0 0.0
        %7097 = vmatpush1.xpose.msra.mxu0 %v6404
        %7098 = vmatprep.subr.mxu0 0.0
        %7099 = vmatpush1.xpose.msra.mxu0 %v6405
        %7100 = vmatprep.subr.mxu0 0.0
        %7101 = vmatpush1.xpose.msra.mxu0 %v6406
        %7102 = vmatprep.subr.mxu0 0.0
        %7103 = vmatpush1.xpose.msra.mxu0 %v6407
        %7104 = vmatprep.subr.mxu0 0.0
        %7105 = vmatpush1.xpose.msra.mxu0 %v6408
        %7106 = vmatprep.subr.mxu0 0.0
        %7107 = vmatpush1.xpose.msra.mxu0 %v6409
        %7108 = vmatprep.subr.mxu0 0.0
        %7109 = vmatpush1.xpose.msra.mxu0 %v6410
        %7110 = vmatprep.subr.mxu0 0.0
        %7111 = vmatpush1.xpose.msra.mxu0 %v6411
        %7112 = vmatprep.subr.mxu0 0.0
        %7113 = vmatpush1.xpose.msra.mxu0 %v6412
        %7114 = vmatprep.subr.mxu0 0.0
        %7115 = vmatpush1.xpose.msra.mxu0 %v6413
        %7116 = vmatprep.subr.mxu0 0.0
        %7117 = vmatpush1.xpose.msra.mxu0 %v6414
        %7118 = vmatprep.subr.mxu0 0.0
        %7119 = vmatpush1.xpose.msra.mxu0 %v6415
        %7120 = vmatprep.subr.mxu0 0.0
        %7121 = vmatpush1.xpose.msra.mxu0 0.0
        %7122 = vmatprep.subr.mxu0 0.0
        %7123 = vmatpush1.xpose.msra.mxu0 0.0
        %7124 = vmatprep.subr.mxu0 0.0
        %7125 = vmatpush1.xpose.msra.mxu0 0.0
        %7126 = vmatprep.subr.mxu0 0.0
        %7127 = vmatpush1.xpose.msra.mxu0 0.0
        %7128 = vmatprep.subr.mxu0 0.0
        %7129 = vmatpush1.xpose.msra.mxu0 0.0
        %7130 = vmatprep.subr.mxu0 0.0
        %7131 = vmatpush1.xpose.msra.mxu0 0.0
        %7132 = vmatprep.subr.mxu0 0.0
        %7133 = vmatpush1.xpose.msra.mxu0 0.0
        %7134 = vmatprep.subr.mxu0 0.0
        %7135 = vmatpush1.xpose.msra.mxu0 0.0
        %7136 = vmatprep.subr.mxu0 0.0
        %7137 = vmatpush1.xpose.msra.mxu0 0.0
        %7138 = vmatprep.subr.mxu0 0.0
        %7139 = vmatpush1.xpose.msra.mxu0 0.0
        %7140 = vmatprep.subr.mxu0 0.0
        %7141 = vmatpush1.xpose.msra.mxu0 0.0
        %7142 = vmatprep.subr.mxu0 0.0
        %7143 = vmatpush1.xpose.msra.mxu0 0.0
        %7144 = vmatprep.subr.mxu0 0.0
        %7145 = vmatpush1.xpose.msra.mxu0 0.0
        %7146 = vmatprep.subr.mxu0 0.0
        %7147 = vmatpush1.xpose.msra.mxu0 0.0
        %7148 = vmatprep.subr.mxu0 0.0
        %7149 = vmatpush1.xpose.msra.mxu0 0.0
        %7150 = vmatprep.subr.mxu0 0.0
        %7151 = vmatpush1.xpose.msra.mxu0 0.0
        %7152 = vmatprep.mubr.f32.mxu0 0.0
        %7153 = vmatmul.mubr.f32.gmra.mrb[0].mxu0 %v310
        %v7154 = vpop.f32.mrb[0].mxu0
        %v7155 = vadd.f32 0.0, %v7154
        %v7156 = vpop.f32.mrb[0].mxu0
        %7157 = vdwg.mxu0
        %7158 = vmatprep.subr.mxu0 0.0
        %7159 = vmatpush1.xpose.msra.mxu0 %v6416
        %7160 = vmatprep.subr.mxu0 0.0
        %7161 = vmatpush1.xpose.msra.mxu0 %v6417
        %7162 = vmatprep.subr.mxu0 0.0
        %7163 = vmatpush1.xpose.msra.mxu0 %v6418
        %7164 = vmatprep.subr.mxu0 0.0
        %7165 = vmatpush1.xpose.msra.mxu0 %v6419
        %7166 = vmatprep.subr.mxu0 0.0
        %7167 = vmatpush1.xpose.msra.mxu0 %v6420
        %7168 = vmatprep.subr.mxu0 0.0
        %7169 = vmatpush1.xpose.msra.mxu0 %v6421
        %7170 = vmatprep.subr.mxu0 0.0
        %7171 = vmatpush1.xpose.msra.mxu0 %v6422
        %7172 = vmatprep.subr.mxu0 0.0
        %7173 = vmatpush1.xpose.msra.mxu0 %v6423
        %7174 = vmatprep.subr.mxu0 0.0
        %7175 = vmatpush1.xpose.msra.mxu0 %v6424
        %7176 = vmatprep.subr.mxu0 0.0
        %7177 = vmatpush1.xpose.msra.mxu0 %v6425
        %7178 = vmatprep.subr.mxu0 0.0
        %7179 = vmatpush1.xpose.msra.mxu0 %v6426
        %7180 = vmatprep.subr.mxu0 0.0
        %7181 = vmatpush1.xpose.msra.mxu0 %v6427
        %7182 = vmatprep.subr.mxu0 0.0
        %7183 = vmatpush1.xpose.msra.mxu0 %v6428
        %7184 = vmatprep.subr.mxu0 0.0
        %7185 = vmatpush1.xpose.msra.mxu0 %v6429
        %7186 = vmatprep.subr.mxu0 0.0
        %7187 = vmatpush1.xpose.msra.mxu0 %v6430
        %7188 = vmatprep.subr.mxu0 0.0
        %7189 = vmatpush1.xpose.msra.mxu0 %v6431
        %7190 = vmatprep.subr.mxu0 0.0
        %7191 = vmatpush1.xpose.msra.mxu0 0.0
        %7192 = vmatprep.subr.mxu0 0.0
        %7193 = vmatpush1.xpose.msra.mxu0 0.0
        %7194 = vmatprep.subr.mxu0 0.0
        %7195 = vmatpush1.xpose.msra.mxu0 0.0
        %7196 = vmatprep.subr.mxu0 0.0
        %7197 = vmatpush1.xpose.msra.mxu0 0.0
        %7198 = vmatprep.subr.mxu0 0.0
        %7199 = vmatpush1.xpose.msra.mxu0 0.0
        %7200 = vmatprep.subr.mxu0 0.0
        %7201 = vmatpush1.xpose.msra.mxu0 0.0
        %7202 = vmatprep.subr.mxu0 0.0
        %7203 = vmatpush1.xpose.msra.mxu0 0.0
        %7204 = vmatprep.subr.mxu0 0.0
        %7205 = vmatpush1.xpose.msra.mxu0 0.0
        %7206 = vmatprep.subr.mxu0 0.0
        %7207 = vmatpush1.xpose.msra.mxu0 0.0
        %7208 = vmatprep.subr.mxu0 0.0
        %7209 = vmatpush1.xpose.msra.mxu0 0.0
        %7210 = vmatprep.subr.mxu0 0.0
        %7211 = vmatpush1.xpose.msra.mxu0 0.0
        %7212 = vmatprep.subr.mxu0 0.0
        %7213 = vmatpush1.xpose.msra.mxu0 0.0
        %7214 = vmatprep.subr.mxu0 0.0
        %7215 = vmatpush1.xpose.msra.mxu0 0.0
        %7216 = vmatprep.subr.mxu0 0.0
        %7217 = vmatpush1.xpose.msra.mxu0 0.0
        %7218 = vmatprep.subr.mxu0 0.0
        %7219 = vmatpush1.xpose.msra.mxu0 0.0
        %7220 = vmatprep.subr.mxu0 0.0
        %7221 = vmatpush1.xpose.msra.mxu0 0.0
        %7222 = vmatprep.mubr.f32.mxu0 0.0
        %7223 = vmatmul.mubr.f32.gmra.mrb[0].mxu0 %v311
        %v7224 = vpop.f32.mrb[0].mxu0
        %v7225 = vadd.f32 0.0, %v7224
        %v7226 = vpop.f32.mrb[0].mxu0
        %7227 = vdwg.mxu0
        %7228 = vmatprep.subr.mxu0 0.0
        %7229 = vmatpush1.xpose.msra.mxu0 %v6432
        %7230 = vmatprep.subr.mxu0 0.0
        %7231 = vmatpush1.xpose.msra.mxu0 %v6433
        %7232 = vmatprep.subr.mxu0 0.0
        %7233 = vmatpush1.xpose.msra.mxu0 %v6434
        %7234 = vmatprep.subr.mxu0 0.0
        %7235 = vmatpush1.xpose.msra.mxu0 %v6435
        %7236 = vmatprep.subr.mxu0 0.0
        %7237 = vmatpush1.xpose.msra.mxu0 %v6436
        %7238 = vmatprep.subr.mxu0 0.0
        %7239 = vmatpush1.xpose.msra.mxu0 %v6437
        %7240 = vmatprep.subr.mxu0 0.0
        %7241 = vmatpush1.xpose.msra.mxu0 %v6438
        %7242 = vmatprep.subr.mxu0 0.0
        %7243 = vmatpush1.xpose.msra.mxu0 %v6439
        %7244 = vmatprep.subr.mxu0 0.0
        %7245 = vmatpush1.xpose.msra.mxu0 %v6440
        %7246 = vmatprep.subr.mxu0 0.0
        %7247 = vmatpush1.xpose.msra.mxu0 %v6441
        %7248 = vmatprep.subr.mxu0 0.0
        %7249 = vmatpush1.xpose.msra.mxu0 %v6442
        %7250 = vmatprep.subr.mxu0 0.0
        %7251 = vmatpush1.xpose.msra.mxu0 %v6443
        %7252 = vmatprep.subr.mxu0 0.0
        %7253 = vmatpush1.xpose.msra.mxu0 %v6444
        %7254 = vmatprep.subr.mxu0 0.0
        %7255 = vmatpush1.xpose.msra.mxu0 %v6445
        %7256 = vmatprep.subr.mxu0 0.0
        %7257 = vmatpush1.xpose.msra.mxu0 %v6446
        %7258 = vmatprep.subr.mxu0 0.0
        %7259 = vmatpush1.xpose.msra.mxu0 %v6447
        %7260 = vmatprep.subr.mxu0 0.0
        %7261 = vmatpush1.xpose.msra.mxu0 0.0
        %7262 = vmatprep.subr.mxu0 0.0
        %7263 = vmatpush1.xpose.msra.mxu0 0.0
        %7264 = vmatprep.subr.mxu0 0.0
        %7265 = vmatpush1.xpose.msra.mxu0 0.0
        %7266 = vmatprep.subr.mxu0 0.0
        %7267 = vmatpush1.xpose.msra.mxu0 0.0
        %7268 = vmatprep.subr.mxu0 0.0
        %7269 = vmatpush1.xpose.msra.mxu0 0.0
        %7270 = vmatprep.subr.mxu0 0.0
        %7271 = vmatpush1.xpose.msra.mxu0 0.0
        %7272 = vmatprep.subr.mxu0 0.0
        %7273 = vmatpush1.xpose.msra.mxu0 0.0
        %7274 = vmatprep.subr.mxu0 0.0
        %7275 = vmatpush1.xpose.msra.mxu0 0.0
        %7276 = vmatprep.subr.mxu0 0.0
        %7277 = vmatpush1.xpose.msra.mxu0 0.0
        %7278 = vmatprep.subr.mxu0 0.0
        %7279 = vmatpush1.xpose.msra.mxu0 0.0
        %7280 = vmatprep.subr.mxu0 0.0
        %7281 = vmatpush1.xpose.msra.mxu0 0.0
        %7282 = vmatprep.subr.mxu0 0.0
        %7283 = vmatpush1.xpose.msra.mxu0 0.0
        %7284 = vmatprep.subr.mxu0 0.0
        %7285 = vmatpush1.xpose.msra.mxu0 0.0
        %7286 = vmatprep.subr.mxu0 0.0
        %7287 = vmatpush1.xpose.msra.mxu0 0.0
        %7288 = vmatprep.subr.mxu0 0.0
        %7289 = vmatpush1.xpose.msra.mxu0 0.0
        %7290 = vmatprep.subr.mxu0 0.0
        %7291 = vmatpush1.xpose.msra.mxu0 0.0
        %7292 = vmatprep.mubr.f32.mxu0 0.0
        %7293 = vmatmul.mubr.f32.gmra.mrb[0].mxu0 %v312
        %v7294 = vpop.f32.mrb[0].mxu0
        %v7295 = vadd.f32 0.0, %v7294
        %v7296 = vpop.f32.mrb[0].mxu0
        %7297 = vdwg.mxu0
        %7298 = vmatprep.subr.mxu0 0.0
        %7299 = vmatpush1.xpose.msra.mxu0 %v6448
        %7300 = vmatprep.subr.mxu0 0.0
        %7301 = vmatpush1.xpose.msra.mxu0 %v6449
        %7302 = vmatprep.subr.mxu0 0.0
        %7303 = vmatpush1.xpose.msra.mxu0 %v6450
        %7304 = vmatprep.subr.mxu0 0.0
        %7305 = vmatpush1.xpose.msra.mxu0 %v6451
        %7306 = vmatprep.subr.mxu0 0.0
        %7307 = vmatpush1.xpose.msra.mxu0 %v6452
        %7308 = vmatprep.subr.mxu0 0.0
        %7309 = vmatpush1.xpose.msra.mxu0 %v6453
        %7310 = vmatprep.subr.mxu0 0.0
        %7311 = vmatpush1.xpose.msra.mxu0 %v6454
        %7312 = vmatprep.subr.mxu0 0.0
        %7313 = vmatpush1.xpose.msra.mxu0 %v6455
        %7314 = vmatprep.subr.mxu0 0.0
        %7315 = vmatpush1.xpose.msra.mxu0 %v6456
        %7316 = vmatprep.subr.mxu0 0.0
        %7317 = vmatpush1.xpose.msra.mxu0 %v6457
        %7318 = vmatprep.subr.mxu0 0.0
        %7319 = vmatpush1.xpose.msra.mxu0 %v6458
        %7320 = vmatprep.subr.mxu0 0.0
        %7321 = vmatpush1.xpose.msra.mxu0 %v6459
        %7322 = vmatprep.subr.mxu0 0.0
        %7323 = vmatpush1.xpose.msra.mxu0 %v6460
        %7324 = vmatprep.subr.mxu0 0.0
        %7325 = vmatpush1.xpose.msra.mxu0 %v6461
        %7326 = vmatprep.subr.mxu0 0.0
        %7327 = vmatpush1.xpose.msra.mxu0 %v6462
        %7328 = vmatprep.subr.mxu0 0.0
        %7329 = vmatpush1.xpose.msra.mxu0 %v6463
        %7330 = vmatprep.subr.mxu0 0.0
        %7331 = vmatpush1.xpose.msra.mxu0 0.0
        %7332 = vmatprep.subr.mxu0 0.0
        %7333 = vmatpush1.xpose.msra.mxu0 0.0
        %7334 = vmatprep.subr.mxu0 0.0
        %7335 = vmatpush1.xpose.msra.mxu0 0.0
        %7336 = vmatprep.subr.mxu0 0.0
        %7337 = vmatpush1.xpose.msra.mxu0 0.0
        %7338 = vmatprep.subr.mxu0 0.0
        %7339 = vmatpush1.xpose.msra.mxu0 0.0
        %7340 = vmatprep.subr.mxu0 0.0
        %7341 = vmatpush1.xpose.msra.mxu0 0.0
        %7342 = vmatprep.subr.mxu0 0.0
        %7343 = vmatpush1.xpose.msra.mxu0 0.0
        %7344 = vmatprep.subr.mxu0 0.0
        %7345 = vmatpush1.xpose.msra.mxu0 0.0
        %7346 = vmatprep.subr.mxu0 0.0
        %7347 = vmatpush1.xpose.msra.mxu0 0.0
        %7348 = vmatprep.subr.mxu0 0.0
        %7349 = vmatpush1.xpose.msra.mxu0 0.0
        %7350 = vmatprep.subr.mxu0 0.0
        %7351 = vmatpush1.xpose.msra.mxu0 0.0
        %7352 = vmatprep.subr.mxu0 0.0
        %7353 = vmatpush1.xpose.msra.mxu0 0.0
        %7354 = vmatprep.subr.mxu0 0.0
        %7355 = vmatpush1.xpose.msra.mxu0 0.0
        %7356 = vmatprep.subr.mxu0 0.0
        %7357 = vmatpush1.xpose.msra.mxu0 0.0
        %7358 = vmatprep.subr.mxu0 0.0
        %7359 = vmatpush1.xpose.msra.mxu0 0.0
        %7360 = vmatprep.subr.mxu0 0.0
        %7361 = vmatpush1.xpose.msra.mxu0 0.0
        %7362 = vmatprep.mubr.f32.mxu0 0.0
        %7363 = vmatmul.mubr.f32.gmra.mrb[0].mxu0 %v313
        %v7364 = vpop.f32.mrb[0].mxu0
        %v7365 = vadd.f32 0.0, %v7364
        %v7366 = vpop.f32.mrb[0].mxu0
        %7367 = vdwg.mxu0
        %7368 = vmatprep.subr.mxu0 0.0
        %7369 = vmatpush1.xpose.msra.mxu0 %v6464
        %7370 = vmatprep.subr.mxu0 0.0
        %7371 = vmatpush1.xpose.msra.mxu0 %v6465
        %7372 = vmatprep.subr.mxu0 0.0
        %7373 = vmatpush1.xpose.msra.mxu0 %v6466
        %7374 = vmatprep.subr.mxu0 0.0
        %7375 = vmatpush1.xpose.msra.mxu0 %v6467
        %7376 = vmatprep.subr.mxu0 0.0
        %7377 = vmatpush1.xpose.msra.mxu0 %v6468
        %7378 = vmatprep.subr.mxu0 0.0
        %7379 = vmatpush1.xpose.msra.mxu0 %v6469
        %7380 = vmatprep.subr.mxu0 0.0
        %7381 = vmatpush1.xpose.msra.mxu0 %v6470
        %7382 = vmatprep.subr.mxu0 0.0
        %7383 = vmatpush1.xpose.msra.mxu0 %v6471
        %7384 = vmatprep.subr.mxu0 0.0
        %7385 = vmatpush1.xpose.msra.mxu0 %v6472
        %7386 = vmatprep.subr.mxu0 0.0
        %7387 = vmatpush1.xpose.msra.mxu0 %v6473
        %7388 = vmatprep.subr.mxu0 0.0
        %7389 = vmatpush1.xpose.msra.mxu0 %v6474
        %7390 = vmatprep.subr.mxu0 0.0
        %7391 = vmatpush1.xpose.msra.mxu0 %v6475
        %7392 = vmatprep.subr.mxu0 0.0
        %7393 = vmatpush1.xpose.msra.mxu0 %v6476
        %7394 = vmatprep.subr.mxu0 0.0
        %7395 = vmatpush1.xpose.msra.mxu0 %v6477
        %7396 = vmatprep.subr.mxu0 0.0
        %7397 = vmatpush1.xpose.msra.mxu0 %v6478
        %7398 = vmatprep.subr.mxu0 0.0
        %7399 = vmatpush1.xpose.msra.mxu0 %v6479
        %7400 = vmatprep.subr.mxu0 0.0
        %7401 = vmatpush1.xpose.msra.mxu0 0.0
        %7402 = vmatprep.subr.mxu0 0.0
        %7403 = vmatpush1.xpose.msra.mxu0 0.0
        %7404 = vmatprep.subr.mxu0 0.0
        %7405 = vmatpush1.xpose.msra.mxu0 0.0
        %7406 = vmatprep.subr.mxu0 0.0
        %7407 = vmatpush1.xpose.msra.mxu0 0.0
        %7408 = vmatprep.subr.mxu0 0.0
        %7409 = vmatpush1.xpose.msra.mxu0 0.0
        %7410 = vmatprep.subr.mxu0 0.0
        %7411 = vmatpush1.xpose.msra.mxu0 0.0
        %7412 = vmatprep.subr.mxu0 0.0
        %7413 = vmatpush1.xpose.msra.mxu0 0.0
        %7414 = vmatprep.subr.mxu0 0.0
        %7415 = vmatpush1.xpose.msra.mxu0 0.0
        %7416 = vmatprep.subr.mxu0 0.0
        %7417 = vmatpush1.xpose.msra.mxu0 0.0
        %7418 = vmatprep.subr.mxu0 0.0
        %7419 = vmatpush1.xpose.msra.mxu0 0.0
        %7420 = vmatprep.subr.mxu0 0.0
        %7421 = vmatpush1.xpose.msra.mxu0 0.0
        %7422 = vmatprep.subr.mxu0 0.0
        %7423 = vmatpush1.xpose.msra.mxu0 0.0
        %7424 = vmatprep.subr.mxu0 0.0
        %7425 = vmatpush1.xpose.msra.mxu0 0.0
        %7426 = vmatprep.subr.mxu0 0.0
        %7427 = vmatpush1.xpose.msra.mxu0 0.0
        %7428 = vmatprep.subr.mxu0 0.0
        %7429 = vmatpush1.xpose.msra.mxu0 0.0
        %7430 = vmatprep.subr.mxu0 0.0
        %7431 = vmatpush1.xpose.msra.mxu0 0.0
        %7432 = vmatprep.mubr.f32.mxu0 0.0
        %7433 = vmatmul.mubr.f32.gmra.mrb[0].mxu0 %v314
        %v7434 = vpop.f32.mrb[0].mxu0
        %v7435 = vadd.f32 0.0, %v7434
        %v7436 = vpop.f32.mrb[0].mxu0
        %7437 = vdwg.mxu0
        %7438 = vmatprep.subr.mxu0 0.0
        %7439 = vmatpush1.xpose.msra.mxu0 %v6480
        %7440 = vmatprep.subr.mxu0 0.0
        %7441 = vmatpush1.xpose.msra.mxu0 %v6481
        %7442 = vmatprep.subr.mxu0 0.0
        %7443 = vmatpush1.xpose.msra.mxu0 %v6482
        %7444 = vmatprep.subr.mxu0 0.0
        %7445 = vmatpush1.xpose.msra.mxu0 %v6483
        %7446 = vmatprep.subr.mxu0 0.0
        %7447 = vmatpush1.xpose.msra.mxu0 %v6484
        %7448 = vmatprep.subr.mxu0 0.0
        %7449 = vmatpush1.xpose.msra.mxu0 %v6485
        %7450 = vmatprep.subr.mxu0 0.0
        %7451 = vmatpush1.xpose.msra.mxu0 %v6486
        %7452 = vmatprep.subr.mxu0 0.0
        %7453 = vmatpush1.xpose.msra.mxu0 %v6487
        %7454 = vmatprep.subr.mxu0 0.0
        %7455 = vmatpush1.xpose.msra.mxu0 %v6488
        %7456 = vmatprep.subr.mxu0 0.0
        %7457 = vmatpush1.xpose.msra.mxu0 %v6489
        %7458 = vmatprep.subr.mxu0 0.0
        %7459 = vmatpush1.xpose.msra.mxu0 %v6490
        %7460 = vmatprep.subr.mxu0 0.0
        %7461 = vmatpush1.xpose.msra.mxu0 %v6491
        %7462 = vmatprep.subr.mxu0 0.0
        %7463 = vmatpush1.xpose.msra.mxu0 %v6492
        %7464 = vmatprep.subr.mxu0 0.0
        %7465 = vmatpush1.xpose.msra.mxu0 %v6493
        %7466 = vmatprep.subr.mxu0 0.0
        %7467 = vmatpush1.xpose.msra.mxu0 %v6494
        %7468 = vmatprep.subr.mxu0 0.0
        %7469 = vmatpush1.xpose.msra.mxu0 %v6495
        %7470 = vmatprep.subr.mxu0 0.0
        %7471 = vmatpush1.xpose.msra.mxu0 0.0
        %7472 = vmatprep.subr.mxu0 0.0
        %7473 = vmatpush1.xpose.msra.mxu0 0.0
        %7474 = vmatprep.subr.mxu0 0.0
        %7475 = vmatpush1.xpose.msra.mxu0 0.0
        %7476 = vmatprep.subr.mxu0 0.0
        %7477 = vmatpush1.xpose.msra.mxu0 0.0
        %7478 = vmatprep.subr.mxu0 0.0
        %7479 = vmatpush1.xpose.msra.mxu0 0.0
        %7480 = vmatprep.subr.mxu0 0.0
        %7481 = vmatpush1.xpose.msra.mxu0 0.0
        %7482 = vmatprep.subr.mxu0 0.0
        %7483 = vmatpush1.xpose.msra.mxu0 0.0
        %7484 = vmatprep.subr.mxu0 0.0
        %7485 = vmatpush1.xpose.msra.mxu0 0.0
        %7486 = vmatprep.subr.mxu0 0.0
        %7487 = vmatpush1.xpose.msra.mxu0 0.0
        %7488 = vmatprep.subr.mxu0 0.0
        %7489 = vmatpush1.xpose.msra.mxu0 0.0
        %7490 = vmatprep.subr.mxu0 0.0
        %7491 = vmatpush1.xpose.msra.mxu0 0.0
        %7492 = vmatprep.subr.mxu0 0.0
        %7493 = vmatpush1.xpose.msra.mxu0 0.0
        %7494 = vmatprep.subr.mxu0 0.0
        %7495 = vmatpush1.xpose.msra.mxu0 0.0
        %7496 = vmatprep.subr.mxu0 0.0
        %7497 = vmatpush1.xpose.msra.mxu0 0.0
        %7498 = vmatprep.subr.mxu0 0.0
        %7499 = vmatpush1.xpose.msra.mxu0 0.0
        %7500 = vmatprep.subr.mxu0 0.0
        %7501 = vmatpush1.xpose.msra.mxu0 0.0
        %7502 = vmatprep.mubr.f32.mxu0 0.0
        %7503 = vmatmul.mubr.f32.gmra.mrb[0].mxu0 %v315
        %v7504 = vpop.f32.mrb[0].mxu0
        %v7505 = vadd.f32 0.0, %v7504
        %v7506 = vpop.f32.mrb[0].mxu0
        %7507 = vdwg.mxu0
        %7508 = vmatprep.subr.mxu0 0.0
        %7509 = vmatpush1.xpose.msra.mxu0 %v6496
        %7510 = vmatprep.subr.mxu0 0.0
        %7511 = vmatpush1.xpose.msra.mxu0 %v6497
        %7512 = vmatprep.subr.mxu0 0.0
        %7513 = vmatpush1.xpose.msra.mxu0 %v6498
        %7514 = vmatprep.subr.mxu0 0.0
        %7515 = vmatpush1.xpose.msra.mxu0 %v6499
        %7516 = vmatprep.subr.mxu0 0.0
        %7517 = vmatpush1.xpose.msra.mxu0 %v6500
        %7518 = vmatprep.subr.mxu0 0.0
        %7519 = vmatpush1.xpose.msra.mxu0 %v6501
        %7520 = vmatprep.subr.mxu0 0.0
        %7521 = vmatpush1.xpose.msra.mxu0 %v6502
        %7522 = vmatprep.subr.mxu0 0.0
        %7523 = vmatpush1.xpose.msra.mxu0 %v6503
        %7524 = vmatprep.subr.mxu0 0.0
        %7525 = vmatpush1.xpose.msra.mxu0 %v6504
        %7526 = vmatprep.subr.mxu0 0.0
        %7527 = vmatpush1.xpose.msra.mxu0 %v6505
        %7528 = vmatprep.subr.mxu0 0.0
        %7529 = vmatpush1.xpose.msra.mxu0 %v6506
        %7530 = vmatprep.subr.mxu0 0.0
        %7531 = vmatpush1.xpose.msra.mxu0 %v6507
        %7532 = vmatprep.subr.mxu0 0.0
        %7533 = vmatpush1.xpose.msra.mxu0 %v6508
        %7534 = vmatprep.subr.mxu0 0.0
        %7535 = vmatpush1.xpose.msra.mxu0 %v6509
        %7536 = vmatprep.subr.mxu0 0.0
        %7537 = vmatpush1.xpose.msra.mxu0 %v6510
        %7538 = vmatprep.subr.mxu0 0.0
        %7539 = vmatpush1.xpose.msra.mxu0 %v6511
        %7540 = vmatprep.subr.mxu0 0.0
        %7541 = vmatpush1.xpose.msra.mxu0 0.0
        %7542 = vmatprep.subr.mxu0 0.0
        %7543 = vmatpush1.xpose.msra.mxu0 0.0
        %7544 = vmatprep.subr.mxu0 0.0
        %7545 = vmatpush1.xpose.msra.mxu0 0.0
        %7546 = vmatprep.subr.mxu0 0.0
        %7547 = vmatpush1.xpose.msra.mxu0 0.0
        %7548 = vmatprep.subr.mxu0 0.0
        %7549 = vmatpush1.xpose.msra.mxu0 0.0
        %7550 = vmatprep.subr.mxu0 0.0
        %7551 = vmatpush1.xpose.msra.mxu0 0.0
        %7552 = vmatprep.subr.mxu0 0.0
        %7553 = vmatpush1.xpose.msra.mxu0 0.0
        %7554 = vmatprep.subr.mxu0 0.0
        %7555 = vmatpush1.xpose.msra.mxu0 0.0
        %7556 = vmatprep.subr.mxu0 0.0
        %7557 = vmatpush1.xpose.msra.mxu0 0.0
        %7558 = vmatprep.subr.mxu0 0.0
        %7559 = vmatpush1.xpose.msra.mxu0 0.0
        %7560 = vmatprep.subr.mxu0 0.0
        %7561 = vmatpush1.xpose.msra.mxu0 0.0
        %7562 = vmatprep.subr.mxu0 0.0
        %7563 = vmatpush1.xpose.msra.mxu0 0.0
        %7564 = vmatprep.subr.mxu0 0.0
        %7565 = vmatpush1.xpose.msra.mxu0 0.0
        %7566 = vmatprep.subr.mxu0 0.0
        %7567 = vmatpush1.xpose.msra.mxu0 0.0
        %7568 = vmatprep.subr.mxu0 0.0
        %7569 = vmatpush1.xpose.msra.mxu0 0.0
        %7570 = vmatprep.subr.mxu0 0.0
        %7571 = vmatpush1.xpose.msra.mxu0 0.0
        %7572 = vmatprep.mubr.f32.mxu0 0.0
        %7573 = vmatmul.mubr.f32.gmra.mrb[0].mxu0 %v316
        %v7574 = vpop.f32.mrb[0].mxu0
        %v7575 = vadd.f32 0.0, %v7574
        %v7576 = vpop.f32.mrb[0].mxu0
        %7577 = vdwg.mxu0
        %7578 = vmatprep.subr.mxu0 0.0
        %7579 = vmatpush1.xpose.msra.mxu0 %v6512
        %7580 = vmatprep.subr.mxu0 0.0
        %7581 = vmatpush1.xpose.msra.mxu0 %v6513
        %7582 = vmatprep.subr.mxu0 0.0
        %7583 = vmatpush1.xpose.msra.mxu0 %v6514
        %7584 = vmatprep.subr.mxu0 0.0
        %7585 = vmatpush1.xpose.msra.mxu0 %v6515
        %7586 = vmatprep.subr.mxu0 0.0
        %7587 = vmatpush1.xpose.msra.mxu0 %v6516
        %7588 = vmatprep.subr.mxu0 0.0
        %7589 = vmatpush1.xpose.msra.mxu0 %v6517
        %7590 = vmatprep.subr.mxu0 0.0
        %7591 = vmatpush1.xpose.msra.mxu0 %v6518
        %7592 = vmatprep.subr.mxu0 0.0
        %7593 = vmatpush1.xpose.msra.mxu0 %v6519
        %7594 = vmatprep.subr.mxu0 0.0
        %7595 = vmatpush1.xpose.msra.mxu0 %v6520
        %7596 = vmatprep.subr.mxu0 0.0
        %7597 = vmatpush1.xpose.msra.mxu0 %v6521
        %7598 = vmatprep.subr.mxu0 0.0
        %7599 = vmatpush1.xpose.msra.mxu0 %v6522
        %7600 = vmatprep.subr.mxu0 0.0
        %7601 = vmatpush1.xpose.msra.mxu0 %v6523
        %7602 = vmatprep.subr.mxu0 0.0
        %7603 = vmatpush1.xpose.msra.mxu0 %v6524
        %7604 = vmatprep.subr.mxu0 0.0
        %7605 = vmatpush1.xpose.msra.mxu0 %v6525
        %7606 = vmatprep.subr.mxu0 0.0
        %7607 = vmatpush1.xpose.msra.mxu0 %v6526
        %7608 = vmatprep.subr.mxu0 0.0
        %7609 = vmatpush1.xpose.msra.mxu0 %v6527
        %7610 = vmatprep.subr.mxu0 0.0
        %7611 = vmatpush1.xpose.msra.mxu0 0.0
        %7612 = vmatprep.subr.mxu0 0.0
        %7613 = vmatpush1.xpose.msra.mxu0 0.0
        %7614 = vmatprep.subr.mxu0 0.0
        %7615 = vmatpush1.xpose.msra.mxu0 0.0
        %7616 = vmatprep.subr.mxu0 0.0
        %7617 = vmatpush1.xpose.msra.mxu0 0.0
        %7618 = vmatprep.subr.mxu0 0.0
        %7619 = vmatpush1.xpose.msra.mxu0 0.0
        %7620 = vmatprep.subr.mxu0 0.0
        %7621 = vmatpush1.xpose.msra.mxu0 0.0
        %7622 = vmatprep.subr.mxu0 0.0
        %7623 = vmatpush1.xpose.msra.mxu0 0.0
        %7624 = vmatprep.subr.mxu0 0.0
        %7625 = vmatpush1.xpose.msra.mxu0 0.0
        %7626 = vmatprep.subr.mxu0 0.0
        %7627 = vmatpush1.xpose.msra.mxu0 0.0
        %7628 = vmatprep.subr.mxu0 0.0
        %7629 = vmatpush1.xpose.msra.mxu0 0.0
        %7630 = vmatprep.subr.mxu0 0.0
        %7631 = vmatpush1.xpose.msra.mxu0 0.0
        %7632 = vmatprep.subr.mxu0 0.0
        %7633 = vmatpush1.xpose.msra.mxu0 0.0
        %7634 = vmatprep.subr.mxu0 0.0
        %7635 = vmatpush1.xpose.msra.mxu0 0.0
        %7636 = vmatprep.subr.mxu0 0.0
        %7637 = vmatpush1.xpose.msra.mxu0 0.0
        %7638 = vmatprep.subr.mxu0 0.0
        %7639 = vmatpush1.xpose.msra.mxu0 0.0
        %7640 = vmatprep.subr.mxu0 0.0
        %7641 = vmatpush1.xpose.msra.mxu0 0.0
        %7642 = vmatprep.mubr.f32.mxu0 0.0
        %7643 = vmatmul.mubr.f32.gmra.mrb[0].mxu0 %v317
        %v7644 = vpop.f32.mrb[0].mxu0
        %v7645 = vadd.f32 0.0, %v7644
        %v7646 = vpop.f32.mrb[0].mxu0
        %7647 = vdwg.mxu0
        %7648 = vst [vmem:[%s265] sm:$0xf] %v6595
        %7649 = vst [vmem:[%s265 + $0x4] sm:$0xf] %v6665
        %7650 = vst [vmem:[%s265 + $0x8] sm:$0xf] %v6735
        %7651 = vst [vmem:[%s265 + $0xc] sm:$0xf] %v6805
        %7652 = vst [vmem:[%s265 + $0x10] sm:$0xf] %v6875
        %7653 = vst [vmem:[%s265 + $0x14] sm:$0xf] %v6945
        %7654 = vst [vmem:[%s265 + $0x18] sm:$0xf] %v7015
        %7655 = vst [vmem:[%s265 + $0x1c] sm:$0xf] %v7085
        %7656 = vst [vmem:[%s265 + $0x20] sm:$0xf] %v7155
        %7657 = vst [vmem:[%s265 + $0x24] sm:$0xf] %v7225
        %7658 = vst [vmem:[%s265 + $0x28] sm:$0xf] %v7295
        %7659 = vst [vmem:[%s265 + $0x2c] sm:$0xf] %v7365
        %7660 = vst [vmem:[%s265 + $0x30] sm:$0xf] %v7435
        %7661 = vst [vmem:[%s265 + $0x34] sm:$0xf] %v7505
        %7662 = vst [vmem:[%s265 + $0x38] sm:$0xf] %v7575
        %7663 = vst [vmem:[%s265 + $0x3c] sm:$0xf] %v7645
        %s7664 = sand.u32 %s109, 1
        %s7665 = scalar_lea.sflag [#allocation4], %s7664
        %s7666 = sand.u32 %s109, 1
        %s7667 = smul.addr %s7666, 64
        %s7668 = scalar_lea.vmem [#allocation8], %s7667
        // Predicated region
        $region45: #{tpu_custom_call.1} parent=31 // pred_check
          %p7669 = pneg %p119
        $region46: #{tpu_custom_call.1} parent=31 // pred_check_branch
          %7671 = sbr.rel (%p7669) target = $region48
        $region47: #{tpu_custom_call.1} parent=31 // pred_region
          %s7672 = smul.u32 16, %s23
          %s7674 = ssub.s32 1024, 1024
          %7675 = vsyncadd %s7665, %s7674
          %s7676 = smul.addr %s7672, 64
          %s7677 = scalar_lea.hbm %s3, %s7676
          %s7678 = sshll.u32 %s7668, 4
          %s7679 = int_to_ptr.vmem [resolvable:$true] %s7678
          %7684 = dma.vmem_to_hbm [thread:$0]  %s7679, 1024, %s7677, %s7665, 64, 64, 4
        $region48: #{tpu_custom_call.1} parent=31 // pred_fallthru
          _
      $region32: #{tpu_custom_call.1} parent=5 // pred_fallthru
        _
      %p7685 = scmp.le.s32.totalorder 2, %s18
      // Predicated region
      $region49: #{tpu_custom_call.1} parent=5 // pred_check
        %p7686 = pneg %p7685
      $region50: #{tpu_custom_call.1} parent=5 // pred_check_branch
        %7688 = sbr.rel (%p7686) target = $region52
      $region51: #{tpu_custom_call.1} parent=5 // pred_region
        %s7689 = ssub.s32 %s18, 2
        // Predicated region
        $region53: #{tpu_custom_call.1} parent=51 // pred_check
          %p7690 = pneg %p125
        $region54: #{tpu_custom_call.1} parent=51 // pred_check_branch
          %7692 = sbr.rel (%p7690) target = $region56
        $region55: #{tpu_custom_call.1} parent=51 // pred_region
          %s7693 = sand.u32 %s110, 1
          %s7694 = scalar_lea.sflag [#allocation4], %s7693
          %s7695 = sand.u32 %s110, 1
          %s7696 = smul.addr %s7695, 64
          %s7697 = scalar_lea.vmem [#allocation8], %s7696
          %7698 = dma.done %s7694, 1024
        $region56: #{tpu_custom_call.1} parent=51 // pred_fallthru
          _
      $region52: #{tpu_custom_call.1} parent=5 // pred_fallthru
        _
    $region6: #{tpu_custom_call.1} parent=1 // loop_footer
      %s22 = sadd.s32 1, %s18
    $region7: #{tpu_custom_call.1} parent=1 // loop_footer_branch
      %17 = sbr.rel target = $region3
    $region8: #{tpu_custom_call.1} parent=1 // loop_exit
      _
    %7699 = vsyncpa [#allocation3], 1
    %s7700 = scalar_lea.sflag [#allocation3], 1
    %7701 = vsyncpa %s7700, 1
    %7702 = vsyncpa [#allocation6], 1
    %s7703 = scalar_lea.sflag [#allocation6], 1
    %7704 = vsyncpa %s7703, 1
    %7705 = vsyncpa [#allocation4], 1
    %s7706 = scalar_lea.sflag [#allocation4], 1
    %7707 = vsyncpa %s7706, 1

</llo_original>
